<compile_context>
chip_gen: v5e
topology: v5e:2x2
jax: 0.10.0
libtpu: 0.0.40
codegen_flags: <defaults>
</compile_context>

<pallas_src>
import jax
import jax.numpy as jnp
from jax.experimental import pallas as pl
from jax.experimental.pallas import tpu as pltpu

LANE = 128  # TPU lane width

_TAPS = [(ki, kj) for ki in range(3) for kj in range(3)]  # ki-major, matches HWIO flatten


def _block_kernel(x_ref, w1_ref, b1_ref, w2_ref, b2_ref, o_ref, h_ref):
    # x_ref : (B, H,  W,  Cin)     NHWC input tile (B = batch tile)
    # w1_ref: (9*Cin,  Cpad)       im2col-packed conv1 weight (cols zero-padded)
    # b1_ref: (1, Cpad)
    # w2_ref: (9*Cpad, Cpad)       im2col-packed conv2 weight (zero-padded)
    # b2_ref: (1, Cpad)
    # o_ref : (B, H2*W2, Cout)     flat, unpadded-channel output tile
    # h_ref : (B, H1, W1, Cpad)    VMEM scratch for the conv1 activation
    B, H, W, Cin = x_ref.shape
    Cpad = h_ref.shape[-1]
    Cout = o_ref.shape[-1]
    H1, W1 = H - 2, W - 2
    H2, W2 = H1 - 2, W1 - 2
    M1 = B * H1 * W1
    M2 = B * H2 * W2

    # ---- conv1: 9 accumulated tap matmuls (K = Cin), no im2col concat ----
    acc1 = jnp.zeros((M1, Cpad), jnp.float32)
    for t, (ki, kj) in enumerate(_TAPS):
        win = x_ref[:, ki:ki + H1, kj:kj + W1, :].reshape(M1, Cin)
        acc1 = acc1 + jnp.dot(win, w1_ref[t * Cin:(t + 1) * Cin, :],
                              preferred_element_type=jnp.float32)
    h = jnp.maximum(acc1 + b1_ref[...], 0.0)                   # bias + ReLU
    h_ref[...] = h.reshape(B, H1, W1, Cpad)                    # lane-dense scratch

    # ---- conv2: 9 accumulated tap matmuls straight from the scratch ----
    # Each tap operand is a full-128-lane window (K = Cpad = 128); no
    # (M, 9*Cpad) slab is ever materialized.
    acc2 = jnp.zeros((M2, Cpad), jnp.float32)
    for t, (ki, kj) in enumerate(_TAPS):
        win = h_ref[:, ki:ki + H2, kj:kj + W2, :].reshape(M2, Cpad)
        acc2 = acc2 + jnp.dot(win, w2_ref[t * Cpad:(t + 1) * Cpad, :],
                              preferred_element_type=jnp.float32)
    out = jnp.maximum(acc2 + b2_ref[...], 0.0)                 # bias + ReLU

    # Drop the zero channel padding before the HBM writeback (16x less output
    # bandwidth than storing Cpad lanes).  H2*W2 is a multiple of 8, so the
    # reshape is sublane-aligned (a view, not a retile).
    o_ref[...] = out[:, :Cout].reshape(B, H2 * W2, Cout).astype(o_ref.dtype)


def prepare_params(w1, b1, w2, b2):
    """One-time host-side parameter packing (would live at model init)."""
    Cout, Cin = w1.shape[0], w1.shape[1]
    Cpad = ((Cout + LANE - 1) // LANE) * LANE

    # OIHW -> HWIO, zero-pad output channels to Cpad, flatten taps (ki-major).
    w1_p = jnp.transpose(w1, (2, 3, 1, 0))                     # (3,3,Cin,Cout)
    w1_p = jnp.pad(w1_p, ((0, 0), (0, 0), (0, 0), (0, Cpad - Cout)))
    w1_p = w1_p.reshape(9 * Cin, Cpad)

    w2_p = jnp.transpose(w2, (2, 3, 1, 0))                     # (3,3,Cout,Cout)
    w2_p = jnp.pad(w2_p, ((0, 0), (0, 0), (0, Cpad - Cout), (0, Cpad - Cout)))
    w2_p = w2_p.reshape(9 * Cpad, Cpad)

    b1_p = jnp.pad(b1, (0, Cpad - Cout)).reshape(1, Cpad)
    b2_p = jnp.pad(b2, (0, Cpad - Cout)).reshape(1, Cpad)
    return w1_p, b1_p, w2_p, b2_p, Cout, Cpad


def _pick_batch_tile(n, max_tile=8):
    """Largest divisor of n (<= max_tile) that still leaves >= 2 grid steps."""
    best = 1
    for b in range(1, min(n, max_tile) + 1):
        if n % b == 0 and n // b >= 2:
            best = b
    return best


def block_forward(x_nchw, w1, b1, w2, b2, b_tile=None):
    """Forward pass of Block.

    x_nchw: (N, Cin, H, W) float32 (PyTorch layout)
    w1    : (Cout, Cin, 3, 3),  b1: (Cout,)
    w2    : (Cout, Cout, 3, 3), b2: (Cout,)
    returns (N, Cout, H-4, W-4) float32 (PyTorch layout)
    """
    N, Cin, H, W = x_nchw.shape
    H1, W1 = H - 2, W - 2
    H2, W2 = H - 4, W - 4

    w1_p, b1_p, w2_p, b2_p, Cout, Cpad = prepare_params(w1, b1, w2, b2)

    if b_tile is None:
        b_tile = _pick_batch_tile(N)
    assert N % b_tile == 0
    grid = (N // b_tile,)

    # NCHW -> NHWC so channels sit on the lane axis.
    x_nhwc = jnp.transpose(x_nchw, (0, 2, 3, 1))

    out_flat = pl.pallas_call(
        _block_kernel,
        out_shape=jax.ShapeDtypeStruct((N, H2 * W2, Cout), jnp.float32),
        grid_spec=pltpu.PrefetchScalarGridSpec(
            num_scalar_prefetch=0,
            grid=grid,
            in_specs=[
                pl.BlockSpec((b_tile, H, W, Cin), lambda n: (n, 0, 0, 0)),
                # Constant-index weight/bias blocks: Pallas only DMAs them on
                # the first grid step (block index never changes).
                pl.BlockSpec((9 * Cin, Cpad), lambda n: (0, 0)),
                pl.BlockSpec((1, Cpad), lambda n: (0, 0)),
                pl.BlockSpec((9 * Cpad, Cpad), lambda n: (0, 0)),
                pl.BlockSpec((1, Cpad), lambda n: (0, 0)),
            ],
            out_specs=pl.BlockSpec((b_tile, H2 * W2, Cout),
                                   lambda n: (n, 0, 0)),
            scratch_shapes=[pltpu.VMEM((b_tile, H1, W1, Cpad), jnp.float32)],
        ),
        compiler_params=pltpu.CompilerParams(
            dimension_semantics=("parallel",)),
    )(x_nhwc, w1_p, b1_p, w2_p, b2_p)

    # Un-flatten spatial dims (free, contiguous in HBM) and return NCHW.
    out_nhwc = out_flat.reshape(N, H2, W2, Cout)
    return jnp.transpose(out_nhwc, (0, 3, 1, 2))


def _reference(x_nchw, w1, b1, w2, b2):
    """Pure-JAX (XLA conv) reference for correctness checking."""
    dn = jax.lax.conv_dimension_numbers(x_nchw.shape, w1.shape,
                                        ("NCHW", "OIHW", "NCHW"))
    y = jax.lax.conv_general_dilated(x_nchw, w1, (1, 1), "VALID",
                                     dimension_numbers=dn)
    y = jax.nn.relu(y + b1.reshape(1, -1, 1, 1))
    y = jax.lax.conv_general_dilated(y, w2, (1, 1), "VALID",
                                     dimension_numbers=dn)
    return jax.nn.relu(y + b2.reshape(1, -1, 1, 1))


if __name__ == "__main__":
    # Small shapes consistent with the module: batch=2, in_ch=4, out_ch=8, 16x16.
    N, Cin, Cout, H, W = 2, 4, 8, 16, 16

    key = jax.random.PRNGKey(0)
    kx, k1, kb1, k2, kb2 = jax.random.split(key, 5)

    x = jax.random.normal(kx, (N, Cin, H, W), dtype=jnp.float32)

    # Deterministic synthetic parameters (Conv2d shapes: (out, in, 3, 3) + (out,)).
    fan1 = Cin * 3 * 3
    w1 = jax.random.uniform(k1, (Cout, Cin, 3, 3), jnp.float32,
                            -1.0, 1.0) / jnp.sqrt(fan1)
    b1 = jax.random.uniform(kb1, (Cout,), jnp.float32, -1.0, 1.0) / jnp.sqrt(fan1)
    fan2 = Cout * 3 * 3
    w2 = jax.random.uniform(k2, (Cout, Cout, 3, 3), jnp.float32,
                            -1.0, 1.0) / jnp.sqrt(fan2)
    b2 = jax.random.uniform(kb2, (Cout,), jnp.float32, -1.0, 1.0) / jnp.sqrt(fan2)

    fwd = jax.jit(block_forward)
    out = jax.block_until_ready(fwd(x, w1, b1, w2, b2))
    ref = jax.block_until_ready(_reference(x, w1, b1, w2, b2))

    assert out.shape == (N, Cout, H - 4, W - 4), out.shape
    assert jnp.allclose(out, ref, atol=2e-4, rtol=2e-4), "mismatch vs reference"

    print("KERNEL_OK")
</pallas_src>

<mosaic_0001>
module attributes {stable_mosaic.version = 11 : i64} {
  func.func @_block_kernel(%arg0: i32, %arg1: memref<1x16x16x4xf32, #tpu.memory_space<vmem>>, %arg2: memref<36x128xf32, #tpu.memory_space<vmem>>, %arg3: memref<1x128xf32, #tpu.memory_space<vmem>>, %arg4: memref<1152x128xf32, #tpu.memory_space<vmem>>, %arg5: memref<1x128xf32, #tpu.memory_space<vmem>>, %arg6: memref<1x144x8xf32, #tpu.memory_space<vmem>>, %arg7: memref<1x14x14x128xf32, #tpu.memory_space<vmem>>) attributes {dimension_semantics = [#tpu.dimension_semantics<parallel>], iteration_bounds = array<i64: 2>, scalar_prefetch = 0 : i64, scratch_operands = 1 : i64, tpu.core_type = #tpu.core_type<tc>, window_params = [{transform_indices = @transform_0, window_bounds = array<i64: 1, 16, 16, 4>}, {pipeline_mode = #tpu.pipeline_mode<synchronous>, transform_indices = @transform_1, window_bounds = array<i64: 36, 128>}, {pipeline_mode = #tpu.pipeline_mode<synchronous>, transform_indices = @transform_2, window_bounds = array<i64: 1, 128>}, {pipeline_mode = #tpu.pipeline_mode<synchronous>, transform_indices = @transform_3, window_bounds = array<i64: 1152, 128>}, {pipeline_mode = #tpu.pipeline_mode<synchronous>, transform_indices = @transform_4, window_bounds = array<i64: 1, 128>}, {transform_indices = @transform_5, window_bounds = array<i64: 1, 144, 8>}]} {
    %cst = arith.constant 0.000000e+00 : f32
    %0 = vector.broadcast %cst : f32 to vector<196x128xf32>
    %c0 = arith.constant 0 : index
    %c0_0 = arith.constant 0 : index
    %c0_1 = arith.constant 0 : index
    %c0_2 = arith.constant 0 : index
    %1 = vector.load %arg1[%c0, %c0_0, %c0_1, %c0_2] : memref<1x16x16x4xf32, #tpu.memory_space<vmem>>, vector<1x14x14x4xf32>
    %2 = vector.shape_cast %1 : vector<1x14x14x4xf32> to vector<196x4xf32>
    %c0_3 = arith.constant 0 : index
    %c0_4 = arith.constant 0 : index
    %3 = vector.load %arg2[%c0_3, %c0_4] : memref<36x128xf32, #tpu.memory_space<vmem>>, vector<4x128xf32>
    %cst_5 = arith.constant dense<0.000000e+00> : vector<196x128xf32>
    %4 = tpu.matmul %2, %3, %cst_5 {dimension_numbers = #tpu.dot_dimension_numbers<[1], [0], [0], [1], [0, 0, 1, 1], [], []>} : vector<196x4xf32>, vector<4x128xf32>, vector<196x128xf32> -> vector<196x128xf32>
    %5 = arith.addf %0, %4 : vector<196x128xf32>
    %c0_6 = arith.constant 0 : index
    %c0_7 = arith.constant 0 : index
    %c1 = arith.constant 1 : index
    %c0_8 = arith.constant 0 : index
    %6 = vector.load %arg1[%c0_6, %c0_7, %c1, %c0_8] : memref<1x16x16x4xf32, #tpu.memory_space<vmem>>, vector<1x14x14x4xf32>
    %7 = vector.shape_cast %6 : vector<1x14x14x4xf32> to vector<196x4xf32>
    %c4 = arith.constant 4 : index
    %c0_9 = arith.constant 0 : index
    %8 = vector.load %arg2[%c4, %c0_9] : memref<36x128xf32, #tpu.memory_space<vmem>>, vector<4x128xf32>
    %cst_10 = arith.constant dense<0.000000e+00> : vector<196x128xf32>
    %9 = tpu.matmul %7, %8, %cst_10 {dimension_numbers = #tpu.dot_dimension_numbers<[1], [0], [0], [1], [0, 0, 1, 1], [], []>} : vector<196x4xf32>, vector<4x128xf32>, vector<196x128xf32> -> vector<196x128xf32>
    %10 = arith.addf %5, %9 : vector<196x128xf32>
    %c0_11 = arith.constant 0 : index
    %c0_12 = arith.constant 0 : index
    %c2 = arith.constant 2 : index
    %c0_13 = arith.constant 0 : index
    %11 = vector.load %arg1[%c0_11, %c0_12, %c2, %c0_13] : memref<1x16x16x4xf32, #tpu.memory_space<vmem>>, vector<1x14x14x4xf32>
    %12 = vector.shape_cast %11 : vector<1x14x14x4xf32> to vector<196x4xf32>
    %c8 = arith.constant 8 : index
    %c0_14 = arith.constant 0 : index
    %13 = vector.load %arg2[%c8, %c0_14] : memref<36x128xf32, #tpu.memory_space<vmem>>, vector<4x128xf32>
    %cst_15 = arith.constant dense<0.000000e+00> : vector<196x128xf32>
    %14 = tpu.matmul %12, %13, %cst_15 {dimension_numbers = #tpu.dot_dimension_numbers<[1], [0], [0], [1], [0, 0, 1, 1], [], []>} : vector<196x4xf32>, vector<4x128xf32>, vector<196x128xf32> -> vector<196x128xf32>
    %15 = arith.addf %10, %14 : vector<196x128xf32>
    %c0_16 = arith.constant 0 : index
    %c1_17 = arith.constant 1 : index
    %c0_18 = arith.constant 0 : index
    %c0_19 = arith.constant 0 : index
    %16 = vector.load %arg1[%c0_16, %c1_17, %c0_18, %c0_19] : memref<1x16x16x4xf32, #tpu.memory_space<vmem>>, vector<1x14x14x4xf32>
    %17 = vector.shape_cast %16 : vector<1x14x14x4xf32> to vector<196x4xf32>
    %c12 = arith.constant 12 : index
    %c0_20 = arith.constant 0 : index
    %18 = vector.load %arg2[%c12, %c0_20] : memref<36x128xf32, #tpu.memory_space<vmem>>, vector<4x128xf32>
    %cst_21 = arith.constant dense<0.000000e+00> : vector<196x128xf32>
    %19 = tpu.matmul %17, %18, %cst_21 {dimension_numbers = #tpu.dot_dimension_numbers<[1], [0], [0], [1], [0, 0, 1, 1], [], []>} : vector<196x4xf32>, vector<4x128xf32>, vector<196x128xf32> -> vector<196x128xf32>
    %20 = arith.addf %15, %19 : vector<196x128xf32>
    %c0_22 = arith.constant 0 : index
    %c1_23 = arith.constant 1 : index
    %c1_24 = arith.constant 1 : index
    %c0_25 = arith.constant 0 : index
    %21 = vector.load %arg1[%c0_22, %c1_23, %c1_24, %c0_25] : memref<1x16x16x4xf32, #tpu.memory_space<vmem>>, vector<1x14x14x4xf32>
    %22 = vector.shape_cast %21 : vector<1x14x14x4xf32> to vector<196x4xf32>
    %c16 = arith.constant 16 : index
    %c0_26 = arith.constant 0 : index
    %23 = vector.load %arg2[%c16, %c0_26] : memref<36x128xf32, #tpu.memory_space<vmem>>, vector<4x128xf32>
    %cst_27 = arith.constant dense<0.000000e+00> : vector<196x128xf32>
    %24 = tpu.matmul %22, %23, %cst_27 {dimension_numbers = #tpu.dot_dimension_numbers<[1], [0], [0], [1], [0, 0, 1, 1], [], []>} : vector<196x4xf32>, vector<4x128xf32>, vector<196x128xf32> -> vector<196x128xf32>
    %25 = arith.addf %20, %24 : vector<196x128xf32>
    %c0_28 = arith.constant 0 : index
    %c1_29 = arith.constant 1 : index
    %c2_30 = arith.constant 2 : index
    %c0_31 = arith.constant 0 : index
    %26 = vector.load %arg1[%c0_28, %c1_29, %c2_30, %c0_31] : memref<1x16x16x4xf32, #tpu.memory_space<vmem>>, vector<1x14x14x4xf32>
    %27 = vector.shape_cast %26 : vector<1x14x14x4xf32> to vector<196x4xf32>
    %c20 = arith.constant 20 : index
    %c0_32 = arith.constant 0 : index
    %28 = vector.load %arg2[%c20, %c0_32] : memref<36x128xf32, #tpu.memory_space<vmem>>, vector<4x128xf32>
    %cst_33 = arith.constant dense<0.000000e+00> : vector<196x128xf32>
    %29 = tpu.matmul %27, %28, %cst_33 {dimension_numbers = #tpu.dot_dimension_numbers<[1], [0], [0], [1], [0, 0, 1, 1], [], []>} : vector<196x4xf32>, vector<4x128xf32>, vector<196x128xf32> -> vector<196x128xf32>
    %30 = arith.addf %25, %29 : vector<196x128xf32>
    %c0_34 = arith.constant 0 : index
    %c2_35 = arith.constant 2 : index
    %c0_36 = arith.constant 0 : index
    %c0_37 = arith.constant 0 : index
    %31 = vector.load %arg1[%c0_34, %c2_35, %c0_36, %c0_37] : memref<1x16x16x4xf32, #tpu.memory_space<vmem>>, vector<1x14x14x4xf32>
    %32 = vector.shape_cast %31 : vector<1x14x14x4xf32> to vector<196x4xf32>
    %c24 = arith.constant 24 : index
    %c0_38 = arith.constant 0 : index
    %33 = vector.load %arg2[%c24, %c0_38] : memref<36x128xf32, #tpu.memory_space<vmem>>, vector<4x128xf32>
    %cst_39 = arith.constant dense<0.000000e+00> : vector<196x128xf32>
    %34 = tpu.matmul %32, %33, %cst_39 {dimension_numbers = #tpu.dot_dimension_numbers<[1], [0], [0], [1], [0, 0, 1, 1], [], []>} : vector<196x4xf32>, vector<4x128xf32>, vector<196x128xf32> -> vector<196x128xf32>
    %35 = arith.addf %30, %34 : vector<196x128xf32>
    %c0_40 = arith.constant 0 : index
    %c2_41 = arith.constant 2 : index
    %c1_42 = arith.constant 1 : index
    %c0_43 = arith.constant 0 : index
    %36 = vector.load %arg1[%c0_40, %c2_41, %c1_42, %c0_43] : memref<1x16x16x4xf32, #tpu.memory_space<vmem>>, vector<1x14x14x4xf32>
    %37 = vector.shape_cast %36 : vector<1x14x14x4xf32> to vector<196x4xf32>
    %c28 = arith.constant 28 : index
    %c0_44 = arith.constant 0 : index
    %38 = vector.load %arg2[%c28, %c0_44] : memref<36x128xf32, #tpu.memory_space<vmem>>, vector<4x128xf32>
    %cst_45 = arith.constant dense<0.000000e+00> : vector<196x128xf32>
    %39 = tpu.matmul %37, %38, %cst_45 {dimension_numbers = #tpu.dot_dimension_numbers<[1], [0], [0], [1], [0, 0, 1, 1], [], []>} : vector<196x4xf32>, vector<4x128xf32>, vector<196x128xf32> -> vector<196x128xf32>
    %40 = arith.addf %35, %39 : vector<196x128xf32>
    %c0_46 = arith.constant 0 : index
    %c2_47 = arith.constant 2 : index
    %c2_48 = arith.constant 2 : index
    %c0_49 = arith.constant 0 : index
    %41 = vector.load %arg1[%c0_46, %c2_47, %c2_48, %c0_49] : memref<1x16x16x4xf32, #tpu.memory_space<vmem>>, vector<1x14x14x4xf32>
    %42 = vector.shape_cast %41 : vector<1x14x14x4xf32> to vector<196x4xf32>
    %c32 = arith.constant 32 : index
    %c0_50 = arith.constant 0 : index
    %43 = vector.load %arg2[%c32, %c0_50] : memref<36x128xf32, #tpu.memory_space<vmem>>, vector<4x128xf32>
    %cst_51 = arith.constant dense<0.000000e+00> : vector<196x128xf32>
    %44 = tpu.matmul %42, %43, %cst_51 {dimension_numbers = #tpu.dot_dimension_numbers<[1], [0], [0], [1], [0, 0, 1, 1], [], []>} : vector<196x4xf32>, vector<4x128xf32>, vector<196x128xf32> -> vector<196x128xf32>
    %45 = arith.addf %40, %44 : vector<196x128xf32>
    %c0_52 = arith.constant 0 : index
    %c0_53 = arith.constant 0 : index
    %46 = vector.load %arg3[%c0_52, %c0_53] : memref<1x128xf32, #tpu.memory_space<vmem>>, vector<1x128xf32>
    %47 = vector.broadcast %46 : vector<1x128xf32> to vector<196x128xf32>
    %48 = arith.addf %45, %47 : vector<196x128xf32>
    %cst_54 = arith.constant 0.000000e+00 : f32
    %49 = vector.broadcast %cst_54 : f32 to vector<196x128xf32>
    %50 = arith.maximumf %48, %49 : vector<196x128xf32>
    %51 = vector.shape_cast %50 : vector<196x128xf32> to vector<1x14x14x128xf32>
    %c0_55 = arith.constant 0 : index
    %c0_56 = arith.constant 0 : index
    %c0_57 = arith.constant 0 : index
    %c0_58 = arith.constant 0 : index
    %52 = vector.load %arg7[%c0_55, %c0_56, %c0_57, %c0_58] : memref<1x14x14x128xf32, #tpu.memory_space<vmem>>, vector<1x14x14x128xf32>
    tpu.vector_store %arg7[%c0_55, %c0_56, %c0_57, %c0_58], %51 {strides = array<i32>} : memref<1x14x14x128xf32, #tpu.memory_space<vmem>>, vector<1x14x14x128xf32>,
    %cst_59 = arith.constant 0.000000e+00 : f32
    %53 = vector.broadcast %cst_59 : f32 to vector<144x128xf32>
    %c0_60 = arith.constant 0 : index
    %c0_61 = arith.constant 0 : index
    %c0_62 = arith.constant 0 : index
    %c0_63 = arith.constant 0 : index
    %54 = vector.load %arg7[%c0_60, %c0_61, %c0_62, %c0_63] : memref<1x14x14x128xf32, #tpu.memory_space<vmem>>, vector<1x12x12x128xf32>
    %55 = vector.shape_cast %54 : vector<1x12x12x128xf32> to vector<144x128xf32>
    %c0_64 = arith.constant 0 : index
    %c0_65 = arith.constant 0 : index
    %56 = vector.load %arg4[%c0_64, %c0_65] : memref<1152x128xf32, #tpu.memory_space<vmem>>, vector<128x128xf32>
    %cst_66 = arith.constant dense<0.000000e+00> : vector<144x128xf32>
    %57 = tpu.matmul %55, %56, %cst_66 {dimension_numbers = #tpu.dot_dimension_numbers<[1], [0], [0], [1], [0, 0, 1, 1], [], []>} : vector<144x128xf32>, vector<128x128xf32>, vector<144x128xf32> -> vector<144x128xf32>
    %58 = arith.addf %53, %57 : vector<144x128xf32>
    %c0_67 = arith.constant 0 : index
    %c0_68 = arith.constant 0 : index
    %c1_69 = arith.constant 1 : index
    %c0_70 = arith.constant 0 : index
    %59 = vector.load %arg7[%c0_67, %c0_68, %c1_69, %c0_70] : memref<1x14x14x128xf32, #tpu.memory_space<vmem>>, vector<1x12x12x128xf32>
    %60 = vector.shape_cast %59 : vector<1x12x12x128xf32> to vector<144x128xf32>
    %c128 = arith.constant 128 : index
    %c0_71 = arith.constant 0 : index
    %61 = vector.load %arg4[%c128, %c0_71] : memref<1152x128xf32, #tpu.memory_space<vmem>>, vector<128x128xf32>
    %cst_72 = arith.constant dense<0.000000e+00> : vector<144x128xf32>
    %62 = tpu.matmul %60, %61, %cst_72 {dimension_numbers = #tpu.dot_dimension_numbers<[1], [0], [0], [1], [0, 0, 1, 1], [], []>} : vector<144x128xf32>, vector<128x128xf32>, vector<144x128xf32> -> vector<144x128xf32>
    %63 = arith.addf %58, %62 : vector<144x128xf32>
    %c0_73 = arith.constant 0 : index
    %c0_74 = arith.constant 0 : index
    %c2_75 = arith.constant 2 : index
    %c0_76 = arith.constant 0 : index
    %64 = vector.load %arg7[%c0_73, %c0_74, %c2_75, %c0_76] : memref<1x14x14x128xf32, #tpu.memory_space<vmem>>, vector<1x12x12x128xf32>
    %65 = vector.shape_cast %64 : vector<1x12x12x128xf32> to vector<144x128xf32>
    %c256 = arith.constant 256 : index
    %c0_77 = arith.constant 0 : index
    %66 = vector.load %arg4[%c256, %c0_77] : memref<1152x128xf32, #tpu.memory_space<vmem>>, vector<128x128xf32>
    %cst_78 = arith.constant dense<0.000000e+00> : vector<144x128xf32>
    %67 = tpu.matmul %65, %66, %cst_78 {dimension_numbers = #tpu.dot_dimension_numbers<[1], [0], [0], [1], [0, 0, 1, 1], [], []>} : vector<144x128xf32>, vector<128x128xf32>, vector<144x128xf32> -> vector<144x128xf32>
    %68 = arith.addf %63, %67 : vector<144x128xf32>
    %c0_79 = arith.constant 0 : index
    %c1_80 = arith.constant 1 : index
    %c0_81 = arith.constant 0 : index
    %c0_82 = arith.constant 0 : index
    %69 = vector.load %arg7[%c0_79, %c1_80, %c0_81, %c0_82] : memref<1x14x14x128xf32, #tpu.memory_space<vmem>>, vector<1x12x12x128xf32>
    %70 = vector.shape_cast %69 : vector<1x12x12x128xf32> to vector<144x128xf32>
    %c384 = arith.constant 384 : index
    %c0_83 = arith.constant 0 : index
    %71 = vector.load %arg4[%c384, %c0_83] : memref<1152x128xf32, #tpu.memory_space<vmem>>, vector<128x128xf32>
    %cst_84 = arith.constant dense<0.000000e+00> : vector<144x128xf32>
    %72 = tpu.matmul %70, %71, %cst_84 {dimension_numbers = #tpu.dot_dimension_numbers<[1], [0], [0], [1], [0, 0, 1, 1], [], []>} : vector<144x128xf32>, vector<128x128xf32>, vector<144x128xf32> -> vector<144x128xf32>
    %73 = arith.addf %68, %72 : vector<144x128xf32>
    %c0_85 = arith.constant 0 : index
    %c1_86 = arith.constant 1 : index
    %c1_87 = arith.constant 1 : index
    %c0_88 = arith.constant 0 : index
    %74 = vector.load %arg7[%c0_85, %c1_86, %c1_87, %c0_88] : memref<1x14x14x128xf32, #tpu.memory_space<vmem>>, vector<1x12x12x128xf32>
    %75 = vector.shape_cast %74 : vector<1x12x12x128xf32> to vector<144x128xf32>
    %c512 = arith.constant 512 : index
    %c0_89 = arith.constant 0 : index
    %76 = vector.load %arg4[%c512, %c0_89] : memref<1152x128xf32, #tpu.memory_space<vmem>>, vector<128x128xf32>
    %cst_90 = arith.constant dense<0.000000e+00> : vector<144x128xf32>
    %77 = tpu.matmul %75, %76, %cst_90 {dimension_numbers = #tpu.dot_dimension_numbers<[1], [0], [0], [1], [0, 0, 1, 1], [], []>} : vector<144x128xf32>, vector<128x128xf32>, vector<144x128xf32> -> vector<144x128xf32>
    %78 = arith.addf %73, %77 : vector<144x128xf32>
    %c0_91 = arith.constant 0 : index
    %c1_92 = arith.constant 1 : index
    %c2_93 = arith.constant 2 : index
    %c0_94 = arith.constant 0 : index
    %79 = vector.load %arg7[%c0_91, %c1_92, %c2_93, %c0_94] : memref<1x14x14x128xf32, #tpu.memory_space<vmem>>, vector<1x12x12x128xf32>
    %80 = vector.shape_cast %79 : vector<1x12x12x128xf32> to vector<144x128xf32>
    %c640 = arith.constant 640 : index
    %c0_95 = arith.constant 0 : index
    %81 = vector.load %arg4[%c640, %c0_95] : memref<1152x128xf32, #tpu.memory_space<vmem>>, vector<128x128xf32>
    %cst_96 = arith.constant dense<0.000000e+00> : vector<144x128xf32>
    %82 = tpu.matmul %80, %81, %cst_96 {dimension_numbers = #tpu.dot_dimension_numbers<[1], [0], [0], [1], [0, 0, 1, 1], [], []>} : vector<144x128xf32>, vector<128x128xf32>, vector<144x128xf32> -> vector<144x128xf32>
    %83 = arith.addf %78, %82 : vector<144x128xf32>
    %c0_97 = arith.constant 0 : index
    %c2_98 = arith.constant 2 : index
    %c0_99 = arith.constant 0 : index
    %c0_100 = arith.constant 0 : index
    %84 = vector.load %arg7[%c0_97, %c2_98, %c0_99, %c0_100] : memref<1x14x14x128xf32, #tpu.memory_space<vmem>>, vector<1x12x12x128xf32>
    %85 = vector.shape_cast %84 : vector<1x12x12x128xf32> to vector<144x128xf32>
    %c768 = arith.constant 768 : index
    %c0_101 = arith.constant 0 : index
    %86 = vector.load %arg4[%c768, %c0_101] : memref<1152x128xf32, #tpu.memory_space<vmem>>, vector<128x128xf32>
    %cst_102 = arith.constant dense<0.000000e+00> : vector<144x128xf32>
    %87 = tpu.matmul %85, %86, %cst_102 {dimension_numbers = #tpu.dot_dimension_numbers<[1], [0], [0], [1], [0, 0, 1, 1], [], []>} : vector<144x128xf32>, vector<128x128xf32>, vector<144x128xf32> -> vector<144x128xf32>
    %88 = arith.addf %83, %87 : vector<144x128xf32>
    %c0_103 = arith.constant 0 : index
    %c2_104 = arith.constant 2 : index
    %c1_105 = arith.constant 1 : index
    %c0_106 = arith.constant 0 : index
    %89 = vector.load %arg7[%c0_103, %c2_104, %c1_105, %c0_106] : memref<1x14x14x128xf32, #tpu.memory_space<vmem>>, vector<1x12x12x128xf32>
    %90 = vector.shape_cast %89 : vector<1x12x12x128xf32> to vector<144x128xf32>
    %c896 = arith.constant 896 : index
    %c0_107 = arith.constant 0 : index
    %91 = vector.load %arg4[%c896, %c0_107] : memref<1152x128xf32, #tpu.memory_space<vmem>>, vector<128x128xf32>
    %cst_108 = arith.constant dense<0.000000e+00> : vector<144x128xf32>
    %92 = tpu.matmul %90, %91, %cst_108 {dimension_numbers = #tpu.dot_dimension_numbers<[1], [0], [0], [1], [0, 0, 1, 1], [], []>} : vector<144x128xf32>, vector<128x128xf32>, vector<144x128xf32> -> vector<144x128xf32>
    %93 = arith.addf %88, %92 : vector<144x128xf32>
    %c0_109 = arith.constant 0 : index
    %c2_110 = arith.constant 2 : index
    %c2_111 = arith.constant 2 : index
    %c0_112 = arith.constant 0 : index
    %94 = vector.load %arg7[%c0_109, %c2_110, %c2_111, %c0_112] : memref<1x14x14x128xf32, #tpu.memory_space<vmem>>, vector<1x12x12x128xf32>
    %95 = vector.shape_cast %94 : vector<1x12x12x128xf32> to vector<144x128xf32>
    %c1024 = arith.constant 1024 : index
    %c0_113 = arith.constant 0 : index
    %96 = vector.load %arg4[%c1024, %c0_113] : memref<1152x128xf32, #tpu.memory_space<vmem>>, vector<128x128xf32>
    %cst_114 = arith.constant dense<0.000000e+00> : vector<144x128xf32>
    %97 = tpu.matmul %95, %96, %cst_114 {dimension_numbers = #tpu.dot_dimension_numbers<[1], [0], [0], [1], [0, 0, 1, 1], [], []>} : vector<144x128xf32>, vector<128x128xf32>, vector<144x128xf32> -> vector<144x128xf32>
    %98 = arith.addf %93, %97 : vector<144x128xf32>
    %c0_115 = arith.constant 0 : index
    %c0_116 = arith.constant 0 : index
    %99 = vector.load %arg5[%c0_115, %c0_116] : memref<1x128xf32, #tpu.memory_space<vmem>>, vector<1x128xf32>
    %100 = vector.broadcast %99 : vector<1x128xf32> to vector<144x128xf32>
    %101 = arith.addf %98, %100 : vector<144x128xf32>
    %cst_117 = arith.constant 0.000000e+00 : f32
    %102 = vector.broadcast %cst_117 : f32 to vector<144x128xf32>
    %103 = arith.maximumf %101, %102 : vector<144x128xf32>
    %104 = vector.extract_strided_slice %103 {offsets = [0, 0], sizes = [144, 8], strides = [1, 1]} : vector<144x128xf32> to vector<144x8xf32>
    %105 = vector.shape_cast %104 : vector<144x8xf32> to vector<1x144x8xf32>
    %c0_118 = arith.constant 0 : index
    %c0_119 = arith.constant 0 : index
    %c0_120 = arith.constant 0 : index
    %106 = vector.load %arg6[%c0_118, %c0_119, %c0_120] : memref<1x144x8xf32, #tpu.memory_space<vmem>>, vector<1x144x8xf32>
    tpu.vector_store %arg6[%c0_118, %c0_119, %c0_120], %105 {strides = array<i32>} : memref<1x144x8xf32, #tpu.memory_space<vmem>>, vector<1x144x8xf32>,
    return
  }
  func.func @transform_0(%arg0: i32) -> (i32, i32, i32, i32) {
    %c0_i32 = arith.constant 0 : i32
    %c0_i32_0 = arith.constant 0 : i32
    %c0_i32_1 = arith.constant 0 : i32
    %c0_i32_2 = arith.constant 0 : i32
    return %arg0, %c0_i32, %c0_i32_0, %c0_i32_1 : i32, i32, i32, i32
  }
  func.func @transform_1(%arg0: i32) -> (i32, i32) {
    %c0_i32 = arith.constant 0 : i32
    %c0_i32_0 = arith.constant 0 : i32
    %c0_i32_1 = arith.constant 0 : i32
    return %c0_i32, %c0_i32_0 : i32, i32
  }
  func.func @transform_2(%arg0: i32) -> (i32, i32) {
    %c0_i32 = arith.constant 0 : i32
    %c0_i32_0 = arith.constant 0 : i32
    %c0_i32_1 = arith.constant 0 : i32
    return %c0_i32, %c0_i32_0 : i32, i32
  }
  func.func @transform_3(%arg0: i32) -> (i32, i32) {
    %c0_i32 = arith.constant 0 : i32
    %c0_i32_0 = arith.constant 0 : i32
    %c0_i32_1 = arith.constant 0 : i32
    return %c0_i32, %c0_i32_0 : i32, i32
  }
  func.func @transform_4(%arg0: i32) -> (i32, i32) {
    %c0_i32 = arith.constant 0 : i32
    %c0_i32_0 = arith.constant 0 : i32
    %c0_i32_1 = arith.constant 0 : i32
    return %c0_i32, %c0_i32_0 : i32, i32
  }
  func.func @transform_5(%arg0: i32) -> (i32, i32, i32) {
    %c0_i32 = arith.constant 0 : i32
    %c0_i32_0 = arith.constant 0 : i32
    %c0_i32_1 = arith.constant 0 : i32
    return %arg0, %c0_i32, %c0_i32_0 : i32, i32, i32
  }
}

</mosaic_0001>

<llo_original>
// kernel: block_forward.1
$region0: #{block_forward.1}
  #allocation0 [shape = 'u32[]', space=smem, size = 0x4, offset = 0x4, fixed_abs, tag = 'smem constant byte address 0x4 - core index']
  #allocation1 [shape = 'u32[72,128]{1,0:T(1,128)}', space=vmem, size = 0x9000, scoped, tag = 'internal scratch']
  #allocation2 [shape = 'f32[1,14,14,128]{3,2,1,0:T(8,128)}', space=vmem, size = 0x1c000, scoped, tag = 'scratch operand']
  %s0 = inlined_call_operand.vmem [shape: f32[2,16,16,4], index: 0, kind: input, shape index: {}]
  %s1 = inlined_call_operand.vmem [shape: f32[36,128], index: 1, kind: input, shape index: {}]
  %s2 = inlined_call_operand.vmem [shape: f32[1,128], index: 2, kind: input, shape index: {}]
  %s3 = inlined_call_operand.vmem [shape: f32[1152,128], index: 3, kind: input, shape index: {}]
  %s4 = inlined_call_operand.vmem [shape: f32[1,128], index: 4, kind: input, shape index: {}]
  %s5 = inlined_call_operand.vmem [shape: f32[2,144,8], index: 5, kind: output, shape index: {}]
  %s6 = sld [smem:[#allocation0]]
  $region53: #{block_forward.1} parent=0
    _
  %s8 = ssub.s32 1, %s6
  %s9 = scalar_select 0, %s8, %s6
  loop: start=0, step=1, limit=4
  $region2: #{block_forward.1} parent=0 // loop_pre_header
    _
  $region3: #{block_forward.1} parent=0 // loop_header
    %s11 = sphi 0, %s15
    %p12 = scmp.ge.s32.totalorder %s11, 4
    %s21 = sphi 0, %s23
    %s24 = sphi 0, %s21
    %s25 = sphi 0, %s24
    %s41 = sphi 0, %s25
    %s45 = sphi 0, %s45
    %s47 = sphi 0, %s45
    %s48 = sphi 0, %s47
    %s62 = sphi 0, %s48
    %s66 = sphi 0, %s66
    %s68 = sphi 0, %s66
    %s69 = sphi 0, %s68
    %s83 = sphi 0, %s69
    %s87 = sphi 0, %s87
    %s89 = sphi 0, %s87
    %s90 = sphi 0, %s89
    %s104 = sphi 0, %s90
    %s108 = sphi 0, %s108
    %s110 = sphi 0, %s108
    %s111 = sphi 0, %s110
    %s125 = sphi 0, %s111
    %s131 = sphi 0, %s133
    %s134 = sphi 0, %s131
    %s135 = sphi 0, %s134
    %s151 = sphi 0, %s135
  $region4: #{block_forward.1} parent=0 // loop_header_branch
    %14 = sbr.rel (%p12) target = $region8
  $region5: #{block_forward.1} parent=0 // loop_body
    %s16 = ssub.s32 %s11, 1
    %s17 = ssub.s32 %s11, 2
    %s18 = sadd.s32 %s11, 1
    %s19 = ssub.s32 %s11, %s18
    %p20 = scmp.eq.s32.totalorder %s19, 0
    %s22 = sadd.s32 %s21, 1
    %s23 = scalar_select %p20, %s21, %s22
    %p26 = pneg %p20
    %p27 = scmp.eq.s32.totalorder %s11, 1
    %p28 = por %p26, %p27
    %p29 = scmp.ne.s32.totalorder %s21, %s24
    %p30 = scmp.eq.s32.totalorder %s11, 0
    %p31 = por %p29, %p30
    %p32 = scmp.ne.s32.totalorder %s21, %s24
    %p33 = scmp.eq.s32.totalorder %s16, 1
    %p34 = por %p32, %p33
    %p35 = scmp.ne.s32.totalorder %s24, %s25
    %p36 = scmp.eq.s32.totalorder %s16, 0
    %p37 = por %p35, %p36
    %p38 = scmp.ne.s32.totalorder %s24, %s25
    %p39 = scmp.eq.s32.totalorder %s17, 1
    %p40 = por %p38, %p39
    %p42 = scmp.ne.s32.totalorder %s25, %s41
    %p43 = scmp.eq.s32.totalorder %s17, 0
    %p44 = por %p42, %p43
    %s46 = sadd.s32 %s45, 1
    %p49 = scmp.eq.s32.totalorder %s11, 1
    %p50 = scmp.ne.s32.totalorder %s45, %s47
    %p51 = scmp.eq.s32.totalorder %s11, 0
    %p52 = por %p50, %p51
    %p53 = scmp.ne.s32.totalorder %s45, %s47
    %p54 = scmp.eq.s32.totalorder %s16, 1
    %p55 = por %p53, %p54
    %p56 = scmp.ne.s32.totalorder %s47, %s48
    %p57 = scmp.eq.s32.totalorder %s16, 0
    %p58 = por %p56, %p57
    %p59 = scmp.ne.s32.totalorder %s47, %s48
    %p60 = scmp.eq.s32.totalorder %s17, 1
    %p61 = por %p59, %p60
    %p63 = scmp.ne.s32.totalorder %s48, %s62
    %p64 = scmp.eq.s32.totalorder %s17, 0
    %p65 = por %p63, %p64
    %s67 = sadd.s32 %s66, 1
    %p70 = scmp.eq.s32.totalorder %s11, 1
    %p71 = scmp.ne.s32.totalorder %s66, %s68
    %p72 = scmp.eq.s32.totalorder %s11, 0
    %p73 = por %p71, %p72
    %p74 = scmp.ne.s32.totalorder %s66, %s68
    %p75 = scmp.eq.s32.totalorder %s16, 1
    %p76 = por %p74, %p75
    %p77 = scmp.ne.s32.totalorder %s68, %s69
    %p78 = scmp.eq.s32.totalorder %s16, 0
    %p79 = por %p77, %p78
    %p80 = scmp.ne.s32.totalorder %s68, %s69
    %p81 = scmp.eq.s32.totalorder %s17, 1
    %p82 = por %p80, %p81
    %p84 = scmp.ne.s32.totalorder %s69, %s83
    %p85 = scmp.eq.s32.totalorder %s17, 0
    %p86 = por %p84, %p85
    %s88 = sadd.s32 %s87, 1
    %p91 = scmp.eq.s32.totalorder %s11, 1
    %p92 = scmp.ne.s32.totalorder %s87, %s89
    %p93 = scmp.eq.s32.totalorder %s11, 0
    %p94 = por %p92, %p93
    %p95 = scmp.ne.s32.totalorder %s87, %s89
    %p96 = scmp.eq.s32.totalorder %s16, 1
    %p97 = por %p95, %p96
    %p98 = scmp.ne.s32.totalorder %s89, %s90
    %p99 = scmp.eq.s32.totalorder %s16, 0
    %p100 = por %p98, %p99
    %p101 = scmp.ne.s32.totalorder %s89, %s90
    %p102 = scmp.eq.s32.totalorder %s17, 1
    %p103 = por %p101, %p102
    %p105 = scmp.ne.s32.totalorder %s90, %s104
    %p106 = scmp.eq.s32.totalorder %s17, 0
    %p107 = por %p105, %p106
    %s109 = sadd.s32 %s108, 1
    %p112 = scmp.eq.s32.totalorder %s11, 1
    %p113 = scmp.ne.s32.totalorder %s108, %s110
    %p114 = scmp.eq.s32.totalorder %s11, 0
    %p115 = por %p113, %p114
    %p116 = scmp.ne.s32.totalorder %s108, %s110
    %p117 = scmp.eq.s32.totalorder %s16, 1
    %p118 = por %p116, %p117
    %p119 = scmp.ne.s32.totalorder %s110, %s111
    %p120 = scmp.eq.s32.totalorder %s16, 0
    %p121 = por %p119, %p120
    %p122 = scmp.ne.s32.totalorder %s110, %s111
    %p123 = scmp.eq.s32.totalorder %s17, 1
    %p124 = por %p122, %p123
    %p126 = scmp.ne.s32.totalorder %s111, %s125
    %p127 = scmp.eq.s32.totalorder %s17, 0
    %p128 = por %p126, %p127
    %s129 = ssub.s32 %s11, %s18
    %p130 = scmp.eq.s32.totalorder %s129, 0
    %s132 = sadd.s32 %s131, 1
    %s133 = scalar_select %p130, %s131, %s132
    %p136 = pneg %p130
    %p137 = scmp.eq.s32.totalorder %s11, 1
    %p138 = por %p136, %p137
    %p139 = scmp.ne.s32.totalorder %s131, %s134
    %p140 = scmp.eq.s32.totalorder %s11, 0
    %p141 = por %p139, %p140
    %p142 = scmp.ne.s32.totalorder %s131, %s134
    %p143 = scmp.eq.s32.totalorder %s16, 1
    %p144 = por %p142, %p143
    %p145 = scmp.ne.s32.totalorder %s134, %s135
    %p146 = scmp.eq.s32.totalorder %s16, 0
    %p147 = por %p145, %p146
    %p148 = scmp.ne.s32.totalorder %s134, %s135
    %p149 = scmp.eq.s32.totalorder %s17, 1
    %p150 = por %p148, %p149
    %p152 = scmp.ne.s32.totalorder %s135, %s151
    %p153 = scmp.eq.s32.totalorder %s17, 0
    %p154 = por %p152, %p153
    %p155 = scmp.le.s32.totalorder 1, %s11
    %p156 = scmp.lt.s32.totalorder %s11, 3
    %p157 = pnand %p155, %p156
    %p158 = pneg %p157
    // Predicated region
    $region9: #{block_forward.1} parent=5 // pred_check
      _
    $region10: #{block_forward.1} parent=5 // pred_check_branch
      %160 = sbr.rel (%p157) target = $region12
    $region11: #{block_forward.1} parent=5 // pred_region
      %s161 = ssub.s32 %s11, 1
      // Predicated region
      $region13: #{block_forward.1} parent=11 // pred_check
        %p162 = pneg %p58
      $region14: #{block_forward.1} parent=11 // pred_check_branch
        %164 = sbr.rel (%p162) target = $region16
      $region15: #{block_forward.1} parent=11 // pred_region
        _
      $region16: #{block_forward.1} parent=11 // pred_fallthru
        _
      // Predicated region
      $region17: #{block_forward.1} parent=11 // pred_check
        %p165 = pneg %p79
      $region18: #{block_forward.1} parent=11 // pred_check_branch
        %167 = sbr.rel (%p165) target = $region20
      $region19: #{block_forward.1} parent=11 // pred_region
        _
      $region20: #{block_forward.1} parent=11 // pred_fallthru
        _
      // Predicated region
      $region21: #{block_forward.1} parent=11 // pred_check
        %p168 = pneg %p100
      $region22: #{block_forward.1} parent=11 // pred_check_branch
        %170 = sbr.rel (%p168) target = $region24
      $region23: #{block_forward.1} parent=11 // pred_region
        _
      $region24: #{block_forward.1} parent=11 // pred_fallthru
        _
      // Predicated region
      $region25: #{block_forward.1} parent=11 // pred_check
        %p171 = pneg %p121
      $region26: #{block_forward.1} parent=11 // pred_check_branch
        %173 = sbr.rel (%p171) target = $region28
      $region27: #{block_forward.1} parent=11 // pred_region
        _
      $region28: #{block_forward.1} parent=11 // pred_fallthru
        _
    $region12: #{block_forward.1} parent=5 // pred_fallthru
      _
    %p174 = scmp.lt.s32.totalorder %s11, 2
    // Predicated region
    $region29: #{block_forward.1} parent=5 // pred_check
      %p175 = pneg %p174
    $region30: #{block_forward.1} parent=5 // pred_check_branch
      %177 = sbr.rel (%p175) target = $region32
    $region31: #{block_forward.1} parent=5 // pred_region
      // Predicated region
      $region33: #{block_forward.1} parent=31 // pred_check
        %p178 = pneg %p31
      $region34: #{block_forward.1} parent=31 // pred_check_branch
        %180 = sbr.rel (%p178) target = $region36
      $region35: #{block_forward.1} parent=31 // pred_region
        %p181 = scmp.lt.s32.totalorder %s11, 1
        %s182 = scalar_select %p181, %s11, 1
        %s183 = smul.addr %s182, 32
        %s184 = smul.addr %s183, 8
        %s185 = scalar_lea.vmem %s0, %s184
      $region36: #{block_forward.1} parent=31 // pred_fallthru
        _
    $region32: #{block_forward.1} parent=5 // pred_fallthru
      _
    %p186 = scmp.le.s32.totalorder 1, %s11
    %p187 = scmp.lt.s32.totalorder %s11, 3
    %p188 = pnand %p186, %p187
    %p189 = pneg %p188
    // Predicated region
    $region37: #{block_forward.1} parent=5 // pred_check
      _
    $region38: #{block_forward.1} parent=5 // pred_check_branch
      %191 = sbr.rel (%p188) target = $region40
    $region39: #{block_forward.1} parent=5 // pred_region
      %s192 = ssub.s32 %s11, 1
      %p193 = scmp.lt.s32.totalorder %s16, 1
      %s194 = scalar_select %p193, %s16, 1
      %s195 = smul.addr %s194, 32
      %s196 = smul.addr %s195, 8
      %s197 = scalar_lea.vmem %s0, %s196
      %p198 = pneg %p37
      %p199 = pneg %p34
      %p200 = pneg %p58
      %p201 = pneg %p55
      %p202 = pneg %p79
      %p203 = pneg %p76
      %p204 = pneg %p100
      %p205 = pneg %p97
      %p206 = pneg %p121
      %p207 = pneg %p118
      %p208 = pneg %p147
      %p209 = pneg %p144
      %p210 = scmp.lt.s32.totalorder %s16, 1
      %s211 = scalar_select %p210, %s16, 1
      %s212 = smul.addr %s211, 18
      %s213 = smul.addr %s212, 8
      %s214 = scalar_lea.vmem %s5, %s213
      %p215 = scmp.lt.s32.totalorder %s16, 1
      %s216 = scalar_select %p215, %s16, 1
      %s217 = smul.addr %s216, 32
      %s218 = smul.addr %s217, 8
      %s219 = scalar_lea.vmem %s0, %s218
      %p220 = scmp.lt.s32.totalorder %s16, 1
      %s221 = scalar_select %p220, %s16, 1
      %s222 = smul.addr %s221, 18
      %s223 = smul.addr %s222, 8
      %s224 = scalar_lea.vmem %s5, %s223
      %v225 = vld [vmem:[%s219] sm:$0xff]
      %v226 = vld [vmem:[%s219 + $0x8] sm:$0x3f]
      %v227 = vld [vmem:[%s219 + $0x10] sm:$0xff]
      %v228 = vld [vmem:[%s219 + $0x18] sm:$0x3f]
      %v229 = vld [vmem:[%s219 + $0x20] sm:$0xff]
      %v230 = vld [vmem:[%s219 + $0x28] sm:$0x3f]
      %v231 = vld [vmem:[%s219 + $0x30] sm:$0xff]
      %v232 = vld [vmem:[%s219 + $0x38] sm:$0x3f]
      %v233 = vld [vmem:[%s219 + $0x40] sm:$0xff]
      %v234 = vld [vmem:[%s219 + $0x48] sm:$0x3f]
      %v235 = vld [vmem:[%s219 + $0x50] sm:$0xff]
      %v236 = vld [vmem:[%s219 + $0x58] sm:$0x3f]
      %v237 = vld [vmem:[%s219 + $0x60] sm:$0xff]
      %v238 = vld [vmem:[%s219 + $0x68] sm:$0x3f]
      %v239 = vld [vmem:[%s219 + $0x70] sm:$0xff]
      %v240 = vld [vmem:[%s219 + $0x78] sm:$0x3f]
      %v241 = vld [vmem:[%s219 + $0x80] sm:$0xff]
      %v242 = vld [vmem:[%s219 + $0x88] sm:$0x3f]
      %v243 = vld [vmem:[%s219 + $0x90] sm:$0xff]
      %v244 = vld [vmem:[%s219 + $0x98] sm:$0x3f]
      %v245 = vld [vmem:[%s219 + $0xa0] sm:$0xff]
      %v246 = vld [vmem:[%s219 + $0xa8] sm:$0x3f]
      %v247 = vld [vmem:[%s219 + $0xb0] sm:$0xff]
      %v248 = vld [vmem:[%s219 + $0xb8] sm:$0x3f]
      %v249 = vld [vmem:[%s219 + $0xc0] sm:$0xff]
      %v250 = vld [vmem:[%s219 + $0xc8] sm:$0x3f]
      %v251 = vld [vmem:[%s219 + $0xd0] sm:$0xff]
      %v252 = vld [vmem:[%s219 + $0xd8] sm:$0x3f]
      %v281 = vrot.slane %v225, 2
      %v282 = vrot.slane %v225, 4
      %v283 = vrot.slane %v225, 6
      %v284 = vrot.slane %v226, 2
      %v285 = vrot.slane %v226, 4
      %v286 = vrot.slane %v227, 2
      %v287 = vrot.slane %v227, 4
      %v288 = vrot.slane %v227, 6
      %v289 = vrot.slane %v228, 2
      %v290 = vrot.slane %v228, 4
      %v291 = vrot.slane %v229, 2
      %v292 = vrot.slane %v229, 4
      %v293 = vrot.slane %v229, 6
      %v294 = vrot.slane %v230, 2
      %v295 = vrot.slane %v230, 4
      %v296 = vrot.slane %v231, 2
      %v297 = vrot.slane %v231, 4
      %v298 = vrot.slane %v231, 6
      %v299 = vrot.slane %v232, 2
      %v300 = vrot.slane %v232, 4
      %v301 = vrot.slane %v233, 2
      %v302 = vrot.slane %v233, 4
      %v303 = vrot.slane %v233, 6
      %v304 = vrot.slane %v234, 2
      %v305 = vrot.slane %v234, 4
      %v306 = vrot.slane %v235, 2
      %v307 = vrot.slane %v235, 4
      %v308 = vrot.slane %v235, 6
      %v309 = vrot.slane %v236, 2
      %v310 = vrot.slane %v236, 4
      %v311 = vrot.slane %v237, 2
      %v312 = vrot.slane %v237, 4
      %v313 = vrot.slane %v237, 6
      %v314 = vrot.slane %v238, 2
      %v315 = vrot.slane %v238, 4
      %v316 = vrot.slane %v239, 2
      %v317 = vrot.slane %v239, 4
      %v318 = vrot.slane %v239, 6
      %v319 = vrot.slane %v240, 2
      %v320 = vrot.slane %v240, 4
      %v321 = vrot.slane %v241, 2
      %v322 = vrot.slane %v241, 4
      %v323 = vrot.slane %v241, 6
      %v324 = vrot.slane %v242, 2
      %v325 = vrot.slane %v242, 4
      %v326 = vrot.slane %v243, 2
      %v327 = vrot.slane %v243, 4
      %v328 = vrot.slane %v243, 6
      %v329 = vrot.slane %v244, 2
      %v330 = vrot.slane %v244, 4
      %v331 = vrot.slane %v245, 2
      %v332 = vrot.slane %v245, 4
      %v333 = vrot.slane %v245, 6
      %v334 = vrot.slane %v246, 2
      %v335 = vrot.slane %v246, 4
      %v336 = vrot.slane %v247, 2
      %v337 = vrot.slane %v247, 4
      %v338 = vrot.slane %v247, 6
      %v339 = vrot.slane %v248, 2
      %v340 = vrot.slane %v248, 4
      %v341 = vrot.slane %v249, 2
      %v342 = vrot.slane %v249, 4
      %v343 = vrot.slane %v249, 6
      %v344 = vrot.slane %v250, 2
      %v345 = vrot.slane %v250, 4
      %v346 = vrot.slane %v251, 2
      %v347 = vrot.slane %v251, 4
      %v348 = vrot.slane %v251, 6
      %v349 = vrot.slane %v252, 2
      %v350 = vrot.slane %v252, 4
      %v351 = vld [vmem:[%s1] sm:$0xf]
      %v352 = vld [vmem:[%s219 + $0x1] sm:$0xff]
      %v353 = vld [vmem:[%s219 + $0x9] sm:$0x3f]
      %v354 = vld [vmem:[%s219 + $0x11] sm:$0xff]
      %v355 = vld [vmem:[%s219 + $0x19] sm:$0x3f]
      %v356 = vld [vmem:[%s219 + $0x21] sm:$0xff]
      %v357 = vld [vmem:[%s219 + $0x29] sm:$0x3f]
      %v358 = vld [vmem:[%s219 + $0x31] sm:$0xff]
      %v359 = vld [vmem:[%s219 + $0x39] sm:$0x3f]
      %v360 = vld [vmem:[%s219 + $0x41] sm:$0xff]
      %v361 = vld [vmem:[%s219 + $0x49] sm:$0x3f]
      %v362 = vld [vmem:[%s219 + $0x51] sm:$0xff]
      %v363 = vld [vmem:[%s219 + $0x59] sm:$0x3f]
      %v364 = vld [vmem:[%s219 + $0x61] sm:$0xff]
      %v365 = vld [vmem:[%s219 + $0x69] sm:$0x3f]
      %v366 = vld [vmem:[%s219 + $0x71] sm:$0xff]
      %v367 = vld [vmem:[%s219 + $0x79] sm:$0x3f]
      %v368 = vld [vmem:[%s219 + $0x81] sm:$0xff]
      %v369 = vld [vmem:[%s219 + $0x89] sm:$0x3f]
      %v370 = vld [vmem:[%s219 + $0x91] sm:$0xff]
      %v371 = vld [vmem:[%s219 + $0x99] sm:$0x3f]
      %v372 = vld [vmem:[%s219 + $0xa1] sm:$0xff]
      %v373 = vld [vmem:[%s219 + $0xa9] sm:$0x3f]
      %v374 = vld [vmem:[%s219 + $0xb1] sm:$0xff]
      %v375 = vld [vmem:[%s219 + $0xb9] sm:$0x3f]
      %v376 = vld [vmem:[%s219 + $0xc1] sm:$0xff]
      %v377 = vld [vmem:[%s219 + $0xc9] sm:$0x3f]
      %v378 = vld [vmem:[%s219 + $0xd1] sm:$0xff]
      %v379 = vld [vmem:[%s219 + $0xd9] sm:$0x3f]
      %v408 = vrot.slane %v352, 2
      %v409 = vrot.slane %v352, 4
      %v410 = vrot.slane %v352, 6
      %v411 = vrot.slane %v353, 2
      %v412 = vrot.slane %v353, 4
      %v413 = vrot.slane %v354, 2
      %v414 = vrot.slane %v354, 4
      %v415 = vrot.slane %v354, 6
      %v416 = vrot.slane %v355, 2
      %v417 = vrot.slane %v355, 4
      %v418 = vrot.slane %v356, 2
      %v419 = vrot.slane %v356, 4
      %v420 = vrot.slane %v356, 6
      %v421 = vrot.slane %v357, 2
      %v422 = vrot.slane %v357, 4
      %v423 = vrot.slane %v358, 2
      %v424 = vrot.slane %v358, 4
      %v425 = vrot.slane %v358, 6
      %v426 = vrot.slane %v359, 2
      %v427 = vrot.slane %v359, 4
      %v428 = vrot.slane %v360, 2
      %v429 = vrot.slane %v360, 4
      %v430 = vrot.slane %v360, 6
      %v431 = vrot.slane %v361, 2
      %v432 = vrot.slane %v361, 4
      %v433 = vrot.slane %v362, 2
      %v434 = vrot.slane %v362, 4
      %v435 = vrot.slane %v362, 6
      %v436 = vrot.slane %v363, 2
      %v437 = vrot.slane %v363, 4
      %v438 = vrot.slane %v364, 2
      %v439 = vrot.slane %v364, 4
      %v440 = vrot.slane %v364, 6
      %v441 = vrot.slane %v365, 2
      %v442 = vrot.slane %v365, 4
      %v443 = vrot.slane %v366, 2
      %v444 = vrot.slane %v366, 4
      %v445 = vrot.slane %v366, 6
      %v446 = vrot.slane %v367, 2
      %v447 = vrot.slane %v367, 4
      %v448 = vrot.slane %v368, 2
      %v449 = vrot.slane %v368, 4
      %v450 = vrot.slane %v368, 6
      %v451 = vrot.slane %v369, 2
      %v452 = vrot.slane %v369, 4
      %v453 = vrot.slane %v370, 2
      %v454 = vrot.slane %v370, 4
      %v455 = vrot.slane %v370, 6
      %v456 = vrot.slane %v371, 2
      %v457 = vrot.slane %v371, 4
      %v458 = vrot.slane %v372, 2
      %v459 = vrot.slane %v372, 4
      %v460 = vrot.slane %v372, 6
      %v461 = vrot.slane %v373, 2
      %v462 = vrot.slane %v373, 4
      %v463 = vrot.slane %v374, 2
      %v464 = vrot.slane %v374, 4
      %v465 = vrot.slane %v374, 6
      %v466 = vrot.slane %v375, 2
      %v467 = vrot.slane %v375, 4
      %v468 = vrot.slane %v376, 2
      %v469 = vrot.slane %v376, 4
      %v470 = vrot.slane %v376, 6
      %v471 = vrot.slane %v377, 2
      %v472 = vrot.slane %v377, 4
      %v473 = vrot.slane %v378, 2
      %v474 = vrot.slane %v378, 4
      %v475 = vrot.slane %v378, 6
      %v476 = vrot.slane %v379, 2
      %v477 = vrot.slane %v379, 4
      %v478 = vld [vmem:[%s1 + $0x4] sm:$0xf]
      %479 = vst [vmem:[#allocation1] ss:$4 sm:$0xff] %v352
      %s480 = scalar_lea.vmem [#allocation1], 1
      %481 = vst [vmem:[%s480] ss:$4 sm:$0xff] %v408
      %s482 = scalar_lea.vmem [#allocation1], 2
      %483 = vst [vmem:[%s482] ss:$4 sm:$0xff] %v409
      %s484 = scalar_lea.vmem [#allocation1], 3
      %485 = vst [vmem:[%s484] ss:$4 sm:$0xff] %v410
      %s486 = scalar_lea.vmem [#allocation1], 32
      %487 = vst [vmem:[%s486] ss:$4 sm:$0xff] %v353
      %s488 = scalar_lea.vmem [#allocation1], 33
      %489 = vst [vmem:[%s488] ss:$4 sm:$0xff] %v411
      %s490 = scalar_lea.vmem [#allocation1], 34
      %491 = vst [vmem:[%s490] ss:$4 sm:$0xff] %v412
      %s492 = scalar_lea.vmem [#allocation1], 35
      %493 = vst [vmem:[%s492] ss:$4 sm:$0xff] %v354
      %v494 = vld.sshfl [vmem:[#allocation1] sm:$0xff pattern:$0x73625140]
      %v495 = vld.sshfl [vmem:[#allocation1 + $0x20] sm:$0xff pattern:$0x73625140]
      %496 = vst [vmem:[#allocation1] ss:$4 sm:$0xff] %v413
      %497 = vst [vmem:[%s480] ss:$4 sm:$0xff] %v414
      %498 = vst [vmem:[%s482] ss:$4 sm:$0xff] %v415
      %499 = vst [vmem:[%s484] ss:$4 sm:$0xff] %v355
      %500 = vst [vmem:[%s486] ss:$4 sm:$0xff] %v416
      %501 = vst [vmem:[%s488] ss:$4 sm:$0xff] %v417
      %502 = vst [vmem:[%s490] ss:$4 sm:$0xff] %v356
      %503 = vst [vmem:[%s492] ss:$4 sm:$0xff] %v418
      %v504 = vld.sshfl [vmem:[#allocation1] sm:$0xff pattern:$0x73625140]
      %v505 = vld.sshfl [vmem:[#allocation1 + $0x20] sm:$0xff pattern:$0x73625140]
      %506 = vst [vmem:[#allocation1] ss:$4 sm:$0xff] %v419
      %507 = vst [vmem:[%s480] ss:$4 sm:$0xff] %v420
      %508 = vst [vmem:[%s482] ss:$4 sm:$0xff] %v357
      %509 = vst [vmem:[%s484] ss:$4 sm:$0xff] %v421
      %510 = vst [vmem:[%s486] ss:$4 sm:$0xff] %v422
      %511 = vst [vmem:[%s488] ss:$4 sm:$0xff] %v358
      %512 = vst [vmem:[%s490] ss:$4 sm:$0xff] %v423
      %513 = vst [vmem:[%s492] ss:$4 sm:$0xff] %v424
      %v514 = vld.sshfl [vmem:[#allocation1] sm:$0xff pattern:$0x73625140]
      %v515 = vld.sshfl [vmem:[#allocation1 + $0x20] sm:$0xff pattern:$0x73625140]
      %516 = vst [vmem:[#allocation1] ss:$4 sm:$0xff] %v425
      %517 = vst [vmem:[%s480] ss:$4 sm:$0xff] %v359
      %518 = vst [vmem:[%s482] ss:$4 sm:$0xff] %v426
      %519 = vst [vmem:[%s484] ss:$4 sm:$0xff] %v427
      %520 = vst [vmem:[%s486] ss:$4 sm:$0xff] %v360
      %521 = vst [vmem:[%s488] ss:$4 sm:$0xff] %v428
      %522 = vst [vmem:[%s490] ss:$4 sm:$0xff] %v429
      %523 = vst [vmem:[%s492] ss:$4 sm:$0xff] %v430
      %v524 = vld.sshfl [vmem:[#allocation1] sm:$0xff pattern:$0x73625140]
      %v525 = vld.sshfl [vmem:[#allocation1 + $0x20] sm:$0xff pattern:$0x73625140]
      %526 = vst [vmem:[#allocation1] ss:$4 sm:$0xff] %v361
      %527 = vst [vmem:[%s480] ss:$4 sm:$0xff] %v431
      %528 = vst [vmem:[%s482] ss:$4 sm:$0xff] %v432
      %529 = vst [vmem:[%s484] ss:$4 sm:$0xff] %v362
      %530 = vst [vmem:[%s486] ss:$4 sm:$0xff] %v433
      %531 = vst [vmem:[%s488] ss:$4 sm:$0xff] %v434
      %532 = vst [vmem:[%s490] ss:$4 sm:$0xff] %v435
      %533 = vst [vmem:[%s492] ss:$4 sm:$0xff] %v363
      %v534 = vld.sshfl [vmem:[#allocation1] sm:$0xff pattern:$0x73625140]
      %v535 = vld.sshfl [vmem:[#allocation1 + $0x20] sm:$0xff pattern:$0x73625140]
      %536 = vst [vmem:[#allocation1] ss:$4 sm:$0xff] %v436
      %537 = vst [vmem:[%s480] ss:$4 sm:$0xff] %v437
      %538 = vst [vmem:[%s482] ss:$4 sm:$0xff] %v364
      %539 = vst [vmem:[%s484] ss:$4 sm:$0xff] %v438
      %540 = vst [vmem:[%s486] ss:$4 sm:$0xff] %v439
      %541 = vst [vmem:[%s488] ss:$4 sm:$0xff] %v440
      %542 = vst [vmem:[%s490] ss:$4 sm:$0xff] %v365
      %543 = vst [vmem:[%s492] ss:$4 sm:$0xff] %v441
      %v544 = vld.sshfl [vmem:[#allocation1] sm:$0xff pattern:$0x73625140]
      %v545 = vld.sshfl [vmem:[#allocation1 + $0x20] sm:$0xff pattern:$0x73625140]
      %546 = vst [vmem:[#allocation1] ss:$4 sm:$0xff] %v442
      %547 = vst [vmem:[%s480] ss:$4 sm:$0xff] %v366
      %548 = vst [vmem:[%s482] ss:$4 sm:$0xff] %v443
      %549 = vst [vmem:[%s484] ss:$4 sm:$0xff] %v444
      %550 = vst [vmem:[%s486] ss:$4 sm:$0xff] %v445
      %551 = vst [vmem:[%s488] ss:$4 sm:$0xff] %v367
      %552 = vst [vmem:[%s490] ss:$4 sm:$0xff] %v446
      %553 = vst [vmem:[%s492] ss:$4 sm:$0xff] %v447
      %v554 = vld.sshfl [vmem:[#allocation1] sm:$0xff pattern:$0x73625140]
      %v555 = vld.sshfl [vmem:[#allocation1 + $0x20] sm:$0xff pattern:$0x73625140]
      %556 = vst [vmem:[#allocation1] ss:$4 sm:$0xff] %v368
      %557 = vst [vmem:[%s480] ss:$4 sm:$0xff] %v448
      %558 = vst [vmem:[%s482] ss:$4 sm:$0xff] %v449
      %559 = vst [vmem:[%s484] ss:$4 sm:$0xff] %v450
      %560 = vst [vmem:[%s486] ss:$4 sm:$0xff] %v369
      %561 = vst [vmem:[%s488] ss:$4 sm:$0xff] %v451
      %562 = vst [vmem:[%s490] ss:$4 sm:$0xff] %v452
      %563 = vst [vmem:[%s492] ss:$4 sm:$0xff] %v370
      %v564 = vld.sshfl [vmem:[#allocation1] sm:$0xff pattern:$0x73625140]
      %v565 = vld.sshfl [vmem:[#allocation1 + $0x20] sm:$0xff pattern:$0x73625140]
      %566 = vst [vmem:[#allocation1] ss:$4 sm:$0xff] %v453
      %567 = vst [vmem:[%s480] ss:$4 sm:$0xff] %v454
      %568 = vst [vmem:[%s482] ss:$4 sm:$0xff] %v455
      %569 = vst [vmem:[%s484] ss:$4 sm:$0xff] %v371
      %570 = vst [vmem:[%s486] ss:$4 sm:$0xff] %v456
      %571 = vst [vmem:[%s488] ss:$4 sm:$0xff] %v457
      %572 = vst [vmem:[%s490] ss:$4 sm:$0xff] %v372
      %573 = vst [vmem:[%s492] ss:$4 sm:$0xff] %v458
      %v574 = vld.sshfl [vmem:[#allocation1] sm:$0xff pattern:$0x73625140]
      %v575 = vld.sshfl [vmem:[#allocation1 + $0x20] sm:$0xff pattern:$0x73625140]
      %576 = vst [vmem:[#allocation1] ss:$4 sm:$0xff] %v459
      %577 = vst [vmem:[%s480] ss:$4 sm:$0xff] %v460
      %578 = vst [vmem:[%s482] ss:$4 sm:$0xff] %v373
      %579 = vst [vmem:[%s484] ss:$4 sm:$0xff] %v461
      %580 = vst [vmem:[%s486] ss:$4 sm:$0xff] %v462
      %581 = vst [vmem:[%s488] ss:$4 sm:$0xff] %v374
      %582 = vst [vmem:[%s490] ss:$4 sm:$0xff] %v463
      %583 = vst [vmem:[%s492] ss:$4 sm:$0xff] %v464
      %v584 = vld.sshfl [vmem:[#allocation1] sm:$0xff pattern:$0x73625140]
      %v585 = vld.sshfl [vmem:[#allocation1 + $0x20] sm:$0xff pattern:$0x73625140]
      %586 = vst [vmem:[#allocation1] ss:$4 sm:$0xff] %v465
      %587 = vst [vmem:[%s480] ss:$4 sm:$0xff] %v375
      %588 = vst [vmem:[%s482] ss:$4 sm:$0xff] %v466
      %589 = vst [vmem:[%s484] ss:$4 sm:$0xff] %v467
      %590 = vst [vmem:[%s486] ss:$4 sm:$0xff] %v376
      %591 = vst [vmem:[%s488] ss:$4 sm:$0xff] %v468
      %592 = vst [vmem:[%s490] ss:$4 sm:$0xff] %v469
      %593 = vst [vmem:[%s492] ss:$4 sm:$0xff] %v470
      %v594 = vld.sshfl [vmem:[#allocation1] sm:$0xff pattern:$0x73625140]
      %v595 = vld.sshfl [vmem:[#allocation1 + $0x20] sm:$0xff pattern:$0x73625140]
      %596 = vst [vmem:[#allocation1] ss:$4 sm:$0xff] %v377
      %597 = vst [vmem:[%s480] ss:$4 sm:$0xff] %v471
      %598 = vst [vmem:[%s482] ss:$4 sm:$0xff] %v472
      %599 = vst [vmem:[%s484] ss:$4 sm:$0xff] %v378
      %600 = vst [vmem:[%s486] ss:$4 sm:$0xff] %v473
      %601 = vst [vmem:[%s488] ss:$4 sm:$0xff] %v474
      %602 = vst [vmem:[%s490] ss:$4 sm:$0xff] %v475
      %603 = vst [vmem:[%s492] ss:$4 sm:$0xff] %v379
      %v604 = vld.sshfl [vmem:[#allocation1] sm:$0xff pattern:$0x73625140]
      %v605 = vld.sshfl [vmem:[#allocation1 + $0x20] sm:$0xff pattern:$0x73625140]
      %606 = vst [vmem:[#allocation1] ss:$4 sm:$0xff] %v476
      %607 = vst [vmem:[%s480] ss:$4 sm:$0xff] %v477
      %v608 = vld.sshfl [vmem:[#allocation1] sm:$0xff pattern:$0x73625140]
      %vm609 = vcmask 31744
      %v610 = vsel %vm609, %v494, 0
      %v612 = vsel %vm609, %v495, 0
      %v614 = vsel %vm609, %v504, 0
      %v616 = vsel %vm609, %v505, 0
      %v618 = vsel %vm609, %v514, 0
      %v620 = vsel %vm609, %v515, 0
      %v622 = vsel %vm609, %v524, 0
      %v624 = vsel %vm609, %v525, 0
      %v626 = vsel %vm609, %v534, 0
      %v628 = vsel %vm609, %v535, 0
      %v630 = vsel %vm609, %v544, 0
      %v632 = vsel %vm609, %v545, 0
      %v634 = vsel %vm609, %v554, 0
      %v636 = vsel %vm609, %v555, 0
      %v638 = vsel %vm609, %v564, 0
      %v640 = vsel %vm609, %v565, 0
      %v642 = vsel %vm609, %v574, 0
      %v644 = vsel %vm609, %v575, 0
      %v646 = vsel %vm609, %v584, 0
      %v648 = vsel %vm609, %v585, 0
      %v650 = vsel %vm609, %v594, 0
      %v652 = vsel %vm609, %v595, 0
      %v654 = vsel %vm609, %v604, 0
      %v656 = vsel %vm609, %v605, 0
      %v658 = vsel %vm609, %v608, 0
      %vm660 = vcmask 1043456
      %v662 = vsel %vm660, %v478, 0
      %664 = vmatpush.msra.mxu0 0.0
      %665 = vmatpush.msra.mxu0 0.0
      %666 = vmatpush.msra.mxu0 0.0
      %667 = vmatpush.msra.mxu0 0.0
      %668 = vmatpush.msra.mxu0 0.0
      %669 = vmatpush.msra.mxu0 0.0
      %670 = vmatpush.msra.mxu0 0.0
      %671 = vmatpush.msra.mxu0 0.0
      %672 = vmatpush.msra.mxu0 0.0
      %673 = vmatpush.msra.mxu0 0.0
      %674 = vmatpush.msra.mxu0 0.0
      %675 = vmatpush.msra.mxu0 0.0
      %676 = vmatpush.msra.mxu0 0.0
      %677 = vmatpush.msra.mxu0 0.0
      %678 = vmatpush.msra.mxu0 0.0
      %679 = vmatpush.msra.mxu0 %v662
      %680 = vmatmul.f32.gmra.mxu0 %v610
      %v681 = vpop.f32.mrf.mxu0
      %v682 = vadd.f32 0.0, %v681
      %683 = vmatmul.f32.gmra.mxu0 %v612
      %v684 = vpop.f32.mrf.mxu0
      %v685 = vadd.f32 0.0, %v684
      %686 = vmatmul.f32.gmra.mxu0 %v614
      %v687 = vpop.f32.mrf.mxu0
      %v688 = vadd.f32 0.0, %v687
      %689 = vmatmul.f32.gmra.mxu0 %v616
      %v690 = vpop.f32.mrf.mxu0
      %v691 = vadd.f32 0.0, %v690
      %692 = vmatmul.f32.gmra.mxu0 %v618
      %v693 = vpop.f32.mrf.mxu0
      %v694 = vadd.f32 0.0, %v693
      %695 = vmatmul.f32.gmra.mxu0 %v620
      %v696 = vpop.f32.mrf.mxu0
      %v697 = vadd.f32 0.0, %v696
      %698 = vmatmul.f32.gmra.mxu0 %v622
      %v699 = vpop.f32.mrf.mxu0
      %v700 = vadd.f32 0.0, %v699
      %701 = vmatmul.f32.gmra.mxu0 %v624
      %v702 = vpop.f32.mrf.mxu0
      %v703 = vadd.f32 0.0, %v702
      %704 = vmatmul.f32.gmra.mxu0 %v626
      %v705 = vpop.f32.mrf.mxu0
      %v706 = vadd.f32 0.0, %v705
      %707 = vmatmul.f32.gmra.mxu0 %v628
      %v708 = vpop.f32.mrf.mxu0
      %v709 = vadd.f32 0.0, %v708
      %710 = vmatmul.f32.gmra.mxu0 %v630
      %v711 = vpop.f32.mrf.mxu0
      %v712 = vadd.f32 0.0, %v711
      %713 = vmatmul.f32.gmra.mxu0 %v632
      %v714 = vpop.f32.mrf.mxu0
      %v715 = vadd.f32 0.0, %v714
      %716 = vmatmul.f32.gmra.mxu0 %v634
      %v717 = vpop.f32.mrf.mxu0
      %v718 = vadd.f32 0.0, %v717
      %719 = vmatmul.f32.gmra.mxu0 %v636
      %v720 = vpop.f32.mrf.mxu0
      %v721 = vadd.f32 0.0, %v720
      %722 = vmatmul.f32.gmra.mxu0 %v638
      %v723 = vpop.f32.mrf.mxu0
      %v724 = vadd.f32 0.0, %v723
      %725 = vmatmul.f32.gmra.mxu0 %v640
      %v726 = vpop.f32.mrf.mxu0
      %v727 = vadd.f32 0.0, %v726
      %728 = vmatmul.f32.gmra.mxu0 %v642
      %v729 = vpop.f32.mrf.mxu0
      %v730 = vadd.f32 0.0, %v729
      %731 = vmatmul.f32.gmra.mxu0 %v644
      %v732 = vpop.f32.mrf.mxu0
      %v733 = vadd.f32 0.0, %v732
      %734 = vmatmul.f32.gmra.mxu0 %v646
      %v735 = vpop.f32.mrf.mxu0
      %v736 = vadd.f32 0.0, %v735
      %737 = vmatmul.f32.gmra.mxu0 %v648
      %v738 = vpop.f32.mrf.mxu0
      %v739 = vadd.f32 0.0, %v738
      %740 = vmatmul.f32.gmra.mxu0 %v650
      %v741 = vpop.f32.mrf.mxu0
      %v742 = vadd.f32 0.0, %v741
      %743 = vmatmul.f32.gmra.mxu0 %v652
      %v744 = vpop.f32.mrf.mxu0
      %v745 = vadd.f32 0.0, %v744
      %746 = vmatmul.f32.gmra.mxu0 %v654
      %v747 = vpop.f32.mrf.mxu0
      %v748 = vadd.f32 0.0, %v747
      %749 = vmatmul.f32.gmra.mxu0 %v656
      %v750 = vpop.f32.mrf.mxu0
      %v751 = vadd.f32 0.0, %v750
      %752 = vmatmul.f32.gmra.mxu0 %v658
      %v753 = vpop.f32.mrf.mxu0
      %v754 = vadd.f32 0.0, %v753
      %755 = vdwg.mxu0
      %756 = vst [vmem:[#allocation1] ss:$4 sm:$0xff] %v225
      %s757 = scalar_lea.vmem [#allocation1], 1
      %758 = vst [vmem:[%s757] ss:$4 sm:$0xff] %v281
      %s759 = scalar_lea.vmem [#allocation1], 2
      %760 = vst [vmem:[%s759] ss:$4 sm:$0xff] %v282
      %s761 = scalar_lea.vmem [#allocation1], 3
      %762 = vst [vmem:[%s761] ss:$4 sm:$0xff] %v283
      %s763 = scalar_lea.vmem [#allocation1], 32
      %764 = vst [vmem:[%s763] ss:$4 sm:$0xff] %v226
      %s765 = scalar_lea.vmem [#allocation1], 33
      %766 = vst [vmem:[%s765] ss:$4 sm:$0xff] %v284
      %s767 = scalar_lea.vmem [#allocation1], 34
      %768 = vst [vmem:[%s767] ss:$4 sm:$0xff] %v285
      %s769 = scalar_lea.vmem [#allocation1], 35
      %770 = vst [vmem:[%s769] ss:$4 sm:$0xff] %v227
      %v771 = vld.sshfl [vmem:[#allocation1] sm:$0xff pattern:$0x73625140]
      %v772 = vld.sshfl [vmem:[#allocation1 + $0x20] sm:$0xff pattern:$0x73625140]
      %773 = vst [vmem:[#allocation1] ss:$4 sm:$0xff] %v286
      %774 = vst [vmem:[%s757] ss:$4 sm:$0xff] %v287
      %775 = vst [vmem:[%s759] ss:$4 sm:$0xff] %v288
      %776 = vst [vmem:[%s761] ss:$4 sm:$0xff] %v228
      %777 = vst [vmem:[%s763] ss:$4 sm:$0xff] %v289
      %778 = vst [vmem:[%s765] ss:$4 sm:$0xff] %v290
      %779 = vst [vmem:[%s767] ss:$4 sm:$0xff] %v229
      %780 = vst [vmem:[%s769] ss:$4 sm:$0xff] %v291
      %v781 = vld.sshfl [vmem:[#allocation1] sm:$0xff pattern:$0x73625140]
      %v782 = vld.sshfl [vmem:[#allocation1 + $0x20] sm:$0xff pattern:$0x73625140]
      %783 = vst [vmem:[#allocation1] ss:$4 sm:$0xff] %v292
      %784 = vst [vmem:[%s757] ss:$4 sm:$0xff] %v293
      %785 = vst [vmem:[%s759] ss:$4 sm:$0xff] %v230
      %786 = vst [vmem:[%s761] ss:$4 sm:$0xff] %v294
      %787 = vst [vmem:[%s763] ss:$4 sm:$0xff] %v295
      %788 = vst [vmem:[%s765] ss:$4 sm:$0xff] %v231
      %789 = vst [vmem:[%s767] ss:$4 sm:$0xff] %v296
      %790 = vst [vmem:[%s769] ss:$4 sm:$0xff] %v297
      %v791 = vld.sshfl [vmem:[#allocation1] sm:$0xff pattern:$0x73625140]
      %v792 = vld.sshfl [vmem:[#allocation1 + $0x20] sm:$0xff pattern:$0x73625140]
      %793 = vst [vmem:[#allocation1] ss:$4 sm:$0xff] %v298
      %794 = vst [vmem:[%s757] ss:$4 sm:$0xff] %v232
      %795 = vst [vmem:[%s759] ss:$4 sm:$0xff] %v299
      %796 = vst [vmem:[%s761] ss:$4 sm:$0xff] %v300
      %797 = vst [vmem:[%s763] ss:$4 sm:$0xff] %v233
      %798 = vst [vmem:[%s765] ss:$4 sm:$0xff] %v301
      %799 = vst [vmem:[%s767] ss:$4 sm:$0xff] %v302
      %800 = vst [vmem:[%s769] ss:$4 sm:$0xff] %v303
      %v801 = vld.sshfl [vmem:[#allocation1] sm:$0xff pattern:$0x73625140]
      %v802 = vld.sshfl [vmem:[#allocation1 + $0x20] sm:$0xff pattern:$0x73625140]
      %803 = vst [vmem:[#allocation1] ss:$4 sm:$0xff] %v234
      %804 = vst [vmem:[%s757] ss:$4 sm:$0xff] %v304
      %805 = vst [vmem:[%s759] ss:$4 sm:$0xff] %v305
      %806 = vst [vmem:[%s761] ss:$4 sm:$0xff] %v235
      %807 = vst [vmem:[%s763] ss:$4 sm:$0xff] %v306
      %808 = vst [vmem:[%s765] ss:$4 sm:$0xff] %v307
      %809 = vst [vmem:[%s767] ss:$4 sm:$0xff] %v308
      %810 = vst [vmem:[%s769] ss:$4 sm:$0xff] %v236
      %v811 = vld.sshfl [vmem:[#allocation1] sm:$0xff pattern:$0x73625140]
      %v812 = vld.sshfl [vmem:[#allocation1 + $0x20] sm:$0xff pattern:$0x73625140]
      %813 = vst [vmem:[#allocation1] ss:$4 sm:$0xff] %v309
      %814 = vst [vmem:[%s757] ss:$4 sm:$0xff] %v310
      %815 = vst [vmem:[%s759] ss:$4 sm:$0xff] %v237
      %816 = vst [vmem:[%s761] ss:$4 sm:$0xff] %v311
      %817 = vst [vmem:[%s763] ss:$4 sm:$0xff] %v312
      %818 = vst [vmem:[%s765] ss:$4 sm:$0xff] %v313
      %819 = vst [vmem:[%s767] ss:$4 sm:$0xff] %v238
      %820 = vst [vmem:[%s769] ss:$4 sm:$0xff] %v314
      %v821 = vld.sshfl [vmem:[#allocation1] sm:$0xff pattern:$0x73625140]
      %v822 = vld.sshfl [vmem:[#allocation1 + $0x20] sm:$0xff pattern:$0x73625140]
      %823 = vst [vmem:[#allocation1] ss:$4 sm:$0xff] %v315
      %824 = vst [vmem:[%s757] ss:$4 sm:$0xff] %v239
      %825 = vst [vmem:[%s759] ss:$4 sm:$0xff] %v316
      %826 = vst [vmem:[%s761] ss:$4 sm:$0xff] %v317
      %827 = vst [vmem:[%s763] ss:$4 sm:$0xff] %v318
      %828 = vst [vmem:[%s765] ss:$4 sm:$0xff] %v240
      %829 = vst [vmem:[%s767] ss:$4 sm:$0xff] %v319
      %830 = vst [vmem:[%s769] ss:$4 sm:$0xff] %v320
      %v831 = vld.sshfl [vmem:[#allocation1] sm:$0xff pattern:$0x73625140]
      %v832 = vld.sshfl [vmem:[#allocation1 + $0x20] sm:$0xff pattern:$0x73625140]
      %833 = vst [vmem:[#allocation1] ss:$4 sm:$0xff] %v241
      %834 = vst [vmem:[%s757] ss:$4 sm:$0xff] %v321
      %835 = vst [vmem:[%s759] ss:$4 sm:$0xff] %v322
      %836 = vst [vmem:[%s761] ss:$4 sm:$0xff] %v323
      %837 = vst [vmem:[%s763] ss:$4 sm:$0xff] %v242
      %838 = vst [vmem:[%s765] ss:$4 sm:$0xff] %v324
      %839 = vst [vmem:[%s767] ss:$4 sm:$0xff] %v325
      %840 = vst [vmem:[%s769] ss:$4 sm:$0xff] %v243
      %v841 = vld.sshfl [vmem:[#allocation1] sm:$0xff pattern:$0x73625140]
      %v842 = vld.sshfl [vmem:[#allocation1 + $0x20] sm:$0xff pattern:$0x73625140]
      %843 = vst [vmem:[#allocation1] ss:$4 sm:$0xff] %v326
      %844 = vst [vmem:[%s757] ss:$4 sm:$0xff] %v327
      %845 = vst [vmem:[%s759] ss:$4 sm:$0xff] %v328
      %846 = vst [vmem:[%s761] ss:$4 sm:$0xff] %v244
      %847 = vst [vmem:[%s763] ss:$4 sm:$0xff] %v329
      %848 = vst [vmem:[%s765] ss:$4 sm:$0xff] %v330
      %849 = vst [vmem:[%s767] ss:$4 sm:$0xff] %v245
      %850 = vst [vmem:[%s769] ss:$4 sm:$0xff] %v331
      %v851 = vld.sshfl [vmem:[#allocation1] sm:$0xff pattern:$0x73625140]
      %v852 = vld.sshfl [vmem:[#allocation1 + $0x20] sm:$0xff pattern:$0x73625140]
      %853 = vst [vmem:[#allocation1] ss:$4 sm:$0xff] %v332
      %854 = vst [vmem:[%s757] ss:$4 sm:$0xff] %v333
      %855 = vst [vmem:[%s759] ss:$4 sm:$0xff] %v246
      %856 = vst [vmem:[%s761] ss:$4 sm:$0xff] %v334
      %857 = vst [vmem:[%s763] ss:$4 sm:$0xff] %v335
      %858 = vst [vmem:[%s765] ss:$4 sm:$0xff] %v247
      %859 = vst [vmem:[%s767] ss:$4 sm:$0xff] %v336
      %860 = vst [vmem:[%s769] ss:$4 sm:$0xff] %v337
      %v861 = vld.sshfl [vmem:[#allocation1] sm:$0xff pattern:$0x73625140]
      %v862 = vld.sshfl [vmem:[#allocation1 + $0x20] sm:$0xff pattern:$0x73625140]
      %863 = vst [vmem:[#allocation1] ss:$4 sm:$0xff] %v338
      %864 = vst [vmem:[%s757] ss:$4 sm:$0xff] %v248
      %865 = vst [vmem:[%s759] ss:$4 sm:$0xff] %v339
      %866 = vst [vmem:[%s761] ss:$4 sm:$0xff] %v340
      %867 = vst [vmem:[%s763] ss:$4 sm:$0xff] %v249
      %868 = vst [vmem:[%s765] ss:$4 sm:$0xff] %v341
      %869 = vst [vmem:[%s767] ss:$4 sm:$0xff] %v342
      %870 = vst [vmem:[%s769] ss:$4 sm:$0xff] %v343
      %v871 = vld.sshfl [vmem:[#allocation1] sm:$0xff pattern:$0x73625140]
      %v872 = vld.sshfl [vmem:[#allocation1 + $0x20] sm:$0xff pattern:$0x73625140]
      %873 = vst [vmem:[#allocation1] ss:$4 sm:$0xff] %v250
      %874 = vst [vmem:[%s757] ss:$4 sm:$0xff] %v344
      %875 = vst [vmem:[%s759] ss:$4 sm:$0xff] %v345
      %876 = vst [vmem:[%s761] ss:$4 sm:$0xff] %v251
      %877 = vst [vmem:[%s763] ss:$4 sm:$0xff] %v346
      %878 = vst [vmem:[%s765] ss:$4 sm:$0xff] %v347
      %879 = vst [vmem:[%s767] ss:$4 sm:$0xff] %v348
      %880 = vst [vmem:[%s769] ss:$4 sm:$0xff] %v252
      %v881 = vld.sshfl [vmem:[#allocation1] sm:$0xff pattern:$0x73625140]
      %v882 = vld.sshfl [vmem:[#allocation1 + $0x20] sm:$0xff pattern:$0x73625140]
      %883 = vst [vmem:[#allocation1] ss:$4 sm:$0xff] %v349
      %884 = vst [vmem:[%s757] ss:$4 sm:$0xff] %v350
      %v885 = vld.sshfl [vmem:[#allocation1] sm:$0xff pattern:$0x73625140]
      %v886 = vsel %vm609, %v771, 0
      %v888 = vsel %vm609, %v772, 0
      %v890 = vsel %vm609, %v781, 0
      %v892 = vsel %vm609, %v782, 0
      %v894 = vsel %vm609, %v791, 0
      %v896 = vsel %vm609, %v792, 0
      %v898 = vsel %vm609, %v801, 0
      %v900 = vsel %vm609, %v802, 0
      %v902 = vsel %vm609, %v811, 0
      %v904 = vsel %vm609, %v812, 0
      %v906 = vsel %vm609, %v821, 0
      %v908 = vsel %vm609, %v822, 0
      %v910 = vsel %vm609, %v831, 0
      %v912 = vsel %vm609, %v832, 0
      %v914 = vsel %vm609, %v841, 0
      %v916 = vsel %vm609, %v842, 0
      %v918 = vsel %vm609, %v851, 0
      %v920 = vsel %vm609, %v852, 0
      %v922 = vsel %vm609, %v861, 0
      %v924 = vsel %vm609, %v862, 0
      %v926 = vsel %vm609, %v871, 0
      %v928 = vsel %vm609, %v872, 0
      %v930 = vsel %vm609, %v881, 0
      %v932 = vsel %vm609, %v882, 0
      %v934 = vsel %vm609, %v885, 0
      %v937 = vsel %vm660, %v351, 0
      %939 = vmatpush.msra.mxu0 0.0
      %940 = vmatpush.msra.mxu0 0.0
      %941 = vmatpush.msra.mxu0 0.0
      %942 = vmatpush.msra.mxu0 0.0
      %943 = vmatpush.msra.mxu0 0.0
      %944 = vmatpush.msra.mxu0 0.0
      %945 = vmatpush.msra.mxu0 0.0
      %946 = vmatpush.msra.mxu0 0.0
      %947 = vmatpush.msra.mxu0 0.0
      %948 = vmatpush.msra.mxu0 0.0
      %949 = vmatpush.msra.mxu0 0.0
      %950 = vmatpush.msra.mxu0 0.0
      %951 = vmatpush.msra.mxu0 0.0
      %952 = vmatpush.msra.mxu0 0.0
      %953 = vmatpush.msra.mxu0 0.0
      %954 = vmatpush.msra.mxu0 %v937
      %955 = vmatmul.f32.gmra.mxu0 %v886
      %v956 = vpop.f32.mrf.mxu0
      %v957 = vadd.f32 %v682, %v956
      %958 = vmatmul.f32.gmra.mxu0 %v888
      %v959 = vpop.f32.mrf.mxu0
      %v960 = vadd.f32 %v685, %v959
      %961 = vmatmul.f32.gmra.mxu0 %v890
      %v962 = vpop.f32.mrf.mxu0
      %v963 = vadd.f32 %v688, %v962
      %964 = vmatmul.f32.gmra.mxu0 %v892
      %v965 = vpop.f32.mrf.mxu0
      %v966 = vadd.f32 %v691, %v965
      %967 = vmatmul.f32.gmra.mxu0 %v894
      %v968 = vpop.f32.mrf.mxu0
      %v969 = vadd.f32 %v694, %v968
      %970 = vmatmul.f32.gmra.mxu0 %v896
      %v971 = vpop.f32.mrf.mxu0
      %v972 = vadd.f32 %v697, %v971
      %973 = vmatmul.f32.gmra.mxu0 %v898
      %v974 = vpop.f32.mrf.mxu0
      %v975 = vadd.f32 %v700, %v974
      %976 = vmatmul.f32.gmra.mxu0 %v900
      %v977 = vpop.f32.mrf.mxu0
      %v978 = vadd.f32 %v703, %v977
      %979 = vmatmul.f32.gmra.mxu0 %v902
      %v980 = vpop.f32.mrf.mxu0
      %v981 = vadd.f32 %v706, %v980
      %982 = vmatmul.f32.gmra.mxu0 %v904
      %v983 = vpop.f32.mrf.mxu0
      %v984 = vadd.f32 %v709, %v983
      %985 = vmatmul.f32.gmra.mxu0 %v906
      %v986 = vpop.f32.mrf.mxu0
      %v987 = vadd.f32 %v712, %v986
      %988 = vmatmul.f32.gmra.mxu0 %v908
      %v989 = vpop.f32.mrf.mxu0
      %v990 = vadd.f32 %v715, %v989
      %991 = vmatmul.f32.gmra.mxu0 %v910
      %v992 = vpop.f32.mrf.mxu0
      %v993 = vadd.f32 %v718, %v992
      %994 = vmatmul.f32.gmra.mxu0 %v912
      %v995 = vpop.f32.mrf.mxu0
      %v996 = vadd.f32 %v721, %v995
      %997 = vmatmul.f32.gmra.mxu0 %v914
      %v998 = vpop.f32.mrf.mxu0
      %v999 = vadd.f32 %v724, %v998
      %1000 = vmatmul.f32.gmra.mxu0 %v916
      %v1001 = vpop.f32.mrf.mxu0
      %v1002 = vadd.f32 %v727, %v1001
      %1003 = vmatmul.f32.gmra.mxu0 %v918
      %v1004 = vpop.f32.mrf.mxu0
      %v1005 = vadd.f32 %v730, %v1004
      %1006 = vmatmul.f32.gmra.mxu0 %v920
      %v1007 = vpop.f32.mrf.mxu0
      %v1008 = vadd.f32 %v733, %v1007
      %1009 = vmatmul.f32.gmra.mxu0 %v922
      %v1010 = vpop.f32.mrf.mxu0
      %v1011 = vadd.f32 %v736, %v1010
      %1012 = vmatmul.f32.gmra.mxu0 %v924
      %v1013 = vpop.f32.mrf.mxu0
      %v1014 = vadd.f32 %v739, %v1013
      %1015 = vmatmul.f32.gmra.mxu0 %v926
      %v1016 = vpop.f32.mrf.mxu0
      %v1017 = vadd.f32 %v742, %v1016
      %1018 = vmatmul.f32.gmra.mxu0 %v928
      %v1019 = vpop.f32.mrf.mxu0
      %v1020 = vadd.f32 %v745, %v1019
      %1021 = vmatmul.f32.gmra.mxu0 %v930
      %v1022 = vpop.f32.mrf.mxu0
      %v1023 = vadd.f32 %v748, %v1022
      %1024 = vmatmul.f32.gmra.mxu0 %v932
      %v1025 = vpop.f32.mrf.mxu0
      %v1026 = vadd.f32 %v751, %v1025
      %1027 = vmatmul.f32.gmra.mxu0 %v934
      %v1028 = vpop.f32.mrf.mxu0
      %v1029 = vadd.f32 %v754, %v1028
      %1030 = vdwg.mxu0
      %v1031 = vld [vmem:[%s219 + $0x2] sm:$0xff]
      %v1032 = vld [vmem:[%s219 + $0xa] sm:$0x3f]
      %v1033 = vld [vmem:[%s219 + $0x12] sm:$0xff]
      %v1034 = vld [vmem:[%s219 + $0x1a] sm:$0x3f]
      %v1035 = vld [vmem:[%s219 + $0x22] sm:$0xff]
      %v1036 = vld [vmem:[%s219 + $0x2a] sm:$0x3f]
      %v1037 = vld [vmem:[%s219 + $0x32] sm:$0xff]
      %v1038 = vld [vmem:[%s219 + $0x3a] sm:$0x3f]
      %v1039 = vld [vmem:[%s219 + $0x42] sm:$0xff]
      %v1040 = vld [vmem:[%s219 + $0x4a] sm:$0x3f]
      %v1041 = vld [vmem:[%s219 + $0x52] sm:$0xff]
      %v1042 = vld [vmem:[%s219 + $0x5a] sm:$0x3f]
      %v1043 = vld [vmem:[%s219 + $0x62] sm:$0xff]
      %v1044 = vld [vmem:[%s219 + $0x6a] sm:$0x3f]
      %v1045 = vld [vmem:[%s219 + $0x72] sm:$0xff]
      %v1046 = vld [vmem:[%s219 + $0x7a] sm:$0x3f]
      %v1047 = vld [vmem:[%s219 + $0x82] sm:$0xff]
      %v1048 = vld [vmem:[%s219 + $0x8a] sm:$0x3f]
      %v1049 = vld [vmem:[%s219 + $0x92] sm:$0xff]
      %v1050 = vld [vmem:[%s219 + $0x9a] sm:$0x3f]
      %v1051 = vld [vmem:[%s219 + $0xa2] sm:$0xff]
      %v1052 = vld [vmem:[%s219 + $0xaa] sm:$0x3f]
      %v1053 = vld [vmem:[%s219 + $0xb2] sm:$0xff]
      %v1054 = vld [vmem:[%s219 + $0xba] sm:$0x3f]
      %v1055 = vld [vmem:[%s219 + $0xc2] sm:$0xff]
      %v1056 = vld [vmem:[%s219 + $0xca] sm:$0x3f]
      %v1057 = vld [vmem:[%s219 + $0xd2] sm:$0xff]
      %v1058 = vld [vmem:[%s219 + $0xda] sm:$0x3f]
      %v1087 = vrot.slane %v1031, 2
      %v1088 = vrot.slane %v1031, 4
      %v1089 = vrot.slane %v1031, 6
      %v1090 = vrot.slane %v1032, 2
      %v1091 = vrot.slane %v1032, 4
      %v1092 = vrot.slane %v1033, 2
      %v1093 = vrot.slane %v1033, 4
      %v1094 = vrot.slane %v1033, 6
      %v1095 = vrot.slane %v1034, 2
      %v1096 = vrot.slane %v1034, 4
      %v1097 = vrot.slane %v1035, 2
      %v1098 = vrot.slane %v1035, 4
      %v1099 = vrot.slane %v1035, 6
      %v1100 = vrot.slane %v1036, 2
      %v1101 = vrot.slane %v1036, 4
      %v1102 = vrot.slane %v1037, 2
      %v1103 = vrot.slane %v1037, 4
      %v1104 = vrot.slane %v1037, 6
      %v1105 = vrot.slane %v1038, 2
      %v1106 = vrot.slane %v1038, 4
      %v1107 = vrot.slane %v1039, 2
      %v1108 = vrot.slane %v1039, 4
      %v1109 = vrot.slane %v1039, 6
      %v1110 = vrot.slane %v1040, 2
      %v1111 = vrot.slane %v1040, 4
      %v1112 = vrot.slane %v1041, 2
      %v1113 = vrot.slane %v1041, 4
      %v1114 = vrot.slane %v1041, 6
      %v1115 = vrot.slane %v1042, 2
      %v1116 = vrot.slane %v1042, 4
      %v1117 = vrot.slane %v1043, 2
      %v1118 = vrot.slane %v1043, 4
      %v1119 = vrot.slane %v1043, 6
      %v1120 = vrot.slane %v1044, 2
      %v1121 = vrot.slane %v1044, 4
      %v1122 = vrot.slane %v1045, 2
      %v1123 = vrot.slane %v1045, 4
      %v1124 = vrot.slane %v1045, 6
      %v1125 = vrot.slane %v1046, 2
      %v1126 = vrot.slane %v1046, 4
      %v1127 = vrot.slane %v1047, 2
      %v1128 = vrot.slane %v1047, 4
      %v1129 = vrot.slane %v1047, 6
      %v1130 = vrot.slane %v1048, 2
      %v1131 = vrot.slane %v1048, 4
      %v1132 = vrot.slane %v1049, 2
      %v1133 = vrot.slane %v1049, 4
      %v1134 = vrot.slane %v1049, 6
      %v1135 = vrot.slane %v1050, 2
      %v1136 = vrot.slane %v1050, 4
      %v1137 = vrot.slane %v1051, 2
      %v1138 = vrot.slane %v1051, 4
      %v1139 = vrot.slane %v1051, 6
      %v1140 = vrot.slane %v1052, 2
      %v1141 = vrot.slane %v1052, 4
      %v1142 = vrot.slane %v1053, 2
      %v1143 = vrot.slane %v1053, 4
      %v1144 = vrot.slane %v1053, 6
      %v1145 = vrot.slane %v1054, 2
      %v1146 = vrot.slane %v1054, 4
      %v1147 = vrot.slane %v1055, 2
      %v1148 = vrot.slane %v1055, 4
      %v1149 = vrot.slane %v1055, 6
      %v1150 = vrot.slane %v1056, 2
      %v1151 = vrot.slane %v1056, 4
      %v1152 = vrot.slane %v1057, 2
      %v1153 = vrot.slane %v1057, 4
      %v1154 = vrot.slane %v1057, 6
      %v1155 = vrot.slane %v1058, 2
      %v1156 = vrot.slane %v1058, 4
      %v1157 = vld [vmem:[%s1 + $0x8] sm:$0xf]
      %1158 = vst [vmem:[#allocation1] ss:$4 sm:$0xff] %v1031
      %s1159 = scalar_lea.vmem [#allocation1], 1
      %1160 = vst [vmem:[%s1159] ss:$4 sm:$0xff] %v1087
      %s1161 = scalar_lea.vmem [#allocation1], 2
      %1162 = vst [vmem:[%s1161] ss:$4 sm:$0xff] %v1088
      %s1163 = scalar_lea.vmem [#allocation1], 3
      %1164 = vst [vmem:[%s1163] ss:$4 sm:$0xff] %v1089
      %s1165 = scalar_lea.vmem [#allocation1], 32
      %1166 = vst [vmem:[%s1165] ss:$4 sm:$0xff] %v1032
      %s1167 = scalar_lea.vmem [#allocation1], 33
      %1168 = vst [vmem:[%s1167] ss:$4 sm:$0xff] %v1090
      %s1169 = scalar_lea.vmem [#allocation1], 34
      %1170 = vst [vmem:[%s1169] ss:$4 sm:$0xff] %v1091
      %s1171 = scalar_lea.vmem [#allocation1], 35
      %1172 = vst [vmem:[%s1171] ss:$4 sm:$0xff] %v1033
      %v1173 = vld.sshfl [vmem:[#allocation1] sm:$0xff pattern:$0x73625140]
      %v1174 = vld.sshfl [vmem:[#allocation1 + $0x20] sm:$0xff pattern:$0x73625140]
      %1175 = vst [vmem:[#allocation1] ss:$4 sm:$0xff] %v1092
      %1176 = vst [vmem:[%s1159] ss:$4 sm:$0xff] %v1093
      %1177 = vst [vmem:[%s1161] ss:$4 sm:$0xff] %v1094
      %1178 = vst [vmem:[%s1163] ss:$4 sm:$0xff] %v1034
      %1179 = vst [vmem:[%s1165] ss:$4 sm:$0xff] %v1095
      %1180 = vst [vmem:[%s1167] ss:$4 sm:$0xff] %v1096
      %1181 = vst [vmem:[%s1169] ss:$4 sm:$0xff] %v1035
      %1182 = vst [vmem:[%s1171] ss:$4 sm:$0xff] %v1097
      %v1183 = vld.sshfl [vmem:[#allocation1] sm:$0xff pattern:$0x73625140]
      %v1184 = vld.sshfl [vmem:[#allocation1 + $0x20] sm:$0xff pattern:$0x73625140]
      %1185 = vst [vmem:[#allocation1] ss:$4 sm:$0xff] %v1098
      %1186 = vst [vmem:[%s1159] ss:$4 sm:$0xff] %v1099
      %1187 = vst [vmem:[%s1161] ss:$4 sm:$0xff] %v1036
      %1188 = vst [vmem:[%s1163] ss:$4 sm:$0xff] %v1100
      %1189 = vst [vmem:[%s1165] ss:$4 sm:$0xff] %v1101
      %1190 = vst [vmem:[%s1167] ss:$4 sm:$0xff] %v1037
      %1191 = vst [vmem:[%s1169] ss:$4 sm:$0xff] %v1102
      %1192 = vst [vmem:[%s1171] ss:$4 sm:$0xff] %v1103
      %v1193 = vld.sshfl [vmem:[#allocation1] sm:$0xff pattern:$0x73625140]
      %v1194 = vld.sshfl [vmem:[#allocation1 + $0x20] sm:$0xff pattern:$0x73625140]
      %1195 = vst [vmem:[#allocation1] ss:$4 sm:$0xff] %v1104
      %1196 = vst [vmem:[%s1159] ss:$4 sm:$0xff] %v1038
      %1197 = vst [vmem:[%s1161] ss:$4 sm:$0xff] %v1105
      %1198 = vst [vmem:[%s1163] ss:$4 sm:$0xff] %v1106
      %1199 = vst [vmem:[%s1165] ss:$4 sm:$0xff] %v1039
      %1200 = vst [vmem:[%s1167] ss:$4 sm:$0xff] %v1107
      %1201 = vst [vmem:[%s1169] ss:$4 sm:$0xff] %v1108
      %1202 = vst [vmem:[%s1171] ss:$4 sm:$0xff] %v1109
      %v1203 = vld.sshfl [vmem:[#allocation1] sm:$0xff pattern:$0x73625140]
      %v1204 = vld.sshfl [vmem:[#allocation1 + $0x20] sm:$0xff pattern:$0x73625140]
      %1205 = vst [vmem:[#allocation1] ss:$4 sm:$0xff] %v1040
      %1206 = vst [vmem:[%s1159] ss:$4 sm:$0xff] %v1110
      %1207 = vst [vmem:[%s1161] ss:$4 sm:$0xff] %v1111
      %1208 = vst [vmem:[%s1163] ss:$4 sm:$0xff] %v1041
      %1209 = vst [vmem:[%s1165] ss:$4 sm:$0xff] %v1112
      %1210 = vst [vmem:[%s1167] ss:$4 sm:$0xff] %v1113
      %1211 = vst [vmem:[%s1169] ss:$4 sm:$0xff] %v1114
      %1212 = vst [vmem:[%s1171] ss:$4 sm:$0xff] %v1042
      %v1213 = vld.sshfl [vmem:[#allocation1] sm:$0xff pattern:$0x73625140]
      %v1214 = vld.sshfl [vmem:[#allocation1 + $0x20] sm:$0xff pattern:$0x73625140]
      %1215 = vst [vmem:[#allocation1] ss:$4 sm:$0xff] %v1115
      %1216 = vst [vmem:[%s1159] ss:$4 sm:$0xff] %v1116
      %1217 = vst [vmem:[%s1161] ss:$4 sm:$0xff] %v1043
      %1218 = vst [vmem:[%s1163] ss:$4 sm:$0xff] %v1117
      %1219 = vst [vmem:[%s1165] ss:$4 sm:$0xff] %v1118
      %1220 = vst [vmem:[%s1167] ss:$4 sm:$0xff] %v1119
      %1221 = vst [vmem:[%s1169] ss:$4 sm:$0xff] %v1044
      %1222 = vst [vmem:[%s1171] ss:$4 sm:$0xff] %v1120
      %v1223 = vld.sshfl [vmem:[#allocation1] sm:$0xff pattern:$0x73625140]
      %v1224 = vld.sshfl [vmem:[#allocation1 + $0x20] sm:$0xff pattern:$0x73625140]
      %1225 = vst [vmem:[#allocation1] ss:$4 sm:$0xff] %v1121
      %1226 = vst [vmem:[%s1159] ss:$4 sm:$0xff] %v1045
      %1227 = vst [vmem:[%s1161] ss:$4 sm:$0xff] %v1122
      %1228 = vst [vmem:[%s1163] ss:$4 sm:$0xff] %v1123
      %1229 = vst [vmem:[%s1165] ss:$4 sm:$0xff] %v1124
      %1230 = vst [vmem:[%s1167] ss:$4 sm:$0xff] %v1046
      %1231 = vst [vmem:[%s1169] ss:$4 sm:$0xff] %v1125
      %1232 = vst [vmem:[%s1171] ss:$4 sm:$0xff] %v1126
      %v1233 = vld.sshfl [vmem:[#allocation1] sm:$0xff pattern:$0x73625140]
      %v1234 = vld.sshfl [vmem:[#allocation1 + $0x20] sm:$0xff pattern:$0x73625140]
      %1235 = vst [vmem:[#allocation1] ss:$4 sm:$0xff] %v1047
      %1236 = vst [vmem:[%s1159] ss:$4 sm:$0xff] %v1127
      %1237 = vst [vmem:[%s1161] ss:$4 sm:$0xff] %v1128
      %1238 = vst [vmem:[%s1163] ss:$4 sm:$0xff] %v1129
      %1239 = vst [vmem:[%s1165] ss:$4 sm:$0xff] %v1048
      %1240 = vst [vmem:[%s1167] ss:$4 sm:$0xff] %v1130
      %1241 = vst [vmem:[%s1169] ss:$4 sm:$0xff] %v1131
      %1242 = vst [vmem:[%s1171] ss:$4 sm:$0xff] %v1049
      %v1243 = vld.sshfl [vmem:[#allocation1] sm:$0xff pattern:$0x73625140]
      %v1244 = vld.sshfl [vmem:[#allocation1 + $0x20] sm:$0xff pattern:$0x73625140]
      %1245 = vst [vmem:[#allocation1] ss:$4 sm:$0xff] %v1132
      %1246 = vst [vmem:[%s1159] ss:$4 sm:$0xff] %v1133
      %1247 = vst [vmem:[%s1161] ss:$4 sm:$0xff] %v1134
      %1248 = vst [vmem:[%s1163] ss:$4 sm:$0xff] %v1050
      %1249 = vst [vmem:[%s1165] ss:$4 sm:$0xff] %v1135
      %1250 = vst [vmem:[%s1167] ss:$4 sm:$0xff] %v1136
      %1251 = vst [vmem:[%s1169] ss:$4 sm:$0xff] %v1051
      %1252 = vst [vmem:[%s1171] ss:$4 sm:$0xff] %v1137
      %v1253 = vld.sshfl [vmem:[#allocation1] sm:$0xff pattern:$0x73625140]
      %v1254 = vld.sshfl [vmem:[#allocation1 + $0x20] sm:$0xff pattern:$0x73625140]
      %1255 = vst [vmem:[#allocation1] ss:$4 sm:$0xff] %v1138
      %1256 = vst [vmem:[%s1159] ss:$4 sm:$0xff] %v1139
      %1257 = vst [vmem:[%s1161] ss:$4 sm:$0xff] %v1052
      %1258 = vst [vmem:[%s1163] ss:$4 sm:$0xff] %v1140
      %1259 = vst [vmem:[%s1165] ss:$4 sm:$0xff] %v1141
      %1260 = vst [vmem:[%s1167] ss:$4 sm:$0xff] %v1053
      %1261 = vst [vmem:[%s1169] ss:$4 sm:$0xff] %v1142
      %1262 = vst [vmem:[%s1171] ss:$4 sm:$0xff] %v1143
      %v1263 = vld.sshfl [vmem:[#allocation1] sm:$0xff pattern:$0x73625140]
      %v1264 = vld.sshfl [vmem:[#allocation1 + $0x20] sm:$0xff pattern:$0x73625140]
      %1265 = vst [vmem:[#allocation1] ss:$4 sm:$0xff] %v1144
      %1266 = vst [vmem:[%s1159] ss:$4 sm:$0xff] %v1054
      %1267 = vst [vmem:[%s1161] ss:$4 sm:$0xff] %v1145
      %1268 = vst [vmem:[%s1163] ss:$4 sm:$0xff] %v1146
      %1269 = vst [vmem:[%s1165] ss:$4 sm:$0xff] %v1055
      %1270 = vst [vmem:[%s1167] ss:$4 sm:$0xff] %v1147
      %1271 = vst [vmem:[%s1169] ss:$4 sm:$0xff] %v1148
      %1272 = vst [vmem:[%s1171] ss:$4 sm:$0xff] %v1149
      %v1273 = vld.sshfl [vmem:[#allocation1] sm:$0xff pattern:$0x73625140]
      %v1274 = vld.sshfl [vmem:[#allocation1 + $0x20] sm:$0xff pattern:$0x73625140]
      %1275 = vst [vmem:[#allocation1] ss:$4 sm:$0xff] %v1056
      %1276 = vst [vmem:[%s1159] ss:$4 sm:$0xff] %v1150
      %1277 = vst [vmem:[%s1161] ss:$4 sm:$0xff] %v1151
      %1278 = vst [vmem:[%s1163] ss:$4 sm:$0xff] %v1057
      %1279 = vst [vmem:[%s1165] ss:$4 sm:$0xff] %v1152
      %1280 = vst [vmem:[%s1167] ss:$4 sm:$0xff] %v1153
      %1281 = vst [vmem:[%s1169] ss:$4 sm:$0xff] %v1154
      %1282 = vst [vmem:[%s1171] ss:$4 sm:$0xff] %v1058
      %v1283 = vld.sshfl [vmem:[#allocation1] sm:$0xff pattern:$0x73625140]
      %v1284 = vld.sshfl [vmem:[#allocation1 + $0x20] sm:$0xff pattern:$0x73625140]
      %1285 = vst [vmem:[#allocation1] ss:$4 sm:$0xff] %v1155
      %1286 = vst [vmem:[%s1159] ss:$4 sm:$0xff] %v1156
      %v1287 = vld.sshfl [vmem:[#allocation1] sm:$0xff pattern:$0x73625140]
      %v1288 = vsel %vm609, %v1173, 0
      %v1290 = vsel %vm609, %v1174, 0
      %v1292 = vsel %vm609, %v1183, 0
      %v1294 = vsel %vm609, %v1184, 0
      %v1296 = vsel %vm609, %v1193, 0
      %v1298 = vsel %vm609, %v1194, 0
      %v1300 = vsel %vm609, %v1203, 0
      %v1302 = vsel %vm609, %v1204, 0
      %v1304 = vsel %vm609, %v1213, 0
      %v1306 = vsel %vm609, %v1214, 0
      %v1308 = vsel %vm609, %v1223, 0
      %v1310 = vsel %vm609, %v1224, 0
      %v1312 = vsel %vm609, %v1233, 0
      %v1314 = vsel %vm609, %v1234, 0
      %v1316 = vsel %vm609, %v1243, 0
      %v1318 = vsel %vm609, %v1244, 0
      %v1320 = vsel %vm609, %v1253, 0
      %v1322 = vsel %vm609, %v1254, 0
      %v1324 = vsel %vm609, %v1263, 0
      %v1326 = vsel %vm609, %v1264, 0
      %v1328 = vsel %vm609, %v1273, 0
      %v1330 = vsel %vm609, %v1274, 0
      %v1332 = vsel %vm609, %v1283, 0
      %v1334 = vsel %vm609, %v1284, 0
      %v1336 = vsel %vm609, %v1287, 0
      %v1339 = vsel %vm660, %v1157, 0
      %1341 = vmatpush.msra.mxu0 0.0
      %1342 = vmatpush.msra.mxu0 0.0
      %1343 = vmatpush.msra.mxu0 0.0
      %1344 = vmatpush.msra.mxu0 0.0
      %1345 = vmatpush.msra.mxu0 0.0
      %1346 = vmatpush.msra.mxu0 0.0
      %1347 = vmatpush.msra.mxu0 0.0
      %1348 = vmatpush.msra.mxu0 0.0
      %1349 = vmatpush.msra.mxu0 0.0
      %1350 = vmatpush.msra.mxu0 0.0
      %1351 = vmatpush.msra.mxu0 0.0
      %1352 = vmatpush.msra.mxu0 0.0
      %1353 = vmatpush.msra.mxu0 0.0
      %1354 = vmatpush.msra.mxu0 0.0
      %1355 = vmatpush.msra.mxu0 0.0
      %1356 = vmatpush.msra.mxu0 %v1339
      %1357 = vmatmul.f32.gmra.mxu0 %v1288
      %v1358 = vpop.f32.mrf.mxu0
      %v1359 = vadd.f32 0.0, %v1358
      %1360 = vmatmul.f32.gmra.mxu0 %v1290
      %v1361 = vpop.f32.mrf.mxu0
      %v1362 = vadd.f32 0.0, %v1361
      %1363 = vmatmul.f32.gmra.mxu0 %v1292
      %v1364 = vpop.f32.mrf.mxu0
      %v1365 = vadd.f32 0.0, %v1364
      %1366 = vmatmul.f32.gmra.mxu0 %v1294
      %v1367 = vpop.f32.mrf.mxu0
      %v1368 = vadd.f32 0.0, %v1367
      %1369 = vmatmul.f32.gmra.mxu0 %v1296
      %v1370 = vpop.f32.mrf.mxu0
      %v1371 = vadd.f32 0.0, %v1370
      %1372 = vmatmul.f32.gmra.mxu0 %v1298
      %v1373 = vpop.f32.mrf.mxu0
      %v1374 = vadd.f32 0.0, %v1373
      %1375 = vmatmul.f32.gmra.mxu0 %v1300
      %v1376 = vpop.f32.mrf.mxu0
      %v1377 = vadd.f32 0.0, %v1376
      %1378 = vmatmul.f32.gmra.mxu0 %v1302
      %v1379 = vpop.f32.mrf.mxu0
      %v1380 = vadd.f32 0.0, %v1379
      %1381 = vmatmul.f32.gmra.mxu0 %v1304
      %v1382 = vpop.f32.mrf.mxu0
      %v1383 = vadd.f32 0.0, %v1382
      %1384 = vmatmul.f32.gmra.mxu0 %v1306
      %v1385 = vpop.f32.mrf.mxu0
      %v1386 = vadd.f32 0.0, %v1385
      %1387 = vmatmul.f32.gmra.mxu0 %v1308
      %v1388 = vpop.f32.mrf.mxu0
      %v1389 = vadd.f32 0.0, %v1388
      %1390 = vmatmul.f32.gmra.mxu0 %v1310
      %v1391 = vpop.f32.mrf.mxu0
      %v1392 = vadd.f32 0.0, %v1391
      %1393 = vmatmul.f32.gmra.mxu0 %v1312
      %v1394 = vpop.f32.mrf.mxu0
      %v1395 = vadd.f32 0.0, %v1394
      %1396 = vmatmul.f32.gmra.mxu0 %v1314
      %v1397 = vpop.f32.mrf.mxu0
      %v1398 = vadd.f32 0.0, %v1397
      %1399 = vmatmul.f32.gmra.mxu0 %v1316
      %v1400 = vpop.f32.mrf.mxu0
      %v1401 = vadd.f32 0.0, %v1400
      %1402 = vmatmul.f32.gmra.mxu0 %v1318
      %v1403 = vpop.f32.mrf.mxu0
      %v1404 = vadd.f32 0.0, %v1403
      %1405 = vmatmul.f32.gmra.mxu0 %v1320
      %v1406 = vpop.f32.mrf.mxu0
      %v1407 = vadd.f32 0.0, %v1406
      %1408 = vmatmul.f32.gmra.mxu0 %v1322
      %v1409 = vpop.f32.mrf.mxu0
      %v1410 = vadd.f32 0.0, %v1409
      %1411 = vmatmul.f32.gmra.mxu0 %v1324
      %v1412 = vpop.f32.mrf.mxu0
      %v1413 = vadd.f32 0.0, %v1412
      %1414 = vmatmul.f32.gmra.mxu0 %v1326
      %v1415 = vpop.f32.mrf.mxu0
      %v1416 = vadd.f32 0.0, %v1415
      %1417 = vmatmul.f32.gmra.mxu0 %v1328
      %v1418 = vpop.f32.mrf.mxu0
      %v1419 = vadd.f32 0.0, %v1418
      %1420 = vmatmul.f32.gmra.mxu0 %v1330
      %v1421 = vpop.f32.mrf.mxu0
      %v1422 = vadd.f32 0.0, %v1421
      %1423 = vmatmul.f32.gmra.mxu0 %v1332
      %v1424 = vpop.f32.mrf.mxu0
      %v1425 = vadd.f32 0.0, %v1424
      %1426 = vmatmul.f32.gmra.mxu0 %v1334
      %v1427 = vpop.f32.mrf.mxu0
      %v1428 = vadd.f32 0.0, %v1427
      %1429 = vmatmul.f32.gmra.mxu0 %v1336
      %v1430 = vpop.f32.mrf.mxu0
      %v1431 = vadd.f32 0.0, %v1430
      %1432 = vdwg.mxu0
      %v1433 = vadd.f32 %v957, %v1359
      %v1434 = vadd.f32 %v960, %v1362
      %v1435 = vadd.f32 %v963, %v1365
      %v1436 = vadd.f32 %v966, %v1368
      %v1437 = vadd.f32 %v969, %v1371
      %v1438 = vadd.f32 %v972, %v1374
      %v1439 = vadd.f32 %v975, %v1377
      %v1440 = vadd.f32 %v978, %v1380
      %v1441 = vadd.f32 %v981, %v1383
      %v1442 = vadd.f32 %v984, %v1386
      %v1443 = vadd.f32 %v987, %v1389
      %v1444 = vadd.f32 %v990, %v1392
      %v1445 = vadd.f32 %v993, %v1395
      %v1446 = vadd.f32 %v996, %v1398
      %v1447 = vadd.f32 %v999, %v1401
      %v1448 = vadd.f32 %v1002, %v1404
      %v1449 = vadd.f32 %v1005, %v1407
      %v1450 = vadd.f32 %v1008, %v1410
      %v1451 = vadd.f32 %v1011, %v1413
      %v1452 = vadd.f32 %v1014, %v1416
      %v1453 = vadd.f32 %v1017, %v1419
      %v1454 = vadd.f32 %v1020, %v1422
      %v1455 = vadd.f32 %v1023, %v1425
      %v1456 = vadd.f32 %v1026, %v1428
      %v1457 = vadd.f32 %v1029, %v1431
      %s1458 = scalar_lea.vmem %s219, 16
      %v1459 = vld [vmem:[%s1458] sm:$0xff]
      %v1460 = vld [vmem:[%s1458 + $0x8] sm:$0x3f]
      %v1461 = vld [vmem:[%s1458 + $0x10] sm:$0xff]
      %v1462 = vld [vmem:[%s1458 + $0x18] sm:$0x3f]
      %v1463 = vld [vmem:[%s1458 + $0x20] sm:$0xff]
      %v1464 = vld [vmem:[%s1458 + $0x28] sm:$0x3f]
      %v1465 = vld [vmem:[%s1458 + $0x30] sm:$0xff]
      %v1466 = vld [vmem:[%s1458 + $0x38] sm:$0x3f]
      %v1467 = vld [vmem:[%s1458 + $0x40] sm:$0xff]
      %v1468 = vld [vmem:[%s1458 + $0x48] sm:$0x3f]
      %v1469 = vld [vmem:[%s1458 + $0x50] sm:$0xff]
      %v1470 = vld [vmem:[%s1458 + $0x58] sm:$0x3f]
      %v1471 = vld [vmem:[%s1458 + $0x60] sm:$0xff]
      %v1472 = vld [vmem:[%s1458 + $0x68] sm:$0x3f]
      %v1473 = vld [vmem:[%s1458 + $0x70] sm:$0xff]
      %v1474 = vld [vmem:[%s1458 + $0x78] sm:$0x3f]
      %v1475 = vld [vmem:[%s1458 + $0x80] sm:$0xff]
      %v1476 = vld [vmem:[%s1458 + $0x88] sm:$0x3f]
      %v1477 = vld [vmem:[%s1458 + $0x90] sm:$0xff]
      %v1478 = vld [vmem:[%s1458 + $0x98] sm:$0x3f]
      %v1479 = vld [vmem:[%s1458 + $0xa0] sm:$0xff]
      %v1480 = vld [vmem:[%s1458 + $0xa8] sm:$0x3f]
      %v1481 = vld [vmem:[%s1458 + $0xb0] sm:$0xff]
      %v1482 = vld [vmem:[%s1458 + $0xb8] sm:$0x3f]
      %v1483 = vld [vmem:[%s1458 + $0xc0] sm:$0xff]
      %v1484 = vld [vmem:[%s1458 + $0xc8] sm:$0x3f]
      %v1485 = vld [vmem:[%s1458 + $0xd0] sm:$0xff]
      %v1486 = vld [vmem:[%s1458 + $0xd8] sm:$0x3f]
      %v1515 = vrot.slane %v1459, 2
      %v1516 = vrot.slane %v1459, 4
      %v1517 = vrot.slane %v1459, 6
      %v1518 = vrot.slane %v1460, 2
      %v1519 = vrot.slane %v1460, 4
      %v1520 = vrot.slane %v1461, 2
      %v1521 = vrot.slane %v1461, 4
      %v1522 = vrot.slane %v1461, 6
      %v1523 = vrot.slane %v1462, 2
      %v1524 = vrot.slane %v1462, 4
      %v1525 = vrot.slane %v1463, 2
      %v1526 = vrot.slane %v1463, 4
      %v1527 = vrot.slane %v1463, 6
      %v1528 = vrot.slane %v1464, 2
      %v1529 = vrot.slane %v1464, 4
      %v1530 = vrot.slane %v1465, 2
      %v1531 = vrot.slane %v1465, 4
      %v1532 = vrot.slane %v1465, 6
      %v1533 = vrot.slane %v1466, 2
      %v1534 = vrot.slane %v1466, 4
      %v1535 = vrot.slane %v1467, 2
      %v1536 = vrot.slane %v1467, 4
      %v1537 = vrot.slane %v1467, 6
      %v1538 = vrot.slane %v1468, 2
      %v1539 = vrot.slane %v1468, 4
      %v1540 = vrot.slane %v1469, 2
      %v1541 = vrot.slane %v1469, 4
      %v1542 = vrot.slane %v1469, 6
      %v1543 = vrot.slane %v1470, 2
      %v1544 = vrot.slane %v1470, 4
      %v1545 = vrot.slane %v1471, 2
      %v1546 = vrot.slane %v1471, 4
      %v1547 = vrot.slane %v1471, 6
      %v1548 = vrot.slane %v1472, 2
      %v1549 = vrot.slane %v1472, 4
      %v1550 = vrot.slane %v1473, 2
      %v1551 = vrot.slane %v1473, 4
      %v1552 = vrot.slane %v1473, 6
      %v1553 = vrot.slane %v1474, 2
      %v1554 = vrot.slane %v1474, 4
      %v1555 = vrot.slane %v1475, 2
      %v1556 = vrot.slane %v1475, 4
      %v1557 = vrot.slane %v1475, 6
      %v1558 = vrot.slane %v1476, 2
      %v1559 = vrot.slane %v1476, 4
      %v1560 = vrot.slane %v1477, 2
      %v1561 = vrot.slane %v1477, 4
      %v1562 = vrot.slane %v1477, 6
      %v1563 = vrot.slane %v1478, 2
      %v1564 = vrot.slane %v1478, 4
      %v1565 = vrot.slane %v1479, 2
      %v1566 = vrot.slane %v1479, 4
      %v1567 = vrot.slane %v1479, 6
      %v1568 = vrot.slane %v1480, 2
      %v1569 = vrot.slane %v1480, 4
      %v1570 = vrot.slane %v1481, 2
      %v1571 = vrot.slane %v1481, 4
      %v1572 = vrot.slane %v1481, 6
      %v1573 = vrot.slane %v1482, 2
      %v1574 = vrot.slane %v1482, 4
      %v1575 = vrot.slane %v1483, 2
      %v1576 = vrot.slane %v1483, 4
      %v1577 = vrot.slane %v1483, 6
      %v1578 = vrot.slane %v1484, 2
      %v1579 = vrot.slane %v1484, 4
      %v1580 = vrot.slane %v1485, 2
      %v1581 = vrot.slane %v1485, 4
      %v1582 = vrot.slane %v1485, 6
      %v1583 = vrot.slane %v1486, 2
      %v1584 = vrot.slane %v1486, 4
      %v1585 = vld [vmem:[%s1 + $0xc] sm:$0xf]
      %1586 = vst [vmem:[#allocation1] ss:$4 sm:$0xff] %v1459
      %s1587 = scalar_lea.vmem [#allocation1], 1
      %1588 = vst [vmem:[%s1587] ss:$4 sm:$0xff] %v1515
      %s1589 = scalar_lea.vmem [#allocation1], 2
      %1590 = vst [vmem:[%s1589] ss:$4 sm:$0xff] %v1516
      %s1591 = scalar_lea.vmem [#allocation1], 3
      %1592 = vst [vmem:[%s1591] ss:$4 sm:$0xff] %v1517
      %s1593 = scalar_lea.vmem [#allocation1], 32
      %1594 = vst [vmem:[%s1593] ss:$4 sm:$0xff] %v1460
      %s1595 = scalar_lea.vmem [#allocation1], 33
      %1596 = vst [vmem:[%s1595] ss:$4 sm:$0xff] %v1518
      %s1597 = scalar_lea.vmem [#allocation1], 34
      %1598 = vst [vmem:[%s1597] ss:$4 sm:$0xff] %v1519
      %s1599 = scalar_lea.vmem [#allocation1], 35
      %1600 = vst [vmem:[%s1599] ss:$4 sm:$0xff] %v1461
      %v1601 = vld.sshfl [vmem:[#allocation1] sm:$0xff pattern:$0x73625140]
      %v1602 = vld.sshfl [vmem:[#allocation1 + $0x20] sm:$0xff pattern:$0x73625140]
      %1603 = vst [vmem:[#allocation1] ss:$4 sm:$0xff] %v1520
      %1604 = vst [vmem:[%s1587] ss:$4 sm:$0xff] %v1521
      %1605 = vst [vmem:[%s1589] ss:$4 sm:$0xff] %v1522
      %1606 = vst [vmem:[%s1591] ss:$4 sm:$0xff] %v1462
      %1607 = vst [vmem:[%s1593] ss:$4 sm:$0xff] %v1523
      %1608 = vst [vmem:[%s1595] ss:$4 sm:$0xff] %v1524
      %1609 = vst [vmem:[%s1597] ss:$4 sm:$0xff] %v1463
      %1610 = vst [vmem:[%s1599] ss:$4 sm:$0xff] %v1525
      %v1611 = vld.sshfl [vmem:[#allocation1] sm:$0xff pattern:$0x73625140]
      %v1612 = vld.sshfl [vmem:[#allocation1 + $0x20] sm:$0xff pattern:$0x73625140]
      %1613 = vst [vmem:[#allocation1] ss:$4 sm:$0xff] %v1526
      %1614 = vst [vmem:[%s1587] ss:$4 sm:$0xff] %v1527
      %1615 = vst [vmem:[%s1589] ss:$4 sm:$0xff] %v1464
      %1616 = vst [vmem:[%s1591] ss:$4 sm:$0xff] %v1528
      %1617 = vst [vmem:[%s1593] ss:$4 sm:$0xff] %v1529
      %1618 = vst [vmem:[%s1595] ss:$4 sm:$0xff] %v1465
      %1619 = vst [vmem:[%s1597] ss:$4 sm:$0xff] %v1530
      %1620 = vst [vmem:[%s1599] ss:$4 sm:$0xff] %v1531
      %v1621 = vld.sshfl [vmem:[#allocation1] sm:$0xff pattern:$0x73625140]
      %v1622 = vld.sshfl [vmem:[#allocation1 + $0x20] sm:$0xff pattern:$0x73625140]
      %1623 = vst [vmem:[#allocation1] ss:$4 sm:$0xff] %v1532
      %1624 = vst [vmem:[%s1587] ss:$4 sm:$0xff] %v1466
      %1625 = vst [vmem:[%s1589] ss:$4 sm:$0xff] %v1533
      %1626 = vst [vmem:[%s1591] ss:$4 sm:$0xff] %v1534
      %1627 = vst [vmem:[%s1593] ss:$4 sm:$0xff] %v1467
      %1628 = vst [vmem:[%s1595] ss:$4 sm:$0xff] %v1535
      %1629 = vst [vmem:[%s1597] ss:$4 sm:$0xff] %v1536
      %1630 = vst [vmem:[%s1599] ss:$4 sm:$0xff] %v1537
      %v1631 = vld.sshfl [vmem:[#allocation1] sm:$0xff pattern:$0x73625140]
      %v1632 = vld.sshfl [vmem:[#allocation1 + $0x20] sm:$0xff pattern:$0x73625140]
      %1633 = vst [vmem:[#allocation1] ss:$4 sm:$0xff] %v1468
      %1634 = vst [vmem:[%s1587] ss:$4 sm:$0xff] %v1538
      %1635 = vst [vmem:[%s1589] ss:$4 sm:$0xff] %v1539
      %1636 = vst [vmem:[%s1591] ss:$4 sm:$0xff] %v1469
      %1637 = vst [vmem:[%s1593] ss:$4 sm:$0xff] %v1540
      %1638 = vst [vmem:[%s1595] ss:$4 sm:$0xff] %v1541
      %1639 = vst [vmem:[%s1597] ss:$4 sm:$0xff] %v1542
      %1640 = vst [vmem:[%s1599] ss:$4 sm:$0xff] %v1470
      %v1641 = vld.sshfl [vmem:[#allocation1] sm:$0xff pattern:$0x73625140]
      %v1642 = vld.sshfl [vmem:[#allocation1 + $0x20] sm:$0xff pattern:$0x73625140]
      %1643 = vst [vmem:[#allocation1] ss:$4 sm:$0xff] %v1543
      %1644 = vst [vmem:[%s1587] ss:$4 sm:$0xff] %v1544
      %1645 = vst [vmem:[%s1589] ss:$4 sm:$0xff] %v1471
      %1646 = vst [vmem:[%s1591] ss:$4 sm:$0xff] %v1545
      %1647 = vst [vmem:[%s1593] ss:$4 sm:$0xff] %v1546
      %1648 = vst [vmem:[%s1595] ss:$4 sm:$0xff] %v1547
      %1649 = vst [vmem:[%s1597] ss:$4 sm:$0xff] %v1472
      %1650 = vst [vmem:[%s1599] ss:$4 sm:$0xff] %v1548
      %v1651 = vld.sshfl [vmem:[#allocation1] sm:$0xff pattern:$0x73625140]
      %v1652 = vld.sshfl [vmem:[#allocation1 + $0x20] sm:$0xff pattern:$0x73625140]
      %1653 = vst [vmem:[#allocation1] ss:$4 sm:$0xff] %v1549
      %1654 = vst [vmem:[%s1587] ss:$4 sm:$0xff] %v1473
      %1655 = vst [vmem:[%s1589] ss:$4 sm:$0xff] %v1550
      %1656 = vst [vmem:[%s1591] ss:$4 sm:$0xff] %v1551
      %1657 = vst [vmem:[%s1593] ss:$4 sm:$0xff] %v1552
      %1658 = vst [vmem:[%s1595] ss:$4 sm:$0xff] %v1474
      %1659 = vst [vmem:[%s1597] ss:$4 sm:$0xff] %v1553
      %1660 = vst [vmem:[%s1599] ss:$4 sm:$0xff] %v1554
      %v1661 = vld.sshfl [vmem:[#allocation1] sm:$0xff pattern:$0x73625140]
      %v1662 = vld.sshfl [vmem:[#allocation1 + $0x20] sm:$0xff pattern:$0x73625140]
      %1663 = vst [vmem:[#allocation1] ss:$4 sm:$0xff] %v1475
      %1664 = vst [vmem:[%s1587] ss:$4 sm:$0xff] %v1555
      %1665 = vst [vmem:[%s1589] ss:$4 sm:$0xff] %v1556
      %1666 = vst [vmem:[%s1591] ss:$4 sm:$0xff] %v1557
      %1667 = vst [vmem:[%s1593] ss:$4 sm:$0xff] %v1476
      %1668 = vst [vmem:[%s1595] ss:$4 sm:$0xff] %v1558
      %1669 = vst [vmem:[%s1597] ss:$4 sm:$0xff] %v1559
      %1670 = vst [vmem:[%s1599] ss:$4 sm:$0xff] %v1477
      %v1671 = vld.sshfl [vmem:[#allocation1] sm:$0xff pattern:$0x73625140]
      %v1672 = vld.sshfl [vmem:[#allocation1 + $0x20] sm:$0xff pattern:$0x73625140]
      %1673 = vst [vmem:[#allocation1] ss:$4 sm:$0xff] %v1560
      %1674 = vst [vmem:[%s1587] ss:$4 sm:$0xff] %v1561
      %1675 = vst [vmem:[%s1589] ss:$4 sm:$0xff] %v1562
      %1676 = vst [vmem:[%s1591] ss:$4 sm:$0xff] %v1478
      %1677 = vst [vmem:[%s1593] ss:$4 sm:$0xff] %v1563
      %1678 = vst [vmem:[%s1595] ss:$4 sm:$0xff] %v1564
      %1679 = vst [vmem:[%s1597] ss:$4 sm:$0xff] %v1479
      %1680 = vst [vmem:[%s1599] ss:$4 sm:$0xff] %v1565
      %v1681 = vld.sshfl [vmem:[#allocation1] sm:$0xff pattern:$0x73625140]
      %v1682 = vld.sshfl [vmem:[#allocation1 + $0x20] sm:$0xff pattern:$0x73625140]
      %1683 = vst [vmem:[#allocation1] ss:$4 sm:$0xff] %v1566
      %1684 = vst [vmem:[%s1587] ss:$4 sm:$0xff] %v1567
      %1685 = vst [vmem:[%s1589] ss:$4 sm:$0xff] %v1480
      %1686 = vst [vmem:[%s1591] ss:$4 sm:$0xff] %v1568
      %1687 = vst [vmem:[%s1593] ss:$4 sm:$0xff] %v1569
      %1688 = vst [vmem:[%s1595] ss:$4 sm:$0xff] %v1481
      %1689 = vst [vmem:[%s1597] ss:$4 sm:$0xff] %v1570
      %1690 = vst [vmem:[%s1599] ss:$4 sm:$0xff] %v1571
      %v1691 = vld.sshfl [vmem:[#allocation1] sm:$0xff pattern:$0x73625140]
      %v1692 = vld.sshfl [vmem:[#allocation1 + $0x20] sm:$0xff pattern:$0x73625140]
      %1693 = vst [vmem:[#allocation1] ss:$4 sm:$0xff] %v1572
      %1694 = vst [vmem:[%s1587] ss:$4 sm:$0xff] %v1482
      %1695 = vst [vmem:[%s1589] ss:$4 sm:$0xff] %v1573
      %1696 = vst [vmem:[%s1591] ss:$4 sm:$0xff] %v1574
      %1697 = vst [vmem:[%s1593] ss:$4 sm:$0xff] %v1483
      %1698 = vst [vmem:[%s1595] ss:$4 sm:$0xff] %v1575
      %1699 = vst [vmem:[%s1597] ss:$4 sm:$0xff] %v1576
      %1700 = vst [vmem:[%s1599] ss:$4 sm:$0xff] %v1577
      %v1701 = vld.sshfl [vmem:[#allocation1] sm:$0xff pattern:$0x73625140]
      %v1702 = vld.sshfl [vmem:[#allocation1 + $0x20] sm:$0xff pattern:$0x73625140]
      %1703 = vst [vmem:[#allocation1] ss:$4 sm:$0xff] %v1484
      %1704 = vst [vmem:[%s1587] ss:$4 sm:$0xff] %v1578
      %1705 = vst [vmem:[%s1589] ss:$4 sm:$0xff] %v1579
      %1706 = vst [vmem:[%s1591] ss:$4 sm:$0xff] %v1485
      %1707 = vst [vmem:[%s1593] ss:$4 sm:$0xff] %v1580
      %1708 = vst [vmem:[%s1595] ss:$4 sm:$0xff] %v1581
      %1709 = vst [vmem:[%s1597] ss:$4 sm:$0xff] %v1582
      %1710 = vst [vmem:[%s1599] ss:$4 sm:$0xff] %v1486
      %v1711 = vld.sshfl [vmem:[#allocation1] sm:$0xff pattern:$0x73625140]
      %v1712 = vld.sshfl [vmem:[#allocation1 + $0x20] sm:$0xff pattern:$0x73625140]
      %1713 = vst [vmem:[#allocation1] ss:$4 sm:$0xff] %v1583
      %1714 = vst [vmem:[%s1587] ss:$4 sm:$0xff] %v1584
      %v1715 = vld.sshfl [vmem:[#allocation1] sm:$0xff pattern:$0x73625140]
      %v1716 = vsel %vm609, %v1601, 0
      %v1718 = vsel %vm609, %v1602, 0
      %v1720 = vsel %vm609, %v1611, 0
      %v1722 = vsel %vm609, %v1612, 0
      %v1724 = vsel %vm609, %v1621, 0
      %v1726 = vsel %vm609, %v1622, 0
      %v1728 = vsel %vm609, %v1631, 0
      %v1730 = vsel %vm609, %v1632, 0
      %v1732 = vsel %vm609, %v1641, 0
      %v1734 = vsel %vm609, %v1642, 0
      %v1736 = vsel %vm609, %v1651, 0
      %v1738 = vsel %vm609, %v1652, 0
      %v1740 = vsel %vm609, %v1661, 0
      %v1742 = vsel %vm609, %v1662, 0
      %v1744 = vsel %vm609, %v1671, 0
      %v1746 = vsel %vm609, %v1672, 0
      %v1748 = vsel %vm609, %v1681, 0
      %v1750 = vsel %vm609, %v1682, 0
      %v1752 = vsel %vm609, %v1691, 0
      %v1754 = vsel %vm609, %v1692, 0
      %v1756 = vsel %vm609, %v1701, 0
      %v1758 = vsel %vm609, %v1702, 0
      %v1760 = vsel %vm609, %v1711, 0
      %v1762 = vsel %vm609, %v1712, 0
      %v1764 = vsel %vm609, %v1715, 0
      %v1767 = vsel %vm660, %v1585, 0
      %1769 = vmatpush.msra.mxu0 0.0
      %1770 = vmatpush.msra.mxu0 0.0
      %1771 = vmatpush.msra.mxu0 0.0
      %1772 = vmatpush.msra.mxu0 0.0
      %1773 = vmatpush.msra.mxu0 0.0
      %1774 = vmatpush.msra.mxu0 0.0
      %1775 = vmatpush.msra.mxu0 0.0
      %1776 = vmatpush.msra.mxu0 0.0
      %1777 = vmatpush.msra.mxu0 0.0
      %1778 = vmatpush.msra.mxu0 0.0
      %1779 = vmatpush.msra.mxu0 0.0
      %1780 = vmatpush.msra.mxu0 0.0
      %1781 = vmatpush.msra.mxu0 0.0
      %1782 = vmatpush.msra.mxu0 0.0
      %1783 = vmatpush.msra.mxu0 0.0
      %1784 = vmatpush.msra.mxu0 %v1767
      %1785 = vmatmul.f32.gmra.mxu0 %v1716
      %v1786 = vpop.f32.mrf.mxu0
      %v1787 = vadd.f32 0.0, %v1786
      %1788 = vmatmul.f32.gmra.mxu0 %v1718
      %v1789 = vpop.f32.mrf.mxu0
      %v1790 = vadd.f32 0.0, %v1789
      %1791 = vmatmul.f32.gmra.mxu0 %v1720
      %v1792 = vpop.f32.mrf.mxu0
      %v1793 = vadd.f32 0.0, %v1792
      %1794 = vmatmul.f32.gmra.mxu0 %v1722
      %v1795 = vpop.f32.mrf.mxu0
      %v1796 = vadd.f32 0.0, %v1795
      %1797 = vmatmul.f32.gmra.mxu0 %v1724
      %v1798 = vpop.f32.mrf.mxu0
      %v1799 = vadd.f32 0.0, %v1798
      %1800 = vmatmul.f32.gmra.mxu0 %v1726
      %v1801 = vpop.f32.mrf.mxu0
      %v1802 = vadd.f32 0.0, %v1801
      %1803 = vmatmul.f32.gmra.mxu0 %v1728
      %v1804 = vpop.f32.mrf.mxu0
      %v1805 = vadd.f32 0.0, %v1804
      %1806 = vmatmul.f32.gmra.mxu0 %v1730
      %v1807 = vpop.f32.mrf.mxu0
      %v1808 = vadd.f32 0.0, %v1807
      %1809 = vmatmul.f32.gmra.mxu0 %v1732
      %v1810 = vpop.f32.mrf.mxu0
      %v1811 = vadd.f32 0.0, %v1810
      %1812 = vmatmul.f32.gmra.mxu0 %v1734
      %v1813 = vpop.f32.mrf.mxu0
      %v1814 = vadd.f32 0.0, %v1813
      %1815 = vmatmul.f32.gmra.mxu0 %v1736
      %v1816 = vpop.f32.mrf.mxu0
      %v1817 = vadd.f32 0.0, %v1816
      %1818 = vmatmul.f32.gmra.mxu0 %v1738
      %v1819 = vpop.f32.mrf.mxu0
      %v1820 = vadd.f32 0.0, %v1819
      %1821 = vmatmul.f32.gmra.mxu0 %v1740
      %v1822 = vpop.f32.mrf.mxu0
      %v1823 = vadd.f32 0.0, %v1822
      %1824 = vmatmul.f32.gmra.mxu0 %v1742
      %v1825 = vpop.f32.mrf.mxu0
      %v1826 = vadd.f32 0.0, %v1825
      %1827 = vmatmul.f32.gmra.mxu0 %v1744
      %v1828 = vpop.f32.mrf.mxu0
      %v1829 = vadd.f32 0.0, %v1828
      %1830 = vmatmul.f32.gmra.mxu0 %v1746
      %v1831 = vpop.f32.mrf.mxu0
      %v1832 = vadd.f32 0.0, %v1831
      %1833 = vmatmul.f32.gmra.mxu0 %v1748
      %v1834 = vpop.f32.mrf.mxu0
      %v1835 = vadd.f32 0.0, %v1834
      %1836 = vmatmul.f32.gmra.mxu0 %v1750
      %v1837 = vpop.f32.mrf.mxu0
      %v1838 = vadd.f32 0.0, %v1837
      %1839 = vmatmul.f32.gmra.mxu0 %v1752
      %v1840 = vpop.f32.mrf.mxu0
      %v1841 = vadd.f32 0.0, %v1840
      %1842 = vmatmul.f32.gmra.mxu0 %v1754
      %v1843 = vpop.f32.mrf.mxu0
      %v1844 = vadd.f32 0.0, %v1843
      %1845 = vmatmul.f32.gmra.mxu0 %v1756
      %v1846 = vpop.f32.mrf.mxu0
      %v1847 = vadd.f32 0.0, %v1846
      %1848 = vmatmul.f32.gmra.mxu0 %v1758
      %v1849 = vpop.f32.mrf.mxu0
      %v1850 = vadd.f32 0.0, %v1849
      %1851 = vmatmul.f32.gmra.mxu0 %v1760
      %v1852 = vpop.f32.mrf.mxu0
      %v1853 = vadd.f32 0.0, %v1852
      %1854 = vmatmul.f32.gmra.mxu0 %v1762
      %v1855 = vpop.f32.mrf.mxu0
      %v1856 = vadd.f32 0.0, %v1855
      %1857 = vmatmul.f32.gmra.mxu0 %v1764
      %v1858 = vpop.f32.mrf.mxu0
      %v1859 = vadd.f32 0.0, %v1858
      %1860 = vdwg.mxu0
      %v1861 = vadd.f32 %v1433, %v1787
      %v1862 = vadd.f32 %v1434, %v1790
      %v1863 = vadd.f32 %v1435, %v1793
      %v1864 = vadd.f32 %v1436, %v1796
      %v1865 = vadd.f32 %v1437, %v1799
      %v1866 = vadd.f32 %v1438, %v1802
      %v1867 = vadd.f32 %v1439, %v1805
      %v1868 = vadd.f32 %v1440, %v1808
      %v1869 = vadd.f32 %v1441, %v1811
      %v1870 = vadd.f32 %v1442, %v1814
      %v1871 = vadd.f32 %v1443, %v1817
      %v1872 = vadd.f32 %v1444, %v1820
      %v1873 = vadd.f32 %v1445, %v1823
      %v1874 = vadd.f32 %v1446, %v1826
      %v1875 = vadd.f32 %v1447, %v1829
      %v1876 = vadd.f32 %v1448, %v1832
      %v1877 = vadd.f32 %v1449, %v1835
      %v1878 = vadd.f32 %v1450, %v1838
      %v1879 = vadd.f32 %v1451, %v1841
      %v1880 = vadd.f32 %v1452, %v1844
      %v1881 = vadd.f32 %v1453, %v1847
      %v1882 = vadd.f32 %v1454, %v1850
      %v1883 = vadd.f32 %v1455, %v1853
      %v1884 = vadd.f32 %v1456, %v1856
      %v1885 = vadd.f32 %v1457, %v1859
      %v1886 = vld [vmem:[%s1458 + $0x1] sm:$0xff]
      %v1887 = vld [vmem:[%s1458 + $0x9] sm:$0x3f]
      %v1888 = vld [vmem:[%s1458 + $0x11] sm:$0xff]
      %v1889 = vld [vmem:[%s1458 + $0x19] sm:$0x3f]
      %v1890 = vld [vmem:[%s1458 + $0x21] sm:$0xff]
      %v1891 = vld [vmem:[%s1458 + $0x29] sm:$0x3f]
      %v1892 = vld [vmem:[%s1458 + $0x31] sm:$0xff]
      %v1893 = vld [vmem:[%s1458 + $0x39] sm:$0x3f]
      %v1894 = vld [vmem:[%s1458 + $0x41] sm:$0xff]
      %v1895 = vld [vmem:[%s1458 + $0x49] sm:$0x3f]
      %v1896 = vld [vmem:[%s1458 + $0x51] sm:$0xff]
      %v1897 = vld [vmem:[%s1458 + $0x59] sm:$0x3f]
      %v1898 = vld [vmem:[%s1458 + $0x61] sm:$0xff]
      %v1899 = vld [vmem:[%s1458 + $0x69] sm:$0x3f]
      %v1900 = vld [vmem:[%s1458 + $0x71] sm:$0xff]
      %v1901 = vld [vmem:[%s1458 + $0x79] sm:$0x3f]
      %v1902 = vld [vmem:[%s1458 + $0x81] sm:$0xff]
      %v1903 = vld [vmem:[%s1458 + $0x89] sm:$0x3f]
      %v1904 = vld [vmem:[%s1458 + $0x91] sm:$0xff]
      %v1905 = vld [vmem:[%s1458 + $0x99] sm:$0x3f]
      %v1906 = vld [vmem:[%s1458 + $0xa1] sm:$0xff]
      %v1907 = vld [vmem:[%s1458 + $0xa9] sm:$0x3f]
      %v1908 = vld [vmem:[%s1458 + $0xb1] sm:$0xff]
      %v1909 = vld [vmem:[%s1458 + $0xb9] sm:$0x3f]
      %v1910 = vld [vmem:[%s1458 + $0xc1] sm:$0xff]
      %v1911 = vld [vmem:[%s1458 + $0xc9] sm:$0x3f]
      %v1912 = vld [vmem:[%s1458 + $0xd1] sm:$0xff]
      %v1913 = vld [vmem:[%s1458 + $0xd9] sm:$0x3f]
      %v1942 = vrot.slane %v1886, 2
      %v1943 = vrot.slane %v1886, 4
      %v1944 = vrot.slane %v1886, 6
      %v1945 = vrot.slane %v1887, 2
      %v1946 = vrot.slane %v1887, 4
      %v1947 = vrot.slane %v1888, 2
      %v1948 = vrot.slane %v1888, 4
      %v1949 = vrot.slane %v1888, 6
      %v1950 = vrot.slane %v1889, 2
      %v1951 = vrot.slane %v1889, 4
      %v1952 = vrot.slane %v1890, 2
      %v1953 = vrot.slane %v1890, 4
      %v1954 = vrot.slane %v1890, 6
      %v1955 = vrot.slane %v1891, 2
      %v1956 = vrot.slane %v1891, 4
      %v1957 = vrot.slane %v1892, 2
      %v1958 = vrot.slane %v1892, 4
      %v1959 = vrot.slane %v1892, 6
      %v1960 = vrot.slane %v1893, 2
      %v1961 = vrot.slane %v1893, 4
      %v1962 = vrot.slane %v1894, 2
      %v1963 = vrot.slane %v1894, 4
      %v1964 = vrot.slane %v1894, 6
      %v1965 = vrot.slane %v1895, 2
      %v1966 = vrot.slane %v1895, 4
      %v1967 = vrot.slane %v1896, 2
      %v1968 = vrot.slane %v1896, 4
      %v1969 = vrot.slane %v1896, 6
      %v1970 = vrot.slane %v1897, 2
      %v1971 = vrot.slane %v1897, 4
      %v1972 = vrot.slane %v1898, 2
      %v1973 = vrot.slane %v1898, 4
      %v1974 = vrot.slane %v1898, 6
      %v1975 = vrot.slane %v1899, 2
      %v1976 = vrot.slane %v1899, 4
      %v1977 = vrot.slane %v1900, 2
      %v1978 = vrot.slane %v1900, 4
      %v1979 = vrot.slane %v1900, 6
      %v1980 = vrot.slane %v1901, 2
      %v1981 = vrot.slane %v1901, 4
      %v1982 = vrot.slane %v1902, 2
      %v1983 = vrot.slane %v1902, 4
      %v1984 = vrot.slane %v1902, 6
      %v1985 = vrot.slane %v1903, 2
      %v1986 = vrot.slane %v1903, 4
      %v1987 = vrot.slane %v1904, 2
      %v1988 = vrot.slane %v1904, 4
      %v1989 = vrot.slane %v1904, 6
      %v1990 = vrot.slane %v1905, 2
      %v1991 = vrot.slane %v1905, 4
      %v1992 = vrot.slane %v1906, 2
      %v1993 = vrot.slane %v1906, 4
      %v1994 = vrot.slane %v1906, 6
      %v1995 = vrot.slane %v1907, 2
      %v1996 = vrot.slane %v1907, 4
      %v1997 = vrot.slane %v1908, 2
      %v1998 = vrot.slane %v1908, 4
      %v1999 = vrot.slane %v1908, 6
      %v2000 = vrot.slane %v1909, 2
      %v2001 = vrot.slane %v1909, 4
      %v2002 = vrot.slane %v1910, 2
      %v2003 = vrot.slane %v1910, 4
      %v2004 = vrot.slane %v1910, 6
      %v2005 = vrot.slane %v1911, 2
      %v2006 = vrot.slane %v1911, 4
      %v2007 = vrot.slane %v1912, 2
      %v2008 = vrot.slane %v1912, 4
      %v2009 = vrot.slane %v1912, 6
      %v2010 = vrot.slane %v1913, 2
      %v2011 = vrot.slane %v1913, 4
      %v2012 = vld [vmem:[%s1 + $0x10] sm:$0xf]
      %2013 = vst [vmem:[#allocation1] ss:$4 sm:$0xff] %v1886
      %s2014 = scalar_lea.vmem [#allocation1], 1
      %2015 = vst [vmem:[%s2014] ss:$4 sm:$0xff] %v1942
      %s2016 = scalar_lea.vmem [#allocation1], 2
      %2017 = vst [vmem:[%s2016] ss:$4 sm:$0xff] %v1943
      %s2018 = scalar_lea.vmem [#allocation1], 3
      %2019 = vst [vmem:[%s2018] ss:$4 sm:$0xff] %v1944
      %s2020 = scalar_lea.vmem [#allocation1], 32
      %2021 = vst [vmem:[%s2020] ss:$4 sm:$0xff] %v1887
      %s2022 = scalar_lea.vmem [#allocation1], 33
      %2023 = vst [vmem:[%s2022] ss:$4 sm:$0xff] %v1945
      %s2024 = scalar_lea.vmem [#allocation1], 34
      %2025 = vst [vmem:[%s2024] ss:$4 sm:$0xff] %v1946
      %s2026 = scalar_lea.vmem [#allocation1], 35
      %2027 = vst [vmem:[%s2026] ss:$4 sm:$0xff] %v1888
      %v2028 = vld.sshfl [vmem:[#allocation1] sm:$0xff pattern:$0x73625140]
      %v2029 = vld.sshfl [vmem:[#allocation1 + $0x20] sm:$0xff pattern:$0x73625140]
      %2030 = vst [vmem:[#allocation1] ss:$4 sm:$0xff] %v1947
      %2031 = vst [vmem:[%s2014] ss:$4 sm:$0xff] %v1948
      %2032 = vst [vmem:[%s2016] ss:$4 sm:$0xff] %v1949
      %2033 = vst [vmem:[%s2018] ss:$4 sm:$0xff] %v1889
      %2034 = vst [vmem:[%s2020] ss:$4 sm:$0xff] %v1950
      %2035 = vst [vmem:[%s2022] ss:$4 sm:$0xff] %v1951
      %2036 = vst [vmem:[%s2024] ss:$4 sm:$0xff] %v1890
      %2037 = vst [vmem:[%s2026] ss:$4 sm:$0xff] %v1952
      %v2038 = vld.sshfl [vmem:[#allocation1] sm:$0xff pattern:$0x73625140]
      %v2039 = vld.sshfl [vmem:[#allocation1 + $0x20] sm:$0xff pattern:$0x73625140]
      %2040 = vst [vmem:[#allocation1] ss:$4 sm:$0xff] %v1953
      %2041 = vst [vmem:[%s2014] ss:$4 sm:$0xff] %v1954
      %2042 = vst [vmem:[%s2016] ss:$4 sm:$0xff] %v1891
      %2043 = vst [vmem:[%s2018] ss:$4 sm:$0xff] %v1955
      %2044 = vst [vmem:[%s2020] ss:$4 sm:$0xff] %v1956
      %2045 = vst [vmem:[%s2022] ss:$4 sm:$0xff] %v1892
      %2046 = vst [vmem:[%s2024] ss:$4 sm:$0xff] %v1957
      %2047 = vst [vmem:[%s2026] ss:$4 sm:$0xff] %v1958
      %v2048 = vld.sshfl [vmem:[#allocation1] sm:$0xff pattern:$0x73625140]
      %v2049 = vld.sshfl [vmem:[#allocation1 + $0x20] sm:$0xff pattern:$0x73625140]
      %2050 = vst [vmem:[#allocation1] ss:$4 sm:$0xff] %v1959
      %2051 = vst [vmem:[%s2014] ss:$4 sm:$0xff] %v1893
      %2052 = vst [vmem:[%s2016] ss:$4 sm:$0xff] %v1960
      %2053 = vst [vmem:[%s2018] ss:$4 sm:$0xff] %v1961
      %2054 = vst [vmem:[%s2020] ss:$4 sm:$0xff] %v1894
      %2055 = vst [vmem:[%s2022] ss:$4 sm:$0xff] %v1962
      %2056 = vst [vmem:[%s2024] ss:$4 sm:$0xff] %v1963
      %2057 = vst [vmem:[%s2026] ss:$4 sm:$0xff] %v1964
      %v2058 = vld.sshfl [vmem:[#allocation1] sm:$0xff pattern:$0x73625140]
      %v2059 = vld.sshfl [vmem:[#allocation1 + $0x20] sm:$0xff pattern:$0x73625140]
      %2060 = vst [vmem:[#allocation1] ss:$4 sm:$0xff] %v1895
      %2061 = vst [vmem:[%s2014] ss:$4 sm:$0xff] %v1965
      %2062 = vst [vmem:[%s2016] ss:$4 sm:$0xff] %v1966
      %2063 = vst [vmem:[%s2018] ss:$4 sm:$0xff] %v1896
      %2064 = vst [vmem:[%s2020] ss:$4 sm:$0xff] %v1967
      %2065 = vst [vmem:[%s2022] ss:$4 sm:$0xff] %v1968
      %2066 = vst [vmem:[%s2024] ss:$4 sm:$0xff] %v1969
      %2067 = vst [vmem:[%s2026] ss:$4 sm:$0xff] %v1897
      %v2068 = vld.sshfl [vmem:[#allocation1] sm:$0xff pattern:$0x73625140]
      %v2069 = vld.sshfl [vmem:[#allocation1 + $0x20] sm:$0xff pattern:$0x73625140]
      %2070 = vst [vmem:[#allocation1] ss:$4 sm:$0xff] %v1970
      %2071 = vst [vmem:[%s2014] ss:$4 sm:$0xff] %v1971
      %2072 = vst [vmem:[%s2016] ss:$4 sm:$0xff] %v1898
      %2073 = vst [vmem:[%s2018] ss:$4 sm:$0xff] %v1972
      %2074 = vst [vmem:[%s2020] ss:$4 sm:$0xff] %v1973
      %2075 = vst [vmem:[%s2022] ss:$4 sm:$0xff] %v1974
      %2076 = vst [vmem:[%s2024] ss:$4 sm:$0xff] %v1899
      %2077 = vst [vmem:[%s2026] ss:$4 sm:$0xff] %v1975
      %v2078 = vld.sshfl [vmem:[#allocation1] sm:$0xff pattern:$0x73625140]
      %v2079 = vld.sshfl [vmem:[#allocation1 + $0x20] sm:$0xff pattern:$0x73625140]
      %2080 = vst [vmem:[#allocation1] ss:$4 sm:$0xff] %v1976
      %2081 = vst [vmem:[%s2014] ss:$4 sm:$0xff] %v1900
      %2082 = vst [vmem:[%s2016] ss:$4 sm:$0xff] %v1977
      %2083 = vst [vmem:[%s2018] ss:$4 sm:$0xff] %v1978
      %2084 = vst [vmem:[%s2020] ss:$4 sm:$0xff] %v1979
      %2085 = vst [vmem:[%s2022] ss:$4 sm:$0xff] %v1901
      %2086 = vst [vmem:[%s2024] ss:$4 sm:$0xff] %v1980
      %2087 = vst [vmem:[%s2026] ss:$4 sm:$0xff] %v1981
      %v2088 = vld.sshfl [vmem:[#allocation1] sm:$0xff pattern:$0x73625140]
      %v2089 = vld.sshfl [vmem:[#allocation1 + $0x20] sm:$0xff pattern:$0x73625140]
      %2090 = vst [vmem:[#allocation1] ss:$4 sm:$0xff] %v1902
      %2091 = vst [vmem:[%s2014] ss:$4 sm:$0xff] %v1982
      %2092 = vst [vmem:[%s2016] ss:$4 sm:$0xff] %v1983
      %2093 = vst [vmem:[%s2018] ss:$4 sm:$0xff] %v1984
      %2094 = vst [vmem:[%s2020] ss:$4 sm:$0xff] %v1903
      %2095 = vst [vmem:[%s2022] ss:$4 sm:$0xff] %v1985
      %2096 = vst [vmem:[%s2024] ss:$4 sm:$0xff] %v1986
      %2097 = vst [vmem:[%s2026] ss:$4 sm:$0xff] %v1904
      %v2098 = vld.sshfl [vmem:[#allocation1] sm:$0xff pattern:$0x73625140]
      %v2099 = vld.sshfl [vmem:[#allocation1 + $0x20] sm:$0xff pattern:$0x73625140]
      %2100 = vst [vmem:[#allocation1] ss:$4 sm:$0xff] %v1987
      %2101 = vst [vmem:[%s2014] ss:$4 sm:$0xff] %v1988
      %2102 = vst [vmem:[%s2016] ss:$4 sm:$0xff] %v1989
      %2103 = vst [vmem:[%s2018] ss:$4 sm:$0xff] %v1905
      %2104 = vst [vmem:[%s2020] ss:$4 sm:$0xff] %v1990
      %2105 = vst [vmem:[%s2022] ss:$4 sm:$0xff] %v1991
      %2106 = vst [vmem:[%s2024] ss:$4 sm:$0xff] %v1906
      %2107 = vst [vmem:[%s2026] ss:$4 sm:$0xff] %v1992
      %v2108 = vld.sshfl [vmem:[#allocation1] sm:$0xff pattern:$0x73625140]
      %v2109 = vld.sshfl [vmem:[#allocation1 + $0x20] sm:$0xff pattern:$0x73625140]
      %2110 = vst [vmem:[#allocation1] ss:$4 sm:$0xff] %v1993
      %2111 = vst [vmem:[%s2014] ss:$4 sm:$0xff] %v1994
      %2112 = vst [vmem:[%s2016] ss:$4 sm:$0xff] %v1907
      %2113 = vst [vmem:[%s2018] ss:$4 sm:$0xff] %v1995
      %2114 = vst [vmem:[%s2020] ss:$4 sm:$0xff] %v1996
      %2115 = vst [vmem:[%s2022] ss:$4 sm:$0xff] %v1908
      %2116 = vst [vmem:[%s2024] ss:$4 sm:$0xff] %v1997
      %2117 = vst [vmem:[%s2026] ss:$4 sm:$0xff] %v1998
      %v2118 = vld.sshfl [vmem:[#allocation1] sm:$0xff pattern:$0x73625140]
      %v2119 = vld.sshfl [vmem:[#allocation1 + $0x20] sm:$0xff pattern:$0x73625140]
      %2120 = vst [vmem:[#allocation1] ss:$4 sm:$0xff] %v1999
      %2121 = vst [vmem:[%s2014] ss:$4 sm:$0xff] %v1909
      %2122 = vst [vmem:[%s2016] ss:$4 sm:$0xff] %v2000
      %2123 = vst [vmem:[%s2018] ss:$4 sm:$0xff] %v2001
      %2124 = vst [vmem:[%s2020] ss:$4 sm:$0xff] %v1910
      %2125 = vst [vmem:[%s2022] ss:$4 sm:$0xff] %v2002
      %2126 = vst [vmem:[%s2024] ss:$4 sm:$0xff] %v2003
      %2127 = vst [vmem:[%s2026] ss:$4 sm:$0xff] %v2004
      %v2128 = vld.sshfl [vmem:[#allocation1] sm:$0xff pattern:$0x73625140]
      %v2129 = vld.sshfl [vmem:[#allocation1 + $0x20] sm:$0xff pattern:$0x73625140]
      %2130 = vst [vmem:[#allocation1] ss:$4 sm:$0xff] %v1911
      %2131 = vst [vmem:[%s2014] ss:$4 sm:$0xff] %v2005
      %2132 = vst [vmem:[%s2016] ss:$4 sm:$0xff] %v2006
      %2133 = vst [vmem:[%s2018] ss:$4 sm:$0xff] %v1912
      %2134 = vst [vmem:[%s2020] ss:$4 sm:$0xff] %v2007
      %2135 = vst [vmem:[%s2022] ss:$4 sm:$0xff] %v2008
      %2136 = vst [vmem:[%s2024] ss:$4 sm:$0xff] %v2009
      %2137 = vst [vmem:[%s2026] ss:$4 sm:$0xff] %v1913
      %v2138 = vld.sshfl [vmem:[#allocation1] sm:$0xff pattern:$0x73625140]
      %v2139 = vld.sshfl [vmem:[#allocation1 + $0x20] sm:$0xff pattern:$0x73625140]
      %2140 = vst [vmem:[#allocation1] ss:$4 sm:$0xff] %v2010
      %2141 = vst [vmem:[%s2014] ss:$4 sm:$0xff] %v2011
      %v2142 = vld.sshfl [vmem:[#allocation1] sm:$0xff pattern:$0x73625140]
      %v2143 = vsel %vm609, %v2028, 0
      %v2145 = vsel %vm609, %v2029, 0
      %v2147 = vsel %vm609, %v2038, 0
      %v2149 = vsel %vm609, %v2039, 0
      %v2151 = vsel %vm609, %v2048, 0
      %v2153 = vsel %vm609, %v2049, 0
      %v2155 = vsel %vm609, %v2058, 0
      %v2157 = vsel %vm609, %v2059, 0
      %v2159 = vsel %vm609, %v2068, 0
      %v2161 = vsel %vm609, %v2069, 0
      %v2163 = vsel %vm609, %v2078, 0
      %v2165 = vsel %vm609, %v2079, 0
      %v2167 = vsel %vm609, %v2088, 0
      %v2169 = vsel %vm609, %v2089, 0
      %v2171 = vsel %vm609, %v2098, 0
      %v2173 = vsel %vm609, %v2099, 0
      %v2175 = vsel %vm609, %v2108, 0
      %v2177 = vsel %vm609, %v2109, 0
      %v2179 = vsel %vm609, %v2118, 0
      %v2181 = vsel %vm609, %v2119, 0
      %v2183 = vsel %vm609, %v2128, 0
      %v2185 = vsel %vm609, %v2129, 0
      %v2187 = vsel %vm609, %v2138, 0
      %v2189 = vsel %vm609, %v2139, 0
      %v2191 = vsel %vm609, %v2142, 0
      %v2194 = vsel %vm660, %v2012, 0
      %2196 = vmatpush.msra.mxu0 0.0
      %2197 = vmatpush.msra.mxu0 0.0
      %2198 = vmatpush.msra.mxu0 0.0
      %2199 = vmatpush.msra.mxu0 0.0
      %2200 = vmatpush.msra.mxu0 0.0
      %2201 = vmatpush.msra.mxu0 0.0
      %2202 = vmatpush.msra.mxu0 0.0
      %2203 = vmatpush.msra.mxu0 0.0
      %2204 = vmatpush.msra.mxu0 0.0
      %2205 = vmatpush.msra.mxu0 0.0
      %2206 = vmatpush.msra.mxu0 0.0
      %2207 = vmatpush.msra.mxu0 0.0
      %2208 = vmatpush.msra.mxu0 0.0
      %2209 = vmatpush.msra.mxu0 0.0
      %2210 = vmatpush.msra.mxu0 0.0
      %2211 = vmatpush.msra.mxu0 %v2194
      %2212 = vmatmul.f32.gmra.mxu0 %v2143
      %v2213 = vpop.f32.mrf.mxu0
      %v2214 = vadd.f32 0.0, %v2213
      %2215 = vmatmul.f32.gmra.mxu0 %v2145
      %v2216 = vpop.f32.mrf.mxu0
      %v2217 = vadd.f32 0.0, %v2216
      %2218 = vmatmul.f32.gmra.mxu0 %v2147
      %v2219 = vpop.f32.mrf.mxu0
      %v2220 = vadd.f32 0.0, %v2219
      %2221 = vmatmul.f32.gmra.mxu0 %v2149
      %v2222 = vpop.f32.mrf.mxu0
      %v2223 = vadd.f32 0.0, %v2222
      %2224 = vmatmul.f32.gmra.mxu0 %v2151
      %v2225 = vpop.f32.mrf.mxu0
      %v2226 = vadd.f32 0.0, %v2225
      %2227 = vmatmul.f32.gmra.mxu0 %v2153
      %v2228 = vpop.f32.mrf.mxu0
      %v2229 = vadd.f32 0.0, %v2228
      %2230 = vmatmul.f32.gmra.mxu0 %v2155
      %v2231 = vpop.f32.mrf.mxu0
      %v2232 = vadd.f32 0.0, %v2231
      %2233 = vmatmul.f32.gmra.mxu0 %v2157
      %v2234 = vpop.f32.mrf.mxu0
      %v2235 = vadd.f32 0.0, %v2234
      %2236 = vmatmul.f32.gmra.mxu0 %v2159
      %v2237 = vpop.f32.mrf.mxu0
      %v2238 = vadd.f32 0.0, %v2237
      %2239 = vmatmul.f32.gmra.mxu0 %v2161
      %v2240 = vpop.f32.mrf.mxu0
      %v2241 = vadd.f32 0.0, %v2240
      %2242 = vmatmul.f32.gmra.mxu0 %v2163
      %v2243 = vpop.f32.mrf.mxu0
      %v2244 = vadd.f32 0.0, %v2243
      %2245 = vmatmul.f32.gmra.mxu0 %v2165
      %v2246 = vpop.f32.mrf.mxu0
      %v2247 = vadd.f32 0.0, %v2246
      %2248 = vmatmul.f32.gmra.mxu0 %v2167
      %v2249 = vpop.f32.mrf.mxu0
      %v2250 = vadd.f32 0.0, %v2249
      %2251 = vmatmul.f32.gmra.mxu0 %v2169
      %v2252 = vpop.f32.mrf.mxu0
      %v2253 = vadd.f32 0.0, %v2252
      %2254 = vmatmul.f32.gmra.mxu0 %v2171
      %v2255 = vpop.f32.mrf.mxu0
      %v2256 = vadd.f32 0.0, %v2255
      %2257 = vmatmul.f32.gmra.mxu0 %v2173
      %v2258 = vpop.f32.mrf.mxu0
      %v2259 = vadd.f32 0.0, %v2258
      %2260 = vmatmul.f32.gmra.mxu0 %v2175
      %v2261 = vpop.f32.mrf.mxu0
      %v2262 = vadd.f32 0.0, %v2261
      %2263 = vmatmul.f32.gmra.mxu0 %v2177
      %v2264 = vpop.f32.mrf.mxu0
      %v2265 = vadd.f32 0.0, %v2264
      %2266 = vmatmul.f32.gmra.mxu0 %v2179
      %v2267 = vpop.f32.mrf.mxu0
      %v2268 = vadd.f32 0.0, %v2267
      %2269 = vmatmul.f32.gmra.mxu0 %v2181
      %v2270 = vpop.f32.mrf.mxu0
      %v2271 = vadd.f32 0.0, %v2270
      %2272 = vmatmul.f32.gmra.mxu0 %v2183
      %v2273 = vpop.f32.mrf.mxu0
      %v2274 = vadd.f32 0.0, %v2273
      %2275 = vmatmul.f32.gmra.mxu0 %v2185
      %v2276 = vpop.f32.mrf.mxu0
      %v2277 = vadd.f32 0.0, %v2276
      %2278 = vmatmul.f32.gmra.mxu0 %v2187
      %v2279 = vpop.f32.mrf.mxu0
      %v2280 = vadd.f32 0.0, %v2279
      %2281 = vmatmul.f32.gmra.mxu0 %v2189
      %v2282 = vpop.f32.mrf.mxu0
      %v2283 = vadd.f32 0.0, %v2282
      %2284 = vmatmul.f32.gmra.mxu0 %v2191
      %v2285 = vpop.f32.mrf.mxu0
      %v2286 = vadd.f32 0.0, %v2285
      %2287 = vdwg.mxu0
      %v2288 = vadd.f32 %v1861, %v2214
      %v2289 = vadd.f32 %v1862, %v2217
      %v2290 = vadd.f32 %v1863, %v2220
      %v2291 = vadd.f32 %v1864, %v2223
      %v2292 = vadd.f32 %v1865, %v2226
      %v2293 = vadd.f32 %v1866, %v2229
      %v2294 = vadd.f32 %v1867, %v2232
      %v2295 = vadd.f32 %v1868, %v2235
      %v2296 = vadd.f32 %v1869, %v2238
      %v2297 = vadd.f32 %v1870, %v2241
      %v2298 = vadd.f32 %v1871, %v2244
      %v2299 = vadd.f32 %v1872, %v2247
      %v2300 = vadd.f32 %v1873, %v2250
      %v2301 = vadd.f32 %v1874, %v2253
      %v2302 = vadd.f32 %v1875, %v2256
      %v2303 = vadd.f32 %v1876, %v2259
      %v2304 = vadd.f32 %v1877, %v2262
      %v2305 = vadd.f32 %v1878, %v2265
      %v2306 = vadd.f32 %v1879, %v2268
      %v2307 = vadd.f32 %v1880, %v2271
      %v2308 = vadd.f32 %v1881, %v2274
      %v2309 = vadd.f32 %v1882, %v2277
      %v2310 = vadd.f32 %v1883, %v2280
      %v2311 = vadd.f32 %v1884, %v2283
      %v2312 = vadd.f32 %v1885, %v2286
      %v2313 = vld [vmem:[%s1458 + $0x2] sm:$0xff]
      %v2314 = vld [vmem:[%s1458 + $0xa] sm:$0x3f]
      %v2315 = vld [vmem:[%s1458 + $0x12] sm:$0xff]
      %v2316 = vld [vmem:[%s1458 + $0x1a] sm:$0x3f]
      %v2317 = vld [vmem:[%s1458 + $0x22] sm:$0xff]
      %v2318 = vld [vmem:[%s1458 + $0x2a] sm:$0x3f]
      %v2319 = vld [vmem:[%s1458 + $0x32] sm:$0xff]
      %v2320 = vld [vmem:[%s1458 + $0x3a] sm:$0x3f]
      %v2321 = vld [vmem:[%s1458 + $0x42] sm:$0xff]
      %v2322 = vld [vmem:[%s1458 + $0x4a] sm:$0x3f]
      %v2323 = vld [vmem:[%s1458 + $0x52] sm:$0xff]
      %v2324 = vld [vmem:[%s1458 + $0x5a] sm:$0x3f]
      %v2325 = vld [vmem:[%s1458 + $0x62] sm:$0xff]
      %v2326 = vld [vmem:[%s1458 + $0x6a] sm:$0x3f]
      %v2327 = vld [vmem:[%s1458 + $0x72] sm:$0xff]
      %v2328 = vld [vmem:[%s1458 + $0x7a] sm:$0x3f]
      %v2329 = vld [vmem:[%s1458 + $0x82] sm:$0xff]
      %v2330 = vld [vmem:[%s1458 + $0x8a] sm:$0x3f]
      %v2331 = vld [vmem:[%s1458 + $0x92] sm:$0xff]
      %v2332 = vld [vmem:[%s1458 + $0x9a] sm:$0x3f]
      %v2333 = vld [vmem:[%s1458 + $0xa2] sm:$0xff]
      %v2334 = vld [vmem:[%s1458 + $0xaa] sm:$0x3f]
      %v2335 = vld [vmem:[%s1458 + $0xb2] sm:$0xff]
      %v2336 = vld [vmem:[%s1458 + $0xba] sm:$0x3f]
      %v2337 = vld [vmem:[%s1458 + $0xc2] sm:$0xff]
      %v2338 = vld [vmem:[%s1458 + $0xca] sm:$0x3f]
      %v2339 = vld [vmem:[%s1458 + $0xd2] sm:$0xff]
      %v2340 = vld [vmem:[%s1458 + $0xda] sm:$0x3f]
      %v2369 = vrot.slane %v2313, 2
      %v2370 = vrot.slane %v2313, 4
      %v2371 = vrot.slane %v2313, 6
      %v2372 = vrot.slane %v2314, 2
      %v2373 = vrot.slane %v2314, 4
      %v2374 = vrot.slane %v2315, 2
      %v2375 = vrot.slane %v2315, 4
      %v2376 = vrot.slane %v2315, 6
      %v2377 = vrot.slane %v2316, 2
      %v2378 = vrot.slane %v2316, 4
      %v2379 = vrot.slane %v2317, 2
      %v2380 = vrot.slane %v2317, 4
      %v2381 = vrot.slane %v2317, 6
      %v2382 = vrot.slane %v2318, 2
      %v2383 = vrot.slane %v2318, 4
      %v2384 = vrot.slane %v2319, 2
      %v2385 = vrot.slane %v2319, 4
      %v2386 = vrot.slane %v2319, 6
      %v2387 = vrot.slane %v2320, 2
      %v2388 = vrot.slane %v2320, 4
      %v2389 = vrot.slane %v2321, 2
      %v2390 = vrot.slane %v2321, 4
      %v2391 = vrot.slane %v2321, 6
      %v2392 = vrot.slane %v2322, 2
      %v2393 = vrot.slane %v2322, 4
      %v2394 = vrot.slane %v2323, 2
      %v2395 = vrot.slane %v2323, 4
      %v2396 = vrot.slane %v2323, 6
      %v2397 = vrot.slane %v2324, 2
      %v2398 = vrot.slane %v2324, 4
      %v2399 = vrot.slane %v2325, 2
      %v2400 = vrot.slane %v2325, 4
      %v2401 = vrot.slane %v2325, 6
      %v2402 = vrot.slane %v2326, 2
      %v2403 = vrot.slane %v2326, 4
      %v2404 = vrot.slane %v2327, 2
      %v2405 = vrot.slane %v2327, 4
      %v2406 = vrot.slane %v2327, 6
      %v2407 = vrot.slane %v2328, 2
      %v2408 = vrot.slane %v2328, 4
      %v2409 = vrot.slane %v2329, 2
      %v2410 = vrot.slane %v2329, 4
      %v2411 = vrot.slane %v2329, 6
      %v2412 = vrot.slane %v2330, 2
      %v2413 = vrot.slane %v2330, 4
      %v2414 = vrot.slane %v2331, 2
      %v2415 = vrot.slane %v2331, 4
      %v2416 = vrot.slane %v2331, 6
      %v2417 = vrot.slane %v2332, 2
      %v2418 = vrot.slane %v2332, 4
      %v2419 = vrot.slane %v2333, 2
      %v2420 = vrot.slane %v2333, 4
      %v2421 = vrot.slane %v2333, 6
      %v2422 = vrot.slane %v2334, 2
      %v2423 = vrot.slane %v2334, 4
      %v2424 = vrot.slane %v2335, 2
      %v2425 = vrot.slane %v2335, 4
      %v2426 = vrot.slane %v2335, 6
      %v2427 = vrot.slane %v2336, 2
      %v2428 = vrot.slane %v2336, 4
      %v2429 = vrot.slane %v2337, 2
      %v2430 = vrot.slane %v2337, 4
      %v2431 = vrot.slane %v2337, 6
      %v2432 = vrot.slane %v2338, 2
      %v2433 = vrot.slane %v2338, 4
      %v2434 = vrot.slane %v2339, 2
      %v2435 = vrot.slane %v2339, 4
      %v2436 = vrot.slane %v2339, 6
      %v2437 = vrot.slane %v2340, 2
      %v2438 = vrot.slane %v2340, 4
      %v2439 = vld [vmem:[%s1 + $0x14] sm:$0xf]
      %2440 = vst [vmem:[#allocation1] ss:$4 sm:$0xff] %v2313
      %s2441 = scalar_lea.vmem [#allocation1], 1
      %2442 = vst [vmem:[%s2441] ss:$4 sm:$0xff] %v2369
      %s2443 = scalar_lea.vmem [#allocation1], 2
      %2444 = vst [vmem:[%s2443] ss:$4 sm:$0xff] %v2370
      %s2445 = scalar_lea.vmem [#allocation1], 3
      %2446 = vst [vmem:[%s2445] ss:$4 sm:$0xff] %v2371
      %s2447 = scalar_lea.vmem [#allocation1], 32
      %2448 = vst [vmem:[%s2447] ss:$4 sm:$0xff] %v2314
      %s2449 = scalar_lea.vmem [#allocation1], 33
      %2450 = vst [vmem:[%s2449] ss:$4 sm:$0xff] %v2372
      %s2451 = scalar_lea.vmem [#allocation1], 34
      %2452 = vst [vmem:[%s2451] ss:$4 sm:$0xff] %v2373
      %s2453 = scalar_lea.vmem [#allocation1], 35
      %2454 = vst [vmem:[%s2453] ss:$4 sm:$0xff] %v2315
      %v2455 = vld.sshfl [vmem:[#allocation1] sm:$0xff pattern:$0x73625140]
      %v2456 = vld.sshfl [vmem:[#allocation1 + $0x20] sm:$0xff pattern:$0x73625140]
      %2457 = vst [vmem:[#allocation1] ss:$4 sm:$0xff] %v2374
      %2458 = vst [vmem:[%s2441] ss:$4 sm:$0xff] %v2375
      %2459 = vst [vmem:[%s2443] ss:$4 sm:$0xff] %v2376
      %2460 = vst [vmem:[%s2445] ss:$4 sm:$0xff] %v2316
      %2461 = vst [vmem:[%s2447] ss:$4 sm:$0xff] %v2377
      %2462 = vst [vmem:[%s2449] ss:$4 sm:$0xff] %v2378
      %2463 = vst [vmem:[%s2451] ss:$4 sm:$0xff] %v2317
      %2464 = vst [vmem:[%s2453] ss:$4 sm:$0xff] %v2379
      %v2465 = vld.sshfl [vmem:[#allocation1] sm:$0xff pattern:$0x73625140]
      %v2466 = vld.sshfl [vmem:[#allocation1 + $0x20] sm:$0xff pattern:$0x73625140]
      %2467 = vst [vmem:[#allocation1] ss:$4 sm:$0xff] %v2380
      %2468 = vst [vmem:[%s2441] ss:$4 sm:$0xff] %v2381
      %2469 = vst [vmem:[%s2443] ss:$4 sm:$0xff] %v2318
      %2470 = vst [vmem:[%s2445] ss:$4 sm:$0xff] %v2382
      %2471 = vst [vmem:[%s2447] ss:$4 sm:$0xff] %v2383
      %2472 = vst [vmem:[%s2449] ss:$4 sm:$0xff] %v2319
      %2473 = vst [vmem:[%s2451] ss:$4 sm:$0xff] %v2384
      %2474 = vst [vmem:[%s2453] ss:$4 sm:$0xff] %v2385
      %v2475 = vld.sshfl [vmem:[#allocation1] sm:$0xff pattern:$0x73625140]
      %v2476 = vld.sshfl [vmem:[#allocation1 + $0x20] sm:$0xff pattern:$0x73625140]
      %2477 = vst [vmem:[#allocation1] ss:$4 sm:$0xff] %v2386
      %2478 = vst [vmem:[%s2441] ss:$4 sm:$0xff] %v2320
      %2479 = vst [vmem:[%s2443] ss:$4 sm:$0xff] %v2387
      %2480 = vst [vmem:[%s2445] ss:$4 sm:$0xff] %v2388
      %2481 = vst [vmem:[%s2447] ss:$4 sm:$0xff] %v2321
      %2482 = vst [vmem:[%s2449] ss:$4 sm:$0xff] %v2389
      %2483 = vst [vmem:[%s2451] ss:$4 sm:$0xff] %v2390
      %2484 = vst [vmem:[%s2453] ss:$4 sm:$0xff] %v2391
      %v2485 = vld.sshfl [vmem:[#allocation1] sm:$0xff pattern:$0x73625140]
      %v2486 = vld.sshfl [vmem:[#allocation1 + $0x20] sm:$0xff pattern:$0x73625140]
      %2487 = vst [vmem:[#allocation1] ss:$4 sm:$0xff] %v2322
      %2488 = vst [vmem:[%s2441] ss:$4 sm:$0xff] %v2392
      %2489 = vst [vmem:[%s2443] ss:$4 sm:$0xff] %v2393
      %2490 = vst [vmem:[%s2445] ss:$4 sm:$0xff] %v2323
      %2491 = vst [vmem:[%s2447] ss:$4 sm:$0xff] %v2394
      %2492 = vst [vmem:[%s2449] ss:$4 sm:$0xff] %v2395
      %2493 = vst [vmem:[%s2451] ss:$4 sm:$0xff] %v2396
      %2494 = vst [vmem:[%s2453] ss:$4 sm:$0xff] %v2324
      %v2495 = vld.sshfl [vmem:[#allocation1] sm:$0xff pattern:$0x73625140]
      %v2496 = vld.sshfl [vmem:[#allocation1 + $0x20] sm:$0xff pattern:$0x73625140]
      %2497 = vst [vmem:[#allocation1] ss:$4 sm:$0xff] %v2397
      %2498 = vst [vmem:[%s2441] ss:$4 sm:$0xff] %v2398
      %2499 = vst [vmem:[%s2443] ss:$4 sm:$0xff] %v2325
      %2500 = vst [vmem:[%s2445] ss:$4 sm:$0xff] %v2399
      %2501 = vst [vmem:[%s2447] ss:$4 sm:$0xff] %v2400
      %2502 = vst [vmem:[%s2449] ss:$4 sm:$0xff] %v2401
      %2503 = vst [vmem:[%s2451] ss:$4 sm:$0xff] %v2326
      %2504 = vst [vmem:[%s2453] ss:$4 sm:$0xff] %v2402
      %v2505 = vld.sshfl [vmem:[#allocation1] sm:$0xff pattern:$0x73625140]
      %v2506 = vld.sshfl [vmem:[#allocation1 + $0x20] sm:$0xff pattern:$0x73625140]
      %2507 = vst [vmem:[#allocation1] ss:$4 sm:$0xff] %v2403
      %2508 = vst [vmem:[%s2441] ss:$4 sm:$0xff] %v2327
      %2509 = vst [vmem:[%s2443] ss:$4 sm:$0xff] %v2404
      %2510 = vst [vmem:[%s2445] ss:$4 sm:$0xff] %v2405
      %2511 = vst [vmem:[%s2447] ss:$4 sm:$0xff] %v2406
      %2512 = vst [vmem:[%s2449] ss:$4 sm:$0xff] %v2328
      %2513 = vst [vmem:[%s2451] ss:$4 sm:$0xff] %v2407
      %2514 = vst [vmem:[%s2453] ss:$4 sm:$0xff] %v2408
      %v2515 = vld.sshfl [vmem:[#allocation1] sm:$0xff pattern:$0x73625140]
      %v2516 = vld.sshfl [vmem:[#allocation1 + $0x20] sm:$0xff pattern:$0x73625140]
      %2517 = vst [vmem:[#allocation1] ss:$4 sm:$0xff] %v2329
      %2518 = vst [vmem:[%s2441] ss:$4 sm:$0xff] %v2409
      %2519 = vst [vmem:[%s2443] ss:$4 sm:$0xff] %v2410
      %2520 = vst [vmem:[%s2445] ss:$4 sm:$0xff] %v2411
      %2521 = vst [vmem:[%s2447] ss:$4 sm:$0xff] %v2330
      %2522 = vst [vmem:[%s2449] ss:$4 sm:$0xff] %v2412
      %2523 = vst [vmem:[%s2451] ss:$4 sm:$0xff] %v2413
      %2524 = vst [vmem:[%s2453] ss:$4 sm:$0xff] %v2331
      %v2525 = vld.sshfl [vmem:[#allocation1] sm:$0xff pattern:$0x73625140]
      %v2526 = vld.sshfl [vmem:[#allocation1 + $0x20] sm:$0xff pattern:$0x73625140]
      %2527 = vst [vmem:[#allocation1] ss:$4 sm:$0xff] %v2414
      %2528 = vst [vmem:[%s2441] ss:$4 sm:$0xff] %v2415
      %2529 = vst [vmem:[%s2443] ss:$4 sm:$0xff] %v2416
      %2530 = vst [vmem:[%s2445] ss:$4 sm:$0xff] %v2332
      %2531 = vst [vmem:[%s2447] ss:$4 sm:$0xff] %v2417
      %2532 = vst [vmem:[%s2449] ss:$4 sm:$0xff] %v2418
      %2533 = vst [vmem:[%s2451] ss:$4 sm:$0xff] %v2333
      %2534 = vst [vmem:[%s2453] ss:$4 sm:$0xff] %v2419
      %v2535 = vld.sshfl [vmem:[#allocation1] sm:$0xff pattern:$0x73625140]
      %v2536 = vld.sshfl [vmem:[#allocation1 + $0x20] sm:$0xff pattern:$0x73625140]
      %2537 = vst [vmem:[#allocation1] ss:$4 sm:$0xff] %v2420
      %2538 = vst [vmem:[%s2441] ss:$4 sm:$0xff] %v2421
      %2539 = vst [vmem:[%s2443] ss:$4 sm:$0xff] %v2334
      %2540 = vst [vmem:[%s2445] ss:$4 sm:$0xff] %v2422
      %2541 = vst [vmem:[%s2447] ss:$4 sm:$0xff] %v2423
      %2542 = vst [vmem:[%s2449] ss:$4 sm:$0xff] %v2335
      %2543 = vst [vmem:[%s2451] ss:$4 sm:$0xff] %v2424
      %2544 = vst [vmem:[%s2453] ss:$4 sm:$0xff] %v2425
      %v2545 = vld.sshfl [vmem:[#allocation1] sm:$0xff pattern:$0x73625140]
      %v2546 = vld.sshfl [vmem:[#allocation1 + $0x20] sm:$0xff pattern:$0x73625140]
      %2547 = vst [vmem:[#allocation1] ss:$4 sm:$0xff] %v2426
      %2548 = vst [vmem:[%s2441] ss:$4 sm:$0xff] %v2336
      %2549 = vst [vmem:[%s2443] ss:$4 sm:$0xff] %v2427
      %2550 = vst [vmem:[%s2445] ss:$4 sm:$0xff] %v2428
      %2551 = vst [vmem:[%s2447] ss:$4 sm:$0xff] %v2337
      %2552 = vst [vmem:[%s2449] ss:$4 sm:$0xff] %v2429
      %2553 = vst [vmem:[%s2451] ss:$4 sm:$0xff] %v2430
      %2554 = vst [vmem:[%s2453] ss:$4 sm:$0xff] %v2431
      %v2555 = vld.sshfl [vmem:[#allocation1] sm:$0xff pattern:$0x73625140]
      %v2556 = vld.sshfl [vmem:[#allocation1 + $0x20] sm:$0xff pattern:$0x73625140]
      %2557 = vst [vmem:[#allocation1] ss:$4 sm:$0xff] %v2338
      %2558 = vst [vmem:[%s2441] ss:$4 sm:$0xff] %v2432
      %2559 = vst [vmem:[%s2443] ss:$4 sm:$0xff] %v2433
      %2560 = vst [vmem:[%s2445] ss:$4 sm:$0xff] %v2339
      %2561 = vst [vmem:[%s2447] ss:$4 sm:$0xff] %v2434
      %2562 = vst [vmem:[%s2449] ss:$4 sm:$0xff] %v2435
      %2563 = vst [vmem:[%s2451] ss:$4 sm:$0xff] %v2436
      %2564 = vst [vmem:[%s2453] ss:$4 sm:$0xff] %v2340
      %v2565 = vld.sshfl [vmem:[#allocation1] sm:$0xff pattern:$0x73625140]
      %v2566 = vld.sshfl [vmem:[#allocation1 + $0x20] sm:$0xff pattern:$0x73625140]
      %2567 = vst [vmem:[#allocation1] ss:$4 sm:$0xff] %v2437
      %2568 = vst [vmem:[%s2441] ss:$4 sm:$0xff] %v2438
      %v2569 = vld.sshfl [vmem:[#allocation1] sm:$0xff pattern:$0x73625140]
      %v2570 = vsel %vm609, %v2455, 0
      %v2572 = vsel %vm609, %v2456, 0
      %v2574 = vsel %vm609, %v2465, 0
      %v2576 = vsel %vm609, %v2466, 0
      %v2578 = vsel %vm609, %v2475, 0
      %v2580 = vsel %vm609, %v2476, 0
      %v2582 = vsel %vm609, %v2485, 0
      %v2584 = vsel %vm609, %v2486, 0
      %v2586 = vsel %vm609, %v2495, 0
      %v2588 = vsel %vm609, %v2496, 0
      %v2590 = vsel %vm609, %v2505, 0
      %v2592 = vsel %vm609, %v2506, 0
      %v2594 = vsel %vm609, %v2515, 0
      %v2596 = vsel %vm609, %v2516, 0
      %v2598 = vsel %vm609, %v2525, 0
      %v2600 = vsel %vm609, %v2526, 0
      %v2602 = vsel %vm609, %v2535, 0
      %v2604 = vsel %vm609, %v2536, 0
      %v2606 = vsel %vm609, %v2545, 0
      %v2608 = vsel %vm609, %v2546, 0
      %v2610 = vsel %vm609, %v2555, 0
      %v2612 = vsel %vm609, %v2556, 0
      %v2614 = vsel %vm609, %v2565, 0
      %v2616 = vsel %vm609, %v2566, 0
      %v2618 = vsel %vm609, %v2569, 0
      %v2621 = vsel %vm660, %v2439, 0
      %2623 = vmatpush.msra.mxu0 0.0
      %2624 = vmatpush.msra.mxu0 0.0
      %2625 = vmatpush.msra.mxu0 0.0
      %2626 = vmatpush.msra.mxu0 0.0
      %2627 = vmatpush.msra.mxu0 0.0
      %2628 = vmatpush.msra.mxu0 0.0
      %2629 = vmatpush.msra.mxu0 0.0
      %2630 = vmatpush.msra.mxu0 0.0
      %2631 = vmatpush.msra.mxu0 0.0
      %2632 = vmatpush.msra.mxu0 0.0
      %2633 = vmatpush.msra.mxu0 0.0
      %2634 = vmatpush.msra.mxu0 0.0
      %2635 = vmatpush.msra.mxu0 0.0
      %2636 = vmatpush.msra.mxu0 0.0
      %2637 = vmatpush.msra.mxu0 0.0
      %2638 = vmatpush.msra.mxu0 %v2621
      %2639 = vmatmul.f32.gmra.mxu0 %v2570
      %v2640 = vpop.f32.mrf.mxu0
      %v2641 = vadd.f32 0.0, %v2640
      %2642 = vmatmul.f32.gmra.mxu0 %v2572
      %v2643 = vpop.f32.mrf.mxu0
      %v2644 = vadd.f32 0.0, %v2643
      %2645 = vmatmul.f32.gmra.mxu0 %v2574
      %v2646 = vpop.f32.mrf.mxu0
      %v2647 = vadd.f32 0.0, %v2646
      %2648 = vmatmul.f32.gmra.mxu0 %v2576
      %v2649 = vpop.f32.mrf.mxu0
      %v2650 = vadd.f32 0.0, %v2649
      %2651 = vmatmul.f32.gmra.mxu0 %v2578
      %v2652 = vpop.f32.mrf.mxu0
      %v2653 = vadd.f32 0.0, %v2652
      %2654 = vmatmul.f32.gmra.mxu0 %v2580
      %v2655 = vpop.f32.mrf.mxu0
      %v2656 = vadd.f32 0.0, %v2655
      %2657 = vmatmul.f32.gmra.mxu0 %v2582
      %v2658 = vpop.f32.mrf.mxu0
      %v2659 = vadd.f32 0.0, %v2658
      %2660 = vmatmul.f32.gmra.mxu0 %v2584
      %v2661 = vpop.f32.mrf.mxu0
      %v2662 = vadd.f32 0.0, %v2661
      %2663 = vmatmul.f32.gmra.mxu0 %v2586
      %v2664 = vpop.f32.mrf.mxu0
      %v2665 = vadd.f32 0.0, %v2664
      %2666 = vmatmul.f32.gmra.mxu0 %v2588
      %v2667 = vpop.f32.mrf.mxu0
      %v2668 = vadd.f32 0.0, %v2667
      %2669 = vmatmul.f32.gmra.mxu0 %v2590
      %v2670 = vpop.f32.mrf.mxu0
      %v2671 = vadd.f32 0.0, %v2670
      %2672 = vmatmul.f32.gmra.mxu0 %v2592
      %v2673 = vpop.f32.mrf.mxu0
      %v2674 = vadd.f32 0.0, %v2673
      %2675 = vmatmul.f32.gmra.mxu0 %v2594
      %v2676 = vpop.f32.mrf.mxu0
      %v2677 = vadd.f32 0.0, %v2676
      %2678 = vmatmul.f32.gmra.mxu0 %v2596
      %v2679 = vpop.f32.mrf.mxu0
      %v2680 = vadd.f32 0.0, %v2679
      %2681 = vmatmul.f32.gmra.mxu0 %v2598
      %v2682 = vpop.f32.mrf.mxu0
      %v2683 = vadd.f32 0.0, %v2682
      %2684 = vmatmul.f32.gmra.mxu0 %v2600
      %v2685 = vpop.f32.mrf.mxu0
      %v2686 = vadd.f32 0.0, %v2685
      %2687 = vmatmul.f32.gmra.mxu0 %v2602
      %v2688 = vpop.f32.mrf.mxu0
      %v2689 = vadd.f32 0.0, %v2688
      %2690 = vmatmul.f32.gmra.mxu0 %v2604
      %v2691 = vpop.f32.mrf.mxu0
      %v2692 = vadd.f32 0.0, %v2691
      %2693 = vmatmul.f32.gmra.mxu0 %v2606
      %v2694 = vpop.f32.mrf.mxu0
      %v2695 = vadd.f32 0.0, %v2694
      %2696 = vmatmul.f32.gmra.mxu0 %v2608
      %v2697 = vpop.f32.mrf.mxu0
      %v2698 = vadd.f32 0.0, %v2697
      %2699 = vmatmul.f32.gmra.mxu0 %v2610
      %v2700 = vpop.f32.mrf.mxu0
      %v2701 = vadd.f32 0.0, %v2700
      %2702 = vmatmul.f32.gmra.mxu0 %v2612
      %v2703 = vpop.f32.mrf.mxu0
      %v2704 = vadd.f32 0.0, %v2703
      %2705 = vmatmul.f32.gmra.mxu0 %v2614
      %v2706 = vpop.f32.mrf.mxu0
      %v2707 = vadd.f32 0.0, %v2706
      %2708 = vmatmul.f32.gmra.mxu0 %v2616
      %v2709 = vpop.f32.mrf.mxu0
      %v2710 = vadd.f32 0.0, %v2709
      %2711 = vmatmul.f32.gmra.mxu0 %v2618
      %v2712 = vpop.f32.mrf.mxu0
      %v2713 = vadd.f32 0.0, %v2712
      %2714 = vdwg.mxu0
      %v2715 = vadd.f32 %v2288, %v2641
      %v2716 = vadd.f32 %v2289, %v2644
      %v2717 = vadd.f32 %v2290, %v2647
      %v2718 = vadd.f32 %v2291, %v2650
      %v2719 = vadd.f32 %v2292, %v2653
      %v2720 = vadd.f32 %v2293, %v2656
      %v2721 = vadd.f32 %v2294, %v2659
      %v2722 = vadd.f32 %v2295, %v2662
      %v2723 = vadd.f32 %v2296, %v2665
      %v2724 = vadd.f32 %v2297, %v2668
      %v2725 = vadd.f32 %v2298, %v2671
      %v2726 = vadd.f32 %v2299, %v2674
      %v2727 = vadd.f32 %v2300, %v2677
      %v2728 = vadd.f32 %v2301, %v2680
      %v2729 = vadd.f32 %v2302, %v2683
      %v2730 = vadd.f32 %v2303, %v2686
      %v2731 = vadd.f32 %v2304, %v2689
      %v2732 = vadd.f32 %v2305, %v2692
      %v2733 = vadd.f32 %v2306, %v2695
      %v2734 = vadd.f32 %v2307, %v2698
      %v2735 = vadd.f32 %v2308, %v2701
      %v2736 = vadd.f32 %v2309, %v2704
      %v2737 = vadd.f32 %v2310, %v2707
      %v2738 = vadd.f32 %v2311, %v2710
      %v2739 = vadd.f32 %v2312, %v2713
      %s2740 = scalar_lea.vmem %s219, 32
      %v2741 = vld [vmem:[%s2740] sm:$0xff]
      %v2742 = vld [vmem:[%s2740 + $0x8] sm:$0x3f]
      %v2743 = vld [vmem:[%s2740 + $0x10] sm:$0xff]
      %v2744 = vld [vmem:[%s2740 + $0x18] sm:$0x3f]
      %v2745 = vld [vmem:[%s2740 + $0x20] sm:$0xff]
      %v2746 = vld [vmem:[%s2740 + $0x28] sm:$0x3f]
      %v2747 = vld [vmem:[%s2740 + $0x30] sm:$0xff]
      %v2748 = vld [vmem:[%s2740 + $0x38] sm:$0x3f]
      %v2749 = vld [vmem:[%s2740 + $0x40] sm:$0xff]
      %v2750 = vld [vmem:[%s2740 + $0x48] sm:$0x3f]
      %v2751 = vld [vmem:[%s2740 + $0x50] sm:$0xff]
      %v2752 = vld [vmem:[%s2740 + $0x58] sm:$0x3f]
      %v2753 = vld [vmem:[%s2740 + $0x60] sm:$0xff]
      %v2754 = vld [vmem:[%s2740 + $0x68] sm:$0x3f]
      %v2755 = vld [vmem:[%s2740 + $0x70] sm:$0xff]
      %v2756 = vld [vmem:[%s2740 + $0x78] sm:$0x3f]
      %v2757 = vld [vmem:[%s2740 + $0x80] sm:$0xff]
      %v2758 = vld [vmem:[%s2740 + $0x88] sm:$0x3f]
      %v2759 = vld [vmem:[%s2740 + $0x90] sm:$0xff]
      %v2760 = vld [vmem:[%s2740 + $0x98] sm:$0x3f]
      %v2761 = vld [vmem:[%s2740 + $0xa0] sm:$0xff]
      %v2762 = vld [vmem:[%s2740 + $0xa8] sm:$0x3f]
      %v2763 = vld [vmem:[%s2740 + $0xb0] sm:$0xff]
      %v2764 = vld [vmem:[%s2740 + $0xb8] sm:$0x3f]
      %v2765 = vld [vmem:[%s2740 + $0xc0] sm:$0xff]
      %v2766 = vld [vmem:[%s2740 + $0xc8] sm:$0x3f]
      %v2767 = vld [vmem:[%s2740 + $0xd0] sm:$0xff]
      %v2768 = vld [vmem:[%s2740 + $0xd8] sm:$0x3f]
      %v2797 = vrot.slane %v2741, 2
      %v2798 = vrot.slane %v2741, 4
      %v2799 = vrot.slane %v2741, 6
      %v2800 = vrot.slane %v2742, 2
      %v2801 = vrot.slane %v2742, 4
      %v2802 = vrot.slane %v2743, 2
      %v2803 = vrot.slane %v2743, 4
      %v2804 = vrot.slane %v2743, 6
      %v2805 = vrot.slane %v2744, 2
      %v2806 = vrot.slane %v2744, 4
      %v2807 = vrot.slane %v2745, 2
      %v2808 = vrot.slane %v2745, 4
      %v2809 = vrot.slane %v2745, 6
      %v2810 = vrot.slane %v2746, 2
      %v2811 = vrot.slane %v2746, 4
      %v2812 = vrot.slane %v2747, 2
      %v2813 = vrot.slane %v2747, 4
      %v2814 = vrot.slane %v2747, 6
      %v2815 = vrot.slane %v2748, 2
      %v2816 = vrot.slane %v2748, 4
      %v2817 = vrot.slane %v2749, 2
      %v2818 = vrot.slane %v2749, 4
      %v2819 = vrot.slane %v2749, 6
      %v2820 = vrot.slane %v2750, 2
      %v2821 = vrot.slane %v2750, 4
      %v2822 = vrot.slane %v2751, 2
      %v2823 = vrot.slane %v2751, 4
      %v2824 = vrot.slane %v2751, 6
      %v2825 = vrot.slane %v2752, 2
      %v2826 = vrot.slane %v2752, 4
      %v2827 = vrot.slane %v2753, 2
      %v2828 = vrot.slane %v2753, 4
      %v2829 = vrot.slane %v2753, 6
      %v2830 = vrot.slane %v2754, 2
      %v2831 = vrot.slane %v2754, 4
      %v2832 = vrot.slane %v2755, 2
      %v2833 = vrot.slane %v2755, 4
      %v2834 = vrot.slane %v2755, 6
      %v2835 = vrot.slane %v2756, 2
      %v2836 = vrot.slane %v2756, 4
      %v2837 = vrot.slane %v2757, 2
      %v2838 = vrot.slane %v2757, 4
      %v2839 = vrot.slane %v2757, 6
      %v2840 = vrot.slane %v2758, 2
      %v2841 = vrot.slane %v2758, 4
      %v2842 = vrot.slane %v2759, 2
      %v2843 = vrot.slane %v2759, 4
      %v2844 = vrot.slane %v2759, 6
      %v2845 = vrot.slane %v2760, 2
      %v2846 = vrot.slane %v2760, 4
      %v2847 = vrot.slane %v2761, 2
      %v2848 = vrot.slane %v2761, 4
      %v2849 = vrot.slane %v2761, 6
      %v2850 = vrot.slane %v2762, 2
      %v2851 = vrot.slane %v2762, 4
      %v2852 = vrot.slane %v2763, 2
      %v2853 = vrot.slane %v2763, 4
      %v2854 = vrot.slane %v2763, 6
      %v2855 = vrot.slane %v2764, 2
      %v2856 = vrot.slane %v2764, 4
      %v2857 = vrot.slane %v2765, 2
      %v2858 = vrot.slane %v2765, 4
      %v2859 = vrot.slane %v2765, 6
      %v2860 = vrot.slane %v2766, 2
      %v2861 = vrot.slane %v2766, 4
      %v2862 = vrot.slane %v2767, 2
      %v2863 = vrot.slane %v2767, 4
      %v2864 = vrot.slane %v2767, 6
      %v2865 = vrot.slane %v2768, 2
      %v2866 = vrot.slane %v2768, 4
      %v2867 = vld [vmem:[%s1 + $0x18] sm:$0xf]
      %2868 = vst [vmem:[#allocation1] ss:$4 sm:$0xff] %v2741
      %s2869 = scalar_lea.vmem [#allocation1], 1
      %2870 = vst [vmem:[%s2869] ss:$4 sm:$0xff] %v2797
      %s2871 = scalar_lea.vmem [#allocation1], 2
      %2872 = vst [vmem:[%s2871] ss:$4 sm:$0xff] %v2798
      %s2873 = scalar_lea.vmem [#allocation1], 3
      %2874 = vst [vmem:[%s2873] ss:$4 sm:$0xff] %v2799
      %s2875 = scalar_lea.vmem [#allocation1], 32
      %2876 = vst [vmem:[%s2875] ss:$4 sm:$0xff] %v2742
      %s2877 = scalar_lea.vmem [#allocation1], 33
      %2878 = vst [vmem:[%s2877] ss:$4 sm:$0xff] %v2800
      %s2879 = scalar_lea.vmem [#allocation1], 34
      %2880 = vst [vmem:[%s2879] ss:$4 sm:$0xff] %v2801
      %s2881 = scalar_lea.vmem [#allocation1], 35
      %2882 = vst [vmem:[%s2881] ss:$4 sm:$0xff] %v2743
      %v2883 = vld.sshfl [vmem:[#allocation1] sm:$0xff pattern:$0x73625140]
      %v2884 = vld.sshfl [vmem:[#allocation1 + $0x20] sm:$0xff pattern:$0x73625140]
      %2885 = vst [vmem:[#allocation1] ss:$4 sm:$0xff] %v2802
      %2886 = vst [vmem:[%s2869] ss:$4 sm:$0xff] %v2803
      %2887 = vst [vmem:[%s2871] ss:$4 sm:$0xff] %v2804
      %2888 = vst [vmem:[%s2873] ss:$4 sm:$0xff] %v2744
      %2889 = vst [vmem:[%s2875] ss:$4 sm:$0xff] %v2805
      %2890 = vst [vmem:[%s2877] ss:$4 sm:$0xff] %v2806
      %2891 = vst [vmem:[%s2879] ss:$4 sm:$0xff] %v2745
      %2892 = vst [vmem:[%s2881] ss:$4 sm:$0xff] %v2807
      %v2893 = vld.sshfl [vmem:[#allocation1] sm:$0xff pattern:$0x73625140]
      %v2894 = vld.sshfl [vmem:[#allocation1 + $0x20] sm:$0xff pattern:$0x73625140]
      %2895 = vst [vmem:[#allocation1] ss:$4 sm:$0xff] %v2808
      %2896 = vst [vmem:[%s2869] ss:$4 sm:$0xff] %v2809
      %2897 = vst [vmem:[%s2871] ss:$4 sm:$0xff] %v2746
      %2898 = vst [vmem:[%s2873] ss:$4 sm:$0xff] %v2810
      %2899 = vst [vmem:[%s2875] ss:$4 sm:$0xff] %v2811
      %2900 = vst [vmem:[%s2877] ss:$4 sm:$0xff] %v2747
      %2901 = vst [vmem:[%s2879] ss:$4 sm:$0xff] %v2812
      %2902 = vst [vmem:[%s2881] ss:$4 sm:$0xff] %v2813
      %v2903 = vld.sshfl [vmem:[#allocation1] sm:$0xff pattern:$0x73625140]
      %v2904 = vld.sshfl [vmem:[#allocation1 + $0x20] sm:$0xff pattern:$0x73625140]
      %2905 = vst [vmem:[#allocation1] ss:$4 sm:$0xff] %v2814
      %2906 = vst [vmem:[%s2869] ss:$4 sm:$0xff] %v2748
      %2907 = vst [vmem:[%s2871] ss:$4 sm:$0xff] %v2815
      %2908 = vst [vmem:[%s2873] ss:$4 sm:$0xff] %v2816
      %2909 = vst [vmem:[%s2875] ss:$4 sm:$0xff] %v2749
      %2910 = vst [vmem:[%s2877] ss:$4 sm:$0xff] %v2817
      %2911 = vst [vmem:[%s2879] ss:$4 sm:$0xff] %v2818
      %2912 = vst [vmem:[%s2881] ss:$4 sm:$0xff] %v2819
      %v2913 = vld.sshfl [vmem:[#allocation1] sm:$0xff pattern:$0x73625140]
      %v2914 = vld.sshfl [vmem:[#allocation1 + $0x20] sm:$0xff pattern:$0x73625140]
      %2915 = vst [vmem:[#allocation1] ss:$4 sm:$0xff] %v2750
      %2916 = vst [vmem:[%s2869] ss:$4 sm:$0xff] %v2820
      %2917 = vst [vmem:[%s2871] ss:$4 sm:$0xff] %v2821
      %2918 = vst [vmem:[%s2873] ss:$4 sm:$0xff] %v2751
      %2919 = vst [vmem:[%s2875] ss:$4 sm:$0xff] %v2822
      %2920 = vst [vmem:[%s2877] ss:$4 sm:$0xff] %v2823
      %2921 = vst [vmem:[%s2879] ss:$4 sm:$0xff] %v2824
      %2922 = vst [vmem:[%s2881] ss:$4 sm:$0xff] %v2752
      %v2923 = vld.sshfl [vmem:[#allocation1] sm:$0xff pattern:$0x73625140]
      %v2924 = vld.sshfl [vmem:[#allocation1 + $0x20] sm:$0xff pattern:$0x73625140]
      %2925 = vst [vmem:[#allocation1] ss:$4 sm:$0xff] %v2825
      %2926 = vst [vmem:[%s2869] ss:$4 sm:$0xff] %v2826
      %2927 = vst [vmem:[%s2871] ss:$4 sm:$0xff] %v2753
      %2928 = vst [vmem:[%s2873] ss:$4 sm:$0xff] %v2827
      %2929 = vst [vmem:[%s2875] ss:$4 sm:$0xff] %v2828
      %2930 = vst [vmem:[%s2877] ss:$4 sm:$0xff] %v2829
      %2931 = vst [vmem:[%s2879] ss:$4 sm:$0xff] %v2754
      %2932 = vst [vmem:[%s2881] ss:$4 sm:$0xff] %v2830
      %v2933 = vld.sshfl [vmem:[#allocation1] sm:$0xff pattern:$0x73625140]
      %v2934 = vld.sshfl [vmem:[#allocation1 + $0x20] sm:$0xff pattern:$0x73625140]
      %2935 = vst [vmem:[#allocation1] ss:$4 sm:$0xff] %v2831
      %2936 = vst [vmem:[%s2869] ss:$4 sm:$0xff] %v2755
      %2937 = vst [vmem:[%s2871] ss:$4 sm:$0xff] %v2832
      %2938 = vst [vmem:[%s2873] ss:$4 sm:$0xff] %v2833
      %2939 = vst [vmem:[%s2875] ss:$4 sm:$0xff] %v2834
      %2940 = vst [vmem:[%s2877] ss:$4 sm:$0xff] %v2756
      %2941 = vst [vmem:[%s2879] ss:$4 sm:$0xff] %v2835
      %2942 = vst [vmem:[%s2881] ss:$4 sm:$0xff] %v2836
      %v2943 = vld.sshfl [vmem:[#allocation1] sm:$0xff pattern:$0x73625140]
      %v2944 = vld.sshfl [vmem:[#allocation1 + $0x20] sm:$0xff pattern:$0x73625140]
      %2945 = vst [vmem:[#allocation1] ss:$4 sm:$0xff] %v2757
      %2946 = vst [vmem:[%s2869] ss:$4 sm:$0xff] %v2837
      %2947 = vst [vmem:[%s2871] ss:$4 sm:$0xff] %v2838
      %2948 = vst [vmem:[%s2873] ss:$4 sm:$0xff] %v2839
      %2949 = vst [vmem:[%s2875] ss:$4 sm:$0xff] %v2758
      %2950 = vst [vmem:[%s2877] ss:$4 sm:$0xff] %v2840
      %2951 = vst [vmem:[%s2879] ss:$4 sm:$0xff] %v2841
      %2952 = vst [vmem:[%s2881] ss:$4 sm:$0xff] %v2759
      %v2953 = vld.sshfl [vmem:[#allocation1] sm:$0xff pattern:$0x73625140]
      %v2954 = vld.sshfl [vmem:[#allocation1 + $0x20] sm:$0xff pattern:$0x73625140]
      %2955 = vst [vmem:[#allocation1] ss:$4 sm:$0xff] %v2842
      %2956 = vst [vmem:[%s2869] ss:$4 sm:$0xff] %v2843
      %2957 = vst [vmem:[%s2871] ss:$4 sm:$0xff] %v2844
      %2958 = vst [vmem:[%s2873] ss:$4 sm:$0xff] %v2760
      %2959 = vst [vmem:[%s2875] ss:$4 sm:$0xff] %v2845
      %2960 = vst [vmem:[%s2877] ss:$4 sm:$0xff] %v2846
      %2961 = vst [vmem:[%s2879] ss:$4 sm:$0xff] %v2761
      %2962 = vst [vmem:[%s2881] ss:$4 sm:$0xff] %v2847
      %v2963 = vld.sshfl [vmem:[#allocation1] sm:$0xff pattern:$0x73625140]
      %v2964 = vld.sshfl [vmem:[#allocation1 + $0x20] sm:$0xff pattern:$0x73625140]
      %2965 = vst [vmem:[#allocation1] ss:$4 sm:$0xff] %v2848
      %2966 = vst [vmem:[%s2869] ss:$4 sm:$0xff] %v2849
      %2967 = vst [vmem:[%s2871] ss:$4 sm:$0xff] %v2762
      %2968 = vst [vmem:[%s2873] ss:$4 sm:$0xff] %v2850
      %2969 = vst [vmem:[%s2875] ss:$4 sm:$0xff] %v2851
      %2970 = vst [vmem:[%s2877] ss:$4 sm:$0xff] %v2763
      %2971 = vst [vmem:[%s2879] ss:$4 sm:$0xff] %v2852
      %2972 = vst [vmem:[%s2881] ss:$4 sm:$0xff] %v2853
      %v2973 = vld.sshfl [vmem:[#allocation1] sm:$0xff pattern:$0x73625140]
      %v2974 = vld.sshfl [vmem:[#allocation1 + $0x20] sm:$0xff pattern:$0x73625140]
      %2975 = vst [vmem:[#allocation1] ss:$4 sm:$0xff] %v2854
      %2976 = vst [vmem:[%s2869] ss:$4 sm:$0xff] %v2764
      %2977 = vst [vmem:[%s2871] ss:$4 sm:$0xff] %v2855
      %2978 = vst [vmem:[%s2873] ss:$4 sm:$0xff] %v2856
      %2979 = vst [vmem:[%s2875] ss:$4 sm:$0xff] %v2765
      %2980 = vst [vmem:[%s2877] ss:$4 sm:$0xff] %v2857
      %2981 = vst [vmem:[%s2879] ss:$4 sm:$0xff] %v2858
      %2982 = vst [vmem:[%s2881] ss:$4 sm:$0xff] %v2859
      %v2983 = vld.sshfl [vmem:[#allocation1] sm:$0xff pattern:$0x73625140]
      %v2984 = vld.sshfl [vmem:[#allocation1 + $0x20] sm:$0xff pattern:$0x73625140]
      %2985 = vst [vmem:[#allocation1] ss:$4 sm:$0xff] %v2766
      %2986 = vst [vmem:[%s2869] ss:$4 sm:$0xff] %v2860
      %2987 = vst [vmem:[%s2871] ss:$4 sm:$0xff] %v2861
      %2988 = vst [vmem:[%s2873] ss:$4 sm:$0xff] %v2767
      %2989 = vst [vmem:[%s2875] ss:$4 sm:$0xff] %v2862
      %2990 = vst [vmem:[%s2877] ss:$4 sm:$0xff] %v2863
      %2991 = vst [vmem:[%s2879] ss:$4 sm:$0xff] %v2864
      %2992 = vst [vmem:[%s2881] ss:$4 sm:$0xff] %v2768
      %v2993 = vld.sshfl [vmem:[#allocation1] sm:$0xff pattern:$0x73625140]
      %v2994 = vld.sshfl [vmem:[#allocation1 + $0x20] sm:$0xff pattern:$0x73625140]
      %2995 = vst [vmem:[#allocation1] ss:$4 sm:$0xff] %v2865
      %2996 = vst [vmem:[%s2869] ss:$4 sm:$0xff] %v2866
      %v2997 = vld.sshfl [vmem:[#allocation1] sm:$0xff pattern:$0x73625140]
      %v2998 = vsel %vm609, %v2883, 0
      %v3000 = vsel %vm609, %v2884, 0
      %v3002 = vsel %vm609, %v2893, 0
      %v3004 = vsel %vm609, %v2894, 0
      %v3006 = vsel %vm609, %v2903, 0
      %v3008 = vsel %vm609, %v2904, 0
      %v3010 = vsel %vm609, %v2913, 0
      %v3012 = vsel %vm609, %v2914, 0
      %v3014 = vsel %vm609, %v2923, 0
      %v3016 = vsel %vm609, %v2924, 0
      %v3018 = vsel %vm609, %v2933, 0
      %v3020 = vsel %vm609, %v2934, 0
      %v3022 = vsel %vm609, %v2943, 0
      %v3024 = vsel %vm609, %v2944, 0
      %v3026 = vsel %vm609, %v2953, 0
      %v3028 = vsel %vm609, %v2954, 0
      %v3030 = vsel %vm609, %v2963, 0
      %v3032 = vsel %vm609, %v2964, 0
      %v3034 = vsel %vm609, %v2973, 0
      %v3036 = vsel %vm609, %v2974, 0
      %v3038 = vsel %vm609, %v2983, 0
      %v3040 = vsel %vm609, %v2984, 0
      %v3042 = vsel %vm609, %v2993, 0
      %v3044 = vsel %vm609, %v2994, 0
      %v3046 = vsel %vm609, %v2997, 0
      %v3049 = vsel %vm660, %v2867, 0
      %3051 = vmatpush.msra.mxu0 0.0
      %3052 = vmatpush.msra.mxu0 0.0
      %3053 = vmatpush.msra.mxu0 0.0
      %3054 = vmatpush.msra.mxu0 0.0
      %3055 = vmatpush.msra.mxu0 0.0
      %3056 = vmatpush.msra.mxu0 0.0
      %3057 = vmatpush.msra.mxu0 0.0
      %3058 = vmatpush.msra.mxu0 0.0
      %3059 = vmatpush.msra.mxu0 0.0
      %3060 = vmatpush.msra.mxu0 0.0
      %3061 = vmatpush.msra.mxu0 0.0
      %3062 = vmatpush.msra.mxu0 0.0
      %3063 = vmatpush.msra.mxu0 0.0
      %3064 = vmatpush.msra.mxu0 0.0
      %3065 = vmatpush.msra.mxu0 0.0
      %3066 = vmatpush.msra.mxu0 %v3049
      %3067 = vmatmul.f32.gmra.mxu0 %v2998
      %v3068 = vpop.f32.mrf.mxu0
      %v3069 = vadd.f32 0.0, %v3068
      %3070 = vmatmul.f32.gmra.mxu0 %v3000
      %v3071 = vpop.f32.mrf.mxu0
      %v3072 = vadd.f32 0.0, %v3071
      %3073 = vmatmul.f32.gmra.mxu0 %v3002
      %v3074 = vpop.f32.mrf.mxu0
      %v3075 = vadd.f32 0.0, %v3074
      %3076 = vmatmul.f32.gmra.mxu0 %v3004
      %v3077 = vpop.f32.mrf.mxu0
      %v3078 = vadd.f32 0.0, %v3077
      %3079 = vmatmul.f32.gmra.mxu0 %v3006
      %v3080 = vpop.f32.mrf.mxu0
      %v3081 = vadd.f32 0.0, %v3080
      %3082 = vmatmul.f32.gmra.mxu0 %v3008
      %v3083 = vpop.f32.mrf.mxu0
      %v3084 = vadd.f32 0.0, %v3083
      %3085 = vmatmul.f32.gmra.mxu0 %v3010
      %v3086 = vpop.f32.mrf.mxu0
      %v3087 = vadd.f32 0.0, %v3086
      %3088 = vmatmul.f32.gmra.mxu0 %v3012
      %v3089 = vpop.f32.mrf.mxu0
      %v3090 = vadd.f32 0.0, %v3089
      %3091 = vmatmul.f32.gmra.mxu0 %v3014
      %v3092 = vpop.f32.mrf.mxu0
      %v3093 = vadd.f32 0.0, %v3092
      %3094 = vmatmul.f32.gmra.mxu0 %v3016
      %v3095 = vpop.f32.mrf.mxu0
      %v3096 = vadd.f32 0.0, %v3095
      %3097 = vmatmul.f32.gmra.mxu0 %v3018
      %v3098 = vpop.f32.mrf.mxu0
      %v3099 = vadd.f32 0.0, %v3098
      %3100 = vmatmul.f32.gmra.mxu0 %v3020
      %v3101 = vpop.f32.mrf.mxu0
      %v3102 = vadd.f32 0.0, %v3101
      %3103 = vmatmul.f32.gmra.mxu0 %v3022
      %v3104 = vpop.f32.mrf.mxu0
      %v3105 = vadd.f32 0.0, %v3104
      %3106 = vmatmul.f32.gmra.mxu0 %v3024
      %v3107 = vpop.f32.mrf.mxu0
      %v3108 = vadd.f32 0.0, %v3107
      %3109 = vmatmul.f32.gmra.mxu0 %v3026
      %v3110 = vpop.f32.mrf.mxu0
      %v3111 = vadd.f32 0.0, %v3110
      %3112 = vmatmul.f32.gmra.mxu0 %v3028
      %v3113 = vpop.f32.mrf.mxu0
      %v3114 = vadd.f32 0.0, %v3113
      %3115 = vmatmul.f32.gmra.mxu0 %v3030
      %v3116 = vpop.f32.mrf.mxu0
      %v3117 = vadd.f32 0.0, %v3116
      %3118 = vmatmul.f32.gmra.mxu0 %v3032
      %v3119 = vpop.f32.mrf.mxu0
      %v3120 = vadd.f32 0.0, %v3119
      %3121 = vmatmul.f32.gmra.mxu0 %v3034
      %v3122 = vpop.f32.mrf.mxu0
      %v3123 = vadd.f32 0.0, %v3122
      %3124 = vmatmul.f32.gmra.mxu0 %v3036
      %v3125 = vpop.f32.mrf.mxu0
      %v3126 = vadd.f32 0.0, %v3125
      %3127 = vmatmul.f32.gmra.mxu0 %v3038
      %v3128 = vpop.f32.mrf.mxu0
      %v3129 = vadd.f32 0.0, %v3128
      %3130 = vmatmul.f32.gmra.mxu0 %v3040
      %v3131 = vpop.f32.mrf.mxu0
      %v3132 = vadd.f32 0.0, %v3131
      %3133 = vmatmul.f32.gmra.mxu0 %v3042
      %v3134 = vpop.f32.mrf.mxu0
      %v3135 = vadd.f32 0.0, %v3134
      %3136 = vmatmul.f32.gmra.mxu0 %v3044
      %v3137 = vpop.f32.mrf.mxu0
      %v3138 = vadd.f32 0.0, %v3137
      %3139 = vmatmul.f32.gmra.mxu0 %v3046
      %v3140 = vpop.f32.mrf.mxu0
      %v3141 = vadd.f32 0.0, %v3140
      %3142 = vdwg.mxu0
      %v3143 = vadd.f32 %v2715, %v3069
      %v3144 = vadd.f32 %v2716, %v3072
      %v3145 = vadd.f32 %v2717, %v3075
      %v3146 = vadd.f32 %v2718, %v3078
      %v3147 = vadd.f32 %v2719, %v3081
      %v3148 = vadd.f32 %v2720, %v3084
      %v3149 = vadd.f32 %v2721, %v3087
      %v3150 = vadd.f32 %v2722, %v3090
      %v3151 = vadd.f32 %v2723, %v3093
      %v3152 = vadd.f32 %v2724, %v3096
      %v3153 = vadd.f32 %v2725, %v3099
      %v3154 = vadd.f32 %v2726, %v3102
      %v3155 = vadd.f32 %v2727, %v3105
      %v3156 = vadd.f32 %v2728, %v3108
      %v3157 = vadd.f32 %v2729, %v3111
      %v3158 = vadd.f32 %v2730, %v3114
      %v3159 = vadd.f32 %v2731, %v3117
      %v3160 = vadd.f32 %v2732, %v3120
      %v3161 = vadd.f32 %v2733, %v3123
      %v3162 = vadd.f32 %v2734, %v3126
      %v3163 = vadd.f32 %v2735, %v3129
      %v3164 = vadd.f32 %v2736, %v3132
      %v3165 = vadd.f32 %v2737, %v3135
      %v3166 = vadd.f32 %v2738, %v3138
      %v3167 = vadd.f32 %v2739, %v3141
      %v3168 = vld [vmem:[%s2740 + $0x1] sm:$0xff]
      %v3169 = vld [vmem:[%s2740 + $0x9] sm:$0x3f]
      %v3170 = vld [vmem:[%s2740 + $0x11] sm:$0xff]
      %v3171 = vld [vmem:[%s2740 + $0x19] sm:$0x3f]
      %v3172 = vld [vmem:[%s2740 + $0x21] sm:$0xff]
      %v3173 = vld [vmem:[%s2740 + $0x29] sm:$0x3f]
      %v3174 = vld [vmem:[%s2740 + $0x31] sm:$0xff]
      %v3175 = vld [vmem:[%s2740 + $0x39] sm:$0x3f]
      %v3176 = vld [vmem:[%s2740 + $0x41] sm:$0xff]
      %v3177 = vld [vmem:[%s2740 + $0x49] sm:$0x3f]
      %v3178 = vld [vmem:[%s2740 + $0x51] sm:$0xff]
      %v3179 = vld [vmem:[%s2740 + $0x59] sm:$0x3f]
      %v3180 = vld [vmem:[%s2740 + $0x61] sm:$0xff]
      %v3181 = vld [vmem:[%s2740 + $0x69] sm:$0x3f]
      %v3182 = vld [vmem:[%s2740 + $0x71] sm:$0xff]
      %v3183 = vld [vmem:[%s2740 + $0x79] sm:$0x3f]
      %v3184 = vld [vmem:[%s2740 + $0x81] sm:$0xff]
      %v3185 = vld [vmem:[%s2740 + $0x89] sm:$0x3f]
      %v3186 = vld [vmem:[%s2740 + $0x91] sm:$0xff]
      %v3187 = vld [vmem:[%s2740 + $0x99] sm:$0x3f]
      %v3188 = vld [vmem:[%s2740 + $0xa1] sm:$0xff]
      %v3189 = vld [vmem:[%s2740 + $0xa9] sm:$0x3f]
      %v3190 = vld [vmem:[%s2740 + $0xb1] sm:$0xff]
      %v3191 = vld [vmem:[%s2740 + $0xb9] sm:$0x3f]
      %v3192 = vld [vmem:[%s2740 + $0xc1] sm:$0xff]
      %v3193 = vld [vmem:[%s2740 + $0xc9] sm:$0x3f]
      %v3194 = vld [vmem:[%s2740 + $0xd1] sm:$0xff]
      %v3195 = vld [vmem:[%s2740 + $0xd9] sm:$0x3f]
      %v3224 = vrot.slane %v3168, 2
      %v3225 = vrot.slane %v3168, 4
      %v3226 = vrot.slane %v3168, 6
      %v3227 = vrot.slane %v3169, 2
      %v3228 = vrot.slane %v3169, 4
      %v3229 = vrot.slane %v3170, 2
      %v3230 = vrot.slane %v3170, 4
      %v3231 = vrot.slane %v3170, 6
      %v3232 = vrot.slane %v3171, 2
      %v3233 = vrot.slane %v3171, 4
      %v3234 = vrot.slane %v3172, 2
      %v3235 = vrot.slane %v3172, 4
      %v3236 = vrot.slane %v3172, 6
      %v3237 = vrot.slane %v3173, 2
      %v3238 = vrot.slane %v3173, 4
      %v3239 = vrot.slane %v3174, 2
      %v3240 = vrot.slane %v3174, 4
      %v3241 = vrot.slane %v3174, 6
      %v3242 = vrot.slane %v3175, 2
      %v3243 = vrot.slane %v3175, 4
      %v3244 = vrot.slane %v3176, 2
      %v3245 = vrot.slane %v3176, 4
      %v3246 = vrot.slane %v3176, 6
      %v3247 = vrot.slane %v3177, 2
      %v3248 = vrot.slane %v3177, 4
      %v3249 = vrot.slane %v3178, 2
      %v3250 = vrot.slane %v3178, 4
      %v3251 = vrot.slane %v3178, 6
      %v3252 = vrot.slane %v3179, 2
      %v3253 = vrot.slane %v3179, 4
      %v3254 = vrot.slane %v3180, 2
      %v3255 = vrot.slane %v3180, 4
      %v3256 = vrot.slane %v3180, 6
      %v3257 = vrot.slane %v3181, 2
      %v3258 = vrot.slane %v3181, 4
      %v3259 = vrot.slane %v3182, 2
      %v3260 = vrot.slane %v3182, 4
      %v3261 = vrot.slane %v3182, 6
      %v3262 = vrot.slane %v3183, 2
      %v3263 = vrot.slane %v3183, 4
      %v3264 = vrot.slane %v3184, 2
      %v3265 = vrot.slane %v3184, 4
      %v3266 = vrot.slane %v3184, 6
      %v3267 = vrot.slane %v3185, 2
      %v3268 = vrot.slane %v3185, 4
      %v3269 = vrot.slane %v3186, 2
      %v3270 = vrot.slane %v3186, 4
      %v3271 = vrot.slane %v3186, 6
      %v3272 = vrot.slane %v3187, 2
      %v3273 = vrot.slane %v3187, 4
      %v3274 = vrot.slane %v3188, 2
      %v3275 = vrot.slane %v3188, 4
      %v3276 = vrot.slane %v3188, 6
      %v3277 = vrot.slane %v3189, 2
      %v3278 = vrot.slane %v3189, 4
      %v3279 = vrot.slane %v3190, 2
      %v3280 = vrot.slane %v3190, 4
      %v3281 = vrot.slane %v3190, 6
      %v3282 = vrot.slane %v3191, 2
      %v3283 = vrot.slane %v3191, 4
      %v3284 = vrot.slane %v3192, 2
      %v3285 = vrot.slane %v3192, 4
      %v3286 = vrot.slane %v3192, 6
      %v3287 = vrot.slane %v3193, 2
      %v3288 = vrot.slane %v3193, 4
      %v3289 = vrot.slane %v3194, 2
      %v3290 = vrot.slane %v3194, 4
      %v3291 = vrot.slane %v3194, 6
      %v3292 = vrot.slane %v3195, 2
      %v3293 = vrot.slane %v3195, 4
      %v3294 = vld [vmem:[%s1 + $0x1c] sm:$0xf]
      %3295 = vst [vmem:[#allocation1] ss:$4 sm:$0xff] %v3168
      %s3296 = scalar_lea.vmem [#allocation1], 1
      %3297 = vst [vmem:[%s3296] ss:$4 sm:$0xff] %v3224
      %s3298 = scalar_lea.vmem [#allocation1], 2
      %3299 = vst [vmem:[%s3298] ss:$4 sm:$0xff] %v3225
      %s3300 = scalar_lea.vmem [#allocation1], 3
      %3301 = vst [vmem:[%s3300] ss:$4 sm:$0xff] %v3226
      %s3302 = scalar_lea.vmem [#allocation1], 32
      %3303 = vst [vmem:[%s3302] ss:$4 sm:$0xff] %v3169
      %s3304 = scalar_lea.vmem [#allocation1], 33
      %3305 = vst [vmem:[%s3304] ss:$4 sm:$0xff] %v3227
      %s3306 = scalar_lea.vmem [#allocation1], 34
      %3307 = vst [vmem:[%s3306] ss:$4 sm:$0xff] %v3228
      %s3308 = scalar_lea.vmem [#allocation1], 35
      %3309 = vst [vmem:[%s3308] ss:$4 sm:$0xff] %v3170
      %v3310 = vld.sshfl [vmem:[#allocation1] sm:$0xff pattern:$0x73625140]
      %v3311 = vld.sshfl [vmem:[#allocation1 + $0x20] sm:$0xff pattern:$0x73625140]
      %3312 = vst [vmem:[#allocation1] ss:$4 sm:$0xff] %v3229
      %3313 = vst [vmem:[%s3296] ss:$4 sm:$0xff] %v3230
      %3314 = vst [vmem:[%s3298] ss:$4 sm:$0xff] %v3231
      %3315 = vst [vmem:[%s3300] ss:$4 sm:$0xff] %v3171
      %3316 = vst [vmem:[%s3302] ss:$4 sm:$0xff] %v3232
      %3317 = vst [vmem:[%s3304] ss:$4 sm:$0xff] %v3233
      %3318 = vst [vmem:[%s3306] ss:$4 sm:$0xff] %v3172
      %3319 = vst [vmem:[%s3308] ss:$4 sm:$0xff] %v3234
      %v3320 = vld.sshfl [vmem:[#allocation1] sm:$0xff pattern:$0x73625140]
      %v3321 = vld.sshfl [vmem:[#allocation1 + $0x20] sm:$0xff pattern:$0x73625140]
      %3322 = vst [vmem:[#allocation1] ss:$4 sm:$0xff] %v3235
      %3323 = vst [vmem:[%s3296] ss:$4 sm:$0xff] %v3236
      %3324 = vst [vmem:[%s3298] ss:$4 sm:$0xff] %v3173
      %3325 = vst [vmem:[%s3300] ss:$4 sm:$0xff] %v3237
      %3326 = vst [vmem:[%s3302] ss:$4 sm:$0xff] %v3238
      %3327 = vst [vmem:[%s3304] ss:$4 sm:$0xff] %v3174
      %3328 = vst [vmem:[%s3306] ss:$4 sm:$0xff] %v3239
      %3329 = vst [vmem:[%s3308] ss:$4 sm:$0xff] %v3240
      %v3330 = vld.sshfl [vmem:[#allocation1] sm:$0xff pattern:$0x73625140]
      %v3331 = vld.sshfl [vmem:[#allocation1 + $0x20] sm:$0xff pattern:$0x73625140]
      %3332 = vst [vmem:[#allocation1] ss:$4 sm:$0xff] %v3241
      %3333 = vst [vmem:[%s3296] ss:$4 sm:$0xff] %v3175
      %3334 = vst [vmem:[%s3298] ss:$4 sm:$0xff] %v3242
      %3335 = vst [vmem:[%s3300] ss:$4 sm:$0xff] %v3243
      %3336 = vst [vmem:[%s3302] ss:$4 sm:$0xff] %v3176
      %3337 = vst [vmem:[%s3304] ss:$4 sm:$0xff] %v3244
      %3338 = vst [vmem:[%s3306] ss:$4 sm:$0xff] %v3245
      %3339 = vst [vmem:[%s3308] ss:$4 sm:$0xff] %v3246
      %v3340 = vld.sshfl [vmem:[#allocation1] sm:$0xff pattern:$0x73625140]
      %v3341 = vld.sshfl [vmem:[#allocation1 + $0x20] sm:$0xff pattern:$0x73625140]
      %3342 = vst [vmem:[#allocation1] ss:$4 sm:$0xff] %v3177
      %3343 = vst [vmem:[%s3296] ss:$4 sm:$0xff] %v3247
      %3344 = vst [vmem:[%s3298] ss:$4 sm:$0xff] %v3248
      %3345 = vst [vmem:[%s3300] ss:$4 sm:$0xff] %v3178
      %3346 = vst [vmem:[%s3302] ss:$4 sm:$0xff] %v3249
      %3347 = vst [vmem:[%s3304] ss:$4 sm:$0xff] %v3250
      %3348 = vst [vmem:[%s3306] ss:$4 sm:$0xff] %v3251
      %3349 = vst [vmem:[%s3308] ss:$4 sm:$0xff] %v3179
      %v3350 = vld.sshfl [vmem:[#allocation1] sm:$0xff pattern:$0x73625140]
      %v3351 = vld.sshfl [vmem:[#allocation1 + $0x20] sm:$0xff pattern:$0x73625140]
      %3352 = vst [vmem:[#allocation1] ss:$4 sm:$0xff] %v3252
      %3353 = vst [vmem:[%s3296] ss:$4 sm:$0xff] %v3253
      %3354 = vst [vmem:[%s3298] ss:$4 sm:$0xff] %v3180
      %3355 = vst [vmem:[%s3300] ss:$4 sm:$0xff] %v3254
      %3356 = vst [vmem:[%s3302] ss:$4 sm:$0xff] %v3255
      %3357 = vst [vmem:[%s3304] ss:$4 sm:$0xff] %v3256
      %3358 = vst [vmem:[%s3306] ss:$4 sm:$0xff] %v3181
      %3359 = vst [vmem:[%s3308] ss:$4 sm:$0xff] %v3257
      %v3360 = vld.sshfl [vmem:[#allocation1] sm:$0xff pattern:$0x73625140]
      %v3361 = vld.sshfl [vmem:[#allocation1 + $0x20] sm:$0xff pattern:$0x73625140]
      %3362 = vst [vmem:[#allocation1] ss:$4 sm:$0xff] %v3258
      %3363 = vst [vmem:[%s3296] ss:$4 sm:$0xff] %v3182
      %3364 = vst [vmem:[%s3298] ss:$4 sm:$0xff] %v3259
      %3365 = vst [vmem:[%s3300] ss:$4 sm:$0xff] %v3260
      %3366 = vst [vmem:[%s3302] ss:$4 sm:$0xff] %v3261
      %3367 = vst [vmem:[%s3304] ss:$4 sm:$0xff] %v3183
      %3368 = vst [vmem:[%s3306] ss:$4 sm:$0xff] %v3262
      %3369 = vst [vmem:[%s3308] ss:$4 sm:$0xff] %v3263
      %v3370 = vld.sshfl [vmem:[#allocation1] sm:$0xff pattern:$0x73625140]
      %v3371 = vld.sshfl [vmem:[#allocation1 + $0x20] sm:$0xff pattern:$0x73625140]
      %3372 = vst [vmem:[#allocation1] ss:$4 sm:$0xff] %v3184
      %3373 = vst [vmem:[%s3296] ss:$4 sm:$0xff] %v3264
      %3374 = vst [vmem:[%s3298] ss:$4 sm:$0xff] %v3265
      %3375 = vst [vmem:[%s3300] ss:$4 sm:$0xff] %v3266
      %3376 = vst [vmem:[%s3302] ss:$4 sm:$0xff] %v3185
      %3377 = vst [vmem:[%s3304] ss:$4 sm:$0xff] %v3267
      %3378 = vst [vmem:[%s3306] ss:$4 sm:$0xff] %v3268
      %3379 = vst [vmem:[%s3308] ss:$4 sm:$0xff] %v3186
      %v3380 = vld.sshfl [vmem:[#allocation1] sm:$0xff pattern:$0x73625140]
      %v3381 = vld.sshfl [vmem:[#allocation1 + $0x20] sm:$0xff pattern:$0x73625140]
      %3382 = vst [vmem:[#allocation1] ss:$4 sm:$0xff] %v3269
      %3383 = vst [vmem:[%s3296] ss:$4 sm:$0xff] %v3270
      %3384 = vst [vmem:[%s3298] ss:$4 sm:$0xff] %v3271
      %3385 = vst [vmem:[%s3300] ss:$4 sm:$0xff] %v3187
      %3386 = vst [vmem:[%s3302] ss:$4 sm:$0xff] %v3272
      %3387 = vst [vmem:[%s3304] ss:$4 sm:$0xff] %v3273
      %3388 = vst [vmem:[%s3306] ss:$4 sm:$0xff] %v3188
      %3389 = vst [vmem:[%s3308] ss:$4 sm:$0xff] %v3274
      %v3390 = vld.sshfl [vmem:[#allocation1] sm:$0xff pattern:$0x73625140]
      %v3391 = vld.sshfl [vmem:[#allocation1 + $0x20] sm:$0xff pattern:$0x73625140]
      %3392 = vst [vmem:[#allocation1] ss:$4 sm:$0xff] %v3275
      %3393 = vst [vmem:[%s3296] ss:$4 sm:$0xff] %v3276
      %3394 = vst [vmem:[%s3298] ss:$4 sm:$0xff] %v3189
      %3395 = vst [vmem:[%s3300] ss:$4 sm:$0xff] %v3277
      %3396 = vst [vmem:[%s3302] ss:$4 sm:$0xff] %v3278
      %3397 = vst [vmem:[%s3304] ss:$4 sm:$0xff] %v3190
      %3398 = vst [vmem:[%s3306] ss:$4 sm:$0xff] %v3279
      %3399 = vst [vmem:[%s3308] ss:$4 sm:$0xff] %v3280
      %v3400 = vld.sshfl [vmem:[#allocation1] sm:$0xff pattern:$0x73625140]
      %v3401 = vld.sshfl [vmem:[#allocation1 + $0x20] sm:$0xff pattern:$0x73625140]
      %3402 = vst [vmem:[#allocation1] ss:$4 sm:$0xff] %v3281
      %3403 = vst [vmem:[%s3296] ss:$4 sm:$0xff] %v3191
      %3404 = vst [vmem:[%s3298] ss:$4 sm:$0xff] %v3282
      %3405 = vst [vmem:[%s3300] ss:$4 sm:$0xff] %v3283
      %3406 = vst [vmem:[%s3302] ss:$4 sm:$0xff] %v3192
      %3407 = vst [vmem:[%s3304] ss:$4 sm:$0xff] %v3284
      %3408 = vst [vmem:[%s3306] ss:$4 sm:$0xff] %v3285
      %3409 = vst [vmem:[%s3308] ss:$4 sm:$0xff] %v3286
      %v3410 = vld.sshfl [vmem:[#allocation1] sm:$0xff pattern:$0x73625140]
      %v3411 = vld.sshfl [vmem:[#allocation1 + $0x20] sm:$0xff pattern:$0x73625140]
      %3412 = vst [vmem:[#allocation1] ss:$4 sm:$0xff] %v3193
      %3413 = vst [vmem:[%s3296] ss:$4 sm:$0xff] %v3287
      %3414 = vst [vmem:[%s3298] ss:$4 sm:$0xff] %v3288
      %3415 = vst [vmem:[%s3300] ss:$4 sm:$0xff] %v3194
      %3416 = vst [vmem:[%s3302] ss:$4 sm:$0xff] %v3289
      %3417 = vst [vmem:[%s3304] ss:$4 sm:$0xff] %v3290
      %3418 = vst [vmem:[%s3306] ss:$4 sm:$0xff] %v3291
      %3419 = vst [vmem:[%s3308] ss:$4 sm:$0xff] %v3195
      %v3420 = vld.sshfl [vmem:[#allocation1] sm:$0xff pattern:$0x73625140]
      %v3421 = vld.sshfl [vmem:[#allocation1 + $0x20] sm:$0xff pattern:$0x73625140]
      %3422 = vst [vmem:[#allocation1] ss:$4 sm:$0xff] %v3292
      %3423 = vst [vmem:[%s3296] ss:$4 sm:$0xff] %v3293
      %v3424 = vld.sshfl [vmem:[#allocation1] sm:$0xff pattern:$0x73625140]
      %v3425 = vsel %vm609, %v3310, 0
      %v3427 = vsel %vm609, %v3311, 0
      %v3429 = vsel %vm609, %v3320, 0
      %v3431 = vsel %vm609, %v3321, 0
      %v3433 = vsel %vm609, %v3330, 0
      %v3435 = vsel %vm609, %v3331, 0
      %v3437 = vsel %vm609, %v3340, 0
      %v3439 = vsel %vm609, %v3341, 0
      %v3441 = vsel %vm609, %v3350, 0
      %v3443 = vsel %vm609, %v3351, 0
      %v3445 = vsel %vm609, %v3360, 0
      %v3447 = vsel %vm609, %v3361, 0
      %v3449 = vsel %vm609, %v3370, 0
      %v3451 = vsel %vm609, %v3371, 0
      %v3453 = vsel %vm609, %v3380, 0
      %v3455 = vsel %vm609, %v3381, 0
      %v3457 = vsel %vm609, %v3390, 0
      %v3459 = vsel %vm609, %v3391, 0
      %v3461 = vsel %vm609, %v3400, 0
      %v3463 = vsel %vm609, %v3401, 0
      %v3465 = vsel %vm609, %v3410, 0
      %v3467 = vsel %vm609, %v3411, 0
      %v3469 = vsel %vm609, %v3420, 0
      %v3471 = vsel %vm609, %v3421, 0
      %v3473 = vsel %vm609, %v3424, 0
      %v3476 = vsel %vm660, %v3294, 0
      %3478 = vmatpush.msra.mxu0 0.0
      %3479 = vmatpush.msra.mxu0 0.0
      %3480 = vmatpush.msra.mxu0 0.0
      %3481 = vmatpush.msra.mxu0 0.0
      %3482 = vmatpush.msra.mxu0 0.0
      %3483 = vmatpush.msra.mxu0 0.0
      %3484 = vmatpush.msra.mxu0 0.0
      %3485 = vmatpush.msra.mxu0 0.0
      %3486 = vmatpush.msra.mxu0 0.0
      %3487 = vmatpush.msra.mxu0 0.0
      %3488 = vmatpush.msra.mxu0 0.0
      %3489 = vmatpush.msra.mxu0 0.0
      %3490 = vmatpush.msra.mxu0 0.0
      %3491 = vmatpush.msra.mxu0 0.0
      %3492 = vmatpush.msra.mxu0 0.0
      %3493 = vmatpush.msra.mxu0 %v3476
      %3494 = vmatmul.f32.gmra.mxu0 %v3425
      %v3495 = vpop.f32.mrf.mxu0
      %v3496 = vadd.f32 0.0, %v3495
      %3497 = vmatmul.f32.gmra.mxu0 %v3427
      %v3498 = vpop.f32.mrf.mxu0
      %v3499 = vadd.f32 0.0, %v3498
      %3500 = vmatmul.f32.gmra.mxu0 %v3429
      %v3501 = vpop.f32.mrf.mxu0
      %v3502 = vadd.f32 0.0, %v3501
      %3503 = vmatmul.f32.gmra.mxu0 %v3431
      %v3504 = vpop.f32.mrf.mxu0
      %v3505 = vadd.f32 0.0, %v3504
      %3506 = vmatmul.f32.gmra.mxu0 %v3433
      %v3507 = vpop.f32.mrf.mxu0
      %v3508 = vadd.f32 0.0, %v3507
      %3509 = vmatmul.f32.gmra.mxu0 %v3435
      %v3510 = vpop.f32.mrf.mxu0
      %v3511 = vadd.f32 0.0, %v3510
      %3512 = vmatmul.f32.gmra.mxu0 %v3437
      %v3513 = vpop.f32.mrf.mxu0
      %v3514 = vadd.f32 0.0, %v3513
      %3515 = vmatmul.f32.gmra.mxu0 %v3439
      %v3516 = vpop.f32.mrf.mxu0
      %v3517 = vadd.f32 0.0, %v3516
      %3518 = vmatmul.f32.gmra.mxu0 %v3441
      %v3519 = vpop.f32.mrf.mxu0
      %v3520 = vadd.f32 0.0, %v3519
      %3521 = vmatmul.f32.gmra.mxu0 %v3443
      %v3522 = vpop.f32.mrf.mxu0
      %v3523 = vadd.f32 0.0, %v3522
      %3524 = vmatmul.f32.gmra.mxu0 %v3445
      %v3525 = vpop.f32.mrf.mxu0
      %v3526 = vadd.f32 0.0, %v3525
      %3527 = vmatmul.f32.gmra.mxu0 %v3447
      %v3528 = vpop.f32.mrf.mxu0
      %v3529 = vadd.f32 0.0, %v3528
      %3530 = vmatmul.f32.gmra.mxu0 %v3449
      %v3531 = vpop.f32.mrf.mxu0
      %v3532 = vadd.f32 0.0, %v3531
      %3533 = vmatmul.f32.gmra.mxu0 %v3451
      %v3534 = vpop.f32.mrf.mxu0
      %v3535 = vadd.f32 0.0, %v3534
      %3536 = vmatmul.f32.gmra.mxu0 %v3453
      %v3537 = vpop.f32.mrf.mxu0
      %v3538 = vadd.f32 0.0, %v3537
      %3539 = vmatmul.f32.gmra.mxu0 %v3455
      %v3540 = vpop.f32.mrf.mxu0
      %v3541 = vadd.f32 0.0, %v3540
      %3542 = vmatmul.f32.gmra.mxu0 %v3457
      %v3543 = vpop.f32.mrf.mxu0
      %v3544 = vadd.f32 0.0, %v3543
      %3545 = vmatmul.f32.gmra.mxu0 %v3459
      %v3546 = vpop.f32.mrf.mxu0
      %v3547 = vadd.f32 0.0, %v3546
      %3548 = vmatmul.f32.gmra.mxu0 %v3461
      %v3549 = vpop.f32.mrf.mxu0
      %v3550 = vadd.f32 0.0, %v3549
      %3551 = vmatmul.f32.gmra.mxu0 %v3463
      %v3552 = vpop.f32.mrf.mxu0
      %v3553 = vadd.f32 0.0, %v3552
      %3554 = vmatmul.f32.gmra.mxu0 %v3465
      %v3555 = vpop.f32.mrf.mxu0
      %v3556 = vadd.f32 0.0, %v3555
      %3557 = vmatmul.f32.gmra.mxu0 %v3467
      %v3558 = vpop.f32.mrf.mxu0
      %v3559 = vadd.f32 0.0, %v3558
      %3560 = vmatmul.f32.gmra.mxu0 %v3469
      %v3561 = vpop.f32.mrf.mxu0
      %v3562 = vadd.f32 0.0, %v3561
      %3563 = vmatmul.f32.gmra.mxu0 %v3471
      %v3564 = vpop.f32.mrf.mxu0
      %v3565 = vadd.f32 0.0, %v3564
      %3566 = vmatmul.f32.gmra.mxu0 %v3473
      %v3567 = vpop.f32.mrf.mxu0
      %v3568 = vadd.f32 0.0, %v3567
      %3569 = vdwg.mxu0
      %v3570 = vadd.f32 %v3143, %v3496
      %v3571 = vadd.f32 %v3144, %v3499
      %v3572 = vadd.f32 %v3145, %v3502
      %v3573 = vadd.f32 %v3146, %v3505
      %v3574 = vadd.f32 %v3147, %v3508
      %v3575 = vadd.f32 %v3148, %v3511
      %v3576 = vadd.f32 %v3149, %v3514
      %v3577 = vadd.f32 %v3150, %v3517
      %v3578 = vadd.f32 %v3151, %v3520
      %v3579 = vadd.f32 %v3152, %v3523
      %v3580 = vadd.f32 %v3153, %v3526
      %v3581 = vadd.f32 %v3154, %v3529
      %v3582 = vadd.f32 %v3155, %v3532
      %v3583 = vadd.f32 %v3156, %v3535
      %v3584 = vadd.f32 %v3157, %v3538
      %v3585 = vadd.f32 %v3158, %v3541
      %v3586 = vadd.f32 %v3159, %v3544
      %v3587 = vadd.f32 %v3160, %v3547
      %v3588 = vadd.f32 %v3161, %v3550
      %v3589 = vadd.f32 %v3162, %v3553
      %v3590 = vadd.f32 %v3163, %v3556
      %v3591 = vadd.f32 %v3164, %v3559
      %v3592 = vadd.f32 %v3165, %v3562
      %v3593 = vadd.f32 %v3166, %v3565
      %v3594 = vadd.f32 %v3167, %v3568
      %v3595 = vld [vmem:[%s2740 + $0x2] sm:$0xff]
      %v3596 = vld [vmem:[%s2740 + $0xa] sm:$0x3f]
      %v3597 = vld [vmem:[%s2740 + $0x12] sm:$0xff]
      %v3598 = vld [vmem:[%s2740 + $0x1a] sm:$0x3f]
      %v3599 = vld [vmem:[%s2740 + $0x22] sm:$0xff]
      %v3600 = vld [vmem:[%s2740 + $0x2a] sm:$0x3f]
      %v3601 = vld [vmem:[%s2740 + $0x32] sm:$0xff]
      %v3602 = vld [vmem:[%s2740 + $0x3a] sm:$0x3f]
      %v3603 = vld [vmem:[%s2740 + $0x42] sm:$0xff]
      %v3604 = vld [vmem:[%s2740 + $0x4a] sm:$0x3f]
      %v3605 = vld [vmem:[%s2740 + $0x52] sm:$0xff]
      %v3606 = vld [vmem:[%s2740 + $0x5a] sm:$0x3f]
      %v3607 = vld [vmem:[%s2740 + $0x62] sm:$0xff]
      %v3608 = vld [vmem:[%s2740 + $0x6a] sm:$0x3f]
      %v3609 = vld [vmem:[%s2740 + $0x72] sm:$0xff]
      %v3610 = vld [vmem:[%s2740 + $0x7a] sm:$0x3f]
      %v3611 = vld [vmem:[%s2740 + $0x82] sm:$0xff]
      %v3612 = vld [vmem:[%s2740 + $0x8a] sm:$0x3f]
      %v3613 = vld [vmem:[%s2740 + $0x92] sm:$0xff]
      %v3614 = vld [vmem:[%s2740 + $0x9a] sm:$0x3f]
      %v3615 = vld [vmem:[%s2740 + $0xa2] sm:$0xff]
      %v3616 = vld [vmem:[%s2740 + $0xaa] sm:$0x3f]
      %v3617 = vld [vmem:[%s2740 + $0xb2] sm:$0xff]
      %v3618 = vld [vmem:[%s2740 + $0xba] sm:$0x3f]
      %v3619 = vld [vmem:[%s2740 + $0xc2] sm:$0xff]
      %v3620 = vld [vmem:[%s2740 + $0xca] sm:$0x3f]
      %v3621 = vld [vmem:[%s2740 + $0xd2] sm:$0xff]
      %v3622 = vld [vmem:[%s2740 + $0xda] sm:$0x3f]
      %v3651 = vrot.slane %v3595, 2
      %v3652 = vrot.slane %v3595, 4
      %v3653 = vrot.slane %v3595, 6
      %v3654 = vrot.slane %v3596, 2
      %v3655 = vrot.slane %v3596, 4
      %v3656 = vrot.slane %v3597, 2
      %v3657 = vrot.slane %v3597, 4
      %v3658 = vrot.slane %v3597, 6
      %v3659 = vrot.slane %v3598, 2
      %v3660 = vrot.slane %v3598, 4
      %v3661 = vrot.slane %v3599, 2
      %v3662 = vrot.slane %v3599, 4
      %v3663 = vrot.slane %v3599, 6
      %v3664 = vrot.slane %v3600, 2
      %v3665 = vrot.slane %v3600, 4
      %v3666 = vrot.slane %v3601, 2
      %v3667 = vrot.slane %v3601, 4
      %v3668 = vrot.slane %v3601, 6
      %v3669 = vrot.slane %v3602, 2
      %v3670 = vrot.slane %v3602, 4
      %v3671 = vrot.slane %v3603, 2
      %v3672 = vrot.slane %v3603, 4
      %v3673 = vrot.slane %v3603, 6
      %v3674 = vrot.slane %v3604, 2
      %v3675 = vrot.slane %v3604, 4
      %v3676 = vrot.slane %v3605, 2
      %v3677 = vrot.slane %v3605, 4
      %v3678 = vrot.slane %v3605, 6
      %v3679 = vrot.slane %v3606, 2
      %v3680 = vrot.slane %v3606, 4
      %v3681 = vrot.slane %v3607, 2
      %v3682 = vrot.slane %v3607, 4
      %v3683 = vrot.slane %v3607, 6
      %v3684 = vrot.slane %v3608, 2
      %v3685 = vrot.slane %v3608, 4
      %v3686 = vrot.slane %v3609, 2
      %v3687 = vrot.slane %v3609, 4
      %v3688 = vrot.slane %v3609, 6
      %v3689 = vrot.slane %v3610, 2
      %v3690 = vrot.slane %v3610, 4
      %v3691 = vrot.slane %v3611, 2
      %v3692 = vrot.slane %v3611, 4
      %v3693 = vrot.slane %v3611, 6
      %v3694 = vrot.slane %v3612, 2
      %v3695 = vrot.slane %v3612, 4
      %v3696 = vrot.slane %v3613, 2
      %v3697 = vrot.slane %v3613, 4
      %v3698 = vrot.slane %v3613, 6
      %v3699 = vrot.slane %v3614, 2
      %v3700 = vrot.slane %v3614, 4
      %v3701 = vrot.slane %v3615, 2
      %v3702 = vrot.slane %v3615, 4
      %v3703 = vrot.slane %v3615, 6
      %v3704 = vrot.slane %v3616, 2
      %v3705 = vrot.slane %v3616, 4
      %v3706 = vrot.slane %v3617, 2
      %v3707 = vrot.slane %v3617, 4
      %v3708 = vrot.slane %v3617, 6
      %v3709 = vrot.slane %v3618, 2
      %v3710 = vrot.slane %v3618, 4
      %v3711 = vrot.slane %v3619, 2
      %v3712 = vrot.slane %v3619, 4
      %v3713 = vrot.slane %v3619, 6
      %v3714 = vrot.slane %v3620, 2
      %v3715 = vrot.slane %v3620, 4
      %v3716 = vrot.slane %v3621, 2
      %v3717 = vrot.slane %v3621, 4
      %v3718 = vrot.slane %v3621, 6
      %v3719 = vrot.slane %v3622, 2
      %v3720 = vrot.slane %v3622, 4
      %v3721 = vld [vmem:[%s1 + $0x20] sm:$0xf]
      %3722 = vst [vmem:[#allocation1] ss:$4 sm:$0xff] %v3595
      %s3723 = scalar_lea.vmem [#allocation1], 1
      %3724 = vst [vmem:[%s3723] ss:$4 sm:$0xff] %v3651
      %s3725 = scalar_lea.vmem [#allocation1], 2
      %3726 = vst [vmem:[%s3725] ss:$4 sm:$0xff] %v3652
      %s3727 = scalar_lea.vmem [#allocation1], 3
      %3728 = vst [vmem:[%s3727] ss:$4 sm:$0xff] %v3653
      %s3729 = scalar_lea.vmem [#allocation1], 32
      %3730 = vst [vmem:[%s3729] ss:$4 sm:$0xff] %v3596
      %s3731 = scalar_lea.vmem [#allocation1], 33
      %3732 = vst [vmem:[%s3731] ss:$4 sm:$0xff] %v3654
      %s3733 = scalar_lea.vmem [#allocation1], 34
      %3734 = vst [vmem:[%s3733] ss:$4 sm:$0xff] %v3655
      %s3735 = scalar_lea.vmem [#allocation1], 35
      %3736 = vst [vmem:[%s3735] ss:$4 sm:$0xff] %v3597
      %v3737 = vld.sshfl [vmem:[#allocation1] sm:$0xff pattern:$0x73625140]
      %v3738 = vld.sshfl [vmem:[#allocation1 + $0x20] sm:$0xff pattern:$0x73625140]
      %3739 = vst [vmem:[#allocation1] ss:$4 sm:$0xff] %v3656
      %3740 = vst [vmem:[%s3723] ss:$4 sm:$0xff] %v3657
      %3741 = vst [vmem:[%s3725] ss:$4 sm:$0xff] %v3658
      %3742 = vst [vmem:[%s3727] ss:$4 sm:$0xff] %v3598
      %3743 = vst [vmem:[%s3729] ss:$4 sm:$0xff] %v3659
      %3744 = vst [vmem:[%s3731] ss:$4 sm:$0xff] %v3660
      %3745 = vst [vmem:[%s3733] ss:$4 sm:$0xff] %v3599
      %3746 = vst [vmem:[%s3735] ss:$4 sm:$0xff] %v3661
      %v3747 = vld.sshfl [vmem:[#allocation1] sm:$0xff pattern:$0x73625140]
      %v3748 = vld.sshfl [vmem:[#allocation1 + $0x20] sm:$0xff pattern:$0x73625140]
      %3749 = vst [vmem:[#allocation1] ss:$4 sm:$0xff] %v3662
      %3750 = vst [vmem:[%s3723] ss:$4 sm:$0xff] %v3663
      %3751 = vst [vmem:[%s3725] ss:$4 sm:$0xff] %v3600
      %3752 = vst [vmem:[%s3727] ss:$4 sm:$0xff] %v3664
      %3753 = vst [vmem:[%s3729] ss:$4 sm:$0xff] %v3665
      %3754 = vst [vmem:[%s3731] ss:$4 sm:$0xff] %v3601
      %3755 = vst [vmem:[%s3733] ss:$4 sm:$0xff] %v3666
      %3756 = vst [vmem:[%s3735] ss:$4 sm:$0xff] %v3667
      %v3757 = vld.sshfl [vmem:[#allocation1] sm:$0xff pattern:$0x73625140]
      %v3758 = vld.sshfl [vmem:[#allocation1 + $0x20] sm:$0xff pattern:$0x73625140]
      %3759 = vst [vmem:[#allocation1] ss:$4 sm:$0xff] %v3668
      %3760 = vst [vmem:[%s3723] ss:$4 sm:$0xff] %v3602
      %3761 = vst [vmem:[%s3725] ss:$4 sm:$0xff] %v3669
      %3762 = vst [vmem:[%s3727] ss:$4 sm:$0xff] %v3670
      %3763 = vst [vmem:[%s3729] ss:$4 sm:$0xff] %v3603
      %3764 = vst [vmem:[%s3731] ss:$4 sm:$0xff] %v3671
      %3765 = vst [vmem:[%s3733] ss:$4 sm:$0xff] %v3672
      %3766 = vst [vmem:[%s3735] ss:$4 sm:$0xff] %v3673
      %v3767 = vld.sshfl [vmem:[#allocation1] sm:$0xff pattern:$0x73625140]
      %v3768 = vld.sshfl [vmem:[#allocation1 + $0x20] sm:$0xff pattern:$0x73625140]
      %3769 = vst [vmem:[#allocation1] ss:$4 sm:$0xff] %v3604
      %3770 = vst [vmem:[%s3723] ss:$4 sm:$0xff] %v3674
      %3771 = vst [vmem:[%s3725] ss:$4 sm:$0xff] %v3675
      %3772 = vst [vmem:[%s3727] ss:$4 sm:$0xff] %v3605
      %3773 = vst [vmem:[%s3729] ss:$4 sm:$0xff] %v3676
      %3774 = vst [vmem:[%s3731] ss:$4 sm:$0xff] %v3677
      %3775 = vst [vmem:[%s3733] ss:$4 sm:$0xff] %v3678
      %3776 = vst [vmem:[%s3735] ss:$4 sm:$0xff] %v3606
      %v3777 = vld.sshfl [vmem:[#allocation1] sm:$0xff pattern:$0x73625140]
      %v3778 = vld.sshfl [vmem:[#allocation1 + $0x20] sm:$0xff pattern:$0x73625140]
      %3779 = vst [vmem:[#allocation1] ss:$4 sm:$0xff] %v3679
      %3780 = vst [vmem:[%s3723] ss:$4 sm:$0xff] %v3680
      %3781 = vst [vmem:[%s3725] ss:$4 sm:$0xff] %v3607
      %3782 = vst [vmem:[%s3727] ss:$4 sm:$0xff] %v3681
      %3783 = vst [vmem:[%s3729] ss:$4 sm:$0xff] %v3682
      %3784 = vst [vmem:[%s3731] ss:$4 sm:$0xff] %v3683
      %3785 = vst [vmem:[%s3733] ss:$4 sm:$0xff] %v3608
      %3786 = vst [vmem:[%s3735] ss:$4 sm:$0xff] %v3684
      %v3787 = vld.sshfl [vmem:[#allocation1] sm:$0xff pattern:$0x73625140]
      %v3788 = vld.sshfl [vmem:[#allocation1 + $0x20] sm:$0xff pattern:$0x73625140]
      %3789 = vst [vmem:[#allocation1] ss:$4 sm:$0xff] %v3685
      %3790 = vst [vmem:[%s3723] ss:$4 sm:$0xff] %v3609
      %3791 = vst [vmem:[%s3725] ss:$4 sm:$0xff] %v3686
      %3792 = vst [vmem:[%s3727] ss:$4 sm:$0xff] %v3687
      %3793 = vst [vmem:[%s3729] ss:$4 sm:$0xff] %v3688
      %3794 = vst [vmem:[%s3731] ss:$4 sm:$0xff] %v3610
      %3795 = vst [vmem:[%s3733] ss:$4 sm:$0xff] %v3689
      %3796 = vst [vmem:[%s3735] ss:$4 sm:$0xff] %v3690
      %v3797 = vld.sshfl [vmem:[#allocation1] sm:$0xff pattern:$0x73625140]
      %v3798 = vld.sshfl [vmem:[#allocation1 + $0x20] sm:$0xff pattern:$0x73625140]
      %3799 = vst [vmem:[#allocation1] ss:$4 sm:$0xff] %v3611
      %3800 = vst [vmem:[%s3723] ss:$4 sm:$0xff] %v3691
      %3801 = vst [vmem:[%s3725] ss:$4 sm:$0xff] %v3692
      %3802 = vst [vmem:[%s3727] ss:$4 sm:$0xff] %v3693
      %3803 = vst [vmem:[%s3729] ss:$4 sm:$0xff] %v3612
      %3804 = vst [vmem:[%s3731] ss:$4 sm:$0xff] %v3694
      %3805 = vst [vmem:[%s3733] ss:$4 sm:$0xff] %v3695
      %3806 = vst [vmem:[%s3735] ss:$4 sm:$0xff] %v3613
      %v3807 = vld.sshfl [vmem:[#allocation1] sm:$0xff pattern:$0x73625140]
      %v3808 = vld.sshfl [vmem:[#allocation1 + $0x20] sm:$0xff pattern:$0x73625140]
      %3809 = vst [vmem:[#allocation1] ss:$4 sm:$0xff] %v3696
      %3810 = vst [vmem:[%s3723] ss:$4 sm:$0xff] %v3697
      %3811 = vst [vmem:[%s3725] ss:$4 sm:$0xff] %v3698
      %3812 = vst [vmem:[%s3727] ss:$4 sm:$0xff] %v3614
      %3813 = vst [vmem:[%s3729] ss:$4 sm:$0xff] %v3699
      %3814 = vst [vmem:[%s3731] ss:$4 sm:$0xff] %v3700
      %3815 = vst [vmem:[%s3733] ss:$4 sm:$0xff] %v3615
      %3816 = vst [vmem:[%s3735] ss:$4 sm:$0xff] %v3701
      %v3817 = vld.sshfl [vmem:[#allocation1] sm:$0xff pattern:$0x73625140]
      %v3818 = vld.sshfl [vmem:[#allocation1 + $0x20] sm:$0xff pattern:$0x73625140]
      %3819 = vst [vmem:[#allocation1] ss:$4 sm:$0xff] %v3702
      %3820 = vst [vmem:[%s3723] ss:$4 sm:$0xff] %v3703
      %3821 = vst [vmem:[%s3725] ss:$4 sm:$0xff] %v3616
      %3822 = vst [vmem:[%s3727] ss:$4 sm:$0xff] %v3704
      %3823 = vst [vmem:[%s3729] ss:$4 sm:$0xff] %v3705
      %3824 = vst [vmem:[%s3731] ss:$4 sm:$0xff] %v3617
      %3825 = vst [vmem:[%s3733] ss:$4 sm:$0xff] %v3706
      %3826 = vst [vmem:[%s3735] ss:$4 sm:$0xff] %v3707
      %v3827 = vld.sshfl [vmem:[#allocation1] sm:$0xff pattern:$0x73625140]
      %v3828 = vld.sshfl [vmem:[#allocation1 + $0x20] sm:$0xff pattern:$0x73625140]
      %3829 = vst [vmem:[#allocation1] ss:$4 sm:$0xff] %v3708
      %3830 = vst [vmem:[%s3723] ss:$4 sm:$0xff] %v3618
      %3831 = vst [vmem:[%s3725] ss:$4 sm:$0xff] %v3709
      %3832 = vst [vmem:[%s3727] ss:$4 sm:$0xff] %v3710
      %3833 = vst [vmem:[%s3729] ss:$4 sm:$0xff] %v3619
      %3834 = vst [vmem:[%s3731] ss:$4 sm:$0xff] %v3711
      %3835 = vst [vmem:[%s3733] ss:$4 sm:$0xff] %v3712
      %3836 = vst [vmem:[%s3735] ss:$4 sm:$0xff] %v3713
      %v3837 = vld.sshfl [vmem:[#allocation1] sm:$0xff pattern:$0x73625140]
      %v3838 = vld.sshfl [vmem:[#allocation1 + $0x20] sm:$0xff pattern:$0x73625140]
      %3839 = vst [vmem:[#allocation1] ss:$4 sm:$0xff] %v3620
      %3840 = vst [vmem:[%s3723] ss:$4 sm:$0xff] %v3714
      %3841 = vst [vmem:[%s3725] ss:$4 sm:$0xff] %v3715
      %3842 = vst [vmem:[%s3727] ss:$4 sm:$0xff] %v3621
      %3843 = vst [vmem:[%s3729] ss:$4 sm:$0xff] %v3716
      %3844 = vst [vmem:[%s3731] ss:$4 sm:$0xff] %v3717
      %3845 = vst [vmem:[%s3733] ss:$4 sm:$0xff] %v3718
      %3846 = vst [vmem:[%s3735] ss:$4 sm:$0xff] %v3622
      %v3847 = vld.sshfl [vmem:[#allocation1] sm:$0xff pattern:$0x73625140]
      %v3848 = vld.sshfl [vmem:[#allocation1 + $0x20] sm:$0xff pattern:$0x73625140]
      %3849 = vst [vmem:[#allocation1] ss:$4 sm:$0xff] %v3719
      %3850 = vst [vmem:[%s3723] ss:$4 sm:$0xff] %v3720
      %v3851 = vld.sshfl [vmem:[#allocation1] sm:$0xff pattern:$0x73625140]
      %v3852 = vsel %vm609, %v3737, 0
      %v3854 = vsel %vm609, %v3738, 0
      %v3856 = vsel %vm609, %v3747, 0
      %v3858 = vsel %vm609, %v3748, 0
      %v3860 = vsel %vm609, %v3757, 0
      %v3862 = vsel %vm609, %v3758, 0
      %v3864 = vsel %vm609, %v3767, 0
      %v3866 = vsel %vm609, %v3768, 0
      %v3868 = vsel %vm609, %v3777, 0
      %v3870 = vsel %vm609, %v3778, 0
      %v3872 = vsel %vm609, %v3787, 0
      %v3874 = vsel %vm609, %v3788, 0
      %v3876 = vsel %vm609, %v3797, 0
      %v3878 = vsel %vm609, %v3798, 0
      %v3880 = vsel %vm609, %v3807, 0
      %v3882 = vsel %vm609, %v3808, 0
      %v3884 = vsel %vm609, %v3817, 0
      %v3886 = vsel %vm609, %v3818, 0
      %v3888 = vsel %vm609, %v3827, 0
      %v3890 = vsel %vm609, %v3828, 0
      %v3892 = vsel %vm609, %v3837, 0
      %v3894 = vsel %vm609, %v3838, 0
      %v3896 = vsel %vm609, %v3847, 0
      %v3898 = vsel %vm609, %v3848, 0
      %v3900 = vsel %vm609, %v3851, 0
      %v3903 = vsel %vm660, %v3721, 0
      %3905 = vmatpush.msra.mxu0 0.0
      %3906 = vmatpush.msra.mxu0 0.0
      %3907 = vmatpush.msra.mxu0 0.0
      %3908 = vmatpush.msra.mxu0 0.0
      %3909 = vmatpush.msra.mxu0 0.0
      %3910 = vmatpush.msra.mxu0 0.0
      %3911 = vmatpush.msra.mxu0 0.0
      %3912 = vmatpush.msra.mxu0 0.0
      %3913 = vmatpush.msra.mxu0 0.0
      %3914 = vmatpush.msra.mxu0 0.0
      %3915 = vmatpush.msra.mxu0 0.0
      %3916 = vmatpush.msra.mxu0 0.0
      %3917 = vmatpush.msra.mxu0 0.0
      %3918 = vmatpush.msra.mxu0 0.0
      %3919 = vmatpush.msra.mxu0 0.0
      %3920 = vmatpush.msra.mxu0 %v3903
      %3921 = vmatmul.f32.gmra.mxu0 %v3852
      %v3922 = vpop.f32.mrf.mxu0
      %v3923 = vadd.f32 0.0, %v3922
      %3924 = vmatmul.f32.gmra.mxu0 %v3854
      %v3925 = vpop.f32.mrf.mxu0
      %v3926 = vadd.f32 0.0, %v3925
      %3927 = vmatmul.f32.gmra.mxu0 %v3856
      %v3928 = vpop.f32.mrf.mxu0
      %v3929 = vadd.f32 0.0, %v3928
      %3930 = vmatmul.f32.gmra.mxu0 %v3858
      %v3931 = vpop.f32.mrf.mxu0
      %v3932 = vadd.f32 0.0, %v3931
      %3933 = vmatmul.f32.gmra.mxu0 %v3860
      %v3934 = vpop.f32.mrf.mxu0
      %v3935 = vadd.f32 0.0, %v3934
      %3936 = vmatmul.f32.gmra.mxu0 %v3862
      %v3937 = vpop.f32.mrf.mxu0
      %v3938 = vadd.f32 0.0, %v3937
      %3939 = vmatmul.f32.gmra.mxu0 %v3864
      %v3940 = vpop.f32.mrf.mxu0
      %v3941 = vadd.f32 0.0, %v3940
      %3942 = vmatmul.f32.gmra.mxu0 %v3866
      %v3943 = vpop.f32.mrf.mxu0
      %v3944 = vadd.f32 0.0, %v3943
      %3945 = vmatmul.f32.gmra.mxu0 %v3868
      %v3946 = vpop.f32.mrf.mxu0
      %v3947 = vadd.f32 0.0, %v3946
      %3948 = vmatmul.f32.gmra.mxu0 %v3870
      %v3949 = vpop.f32.mrf.mxu0
      %v3950 = vadd.f32 0.0, %v3949
      %3951 = vmatmul.f32.gmra.mxu0 %v3872
      %v3952 = vpop.f32.mrf.mxu0
      %v3953 = vadd.f32 0.0, %v3952
      %3954 = vmatmul.f32.gmra.mxu0 %v3874
      %v3955 = vpop.f32.mrf.mxu0
      %v3956 = vadd.f32 0.0, %v3955
      %3957 = vmatmul.f32.gmra.mxu0 %v3876
      %v3958 = vpop.f32.mrf.mxu0
      %v3959 = vadd.f32 0.0, %v3958
      %3960 = vmatmul.f32.gmra.mxu0 %v3878
      %v3961 = vpop.f32.mrf.mxu0
      %v3962 = vadd.f32 0.0, %v3961
      %3963 = vmatmul.f32.gmra.mxu0 %v3880
      %v3964 = vpop.f32.mrf.mxu0
      %v3965 = vadd.f32 0.0, %v3964
      %3966 = vmatmul.f32.gmra.mxu0 %v3882
      %v3967 = vpop.f32.mrf.mxu0
      %v3968 = vadd.f32 0.0, %v3967
      %3969 = vmatmul.f32.gmra.mxu0 %v3884
      %v3970 = vpop.f32.mrf.mxu0
      %v3971 = vadd.f32 0.0, %v3970
      %3972 = vmatmul.f32.gmra.mxu0 %v3886
      %v3973 = vpop.f32.mrf.mxu0
      %v3974 = vadd.f32 0.0, %v3973
      %3975 = vmatmul.f32.gmra.mxu0 %v3888
      %v3976 = vpop.f32.mrf.mxu0
      %v3977 = vadd.f32 0.0, %v3976
      %3978 = vmatmul.f32.gmra.mxu0 %v3890
      %v3979 = vpop.f32.mrf.mxu0
      %v3980 = vadd.f32 0.0, %v3979
      %3981 = vmatmul.f32.gmra.mxu0 %v3892
      %v3982 = vpop.f32.mrf.mxu0
      %v3983 = vadd.f32 0.0, %v3982
      %3984 = vmatmul.f32.gmra.mxu0 %v3894
      %v3985 = vpop.f32.mrf.mxu0
      %v3986 = vadd.f32 0.0, %v3985
      %3987 = vmatmul.f32.gmra.mxu0 %v3896
      %v3988 = vpop.f32.mrf.mxu0
      %v3989 = vadd.f32 0.0, %v3988
      %3990 = vmatmul.f32.gmra.mxu0 %v3898
      %v3991 = vpop.f32.mrf.mxu0
      %v3992 = vadd.f32 0.0, %v3991
      %3993 = vmatmul.f32.gmra.mxu0 %v3900
      %v3994 = vpop.f32.mrf.mxu0
      %v3995 = vadd.f32 0.0, %v3994
      %3996 = vdwg.mxu0
      %v3997 = vadd.f32 %v3570, %v3923
      %v3998 = vadd.f32 %v3571, %v3926
      %v3999 = vadd.f32 %v3572, %v3929
      %v4000 = vadd.f32 %v3573, %v3932
      %v4001 = vadd.f32 %v3574, %v3935
      %v4002 = vadd.f32 %v3575, %v3938
      %v4003 = vadd.f32 %v3576, %v3941
      %v4004 = vadd.f32 %v3577, %v3944
      %v4005 = vadd.f32 %v3578, %v3947
      %v4006 = vadd.f32 %v3579, %v3950
      %v4007 = vadd.f32 %v3580, %v3953
      %v4008 = vadd.f32 %v3581, %v3956
      %v4009 = vadd.f32 %v3582, %v3959
      %v4010 = vadd.f32 %v3583, %v3962
      %v4011 = vadd.f32 %v3584, %v3965
      %v4012 = vadd.f32 %v3585, %v3968
      %v4013 = vadd.f32 %v3586, %v3971
      %v4014 = vadd.f32 %v3587, %v3974
      %v4015 = vadd.f32 %v3588, %v3977
      %v4016 = vadd.f32 %v3589, %v3980
      %v4017 = vadd.f32 %v3590, %v3983
      %v4018 = vadd.f32 %v3591, %v3986
      %v4019 = vadd.f32 %v3592, %v3989
      %v4020 = vadd.f32 %v3593, %v3992
      %v4021 = vadd.f32 %v3594, %v3995
      %v4022 = vld [vmem:[%s2] sm:$0x1]
      %v4024 = vperm.slane %v4022, 0
      %v4026 = vadd.f32 %v3997, %v4024
      %v4027 = vadd.f32 %v3998, %v4024
      %v4028 = vadd.f32 %v3999, %v4024
      %v4029 = vadd.f32 %v4000, %v4024
      %v4030 = vadd.f32 %v4001, %v4024
      %v4031 = vadd.f32 %v4002, %v4024
      %v4032 = vadd.f32 %v4003, %v4024
      %v4033 = vadd.f32 %v4004, %v4024
      %v4034 = vadd.f32 %v4005, %v4024
      %v4035 = vadd.f32 %v4006, %v4024
      %v4036 = vadd.f32 %v4007, %v4024
      %v4037 = vadd.f32 %v4008, %v4024
      %v4038 = vadd.f32 %v4009, %v4024
      %v4039 = vadd.f32 %v4010, %v4024
      %v4040 = vadd.f32 %v4011, %v4024
      %v4041 = vadd.f32 %v4012, %v4024
      %v4042 = vadd.f32 %v4013, %v4024
      %v4043 = vadd.f32 %v4014, %v4024
      %v4044 = vadd.f32 %v4015, %v4024
      %v4045 = vadd.f32 %v4016, %v4024
      %v4046 = vadd.f32 %v4017, %v4024
      %v4047 = vadd.f32 %v4018, %v4024
      %v4048 = vadd.f32 %v4019, %v4024
      %v4049 = vadd.f32 %v4020, %v4024
      %v4050 = vadd.f32 %v4021, %v4024
      %v4051 = vmax.f32 %v4026, 0.0
      %v4052 = vmax.f32 %v4027, 0.0
      %v4053 = vmax.f32 %v4028, 0.0
      %v4054 = vmax.f32 %v4029, 0.0
      %v4055 = vmax.f32 %v4030, 0.0
      %v4056 = vmax.f32 %v4031, 0.0
      %v4057 = vmax.f32 %v4032, 0.0
      %v4058 = vmax.f32 %v4033, 0.0
      %v4059 = vmax.f32 %v4034, 0.0
      %v4060 = vmax.f32 %v4035, 0.0
      %v4061 = vmax.f32 %v4036, 0.0
      %v4062 = vmax.f32 %v4037, 0.0
      %v4063 = vmax.f32 %v4038, 0.0
      %v4064 = vmax.f32 %v4039, 0.0
      %v4065 = vmax.f32 %v4040, 0.0
      %v4066 = vmax.f32 %v4041, 0.0
      %v4067 = vmax.f32 %v4042, 0.0
      %v4068 = vmax.f32 %v4043, 0.0
      %v4069 = vmax.f32 %v4044, 0.0
      %v4070 = vmax.f32 %v4045, 0.0
      %v4071 = vmax.f32 %v4046, 0.0
      %v4072 = vmax.f32 %v4047, 0.0
      %v4073 = vmax.f32 %v4048, 0.0
      %v4074 = vmax.f32 %v4049, 0.0
      %v4075 = vmax.f32 %v4050, 0.0
      %v4101 = vrot.slane %v4051, 2
      %v4102 = vrot.slane %v4051, 4
      %v4103 = vrot.slane %v4051, 6
      %v4104 = vrot.slane %v4052, 2
      %v4105 = vrot.slane %v4052, 4
      %v4106 = vrot.slane %v4052, 6
      %v4107 = vrot.slane %v4053, 2
      %v4108 = vrot.slane %v4053, 4
      %v4109 = vrot.slane %v4053, 6
      %v4110 = vrot.slane %v4054, 2
      %v4111 = vrot.slane %v4054, 4
      %v4112 = vrot.slane %v4054, 6
      %v4113 = vrot.slane %v4055, 2
      %v4114 = vrot.slane %v4055, 4
      %v4115 = vrot.slane %v4055, 6
      %v4116 = vrot.slane %v4056, 2
      %v4117 = vrot.slane %v4056, 4
      %v4118 = vrot.slane %v4056, 6
      %v4119 = vrot.slane %v4057, 2
      %v4120 = vrot.slane %v4057, 4
      %v4121 = vrot.slane %v4057, 6
      %v4122 = vrot.slane %v4058, 2
      %v4123 = vrot.slane %v4058, 4
      %v4124 = vrot.slane %v4058, 6
      %v4125 = vrot.slane %v4059, 2
      %v4126 = vrot.slane %v4059, 4
      %v4127 = vrot.slane %v4059, 6
      %v4128 = vrot.slane %v4060, 2
      %v4129 = vrot.slane %v4060, 4
      %v4130 = vrot.slane %v4060, 6
      %v4131 = vrot.slane %v4061, 2
      %v4132 = vrot.slane %v4061, 4
      %v4133 = vrot.slane %v4061, 6
      %v4134 = vrot.slane %v4062, 2
      %v4135 = vrot.slane %v4062, 4
      %v4136 = vrot.slane %v4062, 6
      %v4137 = vrot.slane %v4063, 2
      %v4138 = vrot.slane %v4063, 4
      %v4139 = vrot.slane %v4063, 6
      %v4140 = vrot.slane %v4064, 2
      %v4141 = vrot.slane %v4064, 4
      %v4142 = vrot.slane %v4064, 6
      %v4143 = vrot.slane %v4065, 2
      %v4144 = vrot.slane %v4065, 4
      %v4145 = vrot.slane %v4065, 6
      %v4146 = vrot.slane %v4066, 2
      %v4147 = vrot.slane %v4066, 4
      %v4148 = vrot.slane %v4066, 6
      %v4149 = vrot.slane %v4067, 2
      %v4150 = vrot.slane %v4067, 4
      %v4151 = vrot.slane %v4067, 6
      %v4152 = vrot.slane %v4068, 2
      %v4153 = vrot.slane %v4068, 4
      %v4154 = vrot.slane %v4068, 6
      %v4155 = vrot.slane %v4069, 2
      %v4156 = vrot.slane %v4069, 4
      %v4157 = vrot.slane %v4069, 6
      %v4158 = vrot.slane %v4070, 2
      %v4159 = vrot.slane %v4070, 4
      %v4160 = vrot.slane %v4070, 6
      %v4161 = vrot.slane %v4071, 2
      %v4162 = vrot.slane %v4071, 4
      %v4163 = vrot.slane %v4071, 6
      %v4164 = vrot.slane %v4072, 2
      %v4165 = vrot.slane %v4072, 4
      %v4166 = vrot.slane %v4072, 6
      %v4167 = vrot.slane %v4073, 2
      %v4168 = vrot.slane %v4073, 4
      %v4169 = vrot.slane %v4073, 6
      %v4170 = vrot.slane %v4074, 2
      %v4171 = vrot.slane %v4074, 4
      %v4172 = vrot.slane %v4074, 6
      %v4173 = vrot.slane %v4075, 2
      %4174 = vst [vmem:[#allocation1] ss:$4 sm:$0xff] %v4051
      %s4175 = scalar_lea.vmem [#allocation1], 1
      %4176 = vst [vmem:[%s4175] ss:$4 sm:$0xff] %v4101
      %s4177 = scalar_lea.vmem [#allocation1], 2
      %4178 = vst [vmem:[%s4177] ss:$4 sm:$0xff] %v4102
      %s4179 = scalar_lea.vmem [#allocation1], 3
      %4180 = vst [vmem:[%s4179] ss:$4 sm:$0xff] %v4103
      %s4181 = scalar_lea.vmem [#allocation1], 32
      %4182 = vst [vmem:[%s4181] ss:$4 sm:$0xff] %v4052
      %s4183 = scalar_lea.vmem [#allocation1], 33
      %4184 = vst [vmem:[%s4183] ss:$4 sm:$0xff] %v4104
      %s4185 = scalar_lea.vmem [#allocation1], 34
      %4186 = vst [vmem:[%s4185] ss:$4 sm:$0xff] %v4105
      %v4187 = vld.sshfl [vmem:[#allocation1] sm:$0xff pattern:$0x73625140]
      %v4188 = vld.sshfl [vmem:[#allocation1 + $0x20] sm:$0xff pattern:$0x73625140]
      %4189 = vst [vmem:[#allocation1] ss:$4 sm:$0xff] %v4106
      %4190 = vst [vmem:[%s4175] ss:$4 sm:$0xff] %v4053
      %4191 = vst [vmem:[%s4177] ss:$4 sm:$0xff] %v4107
      %4192 = vst [vmem:[%s4179] ss:$4 sm:$0xff] %v4108
      %4193 = vst [vmem:[%s4181] ss:$4 sm:$0xff] %v4109
      %4194 = vst [vmem:[%s4183] ss:$4 sm:$0xff] %v4054
      %4195 = vst [vmem:[%s4185] ss:$4 sm:$0xff] %v4110
      %v4196 = vld.sshfl [vmem:[#allocation1] sm:$0xff pattern:$0x73625140]
      %v4197 = vld.sshfl [vmem:[#allocation1 + $0x20] sm:$0xff pattern:$0x73625140]
      %4198 = vst [vmem:[#allocation1] ss:$4 sm:$0xff] %v4111
      %4199 = vst [vmem:[%s4175] ss:$4 sm:$0xff] %v4112
      %4200 = vst [vmem:[%s4177] ss:$4 sm:$0xff] %v4055
      %4201 = vst [vmem:[%s4179] ss:$4 sm:$0xff] %v4113
      %4202 = vst [vmem:[%s4181] ss:$4 sm:$0xff] %v4114
      %4203 = vst [vmem:[%s4183] ss:$4 sm:$0xff] %v4115
      %4204 = vst [vmem:[%s4185] ss:$4 sm:$0xff] %v4056
      %v4205 = vld.sshfl [vmem:[#allocation1] sm:$0xff pattern:$0x73625140]
      %v4206 = vld.sshfl [vmem:[#allocation1 + $0x20] sm:$0xff pattern:$0x73625140]
      %4207 = vst [vmem:[#allocation1] ss:$4 sm:$0xff] %v4116
      %4208 = vst [vmem:[%s4175] ss:$4 sm:$0xff] %v4117
      %4209 = vst [vmem:[%s4177] ss:$4 sm:$0xff] %v4118
      %4210 = vst [vmem:[%s4179] ss:$4 sm:$0xff] %v4057
      %4211 = vst [vmem:[%s4181] ss:$4 sm:$0xff] %v4119
      %4212 = vst [vmem:[%s4183] ss:$4 sm:$0xff] %v4120
      %4213 = vst [vmem:[%s4185] ss:$4 sm:$0xff] %v4121
      %v4214 = vld.sshfl [vmem:[#allocation1] sm:$0xff pattern:$0x73625140]
      %v4215 = vld.sshfl [vmem:[#allocation1 + $0x20] sm:$0xff pattern:$0x73625140]
      %4216 = vst [vmem:[#allocation1] ss:$4 sm:$0xff] %v4058
      %4217 = vst [vmem:[%s4175] ss:$4 sm:$0xff] %v4122
      %4218 = vst [vmem:[%s4177] ss:$4 sm:$0xff] %v4123
      %4219 = vst [vmem:[%s4179] ss:$4 sm:$0xff] %v4124
      %4220 = vst [vmem:[%s4181] ss:$4 sm:$0xff] %v4059
      %4221 = vst [vmem:[%s4183] ss:$4 sm:$0xff] %v4125
      %4222 = vst [vmem:[%s4185] ss:$4 sm:$0xff] %v4126
      %v4223 = vld.sshfl [vmem:[#allocation1] sm:$0xff pattern:$0x73625140]
      %v4224 = vld.sshfl [vmem:[#allocation1 + $0x20] sm:$0xff pattern:$0x73625140]
      %4225 = vst [vmem:[#allocation1] ss:$4 sm:$0xff] %v4127
      %4226 = vst [vmem:[%s4175] ss:$4 sm:$0xff] %v4060
      %4227 = vst [vmem:[%s4177] ss:$4 sm:$0xff] %v4128
      %4228 = vst [vmem:[%s4179] ss:$4 sm:$0xff] %v4129
      %4229 = vst [vmem:[%s4181] ss:$4 sm:$0xff] %v4130
      %4230 = vst [vmem:[%s4183] ss:$4 sm:$0xff] %v4061
      %4231 = vst [vmem:[%s4185] ss:$4 sm:$0xff] %v4131
      %v4232 = vld.sshfl [vmem:[#allocation1] sm:$0xff pattern:$0x73625140]
      %v4233 = vld.sshfl [vmem:[#allocation1 + $0x20] sm:$0xff pattern:$0x73625140]
      %4234 = vst [vmem:[#allocation1] ss:$4 sm:$0xff] %v4132
      %4235 = vst [vmem:[%s4175] ss:$4 sm:$0xff] %v4133
      %4236 = vst [vmem:[%s4177] ss:$4 sm:$0xff] %v4062
      %4237 = vst [vmem:[%s4179] ss:$4 sm:$0xff] %v4134
      %4238 = vst [vmem:[%s4181] ss:$4 sm:$0xff] %v4135
      %4239 = vst [vmem:[%s4183] ss:$4 sm:$0xff] %v4136
      %4240 = vst [vmem:[%s4185] ss:$4 sm:$0xff] %v4063
      %v4241 = vld.sshfl [vmem:[#allocation1] sm:$0xff pattern:$0x73625140]
      %v4242 = vld.sshfl [vmem:[#allocation1 + $0x20] sm:$0xff pattern:$0x73625140]
      %4243 = vst [vmem:[#allocation1] ss:$4 sm:$0xff] %v4137
      %4244 = vst [vmem:[%s4175] ss:$4 sm:$0xff] %v4138
      %4245 = vst [vmem:[%s4177] ss:$4 sm:$0xff] %v4139
      %4246 = vst [vmem:[%s4179] ss:$4 sm:$0xff] %v4064
      %4247 = vst [vmem:[%s4181] ss:$4 sm:$0xff] %v4140
      %4248 = vst [vmem:[%s4183] ss:$4 sm:$0xff] %v4141
      %4249 = vst [vmem:[%s4185] ss:$4 sm:$0xff] %v4142
      %v4250 = vld.sshfl [vmem:[#allocation1] sm:$0xff pattern:$0x73625140]
      %v4251 = vld.sshfl [vmem:[#allocation1 + $0x20] sm:$0xff pattern:$0x73625140]
      %4252 = vst [vmem:[#allocation1] ss:$4 sm:$0xff] %v4065
      %4253 = vst [vmem:[%s4175] ss:$4 sm:$0xff] %v4143
      %4254 = vst [vmem:[%s4177] ss:$4 sm:$0xff] %v4144
      %4255 = vst [vmem:[%s4179] ss:$4 sm:$0xff] %v4145
      %4256 = vst [vmem:[%s4181] ss:$4 sm:$0xff] %v4066
      %4257 = vst [vmem:[%s4183] ss:$4 sm:$0xff] %v4146
      %4258 = vst [vmem:[%s4185] ss:$4 sm:$0xff] %v4147
      %v4259 = vld.sshfl [vmem:[#allocation1] sm:$0xff pattern:$0x73625140]
      %v4260 = vld.sshfl [vmem:[#allocation1 + $0x20] sm:$0xff pattern:$0x73625140]
      %4261 = vst [vmem:[#allocation1] ss:$4 sm:$0xff] %v4148
      %4262 = vst [vmem:[%s4175] ss:$4 sm:$0xff] %v4067
      %4263 = vst [vmem:[%s4177] ss:$4 sm:$0xff] %v4149
      %4264 = vst [vmem:[%s4179] ss:$4 sm:$0xff] %v4150
      %4265 = vst [vmem:[%s4181] ss:$4 sm:$0xff] %v4151
      %4266 = vst [vmem:[%s4183] ss:$4 sm:$0xff] %v4068
      %4267 = vst [vmem:[%s4185] ss:$4 sm:$0xff] %v4152
      %v4268 = vld.sshfl [vmem:[#allocation1] sm:$0xff pattern:$0x73625140]
      %v4269 = vld.sshfl [vmem:[#allocation1 + $0x20] sm:$0xff pattern:$0x73625140]
      %4270 = vst [vmem:[#allocation1] ss:$4 sm:$0xff] %v4153
      %4271 = vst [vmem:[%s4175] ss:$4 sm:$0xff] %v4154
      %4272 = vst [vmem:[%s4177] ss:$4 sm:$0xff] %v4069
      %4273 = vst [vmem:[%s4179] ss:$4 sm:$0xff] %v4155
      %4274 = vst [vmem:[%s4181] ss:$4 sm:$0xff] %v4156
      %4275 = vst [vmem:[%s4183] ss:$4 sm:$0xff] %v4157
      %4276 = vst [vmem:[%s4185] ss:$4 sm:$0xff] %v4070
      %v4277 = vld.sshfl [vmem:[#allocation1] sm:$0xff pattern:$0x73625140]
      %v4278 = vld.sshfl [vmem:[#allocation1 + $0x20] sm:$0xff pattern:$0x73625140]
      %4279 = vst [vmem:[#allocation1] ss:$4 sm:$0xff] %v4158
      %4280 = vst [vmem:[%s4175] ss:$4 sm:$0xff] %v4159
      %4281 = vst [vmem:[%s4177] ss:$4 sm:$0xff] %v4160
      %4282 = vst [vmem:[%s4179] ss:$4 sm:$0xff] %v4071
      %4283 = vst [vmem:[%s4181] ss:$4 sm:$0xff] %v4161
      %4284 = vst [vmem:[%s4183] ss:$4 sm:$0xff] %v4162
      %4285 = vst [vmem:[%s4185] ss:$4 sm:$0xff] %v4163
      %v4286 = vld.sshfl [vmem:[#allocation1] sm:$0xff pattern:$0x73625140]
      %v4287 = vld.sshfl [vmem:[#allocation1 + $0x20] sm:$0xff pattern:$0x73625140]
      %4288 = vst [vmem:[#allocation1] ss:$4 sm:$0xff] %v4072
      %4289 = vst [vmem:[%s4175] ss:$4 sm:$0xff] %v4164
      %4290 = vst [vmem:[%s4177] ss:$4 sm:$0xff] %v4165
      %4291 = vst [vmem:[%s4179] ss:$4 sm:$0xff] %v4166
      %4292 = vst [vmem:[%s4181] ss:$4 sm:$0xff] %v4073
      %4293 = vst [vmem:[%s4183] ss:$4 sm:$0xff] %v4167
      %4294 = vst [vmem:[%s4185] ss:$4 sm:$0xff] %v4168
      %v4295 = vld.sshfl [vmem:[#allocation1] sm:$0xff pattern:$0x73625140]
      %v4296 = vld.sshfl [vmem:[#allocation1 + $0x20] sm:$0xff pattern:$0x73625140]
      %4297 = vst [vmem:[#allocation1] ss:$4 sm:$0xff] %v4169
      %4298 = vst [vmem:[%s4175] ss:$4 sm:$0xff] %v4074
      %4299 = vst [vmem:[%s4177] ss:$4 sm:$0xff] %v4170
      %4300 = vst [vmem:[%s4179] ss:$4 sm:$0xff] %v4171
      %4301 = vst [vmem:[%s4181] ss:$4 sm:$0xff] %v4172
      %4302 = vst [vmem:[%s4183] ss:$4 sm:$0xff] %v4075
      %4303 = vst [vmem:[%s4185] ss:$4 sm:$0xff] %v4173
      %v4304 = vld.sshfl [vmem:[#allocation1] sm:$0xff pattern:$0x73625140]
      %v4305 = vld.sshfl [vmem:[#allocation1 + $0x20] sm:$0xff pattern:$0x73625140]
      %4334 = vst [vmem:[#allocation2] sm:$0xff] %v4187
      %4335 = vst [vmem:[#allocation2 + $0x8] sm:$0x3f] %v4188
      %4336 = vst [vmem:[#allocation2 + $0x10] sm:$0xff] %v4196
      %4337 = vst [vmem:[#allocation2 + $0x18] sm:$0x3f] %v4197
      %4338 = vst [vmem:[#allocation2 + $0x20] sm:$0xff] %v4205
      %4339 = vst [vmem:[#allocation2 + $0x28] sm:$0x3f] %v4206
      %4340 = vst [vmem:[#allocation2 + $0x30] sm:$0xff] %v4214
      %4341 = vst [vmem:[#allocation2 + $0x38] sm:$0x3f] %v4215
      %4342 = vst [vmem:[#allocation2 + $0x40] sm:$0xff] %v4223
      %4343 = vst [vmem:[#allocation2 + $0x48] sm:$0x3f] %v4224
      %4344 = vst [vmem:[#allocation2 + $0x50] sm:$0xff] %v4232
      %4345 = vst [vmem:[#allocation2 + $0x58] sm:$0x3f] %v4233
      %4346 = vst [vmem:[#allocation2 + $0x60] sm:$0xff] %v4241
      %4347 = vst [vmem:[#allocation2 + $0x68] sm:$0x3f] %v4242
      %4348 = vst [vmem:[#allocation2 + $0x70] sm:$0xff] %v4250
      %4349 = vst [vmem:[#allocation2 + $0x78] sm:$0x3f] %v4251
      %4350 = vst [vmem:[#allocation2 + $0x80] sm:$0xff] %v4259
      %4351 = vst [vmem:[#allocation2 + $0x88] sm:$0x3f] %v4260
      %4352 = vst [vmem:[#allocation2 + $0x90] sm:$0xff] %v4268
      %4353 = vst [vmem:[#allocation2 + $0x98] sm:$0x3f] %v4269
      %4354 = vst [vmem:[#allocation2 + $0xa0] sm:$0xff] %v4277
      %4355 = vst [vmem:[#allocation2 + $0xa8] sm:$0x3f] %v4278
      %4356 = vst [vmem:[#allocation2 + $0xb0] sm:$0xff] %v4286
      %4357 = vst [vmem:[#allocation2 + $0xb8] sm:$0x3f] %v4287
      %4358 = vst [vmem:[#allocation2 + $0xc0] sm:$0xff] %v4295
      %4359 = vst [vmem:[#allocation2 + $0xc8] sm:$0x3f] %v4296
      %4360 = vst [vmem:[#allocation2 + $0xd0] sm:$0xff] %v4304
      %4361 = vst [vmem:[#allocation2 + $0xd8] sm:$0x3f] %v4305
      %v4362 = vld [vmem:[#allocation2] sm:$0xff]
      %v4363 = vld [vmem:[#allocation2 + $0x8] sm:$0xf]
      %v4364 = vld [vmem:[#allocation2 + $0x10] sm:$0xff]
      %v4365 = vld [vmem:[#allocation2 + $0x18] sm:$0xf]
      %v4366 = vld [vmem:[#allocation2 + $0x20] sm:$0xff]
      %v4367 = vld [vmem:[#allocation2 + $0x28] sm:$0xf]
      %v4368 = vld [vmem:[#allocation2 + $0x30] sm:$0xff]
      %v4369 = vld [vmem:[#allocation2 + $0x38] sm:$0xf]
      %v4370 = vld [vmem:[#allocation2 + $0x40] sm:$0xff]
      %v4371 = vld [vmem:[#allocation2 + $0x48] sm:$0xf]
      %v4372 = vld [vmem:[#allocation2 + $0x50] sm:$0xff]
      %v4373 = vld [vmem:[#allocation2 + $0x58] sm:$0xf]
      %v4374 = vld [vmem:[#allocation2 + $0x60] sm:$0xff]
      %v4375 = vld [vmem:[#allocation2 + $0x68] sm:$0xf]
      %v4376 = vld [vmem:[#allocation2 + $0x70] sm:$0xff]
      %v4377 = vld [vmem:[#allocation2 + $0x78] sm:$0xf]
      %v4378 = vld [vmem:[#allocation2 + $0x80] sm:$0xff]
      %v4379 = vld [vmem:[#allocation2 + $0x88] sm:$0xf]
      %v4380 = vld [vmem:[#allocation2 + $0x90] sm:$0xff]
      %v4381 = vld [vmem:[#allocation2 + $0x98] sm:$0xf]
      %v4382 = vld [vmem:[#allocation2 + $0xa0] sm:$0xff]
      %v4383 = vld [vmem:[#allocation2 + $0xa8] sm:$0xf]
      %v4384 = vld [vmem:[#allocation2 + $0xb0] sm:$0xff]
      %v4385 = vld [vmem:[#allocation2 + $0xb8] sm:$0xf]
      %v4410 = vrot.slane %v4362, 4
      %v4411 = vrot.slane %v4364, 4
      %v4412 = vrot.slane %v4366, 4
      %v4413 = vrot.slane %v4368, 4
      %v4414 = vrot.slane %v4370, 4
      %v4415 = vrot.slane %v4372, 4
      %v4416 = vrot.slane %v4374, 4
      %v4417 = vrot.slane %v4376, 4
      %v4418 = vrot.slane %v4378, 4
      %v4419 = vrot.slane %v4380, 4
      %v4420 = vrot.slane %v4382, 4
      %v4421 = vrot.slane %v4384, 4
      %v4422 = vld [vmem:[%s3] sm:$0xff]
      %v4423 = vld [vmem:[%s3 + $0x8] sm:$0xff]
      %v4424 = vld [vmem:[%s3 + $0x10] sm:$0xff]
      %v4425 = vld [vmem:[%s3 + $0x18] sm:$0xff]
      %v4426 = vld [vmem:[%s3 + $0x20] sm:$0xff]
      %v4427 = vld [vmem:[%s3 + $0x28] sm:$0xff]
      %v4428 = vld [vmem:[%s3 + $0x30] sm:$0xff]
      %v4429 = vld [vmem:[%s3 + $0x38] sm:$0xff]
      %v4430 = vld [vmem:[%s3 + $0x40] sm:$0xff]
      %v4431 = vld [vmem:[%s3 + $0x48] sm:$0xff]
      %v4432 = vld [vmem:[%s3 + $0x50] sm:$0xff]
      %v4433 = vld [vmem:[%s3 + $0x58] sm:$0xff]
      %v4434 = vld [vmem:[%s3 + $0x60] sm:$0xff]
      %v4435 = vld [vmem:[%s3 + $0x68] sm:$0xff]
      %v4436 = vld [vmem:[%s3 + $0x70] sm:$0xff]
      %v4437 = vld [vmem:[%s3 + $0x78] sm:$0xff]
      %v4438 = vld [vmem:[#allocation2 + $0x1] sm:$0xff]
      %v4439 = vld [vmem:[#allocation2 + $0x9] sm:$0xf]
      %v4440 = vld [vmem:[#allocation2 + $0x11] sm:$0xff]
      %v4441 = vld [vmem:[#allocation2 + $0x19] sm:$0xf]
      %v4442 = vld [vmem:[#allocation2 + $0x21] sm:$0xff]
      %v4443 = vld [vmem:[#allocation2 + $0x29] sm:$0xf]
      %v4444 = vld [vmem:[#allocation2 + $0x31] sm:$0xff]
      %v4445 = vld [vmem:[#allocation2 + $0x39] sm:$0xf]
      %v4446 = vld [vmem:[#allocation2 + $0x41] sm:$0xff]
      %v4447 = vld [vmem:[#allocation2 + $0x49] sm:$0xf]
      %v4448 = vld [vmem:[#allocation2 + $0x51] sm:$0xff]
      %v4449 = vld [vmem:[#allocation2 + $0x59] sm:$0xf]
      %v4450 = vld [vmem:[#allocation2 + $0x61] sm:$0xff]
      %v4451 = vld [vmem:[#allocation2 + $0x69] sm:$0xf]
      %v4452 = vld [vmem:[#allocation2 + $0x71] sm:$0xff]
      %v4453 = vld [vmem:[#allocation2 + $0x79] sm:$0xf]
      %v4454 = vld [vmem:[#allocation2 + $0x81] sm:$0xff]
      %v4455 = vld [vmem:[#allocation2 + $0x89] sm:$0xf]
      %v4456 = vld [vmem:[#allocation2 + $0x91] sm:$0xff]
      %v4457 = vld [vmem:[#allocation2 + $0x99] sm:$0xf]
      %v4458 = vld [vmem:[#allocation2 + $0xa1] sm:$0xff]
      %v4459 = vld [vmem:[#allocation2 + $0xa9] sm:$0xf]
      %v4460 = vld [vmem:[#allocation2 + $0xb1] sm:$0xff]
      %v4461 = vld [vmem:[#allocation2 + $0xb9] sm:$0xf]
      %v4486 = vrot.slane %v4438, 4
      %v4487 = vrot.slane %v4440, 4
      %v4488 = vrot.slane %v4442, 4
      %v4489 = vrot.slane %v4444, 4
      %v4490 = vrot.slane %v4446, 4
      %v4491 = vrot.slane %v4448, 4
      %v4492 = vrot.slane %v4450, 4
      %v4493 = vrot.slane %v4452, 4
      %v4494 = vrot.slane %v4454, 4
      %v4495 = vrot.slane %v4456, 4
      %v4496 = vrot.slane %v4458, 4
      %v4497 = vrot.slane %v4460, 4
      %v4498 = vld [vmem:[%s3 + $0x80] sm:$0xff]
      %v4499 = vld [vmem:[%s3 + $0x88] sm:$0xff]
      %v4500 = vld [vmem:[%s3 + $0x90] sm:$0xff]
      %v4501 = vld [vmem:[%s3 + $0x98] sm:$0xff]
      %v4502 = vld [vmem:[%s3 + $0xa0] sm:$0xff]
      %v4503 = vld [vmem:[%s3 + $0xa8] sm:$0xff]
      %v4504 = vld [vmem:[%s3 + $0xb0] sm:$0xff]
      %v4505 = vld [vmem:[%s3 + $0xb8] sm:$0xff]
      %v4506 = vld [vmem:[%s3 + $0xc0] sm:$0xff]
      %v4507 = vld [vmem:[%s3 + $0xc8] sm:$0xff]
      %v4508 = vld [vmem:[%s3 + $0xd0] sm:$0xff]
      %v4509 = vld [vmem:[%s3 + $0xd8] sm:$0xff]
      %v4510 = vld [vmem:[%s3 + $0xe0] sm:$0xff]
      %v4511 = vld [vmem:[%s3 + $0xe8] sm:$0xff]
      %v4512 = vld [vmem:[%s3 + $0xf0] sm:$0xff]
      %v4513 = vld [vmem:[%s3 + $0xf8] sm:$0xff]
      %4514 = vst [vmem:[#allocation1] ss:$2 sm:$0xff] %v4438
      %s4515 = scalar_lea.vmem [#allocation1], 1
      %4516 = vst [vmem:[%s4515] ss:$2 sm:$0xff] %v4486
      %s4517 = scalar_lea.vmem [#allocation1], 16
      %4518 = vst [vmem:[%s4517] ss:$2 sm:$0xff] %v4439
      %s4519 = scalar_lea.vmem [#allocation1], 17
      %4520 = vst [vmem:[%s4519] ss:$2 sm:$0xff] %v4440
      %s4521 = scalar_lea.vmem [#allocation1], 32
      %4522 = vst [vmem:[%s4521] ss:$2 sm:$0xff] %v4487
      %s4523 = scalar_lea.vmem [#allocation1], 33
      %4524 = vst [vmem:[%s4523] ss:$2 sm:$0xff] %v4441
      %s4525 = scalar_lea.vmem [#allocation1], 48
      %4526 = vst [vmem:[%s4525] ss:$2 sm:$0xff] %v4442
      %s4527 = scalar_lea.vmem [#allocation1], 49
      %4528 = vst [vmem:[%s4527] ss:$2 sm:$0xff] %v4488
      %v4529 = vld.sshfl [vmem:[#allocation1] sm:$0xff pattern:$0x75316420]
      %v4530 = vld.sshfl [vmem:[#allocation1 + $0x10] sm:$0xff pattern:$0x75316420]
      %v4531 = vld.sshfl [vmem:[#allocation1 + $0x20] sm:$0xff pattern:$0x75316420]
      %v4532 = vld.sshfl [vmem:[#allocation1 + $0x30] sm:$0xff pattern:$0x75316420]
      %4533 = vst [vmem:[#allocation1] ss:$2 sm:$0xff] %v4443
      %4534 = vst [vmem:[%s4515] ss:$2 sm:$0xff] %v4444
      %4535 = vst [vmem:[%s4517] ss:$2 sm:$0xff] %v4489
      %4536 = vst [vmem:[%s4519] ss:$2 sm:$0xff] %v4445
      %4537 = vst [vmem:[%s4521] ss:$2 sm:$0xff] %v4446
      %4538 = vst [vmem:[%s4523] ss:$2 sm:$0xff] %v4490
      %4539 = vst [vmem:[%s4525] ss:$2 sm:$0xff] %v4447
      %4540 = vst [vmem:[%s4527] ss:$2 sm:$0xff] %v4448
      %v4541 = vld.sshfl [vmem:[#allocation1] sm:$0xff pattern:$0x75316420]
      %v4542 = vld.sshfl [vmem:[#allocation1 + $0x10] sm:$0xff pattern:$0x75316420]
      %v4543 = vld.sshfl [vmem:[#allocation1 + $0x20] sm:$0xff pattern:$0x75316420]
      %v4544 = vld.sshfl [vmem:[#allocation1 + $0x30] sm:$0xff pattern:$0x75316420]
      %4545 = vst [vmem:[#allocation1] ss:$2 sm:$0xff] %v4491
      %4546 = vst [vmem:[%s4515] ss:$2 sm:$0xff] %v4449
      %4547 = vst [vmem:[%s4517] ss:$2 sm:$0xff] %v4450
      %4548 = vst [vmem:[%s4519] ss:$2 sm:$0xff] %v4492
      %4549 = vst [vmem:[%s4521] ss:$2 sm:$0xff] %v4451
      %4550 = vst [vmem:[%s4523] ss:$2 sm:$0xff] %v4452
      %4551 = vst [vmem:[%s4525] ss:$2 sm:$0xff] %v4493
      %4552 = vst [vmem:[%s4527] ss:$2 sm:$0xff] %v4453
      %v4553 = vld.sshfl [vmem:[#allocation1] sm:$0xff pattern:$0x75316420]
      %v4554 = vld.sshfl [vmem:[#allocation1 + $0x10] sm:$0xff pattern:$0x75316420]
      %v4555 = vld.sshfl [vmem:[#allocation1 + $0x20] sm:$0xff pattern:$0x75316420]
      %v4556 = vld.sshfl [vmem:[#allocation1 + $0x30] sm:$0xff pattern:$0x75316420]
      %4557 = vst [vmem:[#allocation1] ss:$2 sm:$0xff] %v4454
      %4558 = vst [vmem:[%s4515] ss:$2 sm:$0xff] %v4494
      %4559 = vst [vmem:[%s4517] ss:$2 sm:$0xff] %v4455
      %4560 = vst [vmem:[%s4519] ss:$2 sm:$0xff] %v4456
      %4561 = vst [vmem:[%s4521] ss:$2 sm:$0xff] %v4495
      %4562 = vst [vmem:[%s4523] ss:$2 sm:$0xff] %v4457
      %4563 = vst [vmem:[%s4525] ss:$2 sm:$0xff] %v4458
      %4564 = vst [vmem:[%s4527] ss:$2 sm:$0xff] %v4496
      %v4565 = vld.sshfl [vmem:[#allocation1] sm:$0xff pattern:$0x75316420]
      %v4566 = vld.sshfl [vmem:[#allocation1 + $0x10] sm:$0xff pattern:$0x75316420]
      %v4567 = vld.sshfl [vmem:[#allocation1 + $0x20] sm:$0xff pattern:$0x75316420]
      %v4568 = vld.sshfl [vmem:[#allocation1 + $0x30] sm:$0xff pattern:$0x75316420]
      %4569 = vst [vmem:[#allocation1] ss:$2 sm:$0xff] %v4459
      %4570 = vst [vmem:[%s4515] ss:$2 sm:$0xff] %v4460
      %4571 = vst [vmem:[%s4517] ss:$2 sm:$0xff] %v4497
      %4572 = vst [vmem:[%s4519] ss:$2 sm:$0xff] %v4461
      %v4573 = vld.sshfl [vmem:[#allocation1] sm:$0xff pattern:$0x75316420]
      %v4574 = vld.sshfl [vmem:[#allocation1 + $0x10] sm:$0xff pattern:$0x75316420]
      %4593 = vmatpush.msra.mxu0 %v4513
      %4594 = vmatpush.msra.mxu0 %v4512
      %4595 = vmatpush.msra.mxu0 %v4511
      %4596 = vmatpush.msra.mxu0 %v4510
      %4597 = vmatpush.msra.mxu0 %v4509
      %4598 = vmatpush.msra.mxu0 %v4508
      %4599 = vmatpush.msra.mxu0 %v4507
      %4600 = vmatpush.msra.mxu0 %v4506
      %4601 = vmatpush.msra.mxu0 %v4505
      %4602 = vmatpush.msra.mxu0 %v4504
      %4603 = vmatpush.msra.mxu0 %v4503
      %4604 = vmatpush.msra.mxu0 %v4502
      %4605 = vmatpush.msra.mxu0 %v4501
      %4606 = vmatpush.msra.mxu0 %v4500
      %4607 = vmatpush.msra.mxu0 %v4499
      %4608 = vmatpush.msra.mxu0 %v4498
      %4609 = vmatmul.f32.gmra.mxu0 %v4529
      %v4610 = vpop.f32.mrf.mxu0
      %v4611 = vadd.f32 0.0, %v4610
      %4612 = vmatmul.f32.gmra.mxu0 %v4530
      %v4613 = vpop.f32.mrf.mxu0
      %v4614 = vadd.f32 0.0, %v4613
      %4615 = vmatmul.f32.gmra.mxu0 %v4531
      %v4616 = vpop.f32.mrf.mxu0
      %v4617 = vadd.f32 0.0, %v4616
      %4618 = vmatmul.f32.gmra.mxu0 %v4532
      %v4619 = vpop.f32.mrf.mxu0
      %v4620 = vadd.f32 0.0, %v4619
      %4621 = vmatmul.f32.gmra.mxu0 %v4541
      %v4622 = vpop.f32.mrf.mxu0
      %v4623 = vadd.f32 0.0, %v4622
      %4624 = vmatmul.f32.gmra.mxu0 %v4542
      %v4625 = vpop.f32.mrf.mxu0
      %v4626 = vadd.f32 0.0, %v4625
      %4627 = vmatmul.f32.gmra.mxu0 %v4543
      %v4628 = vpop.f32.mrf.mxu0
      %v4629 = vadd.f32 0.0, %v4628
      %4630 = vmatmul.f32.gmra.mxu0 %v4544
      %v4631 = vpop.f32.mrf.mxu0
      %v4632 = vadd.f32 0.0, %v4631
      %4633 = vmatmul.f32.gmra.mxu0 %v4553
      %v4634 = vpop.f32.mrf.mxu0
      %v4635 = vadd.f32 0.0, %v4634
      %4636 = vmatmul.f32.gmra.mxu0 %v4554
      %v4637 = vpop.f32.mrf.mxu0
      %v4638 = vadd.f32 0.0, %v4637
      %4639 = vmatmul.f32.gmra.mxu0 %v4555
      %v4640 = vpop.f32.mrf.mxu0
      %v4641 = vadd.f32 0.0, %v4640
      %4642 = vmatmul.f32.gmra.mxu0 %v4556
      %v4643 = vpop.f32.mrf.mxu0
      %v4644 = vadd.f32 0.0, %v4643
      %4645 = vmatmul.f32.gmra.mxu0 %v4565
      %v4646 = vpop.f32.mrf.mxu0
      %v4647 = vadd.f32 0.0, %v4646
      %4648 = vmatmul.f32.gmra.mxu0 %v4566
      %v4649 = vpop.f32.mrf.mxu0
      %v4650 = vadd.f32 0.0, %v4649
      %4651 = vmatmul.f32.gmra.mxu0 %v4567
      %v4652 = vpop.f32.mrf.mxu0
      %v4653 = vadd.f32 0.0, %v4652
      %4654 = vmatmul.f32.gmra.mxu0 %v4568
      %v4655 = vpop.f32.mrf.mxu0
      %v4656 = vadd.f32 0.0, %v4655
      %4657 = vmatmul.f32.gmra.mxu0 %v4573
      %v4658 = vpop.f32.mrf.mxu0
      %v4659 = vadd.f32 0.0, %v4658
      %4660 = vmatmul.f32.gmra.mxu0 %v4574
      %v4661 = vpop.f32.mrf.mxu0
      %v4662 = vadd.f32 0.0, %v4661
      %4663 = vdwg.mxu0
      %4664 = vst [vmem:[#allocation1] ss:$2 sm:$0xff] %v4362
      %s4665 = scalar_lea.vmem [#allocation1], 1
      %4666 = vst [vmem:[%s4665] ss:$2 sm:$0xff] %v4410
      %s4667 = scalar_lea.vmem [#allocation1], 16
      %4668 = vst [vmem:[%s4667] ss:$2 sm:$0xff] %v4363
      %s4669 = scalar_lea.vmem [#allocation1], 17
      %4670 = vst [vmem:[%s4669] ss:$2 sm:$0xff] %v4364
      %s4671 = scalar_lea.vmem [#allocation1], 32
      %4672 = vst [vmem:[%s4671] ss:$2 sm:$0xff] %v4411
      %s4673 = scalar_lea.vmem [#allocation1], 33
      %4674 = vst [vmem:[%s4673] ss:$2 sm:$0xff] %v4365
      %s4675 = scalar_lea.vmem [#allocation1], 48
      %4676 = vst [vmem:[%s4675] ss:$2 sm:$0xff] %v4366
      %s4677 = scalar_lea.vmem [#allocation1], 49
      %4678 = vst [vmem:[%s4677] ss:$2 sm:$0xff] %v4412
      %v4679 = vld.sshfl [vmem:[#allocation1] sm:$0xff pattern:$0x75316420]
      %v4680 = vld.sshfl [vmem:[#allocation1 + $0x10] sm:$0xff pattern:$0x75316420]
      %v4681 = vld.sshfl [vmem:[#allocation1 + $0x20] sm:$0xff pattern:$0x75316420]
      %v4682 = vld.sshfl [vmem:[#allocation1 + $0x30] sm:$0xff pattern:$0x75316420]
      %4683 = vst [vmem:[#allocation1] ss:$2 sm:$0xff] %v4367
      %4684 = vst [vmem:[%s4665] ss:$2 sm:$0xff] %v4368
      %4685 = vst [vmem:[%s4667] ss:$2 sm:$0xff] %v4413
      %4686 = vst [vmem:[%s4669] ss:$2 sm:$0xff] %v4369
      %4687 = vst [vmem:[%s4671] ss:$2 sm:$0xff] %v4370
      %4688 = vst [vmem:[%s4673] ss:$2 sm:$0xff] %v4414
      %4689 = vst [vmem:[%s4675] ss:$2 sm:$0xff] %v4371
      %4690 = vst [vmem:[%s4677] ss:$2 sm:$0xff] %v4372
      %v4691 = vld.sshfl [vmem:[#allocation1] sm:$0xff pattern:$0x75316420]
      %v4692 = vld.sshfl [vmem:[#allocation1 + $0x10] sm:$0xff pattern:$0x75316420]
      %v4693 = vld.sshfl [vmem:[#allocation1 + $0x20] sm:$0xff pattern:$0x75316420]
      %v4694 = vld.sshfl [vmem:[#allocation1 + $0x30] sm:$0xff pattern:$0x75316420]
      %4695 = vst [vmem:[#allocation1] ss:$2 sm:$0xff] %v4415
      %4696 = vst [vmem:[%s4665] ss:$2 sm:$0xff] %v4373
      %4697 = vst [vmem:[%s4667] ss:$2 sm:$0xff] %v4374
      %4698 = vst [vmem:[%s4669] ss:$2 sm:$0xff] %v4416
      %4699 = vst [vmem:[%s4671] ss:$2 sm:$0xff] %v4375
      %4700 = vst [vmem:[%s4673] ss:$2 sm:$0xff] %v4376
      %4701 = vst [vmem:[%s4675] ss:$2 sm:$0xff] %v4417
      %4702 = vst [vmem:[%s4677] ss:$2 sm:$0xff] %v4377
      %v4703 = vld.sshfl [vmem:[#allocation1] sm:$0xff pattern:$0x75316420]
      %v4704 = vld.sshfl [vmem:[#allocation1 + $0x10] sm:$0xff pattern:$0x75316420]
      %v4705 = vld.sshfl [vmem:[#allocation1 + $0x20] sm:$0xff pattern:$0x75316420]
      %v4706 = vld.sshfl [vmem:[#allocation1 + $0x30] sm:$0xff pattern:$0x75316420]
      %4707 = vst [vmem:[#allocation1] ss:$2 sm:$0xff] %v4378
      %4708 = vst [vmem:[%s4665] ss:$2 sm:$0xff] %v4418
      %4709 = vst [vmem:[%s4667] ss:$2 sm:$0xff] %v4379
      %4710 = vst [vmem:[%s4669] ss:$2 sm:$0xff] %v4380
      %4711 = vst [vmem:[%s4671] ss:$2 sm:$0xff] %v4419
      %4712 = vst [vmem:[%s4673] ss:$2 sm:$0xff] %v4381
      %4713 = vst [vmem:[%s4675] ss:$2 sm:$0xff] %v4382
      %4714 = vst [vmem:[%s4677] ss:$2 sm:$0xff] %v4420
      %v4715 = vld.sshfl [vmem:[#allocation1] sm:$0xff pattern:$0x75316420]
      %v4716 = vld.sshfl [vmem:[#allocation1 + $0x10] sm:$0xff pattern:$0x75316420]
      %v4717 = vld.sshfl [vmem:[#allocation1 + $0x20] sm:$0xff pattern:$0x75316420]
      %v4718 = vld.sshfl [vmem:[#allocation1 + $0x30] sm:$0xff pattern:$0x75316420]
      %4719 = vst [vmem:[#allocation1] ss:$2 sm:$0xff] %v4383
      %4720 = vst [vmem:[%s4665] ss:$2 sm:$0xff] %v4384
      %4721 = vst [vmem:[%s4667] ss:$2 sm:$0xff] %v4421
      %4722 = vst [vmem:[%s4669] ss:$2 sm:$0xff] %v4385
      %v4723 = vld.sshfl [vmem:[#allocation1] sm:$0xff pattern:$0x75316420]
      %v4724 = vld.sshfl [vmem:[#allocation1 + $0x10] sm:$0xff pattern:$0x75316420]
      %4743 = vmatpush.msra.mxu0 %v4437
      %4744 = vmatpush.msra.mxu0 %v4436
      %4745 = vmatpush.msra.mxu0 %v4435
      %4746 = vmatpush.msra.mxu0 %v4434
      %4747 = vmatpush.msra.mxu0 %v4433
      %4748 = vmatpush.msra.mxu0 %v4432
      %4749 = vmatpush.msra.mxu0 %v4431
      %4750 = vmatpush.msra.mxu0 %v4430
      %4751 = vmatpush.msra.mxu0 %v4429
      %4752 = vmatpush.msra.mxu0 %v4428
      %4753 = vmatpush.msra.mxu0 %v4427
      %4754 = vmatpush.msra.mxu0 %v4426
      %4755 = vmatpush.msra.mxu0 %v4425
      %4756 = vmatpush.msra.mxu0 %v4424
      %4757 = vmatpush.msra.mxu0 %v4423
      %4758 = vmatpush.msra.mxu0 %v4422
      %4759 = vmatmul.f32.gmra.mxu0 %v4679
      %v4760 = vpop.f32.mrf.mxu0
      %v4761 = vadd.f32 %v4611, %v4760
      %4762 = vmatmul.f32.gmra.mxu0 %v4680
      %v4763 = vpop.f32.mrf.mxu0
      %v4764 = vadd.f32 %v4614, %v4763
      %4765 = vmatmul.f32.gmra.mxu0 %v4681
      %v4766 = vpop.f32.mrf.mxu0
      %v4767 = vadd.f32 %v4617, %v4766
      %4768 = vmatmul.f32.gmra.mxu0 %v4682
      %v4769 = vpop.f32.mrf.mxu0
      %v4770 = vadd.f32 %v4620, %v4769
      %4771 = vmatmul.f32.gmra.mxu0 %v4691
      %v4772 = vpop.f32.mrf.mxu0
      %v4773 = vadd.f32 %v4623, %v4772
      %4774 = vmatmul.f32.gmra.mxu0 %v4692
      %v4775 = vpop.f32.mrf.mxu0
      %v4776 = vadd.f32 %v4626, %v4775
      %4777 = vmatmul.f32.gmra.mxu0 %v4693
      %v4778 = vpop.f32.mrf.mxu0
      %v4779 = vadd.f32 %v4629, %v4778
      %4780 = vmatmul.f32.gmra.mxu0 %v4694
      %v4781 = vpop.f32.mrf.mxu0
      %v4782 = vadd.f32 %v4632, %v4781
      %4783 = vmatmul.f32.gmra.mxu0 %v4703
      %v4784 = vpop.f32.mrf.mxu0
      %v4785 = vadd.f32 %v4635, %v4784
      %4786 = vmatmul.f32.gmra.mxu0 %v4704
      %v4787 = vpop.f32.mrf.mxu0
      %v4788 = vadd.f32 %v4638, %v4787
      %4789 = vmatmul.f32.gmra.mxu0 %v4705
      %v4790 = vpop.f32.mrf.mxu0
      %v4791 = vadd.f32 %v4641, %v4790
      %4792 = vmatmul.f32.gmra.mxu0 %v4706
      %v4793 = vpop.f32.mrf.mxu0
      %v4794 = vadd.f32 %v4644, %v4793
      %4795 = vmatmul.f32.gmra.mxu0 %v4715
      %v4796 = vpop.f32.mrf.mxu0
      %v4797 = vadd.f32 %v4647, %v4796
      %4798 = vmatmul.f32.gmra.mxu0 %v4716
      %v4799 = vpop.f32.mrf.mxu0
      %v4800 = vadd.f32 %v4650, %v4799
      %4801 = vmatmul.f32.gmra.mxu0 %v4717
      %v4802 = vpop.f32.mrf.mxu0
      %v4803 = vadd.f32 %v4653, %v4802
      %4804 = vmatmul.f32.gmra.mxu0 %v4718
      %v4805 = vpop.f32.mrf.mxu0
      %v4806 = vadd.f32 %v4656, %v4805
      %4807 = vmatmul.f32.gmra.mxu0 %v4723
      %v4808 = vpop.f32.mrf.mxu0
      %v4809 = vadd.f32 %v4659, %v4808
      %4810 = vmatmul.f32.gmra.mxu0 %v4724
      %v4811 = vpop.f32.mrf.mxu0
      %v4812 = vadd.f32 %v4662, %v4811
      %4813 = vdwg.mxu0
      %v4814 = vld [vmem:[#allocation2 + $0x2] sm:$0xff]
      %v4815 = vld [vmem:[#allocation2 + $0xa] sm:$0xf]
      %v4816 = vld [vmem:[#allocation2 + $0x12] sm:$0xff]
      %v4817 = vld [vmem:[#allocation2 + $0x1a] sm:$0xf]
      %v4818 = vld [vmem:[#allocation2 + $0x22] sm:$0xff]
      %v4819 = vld [vmem:[#allocation2 + $0x2a] sm:$0xf]
      %v4820 = vld [vmem:[#allocation2 + $0x32] sm:$0xff]
      %v4821 = vld [vmem:[#allocation2 + $0x3a] sm:$0xf]
      %v4822 = vld [vmem:[#allocation2 + $0x42] sm:$0xff]
      %v4823 = vld [vmem:[#allocation2 + $0x4a] sm:$0xf]
      %v4824 = vld [vmem:[#allocation2 + $0x52] sm:$0xff]
      %v4825 = vld [vmem:[#allocation2 + $0x5a] sm:$0xf]
      %v4826 = vld [vmem:[#allocation2 + $0x62] sm:$0xff]
      %v4827 = vld [vmem:[#allocation2 + $0x6a] sm:$0xf]
      %v4828 = vld [vmem:[#allocation2 + $0x72] sm:$0xff]
      %v4829 = vld [vmem:[#allocation2 + $0x7a] sm:$0xf]
      %v4830 = vld [vmem:[#allocation2 + $0x82] sm:$0xff]
      %v4831 = vld [vmem:[#allocation2 + $0x8a] sm:$0xf]
      %v4832 = vld [vmem:[#allocation2 + $0x92] sm:$0xff]
      %v4833 = vld [vmem:[#allocation2 + $0x9a] sm:$0xf]
      %v4834 = vld [vmem:[#allocation2 + $0xa2] sm:$0xff]
      %v4835 = vld [vmem:[#allocation2 + $0xaa] sm:$0xf]
      %v4836 = vld [vmem:[#allocation2 + $0xb2] sm:$0xff]
      %v4837 = vld [vmem:[#allocation2 + $0xba] sm:$0xf]
      %v4862 = vrot.slane %v4814, 4
      %v4863 = vrot.slane %v4816, 4
      %v4864 = vrot.slane %v4818, 4
      %v4865 = vrot.slane %v4820, 4
      %v4866 = vrot.slane %v4822, 4
      %v4867 = vrot.slane %v4824, 4
      %v4868 = vrot.slane %v4826, 4
      %v4869 = vrot.slane %v4828, 4
      %v4870 = vrot.slane %v4830, 4
      %v4871 = vrot.slane %v4832, 4
      %v4872 = vrot.slane %v4834, 4
      %v4873 = vrot.slane %v4836, 4
      %v4874 = vld [vmem:[%s3 + $0x100] sm:$0xff]
      %v4875 = vld [vmem:[%s3 + $0x108] sm:$0xff]
      %v4876 = vld [vmem:[%s3 + $0x110] sm:$0xff]
      %v4877 = vld [vmem:[%s3 + $0x118] sm:$0xff]
      %v4878 = vld [vmem:[%s3 + $0x120] sm:$0xff]
      %v4879 = vld [vmem:[%s3 + $0x128] sm:$0xff]
      %v4880 = vld [vmem:[%s3 + $0x130] sm:$0xff]
      %v4881 = vld [vmem:[%s3 + $0x138] sm:$0xff]
      %v4882 = vld [vmem:[%s3 + $0x140] sm:$0xff]
      %v4883 = vld [vmem:[%s3 + $0x148] sm:$0xff]
      %v4884 = vld [vmem:[%s3 + $0x150] sm:$0xff]
      %v4885 = vld [vmem:[%s3 + $0x158] sm:$0xff]
      %v4886 = vld [vmem:[%s3 + $0x160] sm:$0xff]
      %v4887 = vld [vmem:[%s3 + $0x168] sm:$0xff]
      %v4888 = vld [vmem:[%s3 + $0x170] sm:$0xff]
      %v4889 = vld [vmem:[%s3 + $0x178] sm:$0xff]
      %4890 = vst [vmem:[#allocation1] ss:$2 sm:$0xff] %v4814
      %s4891 = scalar_lea.vmem [#allocation1], 1
      %4892 = vst [vmem:[%s4891] ss:$2 sm:$0xff] %v4862
      %s4893 = scalar_lea.vmem [#allocation1], 16
      %4894 = vst [vmem:[%s4893] ss:$2 sm:$0xff] %v4815
      %s4895 = scalar_lea.vmem [#allocation1], 17
      %4896 = vst [vmem:[%s4895] ss:$2 sm:$0xff] %v4816
      %s4897 = scalar_lea.vmem [#allocation1], 32
      %4898 = vst [vmem:[%s4897] ss:$2 sm:$0xff] %v4863
      %s4899 = scalar_lea.vmem [#allocation1], 33
      %4900 = vst [vmem:[%s4899] ss:$2 sm:$0xff] %v4817
      %s4901 = scalar_lea.vmem [#allocation1], 48
      %4902 = vst [vmem:[%s4901] ss:$2 sm:$0xff] %v4818
      %s4903 = scalar_lea.vmem [#allocation1], 49
      %4904 = vst [vmem:[%s4903] ss:$2 sm:$0xff] %v4864
      %v4905 = vld.sshfl [vmem:[#allocation1] sm:$0xff pattern:$0x75316420]
      %v4906 = vld.sshfl [vmem:[#allocation1 + $0x10] sm:$0xff pattern:$0x75316420]
      %v4907 = vld.sshfl [vmem:[#allocation1 + $0x20] sm:$0xff pattern:$0x75316420]
      %v4908 = vld.sshfl [vmem:[#allocation1 + $0x30] sm:$0xff pattern:$0x75316420]
      %4909 = vst [vmem:[#allocation1] ss:$2 sm:$0xff] %v4819
      %4910 = vst [vmem:[%s4891] ss:$2 sm:$0xff] %v4820
      %4911 = vst [vmem:[%s4893] ss:$2 sm:$0xff] %v4865
      %4912 = vst [vmem:[%s4895] ss:$2 sm:$0xff] %v4821
      %4913 = vst [vmem:[%s4897] ss:$2 sm:$0xff] %v4822
      %4914 = vst [vmem:[%s4899] ss:$2 sm:$0xff] %v4866
      %4915 = vst [vmem:[%s4901] ss:$2 sm:$0xff] %v4823
      %4916 = vst [vmem:[%s4903] ss:$2 sm:$0xff] %v4824
      %v4917 = vld.sshfl [vmem:[#allocation1] sm:$0xff pattern:$0x75316420]
      %v4918 = vld.sshfl [vmem:[#allocation1 + $0x10] sm:$0xff pattern:$0x75316420]
      %v4919 = vld.sshfl [vmem:[#allocation1 + $0x20] sm:$0xff pattern:$0x75316420]
      %v4920 = vld.sshfl [vmem:[#allocation1 + $0x30] sm:$0xff pattern:$0x75316420]
      %4921 = vst [vmem:[#allocation1] ss:$2 sm:$0xff] %v4867
      %4922 = vst [vmem:[%s4891] ss:$2 sm:$0xff] %v4825
      %4923 = vst [vmem:[%s4893] ss:$2 sm:$0xff] %v4826
      %4924 = vst [vmem:[%s4895] ss:$2 sm:$0xff] %v4868
      %4925 = vst [vmem:[%s4897] ss:$2 sm:$0xff] %v4827
      %4926 = vst [vmem:[%s4899] ss:$2 sm:$0xff] %v4828
      %4927 = vst [vmem:[%s4901] ss:$2 sm:$0xff] %v4869
      %4928 = vst [vmem:[%s4903] ss:$2 sm:$0xff] %v4829
      %v4929 = vld.sshfl [vmem:[#allocation1] sm:$0xff pattern:$0x75316420]
      %v4930 = vld.sshfl [vmem:[#allocation1 + $0x10] sm:$0xff pattern:$0x75316420]
      %v4931 = vld.sshfl [vmem:[#allocation1 + $0x20] sm:$0xff pattern:$0x75316420]
      %v4932 = vld.sshfl [vmem:[#allocation1 + $0x30] sm:$0xff pattern:$0x75316420]
      %4933 = vst [vmem:[#allocation1] ss:$2 sm:$0xff] %v4830
      %4934 = vst [vmem:[%s4891] ss:$2 sm:$0xff] %v4870
      %4935 = vst [vmem:[%s4893] ss:$2 sm:$0xff] %v4831
      %4936 = vst [vmem:[%s4895] ss:$2 sm:$0xff] %v4832
      %4937 = vst [vmem:[%s4897] ss:$2 sm:$0xff] %v4871
      %4938 = vst [vmem:[%s4899] ss:$2 sm:$0xff] %v4833
      %4939 = vst [vmem:[%s4901] ss:$2 sm:$0xff] %v4834
      %4940 = vst [vmem:[%s4903] ss:$2 sm:$0xff] %v4872
      %v4941 = vld.sshfl [vmem:[#allocation1] sm:$0xff pattern:$0x75316420]
      %v4942 = vld.sshfl [vmem:[#allocation1 + $0x10] sm:$0xff pattern:$0x75316420]
      %v4943 = vld.sshfl [vmem:[#allocation1 + $0x20] sm:$0xff pattern:$0x75316420]
      %v4944 = vld.sshfl [vmem:[#allocation1 + $0x30] sm:$0xff pattern:$0x75316420]
      %4945 = vst [vmem:[#allocation1] ss:$2 sm:$0xff] %v4835
      %4946 = vst [vmem:[%s4891] ss:$2 sm:$0xff] %v4836
      %4947 = vst [vmem:[%s4893] ss:$2 sm:$0xff] %v4873
      %4948 = vst [vmem:[%s4895] ss:$2 sm:$0xff] %v4837
      %v4949 = vld.sshfl [vmem:[#allocation1] sm:$0xff pattern:$0x75316420]
      %v4950 = vld.sshfl [vmem:[#allocation1 + $0x10] sm:$0xff pattern:$0x75316420]
      %4969 = vmatpush.msra.mxu0 %v4889
      %4970 = vmatpush.msra.mxu0 %v4888
      %4971 = vmatpush.msra.mxu0 %v4887
      %4972 = vmatpush.msra.mxu0 %v4886
      %4973 = vmatpush.msra.mxu0 %v4885
      %4974 = vmatpush.msra.mxu0 %v4884
      %4975 = vmatpush.msra.mxu0 %v4883
      %4976 = vmatpush.msra.mxu0 %v4882
      %4977 = vmatpush.msra.mxu0 %v4881
      %4978 = vmatpush.msra.mxu0 %v4880
      %4979 = vmatpush.msra.mxu0 %v4879
      %4980 = vmatpush.msra.mxu0 %v4878
      %4981 = vmatpush.msra.mxu0 %v4877
      %4982 = vmatpush.msra.mxu0 %v4876
      %4983 = vmatpush.msra.mxu0 %v4875
      %4984 = vmatpush.msra.mxu0 %v4874
      %4985 = vmatmul.f32.gmra.mxu0 %v4905
      %v4986 = vpop.f32.mrf.mxu0
      %v4987 = vadd.f32 0.0, %v4986
      %4988 = vmatmul.f32.gmra.mxu0 %v4906
      %v4989 = vpop.f32.mrf.mxu0
      %v4990 = vadd.f32 0.0, %v4989
      %4991 = vmatmul.f32.gmra.mxu0 %v4907
      %v4992 = vpop.f32.mrf.mxu0
      %v4993 = vadd.f32 0.0, %v4992
      %4994 = vmatmul.f32.gmra.mxu0 %v4908
      %v4995 = vpop.f32.mrf.mxu0
      %v4996 = vadd.f32 0.0, %v4995
      %4997 = vmatmul.f32.gmra.mxu0 %v4917
      %v4998 = vpop.f32.mrf.mxu0
      %v4999 = vadd.f32 0.0, %v4998
      %5000 = vmatmul.f32.gmra.mxu0 %v4918
      %v5001 = vpop.f32.mrf.mxu0
      %v5002 = vadd.f32 0.0, %v5001
      %5003 = vmatmul.f32.gmra.mxu0 %v4919
      %v5004 = vpop.f32.mrf.mxu0
      %v5005 = vadd.f32 0.0, %v5004
      %5006 = vmatmul.f32.gmra.mxu0 %v4920
      %v5007 = vpop.f32.mrf.mxu0
      %v5008 = vadd.f32 0.0, %v5007
      %5009 = vmatmul.f32.gmra.mxu0 %v4929
      %v5010 = vpop.f32.mrf.mxu0
      %v5011 = vadd.f32 0.0, %v5010
      %5012 = vmatmul.f32.gmra.mxu0 %v4930
      %v5013 = vpop.f32.mrf.mxu0
      %v5014 = vadd.f32 0.0, %v5013
      %5015 = vmatmul.f32.gmra.mxu0 %v4931
      %v5016 = vpop.f32.mrf.mxu0
      %v5017 = vadd.f32 0.0, %v5016
      %5018 = vmatmul.f32.gmra.mxu0 %v4932
      %v5019 = vpop.f32.mrf.mxu0
      %v5020 = vadd.f32 0.0, %v5019
      %5021 = vmatmul.f32.gmra.mxu0 %v4941
      %v5022 = vpop.f32.mrf.mxu0
      %v5023 = vadd.f32 0.0, %v5022
      %5024 = vmatmul.f32.gmra.mxu0 %v4942
      %v5025 = vpop.f32.mrf.mxu0
      %v5026 = vadd.f32 0.0, %v5025
      %5027 = vmatmul.f32.gmra.mxu0 %v4943
      %v5028 = vpop.f32.mrf.mxu0
      %v5029 = vadd.f32 0.0, %v5028
      %5030 = vmatmul.f32.gmra.mxu0 %v4944
      %v5031 = vpop.f32.mrf.mxu0
      %v5032 = vadd.f32 0.0, %v5031
      %5033 = vmatmul.f32.gmra.mxu0 %v4949
      %v5034 = vpop.f32.mrf.mxu0
      %v5035 = vadd.f32 0.0, %v5034
      %5036 = vmatmul.f32.gmra.mxu0 %v4950
      %v5037 = vpop.f32.mrf.mxu0
      %v5038 = vadd.f32 0.0, %v5037
      %5039 = vdwg.mxu0
      %v5040 = vadd.f32 %v4761, %v4987
      %v5041 = vadd.f32 %v4764, %v4990
      %v5042 = vadd.f32 %v4767, %v4993
      %v5043 = vadd.f32 %v4770, %v4996
      %v5044 = vadd.f32 %v4773, %v4999
      %v5045 = vadd.f32 %v4776, %v5002
      %v5046 = vadd.f32 %v4779, %v5005
      %v5047 = vadd.f32 %v4782, %v5008
      %v5048 = vadd.f32 %v4785, %v5011
      %v5049 = vadd.f32 %v4788, %v5014
      %v5050 = vadd.f32 %v4791, %v5017
      %v5051 = vadd.f32 %v4794, %v5020
      %v5052 = vadd.f32 %v4797, %v5023
      %v5053 = vadd.f32 %v4800, %v5026
      %v5054 = vadd.f32 %v4803, %v5029
      %v5055 = vadd.f32 %v4806, %v5032
      %v5056 = vadd.f32 %v4809, %v5035
      %v5057 = vadd.f32 %v4812, %v5038
      %s5058 = scalar_lea.vmem [#allocation2], 16
      %v5059 = vld [vmem:[%s5058] sm:$0xff]
      %v5060 = vld [vmem:[%s5058 + $0x8] sm:$0xf]
      %v5061 = vld [vmem:[%s5058 + $0x10] sm:$0xff]
      %v5062 = vld [vmem:[%s5058 + $0x18] sm:$0xf]
      %v5063 = vld [vmem:[%s5058 + $0x20] sm:$0xff]
      %v5064 = vld [vmem:[%s5058 + $0x28] sm:$0xf]
      %v5065 = vld [vmem:[%s5058 + $0x30] sm:$0xff]
      %v5066 = vld [vmem:[%s5058 + $0x38] sm:$0xf]
      %v5067 = vld [vmem:[%s5058 + $0x40] sm:$0xff]
      %v5068 = vld [vmem:[%s5058 + $0x48] sm:$0xf]
      %v5069 = vld [vmem:[%s5058 + $0x50] sm:$0xff]
      %v5070 = vld [vmem:[%s5058 + $0x58] sm:$0xf]
      %v5071 = vld [vmem:[%s5058 + $0x60] sm:$0xff]
      %v5072 = vld [vmem:[%s5058 + $0x68] sm:$0xf]
      %v5073 = vld [vmem:[%s5058 + $0x70] sm:$0xff]
      %v5074 = vld [vmem:[%s5058 + $0x78] sm:$0xf]
      %v5075 = vld [vmem:[%s5058 + $0x80] sm:$0xff]
      %v5076 = vld [vmem:[%s5058 + $0x88] sm:$0xf]
      %v5077 = vld [vmem:[%s5058 + $0x90] sm:$0xff]
      %v5078 = vld [vmem:[%s5058 + $0x98] sm:$0xf]
      %v5079 = vld [vmem:[%s5058 + $0xa0] sm:$0xff]
      %v5080 = vld [vmem:[%s5058 + $0xa8] sm:$0xf]
      %v5081 = vld [vmem:[%s5058 + $0xb0] sm:$0xff]
      %v5082 = vld [vmem:[%s5058 + $0xb8] sm:$0xf]
      %v5107 = vrot.slane %v5059, 4
      %v5108 = vrot.slane %v5061, 4
      %v5109 = vrot.slane %v5063, 4
      %v5110 = vrot.slane %v5065, 4
      %v5111 = vrot.slane %v5067, 4
      %v5112 = vrot.slane %v5069, 4
      %v5113 = vrot.slane %v5071, 4
      %v5114 = vrot.slane %v5073, 4
      %v5115 = vrot.slane %v5075, 4
      %v5116 = vrot.slane %v5077, 4
      %v5117 = vrot.slane %v5079, 4
      %v5118 = vrot.slane %v5081, 4
      %v5119 = vld [vmem:[%s3 + $0x180] sm:$0xff]
      %v5120 = vld [vmem:[%s3 + $0x188] sm:$0xff]
      %v5121 = vld [vmem:[%s3 + $0x190] sm:$0xff]
      %v5122 = vld [vmem:[%s3 + $0x198] sm:$0xff]
      %v5123 = vld [vmem:[%s3 + $0x1a0] sm:$0xff]
      %v5124 = vld [vmem:[%s3 + $0x1a8] sm:$0xff]
      %v5125 = vld [vmem:[%s3 + $0x1b0] sm:$0xff]
      %v5126 = vld [vmem:[%s3 + $0x1b8] sm:$0xff]
      %v5127 = vld [vmem:[%s3 + $0x1c0] sm:$0xff]
      %v5128 = vld [vmem:[%s3 + $0x1c8] sm:$0xff]
      %v5129 = vld [vmem:[%s3 + $0x1d0] sm:$0xff]
      %v5130 = vld [vmem:[%s3 + $0x1d8] sm:$0xff]
      %v5131 = vld [vmem:[%s3 + $0x1e0] sm:$0xff]
      %v5132 = vld [vmem:[%s3 + $0x1e8] sm:$0xff]
      %v5133 = vld [vmem:[%s3 + $0x1f0] sm:$0xff]
      %v5134 = vld [vmem:[%s3 + $0x1f8] sm:$0xff]
      %5135 = vst [vmem:[#allocation1] ss:$2 sm:$0xff] %v5059
      %s5136 = scalar_lea.vmem [#allocation1], 1
      %5137 = vst [vmem:[%s5136] ss:$2 sm:$0xff] %v5107
      %s5138 = scalar_lea.vmem [#allocation1], 16
      %5139 = vst [vmem:[%s5138] ss:$2 sm:$0xff] %v5060
      %s5140 = scalar_lea.vmem [#allocation1], 17
      %5141 = vst [vmem:[%s5140] ss:$2 sm:$0xff] %v5061
      %s5142 = scalar_lea.vmem [#allocation1], 32
      %5143 = vst [vmem:[%s5142] ss:$2 sm:$0xff] %v5108
      %s5144 = scalar_lea.vmem [#allocation1], 33
      %5145 = vst [vmem:[%s5144] ss:$2 sm:$0xff] %v5062
      %s5146 = scalar_lea.vmem [#allocation1], 48
      %5147 = vst [vmem:[%s5146] ss:$2 sm:$0xff] %v5063
      %s5148 = scalar_lea.vmem [#allocation1], 49
      %5149 = vst [vmem:[%s5148] ss:$2 sm:$0xff] %v5109
      %v5150 = vld.sshfl [vmem:[#allocation1] sm:$0xff pattern:$0x75316420]
      %v5151 = vld.sshfl [vmem:[#allocation1 + $0x10] sm:$0xff pattern:$0x75316420]
      %v5152 = vld.sshfl [vmem:[#allocation1 + $0x20] sm:$0xff pattern:$0x75316420]
      %v5153 = vld.sshfl [vmem:[#allocation1 + $0x30] sm:$0xff pattern:$0x75316420]
      %5154 = vst [vmem:[#allocation1] ss:$2 sm:$0xff] %v5064
      %5155 = vst [vmem:[%s5136] ss:$2 sm:$0xff] %v5065
      %5156 = vst [vmem:[%s5138] ss:$2 sm:$0xff] %v5110
      %5157 = vst [vmem:[%s5140] ss:$2 sm:$0xff] %v5066
      %5158 = vst [vmem:[%s5142] ss:$2 sm:$0xff] %v5067
      %5159 = vst [vmem:[%s5144] ss:$2 sm:$0xff] %v5111
      %5160 = vst [vmem:[%s5146] ss:$2 sm:$0xff] %v5068
      %5161 = vst [vmem:[%s5148] ss:$2 sm:$0xff] %v5069
      %v5162 = vld.sshfl [vmem:[#allocation1] sm:$0xff pattern:$0x75316420]
      %v5163 = vld.sshfl [vmem:[#allocation1 + $0x10] sm:$0xff pattern:$0x75316420]
      %v5164 = vld.sshfl [vmem:[#allocation1 + $0x20] sm:$0xff pattern:$0x75316420]
      %v5165 = vld.sshfl [vmem:[#allocation1 + $0x30] sm:$0xff pattern:$0x75316420]
      %5166 = vst [vmem:[#allocation1] ss:$2 sm:$0xff] %v5112
      %5167 = vst [vmem:[%s5136] ss:$2 sm:$0xff] %v5070
      %5168 = vst [vmem:[%s5138] ss:$2 sm:$0xff] %v5071
      %5169 = vst [vmem:[%s5140] ss:$2 sm:$0xff] %v5113
      %5170 = vst [vmem:[%s5142] ss:$2 sm:$0xff] %v5072
      %5171 = vst [vmem:[%s5144] ss:$2 sm:$0xff] %v5073
      %5172 = vst [vmem:[%s5146] ss:$2 sm:$0xff] %v5114
      %5173 = vst [vmem:[%s5148] ss:$2 sm:$0xff] %v5074
      %v5174 = vld.sshfl [vmem:[#allocation1] sm:$0xff pattern:$0x75316420]
      %v5175 = vld.sshfl [vmem:[#allocation1 + $0x10] sm:$0xff pattern:$0x75316420]
      %v5176 = vld.sshfl [vmem:[#allocation1 + $0x20] sm:$0xff pattern:$0x75316420]
      %v5177 = vld.sshfl [vmem:[#allocation1 + $0x30] sm:$0xff pattern:$0x75316420]
      %5178 = vst [vmem:[#allocation1] ss:$2 sm:$0xff] %v5075
      %5179 = vst [vmem:[%s5136] ss:$2 sm:$0xff] %v5115
      %5180 = vst [vmem:[%s5138] ss:$2 sm:$0xff] %v5076
      %5181 = vst [vmem:[%s5140] ss:$2 sm:$0xff] %v5077
      %5182 = vst [vmem:[%s5142] ss:$2 sm:$0xff] %v5116
      %5183 = vst [vmem:[%s5144] ss:$2 sm:$0xff] %v5078
      %5184 = vst [vmem:[%s5146] ss:$2 sm:$0xff] %v5079
      %5185 = vst [vmem:[%s5148] ss:$2 sm:$0xff] %v5117
      %v5186 = vld.sshfl [vmem:[#allocation1] sm:$0xff pattern:$0x75316420]
      %v5187 = vld.sshfl [vmem:[#allocation1 + $0x10] sm:$0xff pattern:$0x75316420]
      %v5188 = vld.sshfl [vmem:[#allocation1 + $0x20] sm:$0xff pattern:$0x75316420]
      %v5189 = vld.sshfl [vmem:[#allocation1 + $0x30] sm:$0xff pattern:$0x75316420]
      %5190 = vst [vmem:[#allocation1] ss:$2 sm:$0xff] %v5080
      %5191 = vst [vmem:[%s5136] ss:$2 sm:$0xff] %v5081
      %5192 = vst [vmem:[%s5138] ss:$2 sm:$0xff] %v5118
      %5193 = vst [vmem:[%s5140] ss:$2 sm:$0xff] %v5082
      %v5194 = vld.sshfl [vmem:[#allocation1] sm:$0xff pattern:$0x75316420]
      %v5195 = vld.sshfl [vmem:[#allocation1 + $0x10] sm:$0xff pattern:$0x75316420]
      %5214 = vmatpush.msra.mxu0 %v5134
      %5215 = vmatpush.msra.mxu0 %v5133
      %5216 = vmatpush.msra.mxu0 %v5132
      %5217 = vmatpush.msra.mxu0 %v5131
      %5218 = vmatpush.msra.mxu0 %v5130
      %5219 = vmatpush.msra.mxu0 %v5129
      %5220 = vmatpush.msra.mxu0 %v5128
      %5221 = vmatpush.msra.mxu0 %v5127
      %5222 = vmatpush.msra.mxu0 %v5126
      %5223 = vmatpush.msra.mxu0 %v5125
      %5224 = vmatpush.msra.mxu0 %v5124
      %5225 = vmatpush.msra.mxu0 %v5123
      %5226 = vmatpush.msra.mxu0 %v5122
      %5227 = vmatpush.msra.mxu0 %v5121
      %5228 = vmatpush.msra.mxu0 %v5120
      %5229 = vmatpush.msra.mxu0 %v5119
      %5230 = vmatmul.f32.gmra.mxu0 %v5150
      %v5231 = vpop.f32.mrf.mxu0
      %v5232 = vadd.f32 0.0, %v5231
      %5233 = vmatmul.f32.gmra.mxu0 %v5151
      %v5234 = vpop.f32.mrf.mxu0
      %v5235 = vadd.f32 0.0, %v5234
      %5236 = vmatmul.f32.gmra.mxu0 %v5152
      %v5237 = vpop.f32.mrf.mxu0
      %v5238 = vadd.f32 0.0, %v5237
      %5239 = vmatmul.f32.gmra.mxu0 %v5153
      %v5240 = vpop.f32.mrf.mxu0
      %v5241 = vadd.f32 0.0, %v5240
      %5242 = vmatmul.f32.gmra.mxu0 %v5162
      %v5243 = vpop.f32.mrf.mxu0
      %v5244 = vadd.f32 0.0, %v5243
      %5245 = vmatmul.f32.gmra.mxu0 %v5163
      %v5246 = vpop.f32.mrf.mxu0
      %v5247 = vadd.f32 0.0, %v5246
      %5248 = vmatmul.f32.gmra.mxu0 %v5164
      %v5249 = vpop.f32.mrf.mxu0
      %v5250 = vadd.f32 0.0, %v5249
      %5251 = vmatmul.f32.gmra.mxu0 %v5165
      %v5252 = vpop.f32.mrf.mxu0
      %v5253 = vadd.f32 0.0, %v5252
      %5254 = vmatmul.f32.gmra.mxu0 %v5174
      %v5255 = vpop.f32.mrf.mxu0
      %v5256 = vadd.f32 0.0, %v5255
      %5257 = vmatmul.f32.gmra.mxu0 %v5175
      %v5258 = vpop.f32.mrf.mxu0
      %v5259 = vadd.f32 0.0, %v5258
      %5260 = vmatmul.f32.gmra.mxu0 %v5176
      %v5261 = vpop.f32.mrf.mxu0
      %v5262 = vadd.f32 0.0, %v5261
      %5263 = vmatmul.f32.gmra.mxu0 %v5177
      %v5264 = vpop.f32.mrf.mxu0
      %v5265 = vadd.f32 0.0, %v5264
      %5266 = vmatmul.f32.gmra.mxu0 %v5186
      %v5267 = vpop.f32.mrf.mxu0
      %v5268 = vadd.f32 0.0, %v5267
      %5269 = vmatmul.f32.gmra.mxu0 %v5187
      %v5270 = vpop.f32.mrf.mxu0
      %v5271 = vadd.f32 0.0, %v5270
      %5272 = vmatmul.f32.gmra.mxu0 %v5188
      %v5273 = vpop.f32.mrf.mxu0
      %v5274 = vadd.f32 0.0, %v5273
      %5275 = vmatmul.f32.gmra.mxu0 %v5189
      %v5276 = vpop.f32.mrf.mxu0
      %v5277 = vadd.f32 0.0, %v5276
      %5278 = vmatmul.f32.gmra.mxu0 %v5194
      %v5279 = vpop.f32.mrf.mxu0
      %v5280 = vadd.f32 0.0, %v5279
      %5281 = vmatmul.f32.gmra.mxu0 %v5195
      %v5282 = vpop.f32.mrf.mxu0
      %v5283 = vadd.f32 0.0, %v5282
      %5284 = vdwg.mxu0
      %v5285 = vadd.f32 %v5040, %v5232
      %v5286 = vadd.f32 %v5041, %v5235
      %v5287 = vadd.f32 %v5042, %v5238
      %v5288 = vadd.f32 %v5043, %v5241
      %v5289 = vadd.f32 %v5044, %v5244
      %v5290 = vadd.f32 %v5045, %v5247
      %v5291 = vadd.f32 %v5046, %v5250
      %v5292 = vadd.f32 %v5047, %v5253
      %v5293 = vadd.f32 %v5048, %v5256
      %v5294 = vadd.f32 %v5049, %v5259
      %v5295 = vadd.f32 %v5050, %v5262
      %v5296 = vadd.f32 %v5051, %v5265
      %v5297 = vadd.f32 %v5052, %v5268
      %v5298 = vadd.f32 %v5053, %v5271
      %v5299 = vadd.f32 %v5054, %v5274
      %v5300 = vadd.f32 %v5055, %v5277
      %v5301 = vadd.f32 %v5056, %v5280
      %v5302 = vadd.f32 %v5057, %v5283
      %v5303 = vld [vmem:[%s5058 + $0x1] sm:$0xff]
      %v5304 = vld [vmem:[%s5058 + $0x9] sm:$0xf]
      %v5305 = vld [vmem:[%s5058 + $0x11] sm:$0xff]
      %v5306 = vld [vmem:[%s5058 + $0x19] sm:$0xf]
      %v5307 = vld [vmem:[%s5058 + $0x21] sm:$0xff]
      %v5308 = vld [vmem:[%s5058 + $0x29] sm:$0xf]
      %v5309 = vld [vmem:[%s5058 + $0x31] sm:$0xff]
      %v5310 = vld [vmem:[%s5058 + $0x39] sm:$0xf]
      %v5311 = vld [vmem:[%s5058 + $0x41] sm:$0xff]
      %v5312 = vld [vmem:[%s5058 + $0x49] sm:$0xf]
      %v5313 = vld [vmem:[%s5058 + $0x51] sm:$0xff]
      %v5314 = vld [vmem:[%s5058 + $0x59] sm:$0xf]
      %v5315 = vld [vmem:[%s5058 + $0x61] sm:$0xff]
      %v5316 = vld [vmem:[%s5058 + $0x69] sm:$0xf]
      %v5317 = vld [vmem:[%s5058 + $0x71] sm:$0xff]
      %v5318 = vld [vmem:[%s5058 + $0x79] sm:$0xf]
      %v5319 = vld [vmem:[%s5058 + $0x81] sm:$0xff]
      %v5320 = vld [vmem:[%s5058 + $0x89] sm:$0xf]
      %v5321 = vld [vmem:[%s5058 + $0x91] sm:$0xff]
      %v5322 = vld [vmem:[%s5058 + $0x99] sm:$0xf]
      %v5323 = vld [vmem:[%s5058 + $0xa1] sm:$0xff]
      %v5324 = vld [vmem:[%s5058 + $0xa9] sm:$0xf]
      %v5325 = vld [vmem:[%s5058 + $0xb1] sm:$0xff]
      %v5326 = vld [vmem:[%s5058 + $0xb9] sm:$0xf]
      %v5351 = vrot.slane %v5303, 4
      %v5352 = vrot.slane %v5305, 4
      %v5353 = vrot.slane %v5307, 4
      %v5354 = vrot.slane %v5309, 4
      %v5355 = vrot.slane %v5311, 4
      %v5356 = vrot.slane %v5313, 4
      %v5357 = vrot.slane %v5315, 4
      %v5358 = vrot.slane %v5317, 4
      %v5359 = vrot.slane %v5319, 4
      %v5360 = vrot.slane %v5321, 4
      %v5361 = vrot.slane %v5323, 4
      %v5362 = vrot.slane %v5325, 4
      %v5363 = vld [vmem:[%s3 + $0x200] sm:$0xff]
      %v5364 = vld [vmem:[%s3 + $0x208] sm:$0xff]
      %v5365 = vld [vmem:[%s3 + $0x210] sm:$0xff]
      %v5366 = vld [vmem:[%s3 + $0x218] sm:$0xff]
      %v5367 = vld [vmem:[%s3 + $0x220] sm:$0xff]
      %v5368 = vld [vmem:[%s3 + $0x228] sm:$0xff]
      %v5369 = vld [vmem:[%s3 + $0x230] sm:$0xff]
      %v5370 = vld [vmem:[%s3 + $0x238] sm:$0xff]
      %v5371 = vld [vmem:[%s3 + $0x240] sm:$0xff]
      %v5372 = vld [vmem:[%s3 + $0x248] sm:$0xff]
      %v5373 = vld [vmem:[%s3 + $0x250] sm:$0xff]
      %v5374 = vld [vmem:[%s3 + $0x258] sm:$0xff]
      %v5375 = vld [vmem:[%s3 + $0x260] sm:$0xff]
      %v5376 = vld [vmem:[%s3 + $0x268] sm:$0xff]
      %v5377 = vld [vmem:[%s3 + $0x270] sm:$0xff]
      %v5378 = vld [vmem:[%s3 + $0x278] sm:$0xff]
      %5379 = vst [vmem:[#allocation1] ss:$2 sm:$0xff] %v5303
      %s5380 = scalar_lea.vmem [#allocation1], 1
      %5381 = vst [vmem:[%s5380] ss:$2 sm:$0xff] %v5351
      %s5382 = scalar_lea.vmem [#allocation1], 16
      %5383 = vst [vmem:[%s5382] ss:$2 sm:$0xff] %v5304
      %s5384 = scalar_lea.vmem [#allocation1], 17
      %5385 = vst [vmem:[%s5384] ss:$2 sm:$0xff] %v5305
      %s5386 = scalar_lea.vmem [#allocation1], 32
      %5387 = vst [vmem:[%s5386] ss:$2 sm:$0xff] %v5352
      %s5388 = scalar_lea.vmem [#allocation1], 33
      %5389 = vst [vmem:[%s5388] ss:$2 sm:$0xff] %v5306
      %s5390 = scalar_lea.vmem [#allocation1], 48
      %5391 = vst [vmem:[%s5390] ss:$2 sm:$0xff] %v5307
      %s5392 = scalar_lea.vmem [#allocation1], 49
      %5393 = vst [vmem:[%s5392] ss:$2 sm:$0xff] %v5353
      %v5394 = vld.sshfl [vmem:[#allocation1] sm:$0xff pattern:$0x75316420]
      %v5395 = vld.sshfl [vmem:[#allocation1 + $0x10] sm:$0xff pattern:$0x75316420]
      %v5396 = vld.sshfl [vmem:[#allocation1 + $0x20] sm:$0xff pattern:$0x75316420]
      %v5397 = vld.sshfl [vmem:[#allocation1 + $0x30] sm:$0xff pattern:$0x75316420]
      %5398 = vst [vmem:[#allocation1] ss:$2 sm:$0xff] %v5308
      %5399 = vst [vmem:[%s5380] ss:$2 sm:$0xff] %v5309
      %5400 = vst [vmem:[%s5382] ss:$2 sm:$0xff] %v5354
      %5401 = vst [vmem:[%s5384] ss:$2 sm:$0xff] %v5310
      %5402 = vst [vmem:[%s5386] ss:$2 sm:$0xff] %v5311
      %5403 = vst [vmem:[%s5388] ss:$2 sm:$0xff] %v5355
      %5404 = vst [vmem:[%s5390] ss:$2 sm:$0xff] %v5312
      %5405 = vst [vmem:[%s5392] ss:$2 sm:$0xff] %v5313
      %v5406 = vld.sshfl [vmem:[#allocation1] sm:$0xff pattern:$0x75316420]
      %v5407 = vld.sshfl [vmem:[#allocation1 + $0x10] sm:$0xff pattern:$0x75316420]
      %v5408 = vld.sshfl [vmem:[#allocation1 + $0x20] sm:$0xff pattern:$0x75316420]
      %v5409 = vld.sshfl [vmem:[#allocation1 + $0x30] sm:$0xff pattern:$0x75316420]
      %5410 = vst [vmem:[#allocation1] ss:$2 sm:$0xff] %v5356
      %5411 = vst [vmem:[%s5380] ss:$2 sm:$0xff] %v5314
      %5412 = vst [vmem:[%s5382] ss:$2 sm:$0xff] %v5315
      %5413 = vst [vmem:[%s5384] ss:$2 sm:$0xff] %v5357
      %5414 = vst [vmem:[%s5386] ss:$2 sm:$0xff] %v5316
      %5415 = vst [vmem:[%s5388] ss:$2 sm:$0xff] %v5317
      %5416 = vst [vmem:[%s5390] ss:$2 sm:$0xff] %v5358
      %5417 = vst [vmem:[%s5392] ss:$2 sm:$0xff] %v5318
      %v5418 = vld.sshfl [vmem:[#allocation1] sm:$0xff pattern:$0x75316420]
      %v5419 = vld.sshfl [vmem:[#allocation1 + $0x10] sm:$0xff pattern:$0x75316420]
      %v5420 = vld.sshfl [vmem:[#allocation1 + $0x20] sm:$0xff pattern:$0x75316420]
      %v5421 = vld.sshfl [vmem:[#allocation1 + $0x30] sm:$0xff pattern:$0x75316420]
      %5422 = vst [vmem:[#allocation1] ss:$2 sm:$0xff] %v5319
      %5423 = vst [vmem:[%s5380] ss:$2 sm:$0xff] %v5359
      %5424 = vst [vmem:[%s5382] ss:$2 sm:$0xff] %v5320
      %5425 = vst [vmem:[%s5384] ss:$2 sm:$0xff] %v5321
      %5426 = vst [vmem:[%s5386] ss:$2 sm:$0xff] %v5360
      %5427 = vst [vmem:[%s5388] ss:$2 sm:$0xff] %v5322
      %5428 = vst [vmem:[%s5390] ss:$2 sm:$0xff] %v5323
      %5429 = vst [vmem:[%s5392] ss:$2 sm:$0xff] %v5361
      %v5430 = vld.sshfl [vmem:[#allocation1] sm:$0xff pattern:$0x75316420]
      %v5431 = vld.sshfl [vmem:[#allocation1 + $0x10] sm:$0xff pattern:$0x75316420]
      %v5432 = vld.sshfl [vmem:[#allocation1 + $0x20] sm:$0xff pattern:$0x75316420]
      %v5433 = vld.sshfl [vmem:[#allocation1 + $0x30] sm:$0xff pattern:$0x75316420]
      %5434 = vst [vmem:[#allocation1] ss:$2 sm:$0xff] %v5324
      %5435 = vst [vmem:[%s5380] ss:$2 sm:$0xff] %v5325
      %5436 = vst [vmem:[%s5382] ss:$2 sm:$0xff] %v5362
      %5437 = vst [vmem:[%s5384] ss:$2 sm:$0xff] %v5326
      %v5438 = vld.sshfl [vmem:[#allocation1] sm:$0xff pattern:$0x75316420]
      %v5439 = vld.sshfl [vmem:[#allocation1 + $0x10] sm:$0xff pattern:$0x75316420]
      %5458 = vmatpush.msra.mxu0 %v5378
      %5459 = vmatpush.msra.mxu0 %v5377
      %5460 = vmatpush.msra.mxu0 %v5376
      %5461 = vmatpush.msra.mxu0 %v5375
      %5462 = vmatpush.msra.mxu0 %v5374
      %5463 = vmatpush.msra.mxu0 %v5373
      %5464 = vmatpush.msra.mxu0 %v5372
      %5465 = vmatpush.msra.mxu0 %v5371
      %5466 = vmatpush.msra.mxu0 %v5370
      %5467 = vmatpush.msra.mxu0 %v5369
      %5468 = vmatpush.msra.mxu0 %v5368
      %5469 = vmatpush.msra.mxu0 %v5367
      %5470 = vmatpush.msra.mxu0 %v5366
      %5471 = vmatpush.msra.mxu0 %v5365
      %5472 = vmatpush.msra.mxu0 %v5364
      %5473 = vmatpush.msra.mxu0 %v5363
      %5474 = vmatmul.f32.gmra.mxu0 %v5394
      %v5475 = vpop.f32.mrf.mxu0
      %v5476 = vadd.f32 0.0, %v5475
      %5477 = vmatmul.f32.gmra.mxu0 %v5395
      %v5478 = vpop.f32.mrf.mxu0
      %v5479 = vadd.f32 0.0, %v5478
      %5480 = vmatmul.f32.gmra.mxu0 %v5396
      %v5481 = vpop.f32.mrf.mxu0
      %v5482 = vadd.f32 0.0, %v5481
      %5483 = vmatmul.f32.gmra.mxu0 %v5397
      %v5484 = vpop.f32.mrf.mxu0
      %v5485 = vadd.f32 0.0, %v5484
      %5486 = vmatmul.f32.gmra.mxu0 %v5406
      %v5487 = vpop.f32.mrf.mxu0
      %v5488 = vadd.f32 0.0, %v5487
      %5489 = vmatmul.f32.gmra.mxu0 %v5407
      %v5490 = vpop.f32.mrf.mxu0
      %v5491 = vadd.f32 0.0, %v5490
      %5492 = vmatmul.f32.gmra.mxu0 %v5408
      %v5493 = vpop.f32.mrf.mxu0
      %v5494 = vadd.f32 0.0, %v5493
      %5495 = vmatmul.f32.gmra.mxu0 %v5409
      %v5496 = vpop.f32.mrf.mxu0
      %v5497 = vadd.f32 0.0, %v5496
      %5498 = vmatmul.f32.gmra.mxu0 %v5418
      %v5499 = vpop.f32.mrf.mxu0
      %v5500 = vadd.f32 0.0, %v5499
      %5501 = vmatmul.f32.gmra.mxu0 %v5419
      %v5502 = vpop.f32.mrf.mxu0
      %v5503 = vadd.f32 0.0, %v5502
      %5504 = vmatmul.f32.gmra.mxu0 %v5420
      %v5505 = vpop.f32.mrf.mxu0
      %v5506 = vadd.f32 0.0, %v5505
      %5507 = vmatmul.f32.gmra.mxu0 %v5421
      %v5508 = vpop.f32.mrf.mxu0
      %v5509 = vadd.f32 0.0, %v5508
      %5510 = vmatmul.f32.gmra.mxu0 %v5430
      %v5511 = vpop.f32.mrf.mxu0
      %v5512 = vadd.f32 0.0, %v5511
      %5513 = vmatmul.f32.gmra.mxu0 %v5431
      %v5514 = vpop.f32.mrf.mxu0
      %v5515 = vadd.f32 0.0, %v5514
      %5516 = vmatmul.f32.gmra.mxu0 %v5432
      %v5517 = vpop.f32.mrf.mxu0
      %v5518 = vadd.f32 0.0, %v5517
      %5519 = vmatmul.f32.gmra.mxu0 %v5433
      %v5520 = vpop.f32.mrf.mxu0
      %v5521 = vadd.f32 0.0, %v5520
      %5522 = vmatmul.f32.gmra.mxu0 %v5438
      %v5523 = vpop.f32.mrf.mxu0
      %v5524 = vadd.f32 0.0, %v5523
      %5525 = vmatmul.f32.gmra.mxu0 %v5439
      %v5526 = vpop.f32.mrf.mxu0
      %v5527 = vadd.f32 0.0, %v5526
      %5528 = vdwg.mxu0
      %v5529 = vadd.f32 %v5285, %v5476
      %v5530 = vadd.f32 %v5286, %v5479
      %v5531 = vadd.f32 %v5287, %v5482
      %v5532 = vadd.f32 %v5288, %v5485
      %v5533 = vadd.f32 %v5289, %v5488
      %v5534 = vadd.f32 %v5290, %v5491
      %v5535 = vadd.f32 %v5291, %v5494
      %v5536 = vadd.f32 %v5292, %v5497
      %v5537 = vadd.f32 %v5293, %v5500
      %v5538 = vadd.f32 %v5294, %v5503
      %v5539 = vadd.f32 %v5295, %v5506
      %v5540 = vadd.f32 %v5296, %v5509
      %v5541 = vadd.f32 %v5297, %v5512
      %v5542 = vadd.f32 %v5298, %v5515
      %v5543 = vadd.f32 %v5299, %v5518
      %v5544 = vadd.f32 %v5300, %v5521
      %v5545 = vadd.f32 %v5301, %v5524
      %v5546 = vadd.f32 %v5302, %v5527
      %v5547 = vld [vmem:[%s5058 + $0x2] sm:$0xff]
      %v5548 = vld [vmem:[%s5058 + $0xa] sm:$0xf]
      %v5549 = vld [vmem:[%s5058 + $0x12] sm:$0xff]
      %v5550 = vld [vmem:[%s5058 + $0x1a] sm:$0xf]
      %v5551 = vld [vmem:[%s5058 + $0x22] sm:$0xff]
      %v5552 = vld [vmem:[%s5058 + $0x2a] sm:$0xf]
      %v5553 = vld [vmem:[%s5058 + $0x32] sm:$0xff]
      %v5554 = vld [vmem:[%s5058 + $0x3a] sm:$0xf]
      %v5555 = vld [vmem:[%s5058 + $0x42] sm:$0xff]
      %v5556 = vld [vmem:[%s5058 + $0x4a] sm:$0xf]
      %v5557 = vld [vmem:[%s5058 + $0x52] sm:$0xff]
      %v5558 = vld [vmem:[%s5058 + $0x5a] sm:$0xf]
      %v5559 = vld [vmem:[%s5058 + $0x62] sm:$0xff]
      %v5560 = vld [vmem:[%s5058 + $0x6a] sm:$0xf]
      %v5561 = vld [vmem:[%s5058 + $0x72] sm:$0xff]
      %v5562 = vld [vmem:[%s5058 + $0x7a] sm:$0xf]
      %v5563 = vld [vmem:[%s5058 + $0x82] sm:$0xff]
      %v5564 = vld [vmem:[%s5058 + $0x8a] sm:$0xf]
      %v5565 = vld [vmem:[%s5058 + $0x92] sm:$0xff]
      %v5566 = vld [vmem:[%s5058 + $0x9a] sm:$0xf]
      %v5567 = vld [vmem:[%s5058 + $0xa2] sm:$0xff]
      %v5568 = vld [vmem:[%s5058 + $0xaa] sm:$0xf]
      %v5569 = vld [vmem:[%s5058 + $0xb2] sm:$0xff]
      %v5570 = vld [vmem:[%s5058 + $0xba] sm:$0xf]
      %v5595 = vrot.slane %v5547, 4
      %v5596 = vrot.slane %v5549, 4
      %v5597 = vrot.slane %v5551, 4
      %v5598 = vrot.slane %v5553, 4
      %v5599 = vrot.slane %v5555, 4
      %v5600 = vrot.slane %v5557, 4
      %v5601 = vrot.slane %v5559, 4
      %v5602 = vrot.slane %v5561, 4
      %v5603 = vrot.slane %v5563, 4
      %v5604 = vrot.slane %v5565, 4
      %v5605 = vrot.slane %v5567, 4
      %v5606 = vrot.slane %v5569, 4
      %v5607 = vld [vmem:[%s3 + $0x280] sm:$0xff]
      %v5608 = vld [vmem:[%s3 + $0x288] sm:$0xff]
      %v5609 = vld [vmem:[%s3 + $0x290] sm:$0xff]
      %v5610 = vld [vmem:[%s3 + $0x298] sm:$0xff]
      %v5611 = vld [vmem:[%s3 + $0x2a0] sm:$0xff]
      %v5612 = vld [vmem:[%s3 + $0x2a8] sm:$0xff]
      %v5613 = vld [vmem:[%s3 + $0x2b0] sm:$0xff]
      %v5614 = vld [vmem:[%s3 + $0x2b8] sm:$0xff]
      %v5615 = vld [vmem:[%s3 + $0x2c0] sm:$0xff]
      %v5616 = vld [vmem:[%s3 + $0x2c8] sm:$0xff]
      %v5617 = vld [vmem:[%s3 + $0x2d0] sm:$0xff]
      %v5618 = vld [vmem:[%s3 + $0x2d8] sm:$0xff]
      %v5619 = vld [vmem:[%s3 + $0x2e0] sm:$0xff]
      %v5620 = vld [vmem:[%s3 + $0x2e8] sm:$0xff]
      %v5621 = vld [vmem:[%s3 + $0x2f0] sm:$0xff]
      %v5622 = vld [vmem:[%s3 + $0x2f8] sm:$0xff]
      %5623 = vst [vmem:[#allocation1] ss:$2 sm:$0xff] %v5547
      %s5624 = scalar_lea.vmem [#allocation1], 1
      %5625 = vst [vmem:[%s5624] ss:$2 sm:$0xff] %v5595
      %s5626 = scalar_lea.vmem [#allocation1], 16
      %5627 = vst [vmem:[%s5626] ss:$2 sm:$0xff] %v5548
      %s5628 = scalar_lea.vmem [#allocation1], 17
      %5629 = vst [vmem:[%s5628] ss:$2 sm:$0xff] %v5549
      %s5630 = scalar_lea.vmem [#allocation1], 32
      %5631 = vst [vmem:[%s5630] ss:$2 sm:$0xff] %v5596
      %s5632 = scalar_lea.vmem [#allocation1], 33
      %5633 = vst [vmem:[%s5632] ss:$2 sm:$0xff] %v5550
      %s5634 = scalar_lea.vmem [#allocation1], 48
      %5635 = vst [vmem:[%s5634] ss:$2 sm:$0xff] %v5551
      %s5636 = scalar_lea.vmem [#allocation1], 49
      %5637 = vst [vmem:[%s5636] ss:$2 sm:$0xff] %v5597
      %v5638 = vld.sshfl [vmem:[#allocation1] sm:$0xff pattern:$0x75316420]
      %v5639 = vld.sshfl [vmem:[#allocation1 + $0x10] sm:$0xff pattern:$0x75316420]
      %v5640 = vld.sshfl [vmem:[#allocation1 + $0x20] sm:$0xff pattern:$0x75316420]
      %v5641 = vld.sshfl [vmem:[#allocation1 + $0x30] sm:$0xff pattern:$0x75316420]
      %5642 = vst [vmem:[#allocation1] ss:$2 sm:$0xff] %v5552
      %5643 = vst [vmem:[%s5624] ss:$2 sm:$0xff] %v5553
      %5644 = vst [vmem:[%s5626] ss:$2 sm:$0xff] %v5598
      %5645 = vst [vmem:[%s5628] ss:$2 sm:$0xff] %v5554
      %5646 = vst [vmem:[%s5630] ss:$2 sm:$0xff] %v5555
      %5647 = vst [vmem:[%s5632] ss:$2 sm:$0xff] %v5599
      %5648 = vst [vmem:[%s5634] ss:$2 sm:$0xff] %v5556
      %5649 = vst [vmem:[%s5636] ss:$2 sm:$0xff] %v5557
      %v5650 = vld.sshfl [vmem:[#allocation1] sm:$0xff pattern:$0x75316420]
      %v5651 = vld.sshfl [vmem:[#allocation1 + $0x10] sm:$0xff pattern:$0x75316420]
      %v5652 = vld.sshfl [vmem:[#allocation1 + $0x20] sm:$0xff pattern:$0x75316420]
      %v5653 = vld.sshfl [vmem:[#allocation1 + $0x30] sm:$0xff pattern:$0x75316420]
      %5654 = vst [vmem:[#allocation1] ss:$2 sm:$0xff] %v5600
      %5655 = vst [vmem:[%s5624] ss:$2 sm:$0xff] %v5558
      %5656 = vst [vmem:[%s5626] ss:$2 sm:$0xff] %v5559
      %5657 = vst [vmem:[%s5628] ss:$2 sm:$0xff] %v5601
      %5658 = vst [vmem:[%s5630] ss:$2 sm:$0xff] %v5560
      %5659 = vst [vmem:[%s5632] ss:$2 sm:$0xff] %v5561
      %5660 = vst [vmem:[%s5634] ss:$2 sm:$0xff] %v5602
      %5661 = vst [vmem:[%s5636] ss:$2 sm:$0xff] %v5562
      %v5662 = vld.sshfl [vmem:[#allocation1] sm:$0xff pattern:$0x75316420]
      %v5663 = vld.sshfl [vmem:[#allocation1 + $0x10] sm:$0xff pattern:$0x75316420]
      %v5664 = vld.sshfl [vmem:[#allocation1 + $0x20] sm:$0xff pattern:$0x75316420]
      %v5665 = vld.sshfl [vmem:[#allocation1 + $0x30] sm:$0xff pattern:$0x75316420]
      %5666 = vst [vmem:[#allocation1] ss:$2 sm:$0xff] %v5563
      %5667 = vst [vmem:[%s5624] ss:$2 sm:$0xff] %v5603
      %5668 = vst [vmem:[%s5626] ss:$2 sm:$0xff] %v5564
      %5669 = vst [vmem:[%s5628] ss:$2 sm:$0xff] %v5565
      %5670 = vst [vmem:[%s5630] ss:$2 sm:$0xff] %v5604
      %5671 = vst [vmem:[%s5632] ss:$2 sm:$0xff] %v5566
      %5672 = vst [vmem:[%s5634] ss:$2 sm:$0xff] %v5567
      %5673 = vst [vmem:[%s5636] ss:$2 sm:$0xff] %v5605
      %v5674 = vld.sshfl [vmem:[#allocation1] sm:$0xff pattern:$0x75316420]
      %v5675 = vld.sshfl [vmem:[#allocation1 + $0x10] sm:$0xff pattern:$0x75316420]
      %v5676 = vld.sshfl [vmem:[#allocation1 + $0x20] sm:$0xff pattern:$0x75316420]
      %v5677 = vld.sshfl [vmem:[#allocation1 + $0x30] sm:$0xff pattern:$0x75316420]
      %5678 = vst [vmem:[#allocation1] ss:$2 sm:$0xff] %v5568
      %5679 = vst [vmem:[%s5624] ss:$2 sm:$0xff] %v5569
      %5680 = vst [vmem:[%s5626] ss:$2 sm:$0xff] %v5606
      %5681 = vst [vmem:[%s5628] ss:$2 sm:$0xff] %v5570
      %v5682 = vld.sshfl [vmem:[#allocation1] sm:$0xff pattern:$0x75316420]
      %v5683 = vld.sshfl [vmem:[#allocation1 + $0x10] sm:$0xff pattern:$0x75316420]
      %5702 = vmatpush.msra.mxu0 %v5622
      %5703 = vmatpush.msra.mxu0 %v5621
      %5704 = vmatpush.msra.mxu0 %v5620
      %5705 = vmatpush.msra.mxu0 %v5619
      %5706 = vmatpush.msra.mxu0 %v5618
      %5707 = vmatpush.msra.mxu0 %v5617
      %5708 = vmatpush.msra.mxu0 %v5616
      %5709 = vmatpush.msra.mxu0 %v5615
      %5710 = vmatpush.msra.mxu0 %v5614
      %5711 = vmatpush.msra.mxu0 %v5613
      %5712 = vmatpush.msra.mxu0 %v5612
      %5713 = vmatpush.msra.mxu0 %v5611
      %5714 = vmatpush.msra.mxu0 %v5610
      %5715 = vmatpush.msra.mxu0 %v5609
      %5716 = vmatpush.msra.mxu0 %v5608
      %5717 = vmatpush.msra.mxu0 %v5607
      %5718 = vmatmul.f32.gmra.mxu0 %v5638
      %v5719 = vpop.f32.mrf.mxu0
      %v5720 = vadd.f32 0.0, %v5719
      %5721 = vmatmul.f32.gmra.mxu0 %v5639
      %v5722 = vpop.f32.mrf.mxu0
      %v5723 = vadd.f32 0.0, %v5722
      %5724 = vmatmul.f32.gmra.mxu0 %v5640
      %v5725 = vpop.f32.mrf.mxu0
      %v5726 = vadd.f32 0.0, %v5725
      %5727 = vmatmul.f32.gmra.mxu0 %v5641
      %v5728 = vpop.f32.mrf.mxu0
      %v5729 = vadd.f32 0.0, %v5728
      %5730 = vmatmul.f32.gmra.mxu0 %v5650
      %v5731 = vpop.f32.mrf.mxu0
      %v5732 = vadd.f32 0.0, %v5731
      %5733 = vmatmul.f32.gmra.mxu0 %v5651
      %v5734 = vpop.f32.mrf.mxu0
      %v5735 = vadd.f32 0.0, %v5734
      %5736 = vmatmul.f32.gmra.mxu0 %v5652
      %v5737 = vpop.f32.mrf.mxu0
      %v5738 = vadd.f32 0.0, %v5737
      %5739 = vmatmul.f32.gmra.mxu0 %v5653
      %v5740 = vpop.f32.mrf.mxu0
      %v5741 = vadd.f32 0.0, %v5740
      %5742 = vmatmul.f32.gmra.mxu0 %v5662
      %v5743 = vpop.f32.mrf.mxu0
      %v5744 = vadd.f32 0.0, %v5743
      %5745 = vmatmul.f32.gmra.mxu0 %v5663
      %v5746 = vpop.f32.mrf.mxu0
      %v5747 = vadd.f32 0.0, %v5746
      %5748 = vmatmul.f32.gmra.mxu0 %v5664
      %v5749 = vpop.f32.mrf.mxu0
      %v5750 = vadd.f32 0.0, %v5749
      %5751 = vmatmul.f32.gmra.mxu0 %v5665
      %v5752 = vpop.f32.mrf.mxu0
      %v5753 = vadd.f32 0.0, %v5752
      %5754 = vmatmul.f32.gmra.mxu0 %v5674
      %v5755 = vpop.f32.mrf.mxu0
      %v5756 = vadd.f32 0.0, %v5755
      %5757 = vmatmul.f32.gmra.mxu0 %v5675
      %v5758 = vpop.f32.mrf.mxu0
      %v5759 = vadd.f32 0.0, %v5758
      %5760 = vmatmul.f32.gmra.mxu0 %v5676
      %v5761 = vpop.f32.mrf.mxu0
      %v5762 = vadd.f32 0.0, %v5761
      %5763 = vmatmul.f32.gmra.mxu0 %v5677
      %v5764 = vpop.f32.mrf.mxu0
      %v5765 = vadd.f32 0.0, %v5764
      %5766 = vmatmul.f32.gmra.mxu0 %v5682
      %v5767 = vpop.f32.mrf.mxu0
      %v5768 = vadd.f32 0.0, %v5767
      %5769 = vmatmul.f32.gmra.mxu0 %v5683
      %v5770 = vpop.f32.mrf.mxu0
      %v5771 = vadd.f32 0.0, %v5770
      %5772 = vdwg.mxu0
      %v5773 = vadd.f32 %v5529, %v5720
      %v5774 = vadd.f32 %v5530, %v5723
      %v5775 = vadd.f32 %v5531, %v5726
      %v5776 = vadd.f32 %v5532, %v5729
      %v5777 = vadd.f32 %v5533, %v5732
      %v5778 = vadd.f32 %v5534, %v5735
      %v5779 = vadd.f32 %v5535, %v5738
      %v5780 = vadd.f32 %v5536, %v5741
      %v5781 = vadd.f32 %v5537, %v5744
      %v5782 = vadd.f32 %v5538, %v5747
      %v5783 = vadd.f32 %v5539, %v5750
      %v5784 = vadd.f32 %v5540, %v5753
      %v5785 = vadd.f32 %v5541, %v5756
      %v5786 = vadd.f32 %v5542, %v5759
      %v5787 = vadd.f32 %v5543, %v5762
      %v5788 = vadd.f32 %v5544, %v5765
      %v5789 = vadd.f32 %v5545, %v5768
      %v5790 = vadd.f32 %v5546, %v5771
      %s5791 = scalar_lea.vmem [#allocation2], 32
      %v5792 = vld [vmem:[%s5791] sm:$0xff]
      %v5793 = vld [vmem:[%s5791 + $0x8] sm:$0xf]
      %v5794 = vld [vmem:[%s5791 + $0x10] sm:$0xff]
      %v5795 = vld [vmem:[%s5791 + $0x18] sm:$0xf]
      %v5796 = vld [vmem:[%s5791 + $0x20] sm:$0xff]
      %v5797 = vld [vmem:[%s5791 + $0x28] sm:$0xf]
      %v5798 = vld [vmem:[%s5791 + $0x30] sm:$0xff]
      %v5799 = vld [vmem:[%s5791 + $0x38] sm:$0xf]
      %v5800 = vld [vmem:[%s5791 + $0x40] sm:$0xff]
      %v5801 = vld [vmem:[%s5791 + $0x48] sm:$0xf]
      %v5802 = vld [vmem:[%s5791 + $0x50] sm:$0xff]
      %v5803 = vld [vmem:[%s5791 + $0x58] sm:$0xf]
      %v5804 = vld [vmem:[%s5791 + $0x60] sm:$0xff]
      %v5805 = vld [vmem:[%s5791 + $0x68] sm:$0xf]
      %v5806 = vld [vmem:[%s5791 + $0x70] sm:$0xff]
      %v5807 = vld [vmem:[%s5791 + $0x78] sm:$0xf]
      %v5808 = vld [vmem:[%s5791 + $0x80] sm:$0xff]
      %v5809 = vld [vmem:[%s5791 + $0x88] sm:$0xf]
      %v5810 = vld [vmem:[%s5791 + $0x90] sm:$0xff]
      %v5811 = vld [vmem:[%s5791 + $0x98] sm:$0xf]
      %v5812 = vld [vmem:[%s5791 + $0xa0] sm:$0xff]
      %v5813 = vld [vmem:[%s5791 + $0xa8] sm:$0xf]
      %v5814 = vld [vmem:[%s5791 + $0xb0] sm:$0xff]
      %v5815 = vld [vmem:[%s5791 + $0xb8] sm:$0xf]
      %v5840 = vrot.slane %v5792, 4
      %v5841 = vrot.slane %v5794, 4
      %v5842 = vrot.slane %v5796, 4
      %v5843 = vrot.slane %v5798, 4
      %v5844 = vrot.slane %v5800, 4
      %v5845 = vrot.slane %v5802, 4
      %v5846 = vrot.slane %v5804, 4
      %v5847 = vrot.slane %v5806, 4
      %v5848 = vrot.slane %v5808, 4
      %v5849 = vrot.slane %v5810, 4
      %v5850 = vrot.slane %v5812, 4
      %v5851 = vrot.slane %v5814, 4
      %v5852 = vld [vmem:[%s3 + $0x300] sm:$0xff]
      %v5853 = vld [vmem:[%s3 + $0x308] sm:$0xff]
      %v5854 = vld [vmem:[%s3 + $0x310] sm:$0xff]
      %v5855 = vld [vmem:[%s3 + $0x318] sm:$0xff]
      %v5856 = vld [vmem:[%s3 + $0x320] sm:$0xff]
      %v5857 = vld [vmem:[%s3 + $0x328] sm:$0xff]
      %v5858 = vld [vmem:[%s3 + $0x330] sm:$0xff]
      %v5859 = vld [vmem:[%s3 + $0x338] sm:$0xff]
      %v5860 = vld [vmem:[%s3 + $0x340] sm:$0xff]
      %v5861 = vld [vmem:[%s3 + $0x348] sm:$0xff]
      %v5862 = vld [vmem:[%s3 + $0x350] sm:$0xff]
      %v5863 = vld [vmem:[%s3 + $0x358] sm:$0xff]
      %v5864 = vld [vmem:[%s3 + $0x360] sm:$0xff]
      %v5865 = vld [vmem:[%s3 + $0x368] sm:$0xff]
      %v5866 = vld [vmem:[%s3 + $0x370] sm:$0xff]
      %v5867 = vld [vmem:[%s3 + $0x378] sm:$0xff]
      %5868 = vst [vmem:[#allocation1] ss:$2 sm:$0xff] %v5792
      %s5869 = scalar_lea.vmem [#allocation1], 1
      %5870 = vst [vmem:[%s5869] ss:$2 sm:$0xff] %v5840
      %s5871 = scalar_lea.vmem [#allocation1], 16
      %5872 = vst [vmem:[%s5871] ss:$2 sm:$0xff] %v5793
      %s5873 = scalar_lea.vmem [#allocation1], 17
      %5874 = vst [vmem:[%s5873] ss:$2 sm:$0xff] %v5794
      %s5875 = scalar_lea.vmem [#allocation1], 32
      %5876 = vst [vmem:[%s5875] ss:$2 sm:$0xff] %v5841
      %s5877 = scalar_lea.vmem [#allocation1], 33
      %5878 = vst [vmem:[%s5877] ss:$2 sm:$0xff] %v5795
      %s5879 = scalar_lea.vmem [#allocation1], 48
      %5880 = vst [vmem:[%s5879] ss:$2 sm:$0xff] %v5796
      %s5881 = scalar_lea.vmem [#allocation1], 49
      %5882 = vst [vmem:[%s5881] ss:$2 sm:$0xff] %v5842
      %v5883 = vld.sshfl [vmem:[#allocation1] sm:$0xff pattern:$0x75316420]
      %v5884 = vld.sshfl [vmem:[#allocation1 + $0x10] sm:$0xff pattern:$0x75316420]
      %v5885 = vld.sshfl [vmem:[#allocation1 + $0x20] sm:$0xff pattern:$0x75316420]
      %v5886 = vld.sshfl [vmem:[#allocation1 + $0x30] sm:$0xff pattern:$0x75316420]
      %5887 = vst [vmem:[#allocation1] ss:$2 sm:$0xff] %v5797
      %5888 = vst [vmem:[%s5869] ss:$2 sm:$0xff] %v5798
      %5889 = vst [vmem:[%s5871] ss:$2 sm:$0xff] %v5843
      %5890 = vst [vmem:[%s5873] ss:$2 sm:$0xff] %v5799
      %5891 = vst [vmem:[%s5875] ss:$2 sm:$0xff] %v5800
      %5892 = vst [vmem:[%s5877] ss:$2 sm:$0xff] %v5844
      %5893 = vst [vmem:[%s5879] ss:$2 sm:$0xff] %v5801
      %5894 = vst [vmem:[%s5881] ss:$2 sm:$0xff] %v5802
      %v5895 = vld.sshfl [vmem:[#allocation1] sm:$0xff pattern:$0x75316420]
      %v5896 = vld.sshfl [vmem:[#allocation1 + $0x10] sm:$0xff pattern:$0x75316420]
      %v5897 = vld.sshfl [vmem:[#allocation1 + $0x20] sm:$0xff pattern:$0x75316420]
      %v5898 = vld.sshfl [vmem:[#allocation1 + $0x30] sm:$0xff pattern:$0x75316420]
      %5899 = vst [vmem:[#allocation1] ss:$2 sm:$0xff] %v5845
      %5900 = vst [vmem:[%s5869] ss:$2 sm:$0xff] %v5803
      %5901 = vst [vmem:[%s5871] ss:$2 sm:$0xff] %v5804
      %5902 = vst [vmem:[%s5873] ss:$2 sm:$0xff] %v5846
      %5903 = vst [vmem:[%s5875] ss:$2 sm:$0xff] %v5805
      %5904 = vst [vmem:[%s5877] ss:$2 sm:$0xff] %v5806
      %5905 = vst [vmem:[%s5879] ss:$2 sm:$0xff] %v5847
      %5906 = vst [vmem:[%s5881] ss:$2 sm:$0xff] %v5807
      %v5907 = vld.sshfl [vmem:[#allocation1] sm:$0xff pattern:$0x75316420]
      %v5908 = vld.sshfl [vmem:[#allocation1 + $0x10] sm:$0xff pattern:$0x75316420]
      %v5909 = vld.sshfl [vmem:[#allocation1 + $0x20] sm:$0xff pattern:$0x75316420]
      %v5910 = vld.sshfl [vmem:[#allocation1 + $0x30] sm:$0xff pattern:$0x75316420]
      %5911 = vst [vmem:[#allocation1] ss:$2 sm:$0xff] %v5808
      %5912 = vst [vmem:[%s5869] ss:$2 sm:$0xff] %v5848
      %5913 = vst [vmem:[%s5871] ss:$2 sm:$0xff] %v5809
      %5914 = vst [vmem:[%s5873] ss:$2 sm:$0xff] %v5810
      %5915 = vst [vmem:[%s5875] ss:$2 sm:$0xff] %v5849
      %5916 = vst [vmem:[%s5877] ss:$2 sm:$0xff] %v5811
      %5917 = vst [vmem:[%s5879] ss:$2 sm:$0xff] %v5812
      %5918 = vst [vmem:[%s5881] ss:$2 sm:$0xff] %v5850
      %v5919 = vld.sshfl [vmem:[#allocation1] sm:$0xff pattern:$0x75316420]
      %v5920 = vld.sshfl [vmem:[#allocation1 + $0x10] sm:$0xff pattern:$0x75316420]
      %v5921 = vld.sshfl [vmem:[#allocation1 + $0x20] sm:$0xff pattern:$0x75316420]
      %v5922 = vld.sshfl [vmem:[#allocation1 + $0x30] sm:$0xff pattern:$0x75316420]
      %5923 = vst [vmem:[#allocation1] ss:$2 sm:$0xff] %v5813
      %5924 = vst [vmem:[%s5869] ss:$2 sm:$0xff] %v5814
      %5925 = vst [vmem:[%s5871] ss:$2 sm:$0xff] %v5851
      %5926 = vst [vmem:[%s5873] ss:$2 sm:$0xff] %v5815
      %v5927 = vld.sshfl [vmem:[#allocation1] sm:$0xff pattern:$0x75316420]
      %v5928 = vld.sshfl [vmem:[#allocation1 + $0x10] sm:$0xff pattern:$0x75316420]
      %5947 = vmatpush.msra.mxu0 %v5867
      %5948 = vmatpush.msra.mxu0 %v5866
      %5949 = vmatpush.msra.mxu0 %v5865
      %5950 = vmatpush.msra.mxu0 %v5864
      %5951 = vmatpush.msra.mxu0 %v5863
      %5952 = vmatpush.msra.mxu0 %v5862
      %5953 = vmatpush.msra.mxu0 %v5861
      %5954 = vmatpush.msra.mxu0 %v5860
      %5955 = vmatpush.msra.mxu0 %v5859
      %5956 = vmatpush.msra.mxu0 %v5858
      %5957 = vmatpush.msra.mxu0 %v5857
      %5958 = vmatpush.msra.mxu0 %v5856
      %5959 = vmatpush.msra.mxu0 %v5855
      %5960 = vmatpush.msra.mxu0 %v5854
      %5961 = vmatpush.msra.mxu0 %v5853
      %5962 = vmatpush.msra.mxu0 %v5852
      %5963 = vmatmul.f32.gmra.mxu0 %v5883
      %v5964 = vpop.f32.mrf.mxu0
      %v5965 = vadd.f32 0.0, %v5964
      %5966 = vmatmul.f32.gmra.mxu0 %v5884
      %v5967 = vpop.f32.mrf.mxu0
      %v5968 = vadd.f32 0.0, %v5967
      %5969 = vmatmul.f32.gmra.mxu0 %v5885
      %v5970 = vpop.f32.mrf.mxu0
      %v5971 = vadd.f32 0.0, %v5970
      %5972 = vmatmul.f32.gmra.mxu0 %v5886
      %v5973 = vpop.f32.mrf.mxu0
      %v5974 = vadd.f32 0.0, %v5973
      %5975 = vmatmul.f32.gmra.mxu0 %v5895
      %v5976 = vpop.f32.mrf.mxu0
      %v5977 = vadd.f32 0.0, %v5976
      %5978 = vmatmul.f32.gmra.mxu0 %v5896
      %v5979 = vpop.f32.mrf.mxu0
      %v5980 = vadd.f32 0.0, %v5979
      %5981 = vmatmul.f32.gmra.mxu0 %v5897
      %v5982 = vpop.f32.mrf.mxu0
      %v5983 = vadd.f32 0.0, %v5982
      %5984 = vmatmul.f32.gmra.mxu0 %v5898
      %v5985 = vpop.f32.mrf.mxu0
      %v5986 = vadd.f32 0.0, %v5985
      %5987 = vmatmul.f32.gmra.mxu0 %v5907
      %v5988 = vpop.f32.mrf.mxu0
      %v5989 = vadd.f32 0.0, %v5988
      %5990 = vmatmul.f32.gmra.mxu0 %v5908
      %v5991 = vpop.f32.mrf.mxu0
      %v5992 = vadd.f32 0.0, %v5991
      %5993 = vmatmul.f32.gmra.mxu0 %v5909
      %v5994 = vpop.f32.mrf.mxu0
      %v5995 = vadd.f32 0.0, %v5994
      %5996 = vmatmul.f32.gmra.mxu0 %v5910
      %v5997 = vpop.f32.mrf.mxu0
      %v5998 = vadd.f32 0.0, %v5997
      %5999 = vmatmul.f32.gmra.mxu0 %v5919
      %v6000 = vpop.f32.mrf.mxu0
      %v6001 = vadd.f32 0.0, %v6000
      %6002 = vmatmul.f32.gmra.mxu0 %v5920
      %v6003 = vpop.f32.mrf.mxu0
      %v6004 = vadd.f32 0.0, %v6003
      %6005 = vmatmul.f32.gmra.mxu0 %v5921
      %v6006 = vpop.f32.mrf.mxu0
      %v6007 = vadd.f32 0.0, %v6006
      %6008 = vmatmul.f32.gmra.mxu0 %v5922
      %v6009 = vpop.f32.mrf.mxu0
      %v6010 = vadd.f32 0.0, %v6009
      %6011 = vmatmul.f32.gmra.mxu0 %v5927
      %v6012 = vpop.f32.mrf.mxu0
      %v6013 = vadd.f32 0.0, %v6012
      %6014 = vmatmul.f32.gmra.mxu0 %v5928
      %v6015 = vpop.f32.mrf.mxu0
      %v6016 = vadd.f32 0.0, %v6015
      %6017 = vdwg.mxu0
      %v6018 = vadd.f32 %v5773, %v5965
      %v6019 = vadd.f32 %v5774, %v5968
      %v6020 = vadd.f32 %v5775, %v5971
      %v6021 = vadd.f32 %v5776, %v5974
      %v6022 = vadd.f32 %v5777, %v5977
      %v6023 = vadd.f32 %v5778, %v5980
      %v6024 = vadd.f32 %v5779, %v5983
      %v6025 = vadd.f32 %v5780, %v5986
      %v6026 = vadd.f32 %v5781, %v5989
      %v6027 = vadd.f32 %v5782, %v5992
      %v6028 = vadd.f32 %v5783, %v5995
      %v6029 = vadd.f32 %v5784, %v5998
      %v6030 = vadd.f32 %v5785, %v6001
      %v6031 = vadd.f32 %v5786, %v6004
      %v6032 = vadd.f32 %v5787, %v6007
      %v6033 = vadd.f32 %v5788, %v6010
      %v6034 = vadd.f32 %v5789, %v6013
      %v6035 = vadd.f32 %v5790, %v6016
      %v6036 = vld [vmem:[%s5791 + $0x1] sm:$0xff]
      %v6037 = vld [vmem:[%s5791 + $0x9] sm:$0xf]
      %v6038 = vld [vmem:[%s5791 + $0x11] sm:$0xff]
      %v6039 = vld [vmem:[%s5791 + $0x19] sm:$0xf]
      %v6040 = vld [vmem:[%s5791 + $0x21] sm:$0xff]
      %v6041 = vld [vmem:[%s5791 + $0x29] sm:$0xf]
      %v6042 = vld [vmem:[%s5791 + $0x31] sm:$0xff]
      %v6043 = vld [vmem:[%s5791 + $0x39] sm:$0xf]
      %v6044 = vld [vmem:[%s5791 + $0x41] sm:$0xff]
      %v6045 = vld [vmem:[%s5791 + $0x49] sm:$0xf]
      %v6046 = vld [vmem:[%s5791 + $0x51] sm:$0xff]
      %v6047 = vld [vmem:[%s5791 + $0x59] sm:$0xf]
      %v6048 = vld [vmem:[%s5791 + $0x61] sm:$0xff]
      %v6049 = vld [vmem:[%s5791 + $0x69] sm:$0xf]
      %v6050 = vld [vmem:[%s5791 + $0x71] sm:$0xff]
      %v6051 = vld [vmem:[%s5791 + $0x79] sm:$0xf]
      %v6052 = vld [vmem:[%s5791 + $0x81] sm:$0xff]
      %v6053 = vld [vmem:[%s5791 + $0x89] sm:$0xf]
      %v6054 = vld [vmem:[%s5791 + $0x91] sm:$0xff]
      %v6055 = vld [vmem:[%s5791 + $0x99] sm:$0xf]
      %v6056 = vld [vmem:[%s5791 + $0xa1] sm:$0xff]
      %v6057 = vld [vmem:[%s5791 + $0xa9] sm:$0xf]
      %v6058 = vld [vmem:[%s5791 + $0xb1] sm:$0xff]
      %v6059 = vld [vmem:[%s5791 + $0xb9] sm:$0xf]
      %v6084 = vrot.slane %v6036, 4
      %v6085 = vrot.slane %v6038, 4
      %v6086 = vrot.slane %v6040, 4
      %v6087 = vrot.slane %v6042, 4
      %v6088 = vrot.slane %v6044, 4
      %v6089 = vrot.slane %v6046, 4
      %v6090 = vrot.slane %v6048, 4
      %v6091 = vrot.slane %v6050, 4
      %v6092 = vrot.slane %v6052, 4
      %v6093 = vrot.slane %v6054, 4
      %v6094 = vrot.slane %v6056, 4
      %v6095 = vrot.slane %v6058, 4
      %v6096 = vld [vmem:[%s3 + $0x380] sm:$0xff]
      %v6097 = vld [vmem:[%s3 + $0x388] sm:$0xff]
      %v6098 = vld [vmem:[%s3 + $0x390] sm:$0xff]
      %v6099 = vld [vmem:[%s3 + $0x398] sm:$0xff]
      %v6100 = vld [vmem:[%s3 + $0x3a0] sm:$0xff]
      %v6101 = vld [vmem:[%s3 + $0x3a8] sm:$0xff]
      %v6102 = vld [vmem:[%s3 + $0x3b0] sm:$0xff]
      %v6103 = vld [vmem:[%s3 + $0x3b8] sm:$0xff]
      %v6104 = vld [vmem:[%s3 + $0x3c0] sm:$0xff]
      %v6105 = vld [vmem:[%s3 + $0x3c8] sm:$0xff]
      %v6106 = vld [vmem:[%s3 + $0x3d0] sm:$0xff]
      %v6107 = vld [vmem:[%s3 + $0x3d8] sm:$0xff]
      %v6108 = vld [vmem:[%s3 + $0x3e0] sm:$0xff]
      %v6109 = vld [vmem:[%s3 + $0x3e8] sm:$0xff]
      %v6110 = vld [vmem:[%s3 + $0x3f0] sm:$0xff]
      %v6111 = vld [vmem:[%s3 + $0x3f8] sm:$0xff]
      %6112 = vst [vmem:[#allocation1] ss:$2 sm:$0xff] %v6036
      %s6113 = scalar_lea.vmem [#allocation1], 1
      %6114 = vst [vmem:[%s6113] ss:$2 sm:$0xff] %v6084
      %s6115 = scalar_lea.vmem [#allocation1], 16
      %6116 = vst [vmem:[%s6115] ss:$2 sm:$0xff] %v6037
      %s6117 = scalar_lea.vmem [#allocation1], 17
      %6118 = vst [vmem:[%s6117] ss:$2 sm:$0xff] %v6038
      %s6119 = scalar_lea.vmem [#allocation1], 32
      %6120 = vst [vmem:[%s6119] ss:$2 sm:$0xff] %v6085
      %s6121 = scalar_lea.vmem [#allocation1], 33
      %6122 = vst [vmem:[%s6121] ss:$2 sm:$0xff] %v6039
      %s6123 = scalar_lea.vmem [#allocation1], 48
      %6124 = vst [vmem:[%s6123] ss:$2 sm:$0xff] %v6040
      %s6125 = scalar_lea.vmem [#allocation1], 49
      %6126 = vst [vmem:[%s6125] ss:$2 sm:$0xff] %v6086
      %v6127 = vld.sshfl [vmem:[#allocation1] sm:$0xff pattern:$0x75316420]
      %v6128 = vld.sshfl [vmem:[#allocation1 + $0x10] sm:$0xff pattern:$0x75316420]
      %v6129 = vld.sshfl [vmem:[#allocation1 + $0x20] sm:$0xff pattern:$0x75316420]
      %v6130 = vld.sshfl [vmem:[#allocation1 + $0x30] sm:$0xff pattern:$0x75316420]
      %6131 = vst [vmem:[#allocation1] ss:$2 sm:$0xff] %v6041
      %6132 = vst [vmem:[%s6113] ss:$2 sm:$0xff] %v6042
      %6133 = vst [vmem:[%s6115] ss:$2 sm:$0xff] %v6087
      %6134 = vst [vmem:[%s6117] ss:$2 sm:$0xff] %v6043
      %6135 = vst [vmem:[%s6119] ss:$2 sm:$0xff] %v6044
      %6136 = vst [vmem:[%s6121] ss:$2 sm:$0xff] %v6088
      %6137 = vst [vmem:[%s6123] ss:$2 sm:$0xff] %v6045
      %6138 = vst [vmem:[%s6125] ss:$2 sm:$0xff] %v6046
      %v6139 = vld.sshfl [vmem:[#allocation1] sm:$0xff pattern:$0x75316420]
      %v6140 = vld.sshfl [vmem:[#allocation1 + $0x10] sm:$0xff pattern:$0x75316420]
      %v6141 = vld.sshfl [vmem:[#allocation1 + $0x20] sm:$0xff pattern:$0x75316420]
      %v6142 = vld.sshfl [vmem:[#allocation1 + $0x30] sm:$0xff pattern:$0x75316420]
      %6143 = vst [vmem:[#allocation1] ss:$2 sm:$0xff] %v6089
      %6144 = vst [vmem:[%s6113] ss:$2 sm:$0xff] %v6047
      %6145 = vst [vmem:[%s6115] ss:$2 sm:$0xff] %v6048
      %6146 = vst [vmem:[%s6117] ss:$2 sm:$0xff] %v6090
      %6147 = vst [vmem:[%s6119] ss:$2 sm:$0xff] %v6049
      %6148 = vst [vmem:[%s6121] ss:$2 sm:$0xff] %v6050
      %6149 = vst [vmem:[%s6123] ss:$2 sm:$0xff] %v6091
      %6150 = vst [vmem:[%s6125] ss:$2 sm:$0xff] %v6051
      %v6151 = vld.sshfl [vmem:[#allocation1] sm:$0xff pattern:$0x75316420]
      %v6152 = vld.sshfl [vmem:[#allocation1 + $0x10] sm:$0xff pattern:$0x75316420]
      %v6153 = vld.sshfl [vmem:[#allocation1 + $0x20] sm:$0xff pattern:$0x75316420]
      %v6154 = vld.sshfl [vmem:[#allocation1 + $0x30] sm:$0xff pattern:$0x75316420]
      %6155 = vst [vmem:[#allocation1] ss:$2 sm:$0xff] %v6052
      %6156 = vst [vmem:[%s6113] ss:$2 sm:$0xff] %v6092
      %6157 = vst [vmem:[%s6115] ss:$2 sm:$0xff] %v6053
      %6158 = vst [vmem:[%s6117] ss:$2 sm:$0xff] %v6054
      %6159 = vst [vmem:[%s6119] ss:$2 sm:$0xff] %v6093
      %6160 = vst [vmem:[%s6121] ss:$2 sm:$0xff] %v6055
      %6161 = vst [vmem:[%s6123] ss:$2 sm:$0xff] %v6056
      %6162 = vst [vmem:[%s6125] ss:$2 sm:$0xff] %v6094
      %v6163 = vld.sshfl [vmem:[#allocation1] sm:$0xff pattern:$0x75316420]
      %v6164 = vld.sshfl [vmem:[#allocation1 + $0x10] sm:$0xff pattern:$0x75316420]
      %v6165 = vld.sshfl [vmem:[#allocation1 + $0x20] sm:$0xff pattern:$0x75316420]
      %v6166 = vld.sshfl [vmem:[#allocation1 + $0x30] sm:$0xff pattern:$0x75316420]
      %6167 = vst [vmem:[#allocation1] ss:$2 sm:$0xff] %v6057
      %6168 = vst [vmem:[%s6113] ss:$2 sm:$0xff] %v6058
      %6169 = vst [vmem:[%s6115] ss:$2 sm:$0xff] %v6095
      %6170 = vst [vmem:[%s6117] ss:$2 sm:$0xff] %v6059
      %v6171 = vld.sshfl [vmem:[#allocation1] sm:$0xff pattern:$0x75316420]
      %v6172 = vld.sshfl [vmem:[#allocation1 + $0x10] sm:$0xff pattern:$0x75316420]
      %6191 = vmatpush.msra.mxu0 %v6111
      %6192 = vmatpush.msra.mxu0 %v6110
      %6193 = vmatpush.msra.mxu0 %v6109
      %6194 = vmatpush.msra.mxu0 %v6108
      %6195 = vmatpush.msra.mxu0 %v6107
      %6196 = vmatpush.msra.mxu0 %v6106
      %6197 = vmatpush.msra.mxu0 %v6105
      %6198 = vmatpush.msra.mxu0 %v6104
      %6199 = vmatpush.msra.mxu0 %v6103
      %6200 = vmatpush.msra.mxu0 %v6102
      %6201 = vmatpush.msra.mxu0 %v6101
      %6202 = vmatpush.msra.mxu0 %v6100
      %6203 = vmatpush.msra.mxu0 %v6099
      %6204 = vmatpush.msra.mxu0 %v6098
      %6205 = vmatpush.msra.mxu0 %v6097
      %6206 = vmatpush.msra.mxu0 %v6096
      %6207 = vmatmul.f32.gmra.mxu0 %v6127
      %v6208 = vpop.f32.mrf.mxu0
      %v6209 = vadd.f32 0.0, %v6208
      %6210 = vmatmul.f32.gmra.mxu0 %v6128
      %v6211 = vpop.f32.mrf.mxu0
      %v6212 = vadd.f32 0.0, %v6211
      %6213 = vmatmul.f32.gmra.mxu0 %v6129
      %v6214 = vpop.f32.mrf.mxu0
      %v6215 = vadd.f32 0.0, %v6214
      %6216 = vmatmul.f32.gmra.mxu0 %v6130
      %v6217 = vpop.f32.mrf.mxu0
      %v6218 = vadd.f32 0.0, %v6217
      %6219 = vmatmul.f32.gmra.mxu0 %v6139
      %v6220 = vpop.f32.mrf.mxu0
      %v6221 = vadd.f32 0.0, %v6220
      %6222 = vmatmul.f32.gmra.mxu0 %v6140
      %v6223 = vpop.f32.mrf.mxu0
      %v6224 = vadd.f32 0.0, %v6223
      %6225 = vmatmul.f32.gmra.mxu0 %v6141
      %v6226 = vpop.f32.mrf.mxu0
      %v6227 = vadd.f32 0.0, %v6226
      %6228 = vmatmul.f32.gmra.mxu0 %v6142
      %v6229 = vpop.f32.mrf.mxu0
      %v6230 = vadd.f32 0.0, %v6229
      %6231 = vmatmul.f32.gmra.mxu0 %v6151
      %v6232 = vpop.f32.mrf.mxu0
      %v6233 = vadd.f32 0.0, %v6232
      %6234 = vmatmul.f32.gmra.mxu0 %v6152
      %v6235 = vpop.f32.mrf.mxu0
      %v6236 = vadd.f32 0.0, %v6235
      %6237 = vmatmul.f32.gmra.mxu0 %v6153
      %v6238 = vpop.f32.mrf.mxu0
      %v6239 = vadd.f32 0.0, %v6238
      %6240 = vmatmul.f32.gmra.mxu0 %v6154
      %v6241 = vpop.f32.mrf.mxu0
      %v6242 = vadd.f32 0.0, %v6241
      %6243 = vmatmul.f32.gmra.mxu0 %v6163
      %v6244 = vpop.f32.mrf.mxu0
      %v6245 = vadd.f32 0.0, %v6244
      %6246 = vmatmul.f32.gmra.mxu0 %v6164
      %v6247 = vpop.f32.mrf.mxu0
      %v6248 = vadd.f32 0.0, %v6247
      %6249 = vmatmul.f32.gmra.mxu0 %v6165
      %v6250 = vpop.f32.mrf.mxu0
      %v6251 = vadd.f32 0.0, %v6250
      %6252 = vmatmul.f32.gmra.mxu0 %v6166
      %v6253 = vpop.f32.mrf.mxu0
      %v6254 = vadd.f32 0.0, %v6253
      %6255 = vmatmul.f32.gmra.mxu0 %v6171
      %v6256 = vpop.f32.mrf.mxu0
      %v6257 = vadd.f32 0.0, %v6256
      %6258 = vmatmul.f32.gmra.mxu0 %v6172
      %v6259 = vpop.f32.mrf.mxu0
      %v6260 = vadd.f32 0.0, %v6259
      %6261 = vdwg.mxu0
      %v6262 = vadd.f32 %v6018, %v6209
      %v6263 = vadd.f32 %v6019, %v6212
      %v6264 = vadd.f32 %v6020, %v6215
      %v6265 = vadd.f32 %v6021, %v6218
      %v6266 = vadd.f32 %v6022, %v6221
      %v6267 = vadd.f32 %v6023, %v6224
      %v6268 = vadd.f32 %v6024, %v6227
      %v6269 = vadd.f32 %v6025, %v6230
      %v6270 = vadd.f32 %v6026, %v6233
      %v6271 = vadd.f32 %v6027, %v6236
      %v6272 = vadd.f32 %v6028, %v6239
      %v6273 = vadd.f32 %v6029, %v6242
      %v6274 = vadd.f32 %v6030, %v6245
      %v6275 = vadd.f32 %v6031, %v6248
      %v6276 = vadd.f32 %v6032, %v6251
      %v6277 = vadd.f32 %v6033, %v6254
      %v6278 = vadd.f32 %v6034, %v6257
      %v6279 = vadd.f32 %v6035, %v6260
      %v6280 = vld [vmem:[%s5791 + $0x2] sm:$0xff]
      %v6281 = vld [vmem:[%s5791 + $0xa] sm:$0xf]
      %v6282 = vld [vmem:[%s5791 + $0x12] sm:$0xff]
      %v6283 = vld [vmem:[%s5791 + $0x1a] sm:$0xf]
      %v6284 = vld [vmem:[%s5791 + $0x22] sm:$0xff]
      %v6285 = vld [vmem:[%s5791 + $0x2a] sm:$0xf]
      %v6286 = vld [vmem:[%s5791 + $0x32] sm:$0xff]
      %v6287 = vld [vmem:[%s5791 + $0x3a] sm:$0xf]
      %v6288 = vld [vmem:[%s5791 + $0x42] sm:$0xff]
      %v6289 = vld [vmem:[%s5791 + $0x4a] sm:$0xf]
      %v6290 = vld [vmem:[%s5791 + $0x52] sm:$0xff]
      %v6291 = vld [vmem:[%s5791 + $0x5a] sm:$0xf]
      %v6292 = vld [vmem:[%s5791 + $0x62] sm:$0xff]
      %v6293 = vld [vmem:[%s5791 + $0x6a] sm:$0xf]
      %v6294 = vld [vmem:[%s5791 + $0x72] sm:$0xff]
      %v6295 = vld [vmem:[%s5791 + $0x7a] sm:$0xf]
      %v6296 = vld [vmem:[%s5791 + $0x82] sm:$0xff]
      %v6297 = vld [vmem:[%s5791 + $0x8a] sm:$0xf]
      %v6298 = vld [vmem:[%s5791 + $0x92] sm:$0xff]
      %v6299 = vld [vmem:[%s5791 + $0x9a] sm:$0xf]
      %v6300 = vld [vmem:[%s5791 + $0xa2] sm:$0xff]
      %v6301 = vld [vmem:[%s5791 + $0xaa] sm:$0xf]
      %v6302 = vld [vmem:[%s5791 + $0xb2] sm:$0xff]
      %v6303 = vld [vmem:[%s5791 + $0xba] sm:$0xf]
      %v6328 = vrot.slane %v6280, 4
      %v6329 = vrot.slane %v6282, 4
      %v6330 = vrot.slane %v6284, 4
      %v6331 = vrot.slane %v6286, 4
      %v6332 = vrot.slane %v6288, 4
      %v6333 = vrot.slane %v6290, 4
      %v6334 = vrot.slane %v6292, 4
      %v6335 = vrot.slane %v6294, 4
      %v6336 = vrot.slane %v6296, 4
      %v6337 = vrot.slane %v6298, 4
      %v6338 = vrot.slane %v6300, 4
      %v6339 = vrot.slane %v6302, 4
      %v6340 = vld [vmem:[%s3 + $0x400] sm:$0xff]
      %v6341 = vld [vmem:[%s3 + $0x408] sm:$0xff]
      %v6342 = vld [vmem:[%s3 + $0x410] sm:$0xff]
      %v6343 = vld [vmem:[%s3 + $0x418] sm:$0xff]
      %v6344 = vld [vmem:[%s3 + $0x420] sm:$0xff]
      %v6345 = vld [vmem:[%s3 + $0x428] sm:$0xff]
      %v6346 = vld [vmem:[%s3 + $0x430] sm:$0xff]
      %v6347 = vld [vmem:[%s3 + $0x438] sm:$0xff]
      %v6348 = vld [vmem:[%s3 + $0x440] sm:$0xff]
      %v6349 = vld [vmem:[%s3 + $0x448] sm:$0xff]
      %v6350 = vld [vmem:[%s3 + $0x450] sm:$0xff]
      %v6351 = vld [vmem:[%s3 + $0x458] sm:$0xff]
      %v6352 = vld [vmem:[%s3 + $0x460] sm:$0xff]
      %v6353 = vld [vmem:[%s3 + $0x468] sm:$0xff]
      %v6354 = vld [vmem:[%s3 + $0x470] sm:$0xff]
      %v6355 = vld [vmem:[%s3 + $0x478] sm:$0xff]
      %6356 = vst [vmem:[#allocation1] ss:$2 sm:$0xff] %v6280
      %s6357 = scalar_lea.vmem [#allocation1], 1
      %6358 = vst [vmem:[%s6357] ss:$2 sm:$0xff] %v6328
      %s6359 = scalar_lea.vmem [#allocation1], 16
      %6360 = vst [vmem:[%s6359] ss:$2 sm:$0xff] %v6281
      %s6361 = scalar_lea.vmem [#allocation1], 17
      %6362 = vst [vmem:[%s6361] ss:$2 sm:$0xff] %v6282
      %s6363 = scalar_lea.vmem [#allocation1], 32
      %6364 = vst [vmem:[%s6363] ss:$2 sm:$0xff] %v6329
      %s6365 = scalar_lea.vmem [#allocation1], 33
      %6366 = vst [vmem:[%s6365] ss:$2 sm:$0xff] %v6283
      %s6367 = scalar_lea.vmem [#allocation1], 48
      %6368 = vst [vmem:[%s6367] ss:$2 sm:$0xff] %v6284
      %s6369 = scalar_lea.vmem [#allocation1], 49
      %6370 = vst [vmem:[%s6369] ss:$2 sm:$0xff] %v6330
      %v6371 = vld.sshfl [vmem:[#allocation1] sm:$0xff pattern:$0x75316420]
      %v6372 = vld.sshfl [vmem:[#allocation1 + $0x10] sm:$0xff pattern:$0x75316420]
      %v6373 = vld.sshfl [vmem:[#allocation1 + $0x20] sm:$0xff pattern:$0x75316420]
      %v6374 = vld.sshfl [vmem:[#allocation1 + $0x30] sm:$0xff pattern:$0x75316420]
      %6375 = vst [vmem:[#allocation1] ss:$2 sm:$0xff] %v6285
      %6376 = vst [vmem:[%s6357] ss:$2 sm:$0xff] %v6286
      %6377 = vst [vmem:[%s6359] ss:$2 sm:$0xff] %v6331
      %6378 = vst [vmem:[%s6361] ss:$2 sm:$0xff] %v6287
      %6379 = vst [vmem:[%s6363] ss:$2 sm:$0xff] %v6288
      %6380 = vst [vmem:[%s6365] ss:$2 sm:$0xff] %v6332
      %6381 = vst [vmem:[%s6367] ss:$2 sm:$0xff] %v6289
      %6382 = vst [vmem:[%s6369] ss:$2 sm:$0xff] %v6290
      %v6383 = vld.sshfl [vmem:[#allocation1] sm:$0xff pattern:$0x75316420]
      %v6384 = vld.sshfl [vmem:[#allocation1 + $0x10] sm:$0xff pattern:$0x75316420]
      %v6385 = vld.sshfl [vmem:[#allocation1 + $0x20] sm:$0xff pattern:$0x75316420]
      %v6386 = vld.sshfl [vmem:[#allocation1 + $0x30] sm:$0xff pattern:$0x75316420]
      %6387 = vst [vmem:[#allocation1] ss:$2 sm:$0xff] %v6333
      %6388 = vst [vmem:[%s6357] ss:$2 sm:$0xff] %v6291
      %6389 = vst [vmem:[%s6359] ss:$2 sm:$0xff] %v6292
      %6390 = vst [vmem:[%s6361] ss:$2 sm:$0xff] %v6334
      %6391 = vst [vmem:[%s6363] ss:$2 sm:$0xff] %v6293
      %6392 = vst [vmem:[%s6365] ss:$2 sm:$0xff] %v6294
      %6393 = vst [vmem:[%s6367] ss:$2 sm:$0xff] %v6335
      %6394 = vst [vmem:[%s6369] ss:$2 sm:$0xff] %v6295
      %v6395 = vld.sshfl [vmem:[#allocation1] sm:$0xff pattern:$0x75316420]
      %v6396 = vld.sshfl [vmem:[#allocation1 + $0x10] sm:$0xff pattern:$0x75316420]
      %v6397 = vld.sshfl [vmem:[#allocation1 + $0x20] sm:$0xff pattern:$0x75316420]
      %v6398 = vld.sshfl [vmem:[#allocation1 + $0x30] sm:$0xff pattern:$0x75316420]
      %6399 = vst [vmem:[#allocation1] ss:$2 sm:$0xff] %v6296
      %6400 = vst [vmem:[%s6357] ss:$2 sm:$0xff] %v6336
      %6401 = vst [vmem:[%s6359] ss:$2 sm:$0xff] %v6297
      %6402 = vst [vmem:[%s6361] ss:$2 sm:$0xff] %v6298
      %6403 = vst [vmem:[%s6363] ss:$2 sm:$0xff] %v6337
      %6404 = vst [vmem:[%s6365] ss:$2 sm:$0xff] %v6299
      %6405 = vst [vmem:[%s6367] ss:$2 sm:$0xff] %v6300
      %6406 = vst [vmem:[%s6369] ss:$2 sm:$0xff] %v6338
      %v6407 = vld.sshfl [vmem:[#allocation1] sm:$0xff pattern:$0x75316420]
      %v6408 = vld.sshfl [vmem:[#allocation1 + $0x10] sm:$0xff pattern:$0x75316420]
      %v6409 = vld.sshfl [vmem:[#allocation1 + $0x20] sm:$0xff pattern:$0x75316420]
      %v6410 = vld.sshfl [vmem:[#allocation1 + $0x30] sm:$0xff pattern:$0x75316420]
      %6411 = vst [vmem:[#allocation1] ss:$2 sm:$0xff] %v6301
      %6412 = vst [vmem:[%s6357] ss:$2 sm:$0xff] %v6302
      %6413 = vst [vmem:[%s6359] ss:$2 sm:$0xff] %v6339
      %6414 = vst [vmem:[%s6361] ss:$2 sm:$0xff] %v6303
      %v6415 = vld.sshfl [vmem:[#allocation1] sm:$0xff pattern:$0x75316420]
      %v6416 = vld.sshfl [vmem:[#allocation1 + $0x10] sm:$0xff pattern:$0x75316420]
      %6435 = vmatpush.msra.mxu0 %v6355
      %6436 = vmatpush.msra.mxu0 %v6354
      %6437 = vmatpush.msra.mxu0 %v6353
      %6438 = vmatpush.msra.mxu0 %v6352
      %6439 = vmatpush.msra.mxu0 %v6351
      %6440 = vmatpush.msra.mxu0 %v6350
      %6441 = vmatpush.msra.mxu0 %v6349
      %6442 = vmatpush.msra.mxu0 %v6348
      %6443 = vmatpush.msra.mxu0 %v6347
      %6444 = vmatpush.msra.mxu0 %v6346
      %6445 = vmatpush.msra.mxu0 %v6345
      %6446 = vmatpush.msra.mxu0 %v6344
      %6447 = vmatpush.msra.mxu0 %v6343
      %6448 = vmatpush.msra.mxu0 %v6342
      %6449 = vmatpush.msra.mxu0 %v6341
      %6450 = vmatpush.msra.mxu0 %v6340
      %6451 = vmatmul.f32.gmra.mxu0 %v6371
      %v6452 = vpop.f32.mrf.mxu0
      %v6453 = vadd.f32 0.0, %v6452
      %6454 = vmatmul.f32.gmra.mxu0 %v6372
      %v6455 = vpop.f32.mrf.mxu0
      %v6456 = vadd.f32 0.0, %v6455
      %6457 = vmatmul.f32.gmra.mxu0 %v6373
      %v6458 = vpop.f32.mrf.mxu0
      %v6459 = vadd.f32 0.0, %v6458
      %6460 = vmatmul.f32.gmra.mxu0 %v6374
      %v6461 = vpop.f32.mrf.mxu0
      %v6462 = vadd.f32 0.0, %v6461
      %6463 = vmatmul.f32.gmra.mxu0 %v6383
      %v6464 = vpop.f32.mrf.mxu0
      %v6465 = vadd.f32 0.0, %v6464
      %6466 = vmatmul.f32.gmra.mxu0 %v6384
      %v6467 = vpop.f32.mrf.mxu0
      %v6468 = vadd.f32 0.0, %v6467
      %6469 = vmatmul.f32.gmra.mxu0 %v6385
      %v6470 = vpop.f32.mrf.mxu0
      %v6471 = vadd.f32 0.0, %v6470
      %6472 = vmatmul.f32.gmra.mxu0 %v6386
      %v6473 = vpop.f32.mrf.mxu0
      %v6474 = vadd.f32 0.0, %v6473
      %6475 = vmatmul.f32.gmra.mxu0 %v6395
      %v6476 = vpop.f32.mrf.mxu0
      %v6477 = vadd.f32 0.0, %v6476
      %6478 = vmatmul.f32.gmra.mxu0 %v6396
      %v6479 = vpop.f32.mrf.mxu0
      %v6480 = vadd.f32 0.0, %v6479
      %6481 = vmatmul.f32.gmra.mxu0 %v6397
      %v6482 = vpop.f32.mrf.mxu0
      %v6483 = vadd.f32 0.0, %v6482
      %6484 = vmatmul.f32.gmra.mxu0 %v6398
      %v6485 = vpop.f32.mrf.mxu0
      %v6486 = vadd.f32 0.0, %v6485
      %6487 = vmatmul.f32.gmra.mxu0 %v6407
      %v6488 = vpop.f32.mrf.mxu0
      %v6489 = vadd.f32 0.0, %v6488
      %6490 = vmatmul.f32.gmra.mxu0 %v6408
      %v6491 = vpop.f32.mrf.mxu0
      %v6492 = vadd.f32 0.0, %v6491
      %6493 = vmatmul.f32.gmra.mxu0 %v6409
      %v6494 = vpop.f32.mrf.mxu0
      %v6495 = vadd.f32 0.0, %v6494
      %6496 = vmatmul.f32.gmra.mxu0 %v6410
      %v6497 = vpop.f32.mrf.mxu0
      %v6498 = vadd.f32 0.0, %v6497
      %6499 = vmatmul.f32.gmra.mxu0 %v6415
      %v6500 = vpop.f32.mrf.mxu0
      %v6501 = vadd.f32 0.0, %v6500
      %6502 = vmatmul.f32.gmra.mxu0 %v6416
      %v6503 = vpop.f32.mrf.mxu0
      %v6504 = vadd.f32 0.0, %v6503
      %6505 = vdwg.mxu0
      %v6506 = vadd.f32 %v6262, %v6453
      %v6507 = vadd.f32 %v6263, %v6456
      %v6508 = vadd.f32 %v6264, %v6459
      %v6509 = vadd.f32 %v6265, %v6462
      %v6510 = vadd.f32 %v6266, %v6465
      %v6511 = vadd.f32 %v6267, %v6468
      %v6512 = vadd.f32 %v6268, %v6471
      %v6513 = vadd.f32 %v6269, %v6474
      %v6514 = vadd.f32 %v6270, %v6477
      %v6515 = vadd.f32 %v6271, %v6480
      %v6516 = vadd.f32 %v6272, %v6483
      %v6517 = vadd.f32 %v6273, %v6486
      %v6518 = vadd.f32 %v6274, %v6489
      %v6519 = vadd.f32 %v6275, %v6492
      %v6520 = vadd.f32 %v6276, %v6495
      %v6521 = vadd.f32 %v6277, %v6498
      %v6522 = vadd.f32 %v6278, %v6501
      %v6523 = vadd.f32 %v6279, %v6504
      %v6524 = vld [vmem:[%s4] sm:$0x1]
      %v6526 = vperm.slane %v6524, 0
      %v6528 = vadd.f32 %v6506, %v6526
      %v6529 = vadd.f32 %v6507, %v6526
      %v6530 = vadd.f32 %v6508, %v6526
      %v6531 = vadd.f32 %v6509, %v6526
      %v6532 = vadd.f32 %v6510, %v6526
      %v6533 = vadd.f32 %v6511, %v6526
      %v6534 = vadd.f32 %v6512, %v6526
      %v6535 = vadd.f32 %v6513, %v6526
      %v6536 = vadd.f32 %v6514, %v6526
      %v6537 = vadd.f32 %v6515, %v6526
      %v6538 = vadd.f32 %v6516, %v6526
      %v6539 = vadd.f32 %v6517, %v6526
      %v6540 = vadd.f32 %v6518, %v6526
      %v6541 = vadd.f32 %v6519, %v6526
      %v6542 = vadd.f32 %v6520, %v6526
      %v6543 = vadd.f32 %v6521, %v6526
      %v6544 = vadd.f32 %v6522, %v6526
      %v6545 = vadd.f32 %v6523, %v6526
      %v6546 = vmax.f32 %v6528, 0.0
      %v6547 = vmax.f32 %v6529, 0.0
      %v6548 = vmax.f32 %v6530, 0.0
      %v6549 = vmax.f32 %v6531, 0.0
      %v6550 = vmax.f32 %v6532, 0.0
      %v6551 = vmax.f32 %v6533, 0.0
      %v6552 = vmax.f32 %v6534, 0.0
      %v6553 = vmax.f32 %v6535, 0.0
      %v6554 = vmax.f32 %v6536, 0.0
      %v6555 = vmax.f32 %v6537, 0.0
      %v6556 = vmax.f32 %v6538, 0.0
      %v6557 = vmax.f32 %v6539, 0.0
      %v6558 = vmax.f32 %v6540, 0.0
      %v6559 = vmax.f32 %v6541, 0.0
      %v6560 = vmax.f32 %v6542, 0.0
      %v6561 = vmax.f32 %v6543, 0.0
      %v6562 = vmax.f32 %v6544, 0.0
      %v6563 = vmax.f32 %v6545, 0.0
      %vm6564 = vcmask 64512
      %6565 = vst.msk [vmem:[%s224] sm:$0xff] %vm6564, %v6546
      %6566 = vst.msk [vmem:[%s224 + $0x8] sm:$0xff] %vm6564, %v6547
      %6567 = vst.msk [vmem:[%s224 + $0x10] sm:$0xff] %vm6564, %v6548
      %6568 = vst.msk [vmem:[%s224 + $0x18] sm:$0xff] %vm6564, %v6549
      %6569 = vst.msk [vmem:[%s224 + $0x20] sm:$0xff] %vm6564, %v6550
      %6570 = vst.msk [vmem:[%s224 + $0x28] sm:$0xff] %vm6564, %v6551
      %6571 = vst.msk [vmem:[%s224 + $0x30] sm:$0xff] %vm6564, %v6552
      %6572 = vst.msk [vmem:[%s224 + $0x38] sm:$0xff] %vm6564, %v6553
      %6573 = vst.msk [vmem:[%s224 + $0x40] sm:$0xff] %vm6564, %v6554
      %6574 = vst.msk [vmem:[%s224 + $0x48] sm:$0xff] %vm6564, %v6555
      %6575 = vst.msk [vmem:[%s224 + $0x50] sm:$0xff] %vm6564, %v6556
      %6576 = vst.msk [vmem:[%s224 + $0x58] sm:$0xff] %vm6564, %v6557
      %6577 = vst.msk [vmem:[%s224 + $0x60] sm:$0xff] %vm6564, %v6558
      %6578 = vst.msk [vmem:[%s224 + $0x68] sm:$0xff] %vm6564, %v6559
      %6579 = vst.msk [vmem:[%s224 + $0x70] sm:$0xff] %vm6564, %v6560
      %6580 = vst.msk [vmem:[%s224 + $0x78] sm:$0xff] %vm6564, %v6561
      %6581 = vst.msk [vmem:[%s224 + $0x80] sm:$0xff] %vm6564, %v6562
      %6582 = vst.msk [vmem:[%s224 + $0x88] sm:$0xff] %vm6564, %v6563
      %p6583 = scmp.lt.s32.totalorder %s16, 1
      %s6584 = scalar_select %p6583, %s16, 1
      %s6585 = smul.addr %s6584, 18
      %s6586 = smul.addr %s6585, 8
      %s6587 = scalar_lea.vmem %s5, %s6586
      // Predicated region
      $region41: #{block_forward.1} parent=39 // pred_check
        %p6588 = pneg %p144
      $region42: #{block_forward.1} parent=39 // pred_check_branch
        %6590 = sbr.rel (%p6588) target = $region44
      $region43: #{block_forward.1} parent=39 // pred_region
        _
      $region44: #{block_forward.1} parent=39 // pred_fallthru
        _
    $region40: #{block_forward.1} parent=5 // pred_fallthru
      _
    %p6591 = scmp.le.s32.totalorder 2, %s11
    // Predicated region
    $region45: #{block_forward.1} parent=5 // pred_check
      %p6592 = pneg %p6591
    $region46: #{block_forward.1} parent=5 // pred_check_branch
      %6594 = sbr.rel (%p6592) target = $region48
    $region47: #{block_forward.1} parent=5 // pred_region
      %s6595 = ssub.s32 %s11, 2
      // Predicated region
      $region49: #{block_forward.1} parent=47 // pred_check
        %p6596 = pneg %p150
      $region50: #{block_forward.1} parent=47 // pred_check_branch
        %6598 = sbr.rel (%p6596) target = $region52
      $region51: #{block_forward.1} parent=47 // pred_region
        %p6599 = scmp.lt.s32.totalorder %s17, 1
        %s6600 = scalar_select %p6599, %s17, 1
        %s6601 = smul.addr %s6600, 18
        %s6602 = smul.addr %s6601, 8
        %s6603 = scalar_lea.vmem %s5, %s6602
      $region52: #{block_forward.1} parent=47 // pred_fallthru
        _
    $region48: #{block_forward.1} parent=5 // pred_fallthru
      _
  $region6: #{block_forward.1} parent=0 // loop_footer
    %s15 = sadd.s32 1, %s11
  $region7: #{block_forward.1} parent=0 // loop_footer_branch
    %10 = sbr.rel target = $region3
  $region8: #{block_forward.1} parent=0 // loop_exit
    _

</llo_original>
